<compile_context>
chip_gen: v6e
topology: v6e:2x2x1
jax: 0.10.0
libtpu: 0.0.40
codegen_flags: <defaults>
</compile_context>

<pallas_src>
import numpy as np

import jax
import jax.numpy as jnp
from jax.experimental import pallas as pl
from jax.experimental.pallas import tpu as pltpu


# ----------------------------------------------------------------------------
# Parameter init (PyTorch-style uniform(-1/sqrt(fan_in), +1/sqrt(fan_in))).
# ----------------------------------------------------------------------------
def _uniform(key, shape, bound):
    return jax.random.uniform(key, shape, jnp.float32, -bound, bound)


def init_params(key, n_channels=1, channel_blocks=(16, 32, 64)):
    cb = list(channel_blocks)
    lblock = len(cb)
    params = {"encoder": [], "decoder": []}

    enc_cfg = []
    for i in range(lblock):
        if i == 0:
            enc_cfg.append((n_channels, cb[0], 3, 2, 1))
        elif i < lblock - 1:
            enc_cfg.append((cb[i - 1], cb[i], 3, 2, 1))
        else:
            enc_cfg.append((cb[i - 1], cb[i], 7, 1, 0))
    for (cin, cout, k, s, p) in enc_cfg:
        key, kw_, kb_ = jax.random.split(key, 3)
        bound = 1.0 / float(np.sqrt(cin * k * k))
        params["encoder"].append(dict(
            w=_uniform(kw_, (cout, cin, k, k), bound),
            b=_uniform(kb_, (cout,), bound),
            stride=s, padding=p))

    dec_cfg = []
    for i in range(lblock):
        if i == 0:
            dec_cfg.append((cb[lblock - 1], cb[lblock - 2], 7, 1, 0, 0))
        elif i < lblock - 1:
            dec_cfg.append((cb[lblock - 1 - i], cb[lblock - 2 - i], 3, 2, 1, 1))
        else:
            dec_cfg.append((cb[lblock - 1 - i], n_channels, 3, 2, 1, 1))
    for (cin, cout, k, s, p, op) in dec_cfg:
        key, kw_, kb_ = jax.random.split(key, 3)
        bound = 1.0 / float(np.sqrt(cout * k * k))  # torch fan_in = weight.size(1)*k*k
        params["decoder"].append(dict(
            w=_uniform(kw_, (cin, cout, k, k), bound),
            b=_uniform(kb_, (cout,), bound),
            stride=s, padding=p, output_padding=op))
    return params


# ----------------------------------------------------------------------------
# Weight preprocessing: per-kernel-row factors  Y = sum_kh S_kh @ X @ T_kh + b
# (pure numpy, executed once; exact rewrite of Conv2d / ConvTranspose2d).
# ----------------------------------------------------------------------------
def _conv_out(h, k, s, p):
    return (h + 2 * p - k) // s + 1


def _convt_out(h, k, s, p, op):
    return (h - 1) * s - 2 * p + k + op


def _build_conv_factors(w_oihw, k, s, p, h_in, w_in):
    """Conv2d weight (Cout,Cin,k,k) -> S (k,Hout,Hin), T (k, Win*Cin, Wout*Cout)."""
    co, ci = w_oihw.shape[0], w_oihw.shape[1]
    h_out = _conv_out(h_in, k, s, p)
    w_out = _conv_out(w_in, k, s, p)
    S = np.zeros((k, h_out, h_in), np.float32)
    T = np.zeros((k, w_in * ci, w_out * co), np.float32)
    oh = np.arange(h_out)
    iw = np.arange(w_in)
    ow = np.arange(w_out)
    kw_mat = iw[:, None] - (ow[None, :] * s - p)          # (Win, Wout)
    valid_w = (kw_mat >= 0) & (kw_mat < k)
    ii, oo = np.nonzero(valid_w)
    for kh in range(k):
        ih = oh * s - p + kh
        vh = (ih >= 0) & (ih < h_in)
        S[kh, oh[vh], ih[vh]] = 1.0
        wk = np.transpose(w_oihw[:, :, kh, :], (2, 1, 0))  # (k, Cin, Cout)
        t4 = np.zeros((w_in, ci, w_out, co), np.float32)
        t4[ii, :, oo, :] = wk[kw_mat[ii, oo]]
        T[kh] = t4.reshape(w_in * ci, w_out * co)
    return S, T, h_out, w_out


def _build_convt_factors(w_iohw, k, s, p, op, h_in, w_in):
    """ConvTranspose2d weight (Cin,Cout,k,k) -> S, T factors (same contract)."""
    ci, co = w_iohw.shape[0], w_iohw.shape[1]
    h_out = _convt_out(h_in, k, s, p, op)
    w_out = _convt_out(w_in, k, s, p, op)
    S = np.zeros((k, h_out, h_in), np.float32)
    T = np.zeros((k, w_in * ci, w_out * co), np.float32)
    ih = np.arange(h_in)
    iw = np.arange(w_in)
    ow = np.arange(w_out)
    kw_mat = ow[None, :] - (iw[:, None] * s - p)          # (Win, Wout)
    valid_w = (kw_mat >= 0) & (kw_mat < k)
    ii, oo = np.nonzero(valid_w)
    for kh in range(k):
        oh = ih * s - p + kh
        vh = (oh >= 0) & (oh < h_out)
        S[kh, oh[vh], ih[vh]] = 1.0
        wk = np.transpose(w_iohw[:, :, kh, :], (2, 0, 1))  # (k, Cin, Cout)
        t4 = np.zeros((w_in, ci, w_out, co), np.float32)
        t4[ii, :, oo, :] = wk[kw_mat[ii, oo]]
        T[kh] = t4.reshape(w_in * ci, w_out * co)
    return S, T, h_out, w_out


def prepare_fused_params(params, h_in, w_in, dtype=jnp.bfloat16):
    """Build per-layer (S, T, bias_row) device arrays + static layer metadata."""
    layers = []
    h, w = h_in, w_in
    n_enc = len(params["encoder"])
    for i, lyr in enumerate(params["encoder"]):
        wnp = np.asarray(lyr["w"], dtype=np.float32)
        bnp = np.asarray(lyr["b"], dtype=np.float32)
        k = wnp.shape[-1]
        S, T, h, w = _build_conv_factors(wnp, k, lyr["stride"], lyr["padding"], h, w)
        cout = wnp.shape[0]
        act = "relu" if i < n_enc - 1 else "none"
        layers.append(dict(S=jnp.asarray(S, dtype), T=jnp.asarray(T, dtype),
                           b=jnp.asarray(np.tile(bnp, w)[None, :], jnp.float32),
                           k=k, h_out=h, wc_out=w * cout, act=act))
    n_dec = len(params["decoder"])
    for i, lyr in enumerate(params["decoder"]):
        wnp = np.asarray(lyr["w"], dtype=np.float32)
        bnp = np.asarray(lyr["b"], dtype=np.float32)
        k = wnp.shape[-1]
        S, T, h, w = _build_convt_factors(wnp, k, lyr["stride"], lyr["padding"],
                                          lyr["output_padding"], h, w)
        cout = wnp.shape[1]
        act = "relu" if i < n_dec - 1 else "sigmoid"
        layers.append(dict(S=jnp.asarray(S, dtype), T=jnp.asarray(T, dtype),
                           b=jnp.asarray(np.tile(bnp, w)[None, :], jnp.float32),
                           k=k, h_out=h, wc_out=w * cout, act=act))
    return layers


# ----------------------------------------------------------------------------
# Fused Pallas forward: one kernel, all layers, activations resident in VMEM.
# ----------------------------------------------------------------------------
def build_fused_forward(layers, n_channels, h_in, w_in, max_batch_block=8):
    wc_in = w_in * n_channels
    h_last = layers[-1]["h_out"]
    wc_last = layers[-1]["wc_out"]

    meta = []
    h_prev = h_in
    for lyr in layers:
        meta.append((lyr["k"], h_prev, lyr["h_out"], lyr["wc_out"], lyr["act"]))
        h_prev = lyr["h_out"]
    meta = tuple(meta)
    n_layers = len(meta)

    # Resident weight factors: full-array BlockSpecs (exempt from the (8,128)
    # rule), constant index maps -> DMA'd once, re-used across all grid steps.
    flat_inputs = []
    const_specs = []
    for lyr in layers:
        for name in ("S", "T", "b"):
            arr = lyr[name]
            flat_inputs.append(arr)
            const_specs.append(
                pl.BlockSpec(tuple(arr.shape), (lambda b, _nd=arr.ndim: (0,) * _nd)))

    def make_kernel(bblk):
        def kernel(*refs):
            x_ref, out_ref = refs[0], refs[-1]
            lrefs = refs[1:-1]
            # Unrolled batch block: independent matmul chains give the LLO
            # scheduler work to hide MXU fill/drain latency of tiny operands.
            for bi in range(bblk):
                a = x_ref[bi].astype(jnp.bfloat16)          # (H_in, W_in*C_in)
                for li, (k, h_in_l, h_out, wc_out, act) in enumerate(meta):
                    s_ref = lrefs[3 * li]
                    t_ref = lrefs[3 * li + 1]
                    b_ref = lrefs[3 * li + 2]

                    def term(kh, _a=a, _s=s_ref, _t=t_ref,
                             _shrink=(h_out <= h_in_l)):
                        if _shrink:
                            # encoder-ish: shrink rows first -> fewer FLOPs in T matmul
                            rows = jnp.dot(_s[kh], _a,
                                           preferred_element_type=jnp.float32)
                            return jnp.dot(rows.astype(jnp.bfloat16), _t[kh],
                                           preferred_element_type=jnp.float32)
                        # decoder-ish: apply T on the small input first
                        cols = jnp.dot(_a, _t[kh],
                                       preferred_element_type=jnp.float32)
                        return jnp.dot(_s[kh], cols.astype(jnp.bfloat16),
                                       preferred_element_type=jnp.float32)

                    acc = term(0)                            # no zeros init / add-to-zero
                    for kh in range(1, k):
                        acc = acc + term(kh)
                    acc = acc + b_ref[...]                   # (Hout, WCout) + (1, WCout)
                    if act == "relu":
                        acc = jnp.maximum(acc, 0.0)
                    elif act == "sigmoid":
                        # exp on EUP, reciprocal instead of a VPU divide
                        # (approx=False keeps the exact [0,1] output bound)
                        acc = pl.reciprocal(1.0 + jnp.exp(-acc), approx=False)
                    if li + 1 < n_layers:
                        a = acc.astype(jnp.bfloat16)
                    else:
                        out_ref[bi] = acc.astype(out_ref.dtype)
        return kernel

    def forward(x_nchw):
        B = x_nchw.shape[0]
        # Batch block = largest divisor of B up to max_batch_block (static at trace time).
        bblk = max(d for d in range(1, min(B, max_batch_block) + 1) if B % d == 0)
        # NCHW -> (B, H, W*C) matrix representation (boundary glue only).
        a0 = jnp.transpose(x_nchw, (0, 2, 3, 1)).reshape(B, h_in, wc_in)
        in_specs = ([pl.BlockSpec((bblk, h_in, wc_in), lambda b: (b, 0, 0))]
                    + const_specs)
        out_spec = pl.BlockSpec((bblk, h_last, wc_last), lambda b: (b, 0, 0))
        y = pl.pallas_call(
            make_kernel(bblk),
            out_shape=jax.ShapeDtypeStruct((B, h_last, wc_last), jnp.float32),
            grid=(B // bblk,),
            in_specs=in_specs,
            out_specs=out_spec,
            compiler_params=pltpu.CompilerParams(
                dimension_semantics=("parallel",)),   # v7x: batch blocks across 2 TCs
        )(a0, *flat_inputs)
        w_last = wc_last // n_channels
        return jnp.transpose(y.reshape(B, h_last, w_last, n_channels), (0, 3, 1, 2))

    return forward


# ----------------------------------------------------------------------------
# Plain-JAX reference (im2col / dilated ConvT formulation) for validation.
# ----------------------------------------------------------------------------
def _im2col(x_nhwc, k, stride, pad_lo, pad_hi):
    x = jnp.pad(x_nhwc, ((0, 0), (pad_lo, pad_hi), (pad_lo, pad_hi), (0, 0)))
    N, H, W, C = x.shape
    Ho = (H - k) // stride + 1
    Wo = (W - k) // stride + 1
    cols = []
    for i in range(k):
        for j in range(k):
            cols.append(x[:, i:i + stride * Ho:stride, j:j + stride * Wo:stride, :])
    p = jnp.stack(cols, axis=3)
    return p.reshape(N * Ho * Wo, k * k * C), (N, Ho, Wo)


def _ref_act(y, act):
    if act == "relu":
        return jnp.maximum(y, 0.0)
    if act == "sigmoid":
        return jax.nn.sigmoid(y)
    return y


def _ref_conv2d(x, w, b, s, p, act):
    co, ci, k, _ = w.shape
    patches, (N, Ho, Wo) = _im2col(x, k, s, p, p)
    wmat = jnp.transpose(w, (2, 3, 1, 0)).reshape(k * k * ci, co)
    y = _ref_act(patches @ wmat + b, act)
    return y.reshape(N, Ho, Wo, co)


def _ref_convt2d(x, w, b, s, p, op, act):
    N, H, W, ci = x.shape
    _, co, k, _ = w.shape
    Hd, Wd = (H - 1) * s + 1, (W - 1) * s + 1
    xd = jnp.zeros((N, Hd, Wd, ci), x.dtype).at[:, ::s, ::s, :].set(x)
    patches, (N, Ho, Wo) = _im2col(xd, k, 1, k - 1 - p, k - 1 - p + op)
    wmat = jnp.transpose(w[:, :, ::-1, ::-1], (2, 3, 0, 1)).reshape(k * k * ci, co)
    y = _ref_act(patches @ wmat + b, act)
    return y.reshape(N, Ho, Wo, co)


def reference_forward(params, x_nchw):
    # Weights rounded to bf16 to mirror the kernel's bf16 T factors.
    def rw(w):
        return w.astype(jnp.bfloat16).astype(jnp.float32)

    x = jnp.transpose(x_nchw, (0, 2, 3, 1))
    n_enc = len(params["encoder"])
    for i, lyr in enumerate(params["encoder"]):
        act = "relu" if i < n_enc - 1 else "none"
        x = _ref_conv2d(x, rw(lyr["w"]), lyr["b"], lyr["stride"], lyr["padding"], act)
    n_dec = len(params["decoder"])
    for i, lyr in enumerate(params["decoder"]):
        act = "relu" if i < n_dec - 1 else "sigmoid"
        x = _ref_convt2d(x, rw(lyr["w"]), lyr["b"], lyr["stride"], lyr["padding"],
                         lyr["output_padding"], act)
    return jnp.transpose(x, (0, 3, 1, 2))


# ----------------------------------------------------------------------------
if __name__ == "__main__":
    key = jax.random.PRNGKey(0)
    k_params, k_x = jax.random.split(key)

    n_channels = 1
    channel_blocks = (16, 32, 64)
    H = W = 28   # encoder: 28 -> 14 -> 7 -> 1, decoder: 1 -> 7 -> 14 -> 28

    params = init_params(k_params, n_channels, channel_blocks)
    x = jax.random.uniform(k_x, (2, n_channels, H, W), jnp.float32)

    layers = prepare_fused_params(params, H, W)
    forward = jax.jit(build_fused_forward(layers, n_channels, H, W))

    y = forward(x)
    jax.block_until_ready(y)

    assert y.shape == (2, n_channels, H, W), y.shape
    assert bool(jnp.all((y >= 0.0) & (y <= 1.0))), "sigmoid output out of range"

    # Validate against the plain-JAX im2col reference (bf16-rounded weights).
    y_ref = reference_forward(params, x)
    err = float(jnp.max(jnp.abs(y - y_ref)))
    assert err < 5e-2, f"mismatch vs reference: max|diff|={err}"

    print("KERNEL_OK")
</pallas_src>

<mosaic_0001>
module attributes {stable_mosaic.version = 11 : i64} {
  func.func @kernel(%arg0: i32, %arg1: memref<2x28x28xf32, #tpu.memory_space<vmem>>, %arg2: memref<3x14x28xbf16, #tpu.memory_space<vmem>>, %arg3: memref<3x28x224xbf16, #tpu.memory_space<vmem>>, %arg4: memref<1x224xf32, #tpu.memory_space<vmem>>, %arg5: memref<3x7x14xbf16, #tpu.memory_space<vmem>>, %arg6: memref<3x224x224xbf16, #tpu.memory_space<vmem>>, %arg7: memref<1x224xf32, #tpu.memory_space<vmem>>, %arg8: memref<7x1x7xbf16, #tpu.memory_space<vmem>>, %arg9: memref<7x224x64xbf16, #tpu.memory_space<vmem>>, %arg10: memref<1x64xf32, #tpu.memory_space<vmem>>, %arg11: memref<7x7x1xbf16, #tpu.memory_space<vmem>>, %arg12: memref<7x64x224xbf16, #tpu.memory_space<vmem>>, %arg13: memref<1x224xf32, #tpu.memory_space<vmem>>, %arg14: memref<3x14x7xbf16, #tpu.memory_space<vmem>>, %arg15: memref<3x224x224xbf16, #tpu.memory_space<vmem>>, %arg16: memref<1x224xf32, #tpu.memory_space<vmem>>, %arg17: memref<3x28x14xbf16, #tpu.memory_space<vmem>>, %arg18: memref<3x224x28xbf16, #tpu.memory_space<vmem>>, %arg19: memref<1x28xf32, #tpu.memory_space<vmem>>, %arg20: memref<2x28x28xf32, #tpu.memory_space<vmem>>) attributes {dimension_semantics = [#tpu.dimension_semantics<parallel>], iteration_bounds = array<i64: 1>, scalar_prefetch = 0 : i64, scratch_operands = 0 : i64, tpu.core_type = #tpu.core_type<tc>, window_params = [{transform_indices = @transform_0, window_bounds = array<i64: 2, 28, 28>}, {pipeline_mode = #tpu.pipeline_mode<synchronous>, transform_indices = @transform_1, window_bounds = array<i64: 3, 14, 28>}, {pipeline_mode = #tpu.pipeline_mode<synchronous>, transform_indices = @transform_2, window_bounds = array<i64: 3, 28, 224>}, {pipeline_mode = #tpu.pipeline_mode<synchronous>, transform_indices = @transform_3, window_bounds = array<i64: 1, 224>}, {pipeline_mode = #tpu.pipeline_mode<synchronous>, transform_indices = @transform_4, window_bounds = array<i64: 3, 7, 14>}, {pipeline_mode = #tpu.pipeline_mode<synchronous>, transform_indices = @transform_5, window_bounds = array<i64: 3, 224, 224>}, {pipeline_mode = #tpu.pipeline_mode<synchronous>, transform_indices = @transform_6, window_bounds = array<i64: 1, 224>}, {pipeline_mode = #tpu.pipeline_mode<synchronous>, transform_indices = @transform_7, window_bounds = array<i64: 7, 1, 7>}, {pipeline_mode = #tpu.pipeline_mode<synchronous>, transform_indices = @transform_8, window_bounds = array<i64: 7, 224, 64>}, {pipeline_mode = #tpu.pipeline_mode<synchronous>, transform_indices = @transform_9, window_bounds = array<i64: 1, 64>}, {pipeline_mode = #tpu.pipeline_mode<synchronous>, transform_indices = @transform_10, window_bounds = array<i64: 7, 7, 1>}, {pipeline_mode = #tpu.pipeline_mode<synchronous>, transform_indices = @transform_11, window_bounds = array<i64: 7, 64, 224>}, {pipeline_mode = #tpu.pipeline_mode<synchronous>, transform_indices = @transform_12, window_bounds = array<i64: 1, 224>}, {pipeline_mode = #tpu.pipeline_mode<synchronous>, transform_indices = @transform_13, window_bounds = array<i64: 3, 14, 7>}, {pipeline_mode = #tpu.pipeline_mode<synchronous>, transform_indices = @transform_14, window_bounds = array<i64: 3, 224, 224>}, {pipeline_mode = #tpu.pipeline_mode<synchronous>, transform_indices = @transform_15, window_bounds = array<i64: 1, 224>}, {pipeline_mode = #tpu.pipeline_mode<synchronous>, transform_indices = @transform_16, window_bounds = array<i64: 3, 28, 14>}, {pipeline_mode = #tpu.pipeline_mode<synchronous>, transform_indices = @transform_17, window_bounds = array<i64: 3, 224, 28>}, {pipeline_mode = #tpu.pipeline_mode<synchronous>, transform_indices = @transform_18, window_bounds = array<i64: 1, 28>}, {transform_indices = @transform_19, window_bounds = array<i64: 2, 28, 28>}]} {
    %c0 = arith.constant 0 : index
    %c0_0 = arith.constant 0 : index
    %c0_1 = arith.constant 0 : index
    %0 = vector.load %arg1[%c0, %c0_0, %c0_1] : memref<2x28x28xf32, #tpu.memory_space<vmem>>, vector<1x28x28xf32>
    %1 = vector.shape_cast %0 : vector<1x28x28xf32> to vector<28x28xf32>
    %2 = arith.truncf %1 : vector<28x28xf32> to vector<28x28xbf16>
    %c0_2 = arith.constant 0 : index
    %c0_3 = arith.constant 0 : index
    %c0_4 = arith.constant 0 : index
    %3 = vector.load %arg2[%c0_2, %c0_3, %c0_4] : memref<3x14x28xbf16, #tpu.memory_space<vmem>>, vector<1x14x28xbf16>
    %4 = vector.shape_cast %3 : vector<1x14x28xbf16> to vector<14x28xbf16>
    %cst = arith.constant dense<0.000000e+00> : vector<14x28xf32>
    %5 = tpu.matmul %4, %2, %cst {dimension_numbers = #tpu.dot_dimension_numbers<[1], [0], [0], [1], [0, 0, 1, 1], [], []>} : vector<14x28xbf16>, vector<28x28xbf16>, vector<14x28xf32> -> vector<14x28xf32>
    %6 = arith.truncf %5 : vector<14x28xf32> to vector<14x28xbf16>
    %c0_5 = arith.constant 0 : index
    %c0_6 = arith.constant 0 : index
    %c0_7 = arith.constant 0 : index
    %7 = vector.load %arg3[%c0_5, %c0_6, %c0_7] : memref<3x28x224xbf16, #tpu.memory_space<vmem>>, vector<1x28x224xbf16>
    %8 = vector.shape_cast %7 : vector<1x28x224xbf16> to vector<28x224xbf16>
    %cst_8 = arith.constant dense<0.000000e+00> : vector<14x224xf32>
    %9 = tpu.matmul %6, %8, %cst_8 {dimension_numbers = #tpu.dot_dimension_numbers<[1], [0], [0], [1], [0, 0, 1, 1], [], []>} : vector<14x28xbf16>, vector<28x224xbf16>, vector<14x224xf32> -> vector<14x224xf32>
    %c1 = arith.constant 1 : index
    %c0_9 = arith.constant 0 : index
    %c0_10 = arith.constant 0 : index
    %10 = vector.load %arg2[%c1, %c0_9, %c0_10] : memref<3x14x28xbf16, #tpu.memory_space<vmem>>, vector<1x14x28xbf16>
    %11 = vector.shape_cast %10 : vector<1x14x28xbf16> to vector<14x28xbf16>
    %cst_11 = arith.constant dense<0.000000e+00> : vector<14x28xf32>
    %12 = tpu.matmul %11, %2, %cst_11 {dimension_numbers = #tpu.dot_dimension_numbers<[1], [0], [0], [1], [0, 0, 1, 1], [], []>} : vector<14x28xbf16>, vector<28x28xbf16>, vector<14x28xf32> -> vector<14x28xf32>
    %13 = arith.truncf %12 : vector<14x28xf32> to vector<14x28xbf16>
    %c1_12 = arith.constant 1 : index
    %c0_13 = arith.constant 0 : index
    %c0_14 = arith.constant 0 : index
    %14 = vector.load %arg3[%c1_12, %c0_13, %c0_14] : memref<3x28x224xbf16, #tpu.memory_space<vmem>>, vector<1x28x224xbf16>
    %15 = vector.shape_cast %14 : vector<1x28x224xbf16> to vector<28x224xbf16>
    %cst_15 = arith.constant dense<0.000000e+00> : vector<14x224xf32>
    %16 = tpu.matmul %13, %15, %cst_15 {dimension_numbers = #tpu.dot_dimension_numbers<[1], [0], [0], [1], [0, 0, 1, 1], [], []>} : vector<14x28xbf16>, vector<28x224xbf16>, vector<14x224xf32> -> vector<14x224xf32>
    %17 = arith.addf %9, %16 : vector<14x224xf32>
    %c2 = arith.constant 2 : index
    %c0_16 = arith.constant 0 : index
    %c0_17 = arith.constant 0 : index
    %18 = vector.load %arg2[%c2, %c0_16, %c0_17] : memref<3x14x28xbf16, #tpu.memory_space<vmem>>, vector<1x14x28xbf16>
    %19 = vector.shape_cast %18 : vector<1x14x28xbf16> to vector<14x28xbf16>
    %cst_18 = arith.constant dense<0.000000e+00> : vector<14x28xf32>
    %20 = tpu.matmul %19, %2, %cst_18 {dimension_numbers = #tpu.dot_dimension_numbers<[1], [0], [0], [1], [0, 0, 1, 1], [], []>} : vector<14x28xbf16>, vector<28x28xbf16>, vector<14x28xf32> -> vector<14x28xf32>
    %21 = arith.truncf %20 : vector<14x28xf32> to vector<14x28xbf16>
    %c2_19 = arith.constant 2 : index
    %c0_20 = arith.constant 0 : index
    %c0_21 = arith.constant 0 : index
    %22 = vector.load %arg3[%c2_19, %c0_20, %c0_21] : memref<3x28x224xbf16, #tpu.memory_space<vmem>>, vector<1x28x224xbf16>
    %23 = vector.shape_cast %22 : vector<1x28x224xbf16> to vector<28x224xbf16>
    %cst_22 = arith.constant dense<0.000000e+00> : vector<14x224xf32>
    %24 = tpu.matmul %21, %23, %cst_22 {dimension_numbers = #tpu.dot_dimension_numbers<[1], [0], [0], [1], [0, 0, 1, 1], [], []>} : vector<14x28xbf16>, vector<28x224xbf16>, vector<14x224xf32> -> vector<14x224xf32>
    %25 = arith.addf %17, %24 : vector<14x224xf32>
    %c0_23 = arith.constant 0 : index
    %c0_24 = arith.constant 0 : index
    %26 = vector.load %arg4[%c0_23, %c0_24] : memref<1x224xf32, #tpu.memory_space<vmem>>, vector<1x224xf32>
    %27 = vector.broadcast %26 : vector<1x224xf32> to vector<14x224xf32>
    %28 = arith.addf %25, %27 : vector<14x224xf32>
    %cst_25 = arith.constant 0.000000e+00 : f32
    %29 = vector.broadcast %cst_25 : f32 to vector<14x224xf32>
    %30 = arith.maximumf %28, %29 : vector<14x224xf32>
    %31 = arith.truncf %30 : vector<14x224xf32> to vector<14x224xbf16>
    %c0_26 = arith.constant 0 : index
    %c0_27 = arith.constant 0 : index
    %c0_28 = arith.constant 0 : index
    %32 = vector.load %arg5[%c0_26, %c0_27, %c0_28] : memref<3x7x14xbf16, #tpu.memory_space<vmem>>, vector<1x7x14xbf16>
    %33 = vector.shape_cast %32 : vector<1x7x14xbf16> to vector<7x14xbf16>
    %cst_29 = arith.constant dense<0.000000e+00> : vector<7x224xf32>
    %34 = tpu.matmul %33, %31, %cst_29 {dimension_numbers = #tpu.dot_dimension_numbers<[1], [0], [0], [1], [0, 0, 1, 1], [], []>} : vector<7x14xbf16>, vector<14x224xbf16>, vector<7x224xf32> -> vector<7x224xf32>
    %35 = arith.truncf %34 : vector<7x224xf32> to vector<7x224xbf16>
    %c0_30 = arith.constant 0 : index
    %c0_31 = arith.constant 0 : index
    %c0_32 = arith.constant 0 : index
    %36 = vector.load %arg6[%c0_30, %c0_31, %c0_32] : memref<3x224x224xbf16, #tpu.memory_space<vmem>>, vector<1x224x224xbf16>
    %37 = vector.shape_cast %36 : vector<1x224x224xbf16> to vector<224x224xbf16>
    %cst_33 = arith.constant dense<0.000000e+00> : vector<7x224xf32>
    %38 = tpu.matmul %35, %37, %cst_33 {dimension_numbers = #tpu.dot_dimension_numbers<[1], [0], [0], [1], [0, 0, 1, 1], [], []>} : vector<7x224xbf16>, vector<224x224xbf16>, vector<7x224xf32> -> vector<7x224xf32>
    %c1_34 = arith.constant 1 : index
    %c0_35 = arith.constant 0 : index
    %c0_36 = arith.constant 0 : index
    %39 = vector.load %arg5[%c1_34, %c0_35, %c0_36] : memref<3x7x14xbf16, #tpu.memory_space<vmem>>, vector<1x7x14xbf16>
    %40 = vector.shape_cast %39 : vector<1x7x14xbf16> to vector<7x14xbf16>
    %cst_37 = arith.constant dense<0.000000e+00> : vector<7x224xf32>
    %41 = tpu.matmul %40, %31, %cst_37 {dimension_numbers = #tpu.dot_dimension_numbers<[1], [0], [0], [1], [0, 0, 1, 1], [], []>} : vector<7x14xbf16>, vector<14x224xbf16>, vector<7x224xf32> -> vector<7x224xf32>
    %42 = arith.truncf %41 : vector<7x224xf32> to vector<7x224xbf16>
    %c1_38 = arith.constant 1 : index
    %c0_39 = arith.constant 0 : index
    %c0_40 = arith.constant 0 : index
    %43 = vector.load %arg6[%c1_38, %c0_39, %c0_40] : memref<3x224x224xbf16, #tpu.memory_space<vmem>>, vector<1x224x224xbf16>
    %44 = vector.shape_cast %43 : vector<1x224x224xbf16> to vector<224x224xbf16>
    %cst_41 = arith.constant dense<0.000000e+00> : vector<7x224xf32>
    %45 = tpu.matmul %42, %44, %cst_41 {dimension_numbers = #tpu.dot_dimension_numbers<[1], [0], [0], [1], [0, 0, 1, 1], [], []>} : vector<7x224xbf16>, vector<224x224xbf16>, vector<7x224xf32> -> vector<7x224xf32>
    %46 = arith.addf %38, %45 : vector<7x224xf32>
    %c2_42 = arith.constant 2 : index
    %c0_43 = arith.constant 0 : index
    %c0_44 = arith.constant 0 : index
    %47 = vector.load %arg5[%c2_42, %c0_43, %c0_44] : memref<3x7x14xbf16, #tpu.memory_space<vmem>>, vector<1x7x14xbf16>
    %48 = vector.shape_cast %47 : vector<1x7x14xbf16> to vector<7x14xbf16>
    %cst_45 = arith.constant dense<0.000000e+00> : vector<7x224xf32>
    %49 = tpu.matmul %48, %31, %cst_45 {dimension_numbers = #tpu.dot_dimension_numbers<[1], [0], [0], [1], [0, 0, 1, 1], [], []>} : vector<7x14xbf16>, vector<14x224xbf16>, vector<7x224xf32> -> vector<7x224xf32>
    %50 = arith.truncf %49 : vector<7x224xf32> to vector<7x224xbf16>
    %c2_46 = arith.constant 2 : index
    %c0_47 = arith.constant 0 : index
    %c0_48 = arith.constant 0 : index
    %51 = vector.load %arg6[%c2_46, %c0_47, %c0_48] : memref<3x224x224xbf16, #tpu.memory_space<vmem>>, vector<1x224x224xbf16>
    %52 = vector.shape_cast %51 : vector<1x224x224xbf16> to vector<224x224xbf16>
    %cst_49 = arith.constant dense<0.000000e+00> : vector<7x224xf32>
    %53 = tpu.matmul %50, %52, %cst_49 {dimension_numbers = #tpu.dot_dimension_numbers<[1], [0], [0], [1], [0, 0, 1, 1], [], []>} : vector<7x224xbf16>, vector<224x224xbf16>, vector<7x224xf32> -> vector<7x224xf32>
    %54 = arith.addf %46, %53 : vector<7x224xf32>
    %c0_50 = arith.constant 0 : index
    %c0_51 = arith.constant 0 : index
    %55 = vector.load %arg7[%c0_50, %c0_51] : memref<1x224xf32, #tpu.memory_space<vmem>>, vector<1x224xf32>
    %56 = vector.broadcast %55 : vector<1x224xf32> to vector<7x224xf32>
    %57 = arith.addf %54, %56 : vector<7x224xf32>
    %cst_52 = arith.constant 0.000000e+00 : f32
    %58 = vector.broadcast %cst_52 : f32 to vector<7x224xf32>
    %59 = arith.maximumf %57, %58 : vector<7x224xf32>
    %60 = arith.truncf %59 : vector<7x224xf32> to vector<7x224xbf16>
    %c0_53 = arith.constant 0 : index
    %c0_54 = arith.constant 0 : index
    %c0_55 = arith.constant 0 : index
    %61 = vector.load %arg8[%c0_53, %c0_54, %c0_55] : memref<7x1x7xbf16, #tpu.memory_space<vmem>>, vector<1x1x7xbf16>
    %62 = vector.shape_cast %61 : vector<1x1x7xbf16> to vector<1x7xbf16>
    %cst_56 = arith.constant dense<0.000000e+00> : vector<1x224xf32>
    %63 = tpu.matmul %62, %60, %cst_56 {dimension_numbers = #tpu.dot_dimension_numbers<[1], [0], [0], [1], [0, 0, 1, 1], [], []>} : vector<1x7xbf16>, vector<7x224xbf16>, vector<1x224xf32> -> vector<1x224xf32>
    %64 = arith.truncf %63 : vector<1x224xf32> to vector<1x224xbf16>
    %c0_57 = arith.constant 0 : index
    %c0_58 = arith.constant 0 : index
    %c0_59 = arith.constant 0 : index
    %65 = vector.load %arg9[%c0_57, %c0_58, %c0_59] : memref<7x224x64xbf16, #tpu.memory_space<vmem>>, vector<1x224x64xbf16>
    %66 = vector.shape_cast %65 : vector<1x224x64xbf16> to vector<224x64xbf16>
    %cst_60 = arith.constant dense<0.000000e+00> : vector<1x64xf32>
    %67 = tpu.matmul %64, %66, %cst_60 {dimension_numbers = #tpu.dot_dimension_numbers<[1], [0], [0], [1], [0, 0, 1, 1], [], []>} : vector<1x224xbf16>, vector<224x64xbf16>, vector<1x64xf32> -> vector<1x64xf32>
    %c1_61 = arith.constant 1 : index
    %c0_62 = arith.constant 0 : index
    %c0_63 = arith.constant 0 : index
    %68 = vector.load %arg8[%c1_61, %c0_62, %c0_63] : memref<7x1x7xbf16, #tpu.memory_space<vmem>>, vector<1x1x7xbf16>
    %69 = vector.shape_cast %68 : vector<1x1x7xbf16> to vector<1x7xbf16>
    %cst_64 = arith.constant dense<0.000000e+00> : vector<1x224xf32>
    %70 = tpu.matmul %69, %60, %cst_64 {dimension_numbers = #tpu.dot_dimension_numbers<[1], [0], [0], [1], [0, 0, 1, 1], [], []>} : vector<1x7xbf16>, vector<7x224xbf16>, vector<1x224xf32> -> vector<1x224xf32>
    %71 = arith.truncf %70 : vector<1x224xf32> to vector<1x224xbf16>
    %c1_65 = arith.constant 1 : index
    %c0_66 = arith.constant 0 : index
    %c0_67 = arith.constant 0 : index
    %72 = vector.load %arg9[%c1_65, %c0_66, %c0_67] : memref<7x224x64xbf16, #tpu.memory_space<vmem>>, vector<1x224x64xbf16>
    %73 = vector.shape_cast %72 : vector<1x224x64xbf16> to vector<224x64xbf16>
    %cst_68 = arith.constant dense<0.000000e+00> : vector<1x64xf32>
    %74 = tpu.matmul %71, %73, %cst_68 {dimension_numbers = #tpu.dot_dimension_numbers<[1], [0], [0], [1], [0, 0, 1, 1], [], []>} : vector<1x224xbf16>, vector<224x64xbf16>, vector<1x64xf32> -> vector<1x64xf32>
    %75 = arith.addf %67, %74 : vector<1x64xf32>
    %c2_69 = arith.constant 2 : index
    %c0_70 = arith.constant 0 : index
    %c0_71 = arith.constant 0 : index
    %76 = vector.load %arg8[%c2_69, %c0_70, %c0_71] : memref<7x1x7xbf16, #tpu.memory_space<vmem>>, vector<1x1x7xbf16>
    %77 = vector.shape_cast %76 : vector<1x1x7xbf16> to vector<1x7xbf16>
    %cst_72 = arith.constant dense<0.000000e+00> : vector<1x224xf32>
    %78 = tpu.matmul %77, %60, %cst_72 {dimension_numbers = #tpu.dot_dimension_numbers<[1], [0], [0], [1], [0, 0, 1, 1], [], []>} : vector<1x7xbf16>, vector<7x224xbf16>, vector<1x224xf32> -> vector<1x224xf32>
    %79 = arith.truncf %78 : vector<1x224xf32> to vector<1x224xbf16>
    %c2_73 = arith.constant 2 : index
    %c0_74 = arith.constant 0 : index
    %c0_75 = arith.constant 0 : index
    %80 = vector.load %arg9[%c2_73, %c0_74, %c0_75] : memref<7x224x64xbf16, #tpu.memory_space<vmem>>, vector<1x224x64xbf16>
    %81 = vector.shape_cast %80 : vector<1x224x64xbf16> to vector<224x64xbf16>
    %cst_76 = arith.constant dense<0.000000e+00> : vector<1x64xf32>
    %82 = tpu.matmul %79, %81, %cst_76 {dimension_numbers = #tpu.dot_dimension_numbers<[1], [0], [0], [1], [0, 0, 1, 1], [], []>} : vector<1x224xbf16>, vector<224x64xbf16>, vector<1x64xf32> -> vector<1x64xf32>
    %83 = arith.addf %75, %82 : vector<1x64xf32>
    %c3 = arith.constant 3 : index
    %c0_77 = arith.constant 0 : index
    %c0_78 = arith.constant 0 : index
    %84 = vector.load %arg8[%c3, %c0_77, %c0_78] : memref<7x1x7xbf16, #tpu.memory_space<vmem>>, vector<1x1x7xbf16>
    %85 = vector.shape_cast %84 : vector<1x1x7xbf16> to vector<1x7xbf16>
    %cst_79 = arith.constant dense<0.000000e+00> : vector<1x224xf32>
    %86 = tpu.matmul %85, %60, %cst_79 {dimension_numbers = #tpu.dot_dimension_numbers<[1], [0], [0], [1], [0, 0, 1, 1], [], []>} : vector<1x7xbf16>, vector<7x224xbf16>, vector<1x224xf32> -> vector<1x224xf32>
    %87 = arith.truncf %86 : vector<1x224xf32> to vector<1x224xbf16>
    %c3_80 = arith.constant 3 : index
    %c0_81 = arith.constant 0 : index
    %c0_82 = arith.constant 0 : index
    %88 = vector.load %arg9[%c3_80, %c0_81, %c0_82] : memref<7x224x64xbf16, #tpu.memory_space<vmem>>, vector<1x224x64xbf16>
    %89 = vector.shape_cast %88 : vector<1x224x64xbf16> to vector<224x64xbf16>
    %cst_83 = arith.constant dense<0.000000e+00> : vector<1x64xf32>
    %90 = tpu.matmul %87, %89, %cst_83 {dimension_numbers = #tpu.dot_dimension_numbers<[1], [0], [0], [1], [0, 0, 1, 1], [], []>} : vector<1x224xbf16>, vector<224x64xbf16>, vector<1x64xf32> -> vector<1x64xf32>
    %91 = arith.addf %83, %90 : vector<1x64xf32>
    %c4 = arith.constant 4 : index
    %c0_84 = arith.constant 0 : index
    %c0_85 = arith.constant 0 : index
    %92 = vector.load %arg8[%c4, %c0_84, %c0_85] : memref<7x1x7xbf16, #tpu.memory_space<vmem>>, vector<1x1x7xbf16>
    %93 = vector.shape_cast %92 : vector<1x1x7xbf16> to vector<1x7xbf16>
    %cst_86 = arith.constant dense<0.000000e+00> : vector<1x224xf32>
    %94 = tpu.matmul %93, %60, %cst_86 {dimension_numbers = #tpu.dot_dimension_numbers<[1], [0], [0], [1], [0, 0, 1, 1], [], []>} : vector<1x7xbf16>, vector<7x224xbf16>, vector<1x224xf32> -> vector<1x224xf32>
    %95 = arith.truncf %94 : vector<1x224xf32> to vector<1x224xbf16>
    %c4_87 = arith.constant 4 : index
    %c0_88 = arith.constant 0 : index
    %c0_89 = arith.constant 0 : index
    %96 = vector.load %arg9[%c4_87, %c0_88, %c0_89] : memref<7x224x64xbf16, #tpu.memory_space<vmem>>, vector<1x224x64xbf16>
    %97 = vector.shape_cast %96 : vector<1x224x64xbf16> to vector<224x64xbf16>
    %cst_90 = arith.constant dense<0.000000e+00> : vector<1x64xf32>
    %98 = tpu.matmul %95, %97, %cst_90 {dimension_numbers = #tpu.dot_dimension_numbers<[1], [0], [0], [1], [0, 0, 1, 1], [], []>} : vector<1x224xbf16>, vector<224x64xbf16>, vector<1x64xf32> -> vector<1x64xf32>
    %99 = arith.addf %91, %98 : vector<1x64xf32>
    %c5 = arith.constant 5 : index
    %c0_91 = arith.constant 0 : index
    %c0_92 = arith.constant 0 : index
    %100 = vector.load %arg8[%c5, %c0_91, %c0_92] : memref<7x1x7xbf16, #tpu.memory_space<vmem>>, vector<1x1x7xbf16>
    %101 = vector.shape_cast %100 : vector<1x1x7xbf16> to vector<1x7xbf16>
    %cst_93 = arith.constant dense<0.000000e+00> : vector<1x224xf32>
    %102 = tpu.matmul %101, %60, %cst_93 {dimension_numbers = #tpu.dot_dimension_numbers<[1], [0], [0], [1], [0, 0, 1, 1], [], []>} : vector<1x7xbf16>, vector<7x224xbf16>, vector<1x224xf32> -> vector<1x224xf32>
    %103 = arith.truncf %102 : vector<1x224xf32> to vector<1x224xbf16>
    %c5_94 = arith.constant 5 : index
    %c0_95 = arith.constant 0 : index
    %c0_96 = arith.constant 0 : index
    %104 = vector.load %arg9[%c5_94, %c0_95, %c0_96] : memref<7x224x64xbf16, #tpu.memory_space<vmem>>, vector<1x224x64xbf16>
    %105 = vector.shape_cast %104 : vector<1x224x64xbf16> to vector<224x64xbf16>
    %cst_97 = arith.constant dense<0.000000e+00> : vector<1x64xf32>
    %106 = tpu.matmul %103, %105, %cst_97 {dimension_numbers = #tpu.dot_dimension_numbers<[1], [0], [0], [1], [0, 0, 1, 1], [], []>} : vector<1x224xbf16>, vector<224x64xbf16>, vector<1x64xf32> -> vector<1x64xf32>
    %107 = arith.addf %99, %106 : vector<1x64xf32>
    %c6 = arith.constant 6 : index
    %c0_98 = arith.constant 0 : index
    %c0_99 = arith.constant 0 : index
    %108 = vector.load %arg8[%c6, %c0_98, %c0_99] : memref<7x1x7xbf16, #tpu.memory_space<vmem>>, vector<1x1x7xbf16>
    %109 = vector.shape_cast %108 : vector<1x1x7xbf16> to vector<1x7xbf16>
    %cst_100 = arith.constant dense<0.000000e+00> : vector<1x224xf32>
    %110 = tpu.matmul %109, %60, %cst_100 {dimension_numbers = #tpu.dot_dimension_numbers<[1], [0], [0], [1], [0, 0, 1, 1], [], []>} : vector<1x7xbf16>, vector<7x224xbf16>, vector<1x224xf32> -> vector<1x224xf32>
    %111 = arith.truncf %110 : vector<1x224xf32> to vector<1x224xbf16>
    %c6_101 = arith.constant 6 : index
    %c0_102 = arith.constant 0 : index
    %c0_103 = arith.constant 0 : index
    %112 = vector.load %arg9[%c6_101, %c0_102, %c0_103] : memref<7x224x64xbf16, #tpu.memory_space<vmem>>, vector<1x224x64xbf16>
    %113 = vector.shape_cast %112 : vector<1x224x64xbf16> to vector<224x64xbf16>
    %cst_104 = arith.constant dense<0.000000e+00> : vector<1x64xf32>
    %114 = tpu.matmul %111, %113, %cst_104 {dimension_numbers = #tpu.dot_dimension_numbers<[1], [0], [0], [1], [0, 0, 1, 1], [], []>} : vector<1x224xbf16>, vector<224x64xbf16>, vector<1x64xf32> -> vector<1x64xf32>
    %115 = arith.addf %107, %114 : vector<1x64xf32>
    %c0_105 = arith.constant 0 : index
    %c0_106 = arith.constant 0 : index
    %116 = vector.load %arg10[%c0_105, %c0_106] : memref<1x64xf32, #tpu.memory_space<vmem>>, vector<1x64xf32>
    %117 = arith.addf %115, %116 : vector<1x64xf32>
    %118 = arith.truncf %117 : vector<1x64xf32> to vector<1x64xbf16>
    %c0_107 = arith.constant 0 : index
    %c0_108 = arith.constant 0 : index
    %c0_109 = arith.constant 0 : index
    %119 = vector.load %arg12[%c0_107, %c0_108, %c0_109] : memref<7x64x224xbf16, #tpu.memory_space<vmem>>, vector<1x64x224xbf16>
    %120 = vector.shape_cast %119 : vector<1x64x224xbf16> to vector<64x224xbf16>
    %cst_110 = arith.constant dense<0.000000e+00> : vector<1x224xf32>
    %121 = tpu.matmul %118, %120, %cst_110 {dimension_numbers = #tpu.dot_dimension_numbers<[1], [0], [0], [1], [0, 0, 1, 1], [], []>} : vector<1x64xbf16>, vector<64x224xbf16>, vector<1x224xf32> -> vector<1x224xf32>
    %c0_111 = arith.constant 0 : index
    %c0_112 = arith.constant 0 : index
    %c0_113 = arith.constant 0 : index
    %122 = vector.load %arg11[%c0_111, %c0_112, %c0_113] : memref<7x7x1xbf16, #tpu.memory_space<vmem>>, vector<1x7x1xbf16>
    %123 = vector.shape_cast %122 : vector<1x7x1xbf16> to vector<7x1xbf16>
    %124 = arith.truncf %121 : vector<1x224xf32> to vector<1x224xbf16>
    %cst_114 = arith.constant dense<0.000000e+00> : vector<7x224xf32>
    %125 = tpu.matmul %123, %124, %cst_114 {dimension_numbers = #tpu.dot_dimension_numbers<[1], [0], [0], [1], [0, 0, 1, 1], [], []>} : vector<7x1xbf16>, vector<1x224xbf16>, vector<7x224xf32> -> vector<7x224xf32>
    %c1_115 = arith.constant 1 : index
    %c0_116 = arith.constant 0 : index
    %c0_117 = arith.constant 0 : index
    %126 = vector.load %arg12[%c1_115, %c0_116, %c0_117] : memref<7x64x224xbf16, #tpu.memory_space<vmem>>, vector<1x64x224xbf16>
    %127 = vector.shape_cast %126 : vector<1x64x224xbf16> to vector<64x224xbf16>
    %cst_118 = arith.constant dense<0.000000e+00> : vector<1x224xf32>
    %128 = tpu.matmul %118, %127, %cst_118 {dimension_numbers = #tpu.dot_dimension_numbers<[1], [0], [0], [1], [0, 0, 1, 1], [], []>} : vector<1x64xbf16>, vector<64x224xbf16>, vector<1x224xf32> -> vector<1x224xf32>
    %c1_119 = arith.constant 1 : index
    %c0_120 = arith.constant 0 : index
    %c0_121 = arith.constant 0 : index
    %129 = vector.load %arg11[%c1_119, %c0_120, %c0_121] : memref<7x7x1xbf16, #tpu.memory_space<vmem>>, vector<1x7x1xbf16>
    %130 = vector.shape_cast %129 : vector<1x7x1xbf16> to vector<7x1xbf16>
    %131 = arith.truncf %128 : vector<1x224xf32> to vector<1x224xbf16>
    %cst_122 = arith.constant dense<0.000000e+00> : vector<7x224xf32>
    %132 = tpu.matmul %130, %131, %cst_122 {dimension_numbers = #tpu.dot_dimension_numbers<[1], [0], [0], [1], [0, 0, 1, 1], [], []>} : vector<7x1xbf16>, vector<1x224xbf16>, vector<7x224xf32> -> vector<7x224xf32>
    %133 = arith.addf %125, %132 : vector<7x224xf32>
    %c2_123 = arith.constant 2 : index
    %c0_124 = arith.constant 0 : index
    %c0_125 = arith.constant 0 : index
    %134 = vector.load %arg12[%c2_123, %c0_124, %c0_125] : memref<7x64x224xbf16, #tpu.memory_space<vmem>>, vector<1x64x224xbf16>
    %135 = vector.shape_cast %134 : vector<1x64x224xbf16> to vector<64x224xbf16>
    %cst_126 = arith.constant dense<0.000000e+00> : vector<1x224xf32>
    %136 = tpu.matmul %118, %135, %cst_126 {dimension_numbers = #tpu.dot_dimension_numbers<[1], [0], [0], [1], [0, 0, 1, 1], [], []>} : vector<1x64xbf16>, vector<64x224xbf16>, vector<1x224xf32> -> vector<1x224xf32>
    %c2_127 = arith.constant 2 : index
    %c0_128 = arith.constant 0 : index
    %c0_129 = arith.constant 0 : index
    %137 = vector.load %arg11[%c2_127, %c0_128, %c0_129] : memref<7x7x1xbf16, #tpu.memory_space<vmem>>, vector<1x7x1xbf16>
    %138 = vector.shape_cast %137 : vector<1x7x1xbf16> to vector<7x1xbf16>
    %139 = arith.truncf %136 : vector<1x224xf32> to vector<1x224xbf16>
    %cst_130 = arith.constant dense<0.000000e+00> : vector<7x224xf32>
    %140 = tpu.matmul %138, %139, %cst_130 {dimension_numbers = #tpu.dot_dimension_numbers<[1], [0], [0], [1], [0, 0, 1, 1], [], []>} : vector<7x1xbf16>, vector<1x224xbf16>, vector<7x224xf32> -> vector<7x224xf32>
    %141 = arith.addf %133, %140 : vector<7x224xf32>
    %c3_131 = arith.constant 3 : index
    %c0_132 = arith.constant 0 : index
    %c0_133 = arith.constant 0 : index
    %142 = vector.load %arg12[%c3_131, %c0_132, %c0_133] : memref<7x64x224xbf16, #tpu.memory_space<vmem>>, vector<1x64x224xbf16>
    %143 = vector.shape_cast %142 : vector<1x64x224xbf16> to vector<64x224xbf16>
    %cst_134 = arith.constant dense<0.000000e+00> : vector<1x224xf32>
    %144 = tpu.matmul %118, %143, %cst_134 {dimension_numbers = #tpu.dot_dimension_numbers<[1], [0], [0], [1], [0, 0, 1, 1], [], []>} : vector<1x64xbf16>, vector<64x224xbf16>, vector<1x224xf32> -> vector<1x224xf32>
    %c3_135 = arith.constant 3 : index
    %c0_136 = arith.constant 0 : index
    %c0_137 = arith.constant 0 : index
    %145 = vector.load %arg11[%c3_135, %c0_136, %c0_137] : memref<7x7x1xbf16, #tpu.memory_space<vmem>>, vector<1x7x1xbf16>
    %146 = vector.shape_cast %145 : vector<1x7x1xbf16> to vector<7x1xbf16>
    %147 = arith.truncf %144 : vector<1x224xf32> to vector<1x224xbf16>
    %cst_138 = arith.constant dense<0.000000e+00> : vector<7x224xf32>
    %148 = tpu.matmul %146, %147, %cst_138 {dimension_numbers = #tpu.dot_dimension_numbers<[1], [0], [0], [1], [0, 0, 1, 1], [], []>} : vector<7x1xbf16>, vector<1x224xbf16>, vector<7x224xf32> -> vector<7x224xf32>
    %149 = arith.addf %141, %148 : vector<7x224xf32>
    %c4_139 = arith.constant 4 : index
    %c0_140 = arith.constant 0 : index
    %c0_141 = arith.constant 0 : index
    %150 = vector.load %arg12[%c4_139, %c0_140, %c0_141] : memref<7x64x224xbf16, #tpu.memory_space<vmem>>, vector<1x64x224xbf16>
    %151 = vector.shape_cast %150 : vector<1x64x224xbf16> to vector<64x224xbf16>
    %cst_142 = arith.constant dense<0.000000e+00> : vector<1x224xf32>
    %152 = tpu.matmul %118, %151, %cst_142 {dimension_numbers = #tpu.dot_dimension_numbers<[1], [0], [0], [1], [0, 0, 1, 1], [], []>} : vector<1x64xbf16>, vector<64x224xbf16>, vector<1x224xf32> -> vector<1x224xf32>
    %c4_143 = arith.constant 4 : index
    %c0_144 = arith.constant 0 : index
    %c0_145 = arith.constant 0 : index
    %153 = vector.load %arg11[%c4_143, %c0_144, %c0_145] : memref<7x7x1xbf16, #tpu.memory_space<vmem>>, vector<1x7x1xbf16>
    %154 = vector.shape_cast %153 : vector<1x7x1xbf16> to vector<7x1xbf16>
    %155 = arith.truncf %152 : vector<1x224xf32> to vector<1x224xbf16>
    %cst_146 = arith.constant dense<0.000000e+00> : vector<7x224xf32>
    %156 = tpu.matmul %154, %155, %cst_146 {dimension_numbers = #tpu.dot_dimension_numbers<[1], [0], [0], [1], [0, 0, 1, 1], [], []>} : vector<7x1xbf16>, vector<1x224xbf16>, vector<7x224xf32> -> vector<7x224xf32>
    %157 = arith.addf %149, %156 : vector<7x224xf32>
    %c5_147 = arith.constant 5 : index
    %c0_148 = arith.constant 0 : index
    %c0_149 = arith.constant 0 : index
    %158 = vector.load %arg12[%c5_147, %c0_148, %c0_149] : memref<7x64x224xbf16, #tpu.memory_space<vmem>>, vector<1x64x224xbf16>
    %159 = vector.shape_cast %158 : vector<1x64x224xbf16> to vector<64x224xbf16>
    %cst_150 = arith.constant dense<0.000000e+00> : vector<1x224xf32>
    %160 = tpu.matmul %118, %159, %cst_150 {dimension_numbers = #tpu.dot_dimension_numbers<[1], [0], [0], [1], [0, 0, 1, 1], [], []>} : vector<1x64xbf16>, vector<64x224xbf16>, vector<1x224xf32> -> vector<1x224xf32>
    %c5_151 = arith.constant 5 : index
    %c0_152 = arith.constant 0 : index
    %c0_153 = arith.constant 0 : index
    %161 = vector.load %arg11[%c5_151, %c0_152, %c0_153] : memref<7x7x1xbf16, #tpu.memory_space<vmem>>, vector<1x7x1xbf16>
    %162 = vector.shape_cast %161 : vector<1x7x1xbf16> to vector<7x1xbf16>
    %163 = arith.truncf %160 : vector<1x224xf32> to vector<1x224xbf16>
    %cst_154 = arith.constant dense<0.000000e+00> : vector<7x224xf32>
    %164 = tpu.matmul %162, %163, %cst_154 {dimension_numbers = #tpu.dot_dimension_numbers<[1], [0], [0], [1], [0, 0, 1, 1], [], []>} : vector<7x1xbf16>, vector<1x224xbf16>, vector<7x224xf32> -> vector<7x224xf32>
    %165 = arith.addf %157, %164 : vector<7x224xf32>
    %c6_155 = arith.constant 6 : index
    %c0_156 = arith.constant 0 : index
    %c0_157 = arith.constant 0 : index
    %166 = vector.load %arg12[%c6_155, %c0_156, %c0_157] : memref<7x64x224xbf16, #tpu.memory_space<vmem>>, vector<1x64x224xbf16>
    %167 = vector.shape_cast %166 : vector<1x64x224xbf16> to vector<64x224xbf16>
    %cst_158 = arith.constant dense<0.000000e+00> : vector<1x224xf32>
    %168 = tpu.matmul %118, %167, %cst_158 {dimension_numbers = #tpu.dot_dimension_numbers<[1], [0], [0], [1], [0, 0, 1, 1], [], []>} : vector<1x64xbf16>, vector<64x224xbf16>, vector<1x224xf32> -> vector<1x224xf32>
    %c6_159 = arith.constant 6 : index
    %c0_160 = arith.constant 0 : index
    %c0_161 = arith.constant 0 : index
    %169 = vector.load %arg11[%c6_159, %c0_160, %c0_161] : memref<7x7x1xbf16, #tpu.memory_space<vmem>>, vector<1x7x1xbf16>
    %170 = vector.shape_cast %169 : vector<1x7x1xbf16> to vector<7x1xbf16>
    %171 = arith.truncf %168 : vector<1x224xf32> to vector<1x224xbf16>
    %cst_162 = arith.constant dense<0.000000e+00> : vector<7x224xf32>
    %172 = tpu.matmul %170, %171, %cst_162 {dimension_numbers = #tpu.dot_dimension_numbers<[1], [0], [0], [1], [0, 0, 1, 1], [], []>} : vector<7x1xbf16>, vector<1x224xbf16>, vector<7x224xf32> -> vector<7x224xf32>
    %173 = arith.addf %165, %172 : vector<7x224xf32>
    %c0_163 = arith.constant 0 : index
    %c0_164 = arith.constant 0 : index
    %174 = vector.load %arg13[%c0_163, %c0_164] : memref<1x224xf32, #tpu.memory_space<vmem>>, vector<1x224xf32>
    %175 = vector.broadcast %174 : vector<1x224xf32> to vector<7x224xf32>
    %176 = arith.addf %173, %175 : vector<7x224xf32>
    %cst_165 = arith.constant 0.000000e+00 : f32
    %177 = vector.broadcast %cst_165 : f32 to vector<7x224xf32>
    %178 = arith.maximumf %176, %177 : vector<7x224xf32>
    %179 = arith.truncf %178 : vector<7x224xf32> to vector<7x224xbf16>
    %c0_166 = arith.constant 0 : index
    %c0_167 = arith.constant 0 : index
    %c0_168 = arith.constant 0 : index
    %180 = vector.load %arg15[%c0_166, %c0_167, %c0_168] : memref<3x224x224xbf16, #tpu.memory_space<vmem>>, vector<1x224x224xbf16>
    %181 = vector.shape_cast %180 : vector<1x224x224xbf16> to vector<224x224xbf16>
    %cst_169 = arith.constant dense<0.000000e+00> : vector<7x224xf32>
    %182 = tpu.matmul %179, %181, %cst_169 {dimension_numbers = #tpu.dot_dimension_numbers<[1], [0], [0], [1], [0, 0, 1, 1], [], []>} : vector<7x224xbf16>, vector<224x224xbf16>, vector<7x224xf32> -> vector<7x224xf32>
    %c0_170 = arith.constant 0 : index
    %c0_171 = arith.constant 0 : index
    %c0_172 = arith.constant 0 : index
    %183 = vector.load %arg14[%c0_170, %c0_171, %c0_172] : memref<3x14x7xbf16, #tpu.memory_space<vmem>>, vector<1x14x7xbf16>
    %184 = vector.shape_cast %183 : vector<1x14x7xbf16> to vector<14x7xbf16>
    %185 = arith.truncf %182 : vector<7x224xf32> to vector<7x224xbf16>
    %cst_173 = arith.constant dense<0.000000e+00> : vector<14x224xf32>
    %186 = tpu.matmul %184, %185, %cst_173 {dimension_numbers = #tpu.dot_dimension_numbers<[1], [0], [0], [1], [0, 0, 1, 1], [], []>} : vector<14x7xbf16>, vector<7x224xbf16>, vector<14x224xf32> -> vector<14x224xf32>
    %c1_174 = arith.constant 1 : index
    %c0_175 = arith.constant 0 : index
    %c0_176 = arith.constant 0 : index
    %187 = vector.load %arg15[%c1_174, %c0_175, %c0_176] : memref<3x224x224xbf16, #tpu.memory_space<vmem>>, vector<1x224x224xbf16>
    %188 = vector.shape_cast %187 : vector<1x224x224xbf16> to vector<224x224xbf16>
    %cst_177 = arith.constant dense<0.000000e+00> : vector<7x224xf32>
    %189 = tpu.matmul %179, %188, %cst_177 {dimension_numbers = #tpu.dot_dimension_numbers<[1], [0], [0], [1], [0, 0, 1, 1], [], []>} : vector<7x224xbf16>, vector<224x224xbf16>, vector<7x224xf32> -> vector<7x224xf32>
    %c1_178 = arith.constant 1 : index
    %c0_179 = arith.constant 0 : index
    %c0_180 = arith.constant 0 : index
    %190 = vector.load %arg14[%c1_178, %c0_179, %c0_180] : memref<3x14x7xbf16, #tpu.memory_space<vmem>>, vector<1x14x7xbf16>
    %191 = vector.shape_cast %190 : vector<1x14x7xbf16> to vector<14x7xbf16>
    %192 = arith.truncf %189 : vector<7x224xf32> to vector<7x224xbf16>
    %cst_181 = arith.constant dense<0.000000e+00> : vector<14x224xf32>
    %193 = tpu.matmul %191, %192, %cst_181 {dimension_numbers = #tpu.dot_dimension_numbers<[1], [0], [0], [1], [0, 0, 1, 1], [], []>} : vector<14x7xbf16>, vector<7x224xbf16>, vector<14x224xf32> -> vector<14x224xf32>
    %194 = arith.addf %186, %193 : vector<14x224xf32>
    %c2_182 = arith.constant 2 : index
    %c0_183 = arith.constant 0 : index
    %c0_184 = arith.constant 0 : index
    %195 = vector.load %arg15[%c2_182, %c0_183, %c0_184] : memref<3x224x224xbf16, #tpu.memory_space<vmem>>, vector<1x224x224xbf16>
    %196 = vector.shape_cast %195 : vector<1x224x224xbf16> to vector<224x224xbf16>
    %cst_185 = arith.constant dense<0.000000e+00> : vector<7x224xf32>
    %197 = tpu.matmul %179, %196, %cst_185 {dimension_numbers = #tpu.dot_dimension_numbers<[1], [0], [0], [1], [0, 0, 1, 1], [], []>} : vector<7x224xbf16>, vector<224x224xbf16>, vector<7x224xf32> -> vector<7x224xf32>
    %c2_186 = arith.constant 2 : index
    %c0_187 = arith.constant 0 : index
    %c0_188 = arith.constant 0 : index
    %198 = vector.load %arg14[%c2_186, %c0_187, %c0_188] : memref<3x14x7xbf16, #tpu.memory_space<vmem>>, vector<1x14x7xbf16>
    %199 = vector.shape_cast %198 : vector<1x14x7xbf16> to vector<14x7xbf16>
    %200 = arith.truncf %197 : vector<7x224xf32> to vector<7x224xbf16>
    %cst_189 = arith.constant dense<0.000000e+00> : vector<14x224xf32>
    %201 = tpu.matmul %199, %200, %cst_189 {dimension_numbers = #tpu.dot_dimension_numbers<[1], [0], [0], [1], [0, 0, 1, 1], [], []>} : vector<14x7xbf16>, vector<7x224xbf16>, vector<14x224xf32> -> vector<14x224xf32>
    %202 = arith.addf %194, %201 : vector<14x224xf32>
    %c0_190 = arith.constant 0 : index
    %c0_191 = arith.constant 0 : index
    %203 = vector.load %arg16[%c0_190, %c0_191] : memref<1x224xf32, #tpu.memory_space<vmem>>, vector<1x224xf32>
    %204 = vector.broadcast %203 : vector<1x224xf32> to vector<14x224xf32>
    %205 = arith.addf %202, %204 : vector<14x224xf32>
    %cst_192 = arith.constant 0.000000e+00 : f32
    %206 = vector.broadcast %cst_192 : f32 to vector<14x224xf32>
    %207 = arith.maximumf %205, %206 : vector<14x224xf32>
    %208 = arith.truncf %207 : vector<14x224xf32> to vector<14x224xbf16>
    %c0_193 = arith.constant 0 : index
    %c0_194 = arith.constant 0 : index
    %c0_195 = arith.constant 0 : index
    %209 = vector.load %arg18[%c0_193, %c0_194, %c0_195] : memref<3x224x28xbf16, #tpu.memory_space<vmem>>, vector<1x224x28xbf16>
    %210 = vector.shape_cast %209 : vector<1x224x28xbf16> to vector<224x28xbf16>
    %cst_196 = arith.constant dense<0.000000e+00> : vector<14x28xf32>
    %211 = tpu.matmul %208, %210, %cst_196 {dimension_numbers = #tpu.dot_dimension_numbers<[1], [0], [0], [1], [0, 0, 1, 1], [], []>} : vector<14x224xbf16>, vector<224x28xbf16>, vector<14x28xf32> -> vector<14x28xf32>
    %c0_197 = arith.constant 0 : index
    %c0_198 = arith.constant 0 : index
    %c0_199 = arith.constant 0 : index
    %212 = vector.load %arg17[%c0_197, %c0_198, %c0_199] : memref<3x28x14xbf16, #tpu.memory_space<vmem>>, vector<1x28x14xbf16>
    %213 = vector.shape_cast %212 : vector<1x28x14xbf16> to vector<28x14xbf16>
    %214 = arith.truncf %211 : vector<14x28xf32> to vector<14x28xbf16>
    %cst_200 = arith.constant dense<0.000000e+00> : vector<28x28xf32>
    %215 = tpu.matmul %213, %214, %cst_200 {dimension_numbers = #tpu.dot_dimension_numbers<[1], [0], [0], [1], [0, 0, 1, 1], [], []>} : vector<28x14xbf16>, vector<14x28xbf16>, vector<28x28xf32> -> vector<28x28xf32>
    %c1_201 = arith.constant 1 : index
    %c0_202 = arith.constant 0 : index
    %c0_203 = arith.constant 0 : index
    %216 = vector.load %arg18[%c1_201, %c0_202, %c0_203] : memref<3x224x28xbf16, #tpu.memory_space<vmem>>, vector<1x224x28xbf16>
    %217 = vector.shape_cast %216 : vector<1x224x28xbf16> to vector<224x28xbf16>
    %cst_204 = arith.constant dense<0.000000e+00> : vector<14x28xf32>
    %218 = tpu.matmul %208, %217, %cst_204 {dimension_numbers = #tpu.dot_dimension_numbers<[1], [0], [0], [1], [0, 0, 1, 1], [], []>} : vector<14x224xbf16>, vector<224x28xbf16>, vector<14x28xf32> -> vector<14x28xf32>
    %c1_205 = arith.constant 1 : index
    %c0_206 = arith.constant 0 : index
    %c0_207 = arith.constant 0 : index
    %219 = vector.load %arg17[%c1_205, %c0_206, %c0_207] : memref<3x28x14xbf16, #tpu.memory_space<vmem>>, vector<1x28x14xbf16>
    %220 = vector.shape_cast %219 : vector<1x28x14xbf16> to vector<28x14xbf16>
    %221 = arith.truncf %218 : vector<14x28xf32> to vector<14x28xbf16>
    %cst_208 = arith.constant dense<0.000000e+00> : vector<28x28xf32>
    %222 = tpu.matmul %220, %221, %cst_208 {dimension_numbers = #tpu.dot_dimension_numbers<[1], [0], [0], [1], [0, 0, 1, 1], [], []>} : vector<28x14xbf16>, vector<14x28xbf16>, vector<28x28xf32> -> vector<28x28xf32>
    %223 = arith.addf %215, %222 : vector<28x28xf32>
    %c2_209 = arith.constant 2 : index
    %c0_210 = arith.constant 0 : index
    %c0_211 = arith.constant 0 : index
    %224 = vector.load %arg18[%c2_209, %c0_210, %c0_211] : memref<3x224x28xbf16, #tpu.memory_space<vmem>>, vector<1x224x28xbf16>
    %225 = vector.shape_cast %224 : vector<1x224x28xbf16> to vector<224x28xbf16>
    %cst_212 = arith.constant dense<0.000000e+00> : vector<14x28xf32>
    %226 = tpu.matmul %208, %225, %cst_212 {dimension_numbers = #tpu.dot_dimension_numbers<[1], [0], [0], [1], [0, 0, 1, 1], [], []>} : vector<14x224xbf16>, vector<224x28xbf16>, vector<14x28xf32> -> vector<14x28xf32>
    %c2_213 = arith.constant 2 : index
    %c0_214 = arith.constant 0 : index
    %c0_215 = arith.constant 0 : index
    %227 = vector.load %arg17[%c2_213, %c0_214, %c0_215] : memref<3x28x14xbf16, #tpu.memory_space<vmem>>, vector<1x28x14xbf16>
    %228 = vector.shape_cast %227 : vector<1x28x14xbf16> to vector<28x14xbf16>
    %229 = arith.truncf %226 : vector<14x28xf32> to vector<14x28xbf16>
    %cst_216 = arith.constant dense<0.000000e+00> : vector<28x28xf32>
    %230 = tpu.matmul %228, %229, %cst_216 {dimension_numbers = #tpu.dot_dimension_numbers<[1], [0], [0], [1], [0, 0, 1, 1], [], []>} : vector<28x14xbf16>, vector<14x28xbf16>, vector<28x28xf32> -> vector<28x28xf32>
    %231 = arith.addf %223, %230 : vector<28x28xf32>
    %c0_217 = arith.constant 0 : index
    %c0_218 = arith.constant 0 : index
    %232 = vector.load %arg19[%c0_217, %c0_218] : memref<1x28xf32, #tpu.memory_space<vmem>>, vector<1x28xf32>
    %233 = vector.broadcast %232 : vector<1x28xf32> to vector<28x28xf32>
    %234 = arith.addf %231, %233 : vector<28x28xf32>
    %cst_219 = arith.constant 0.000000e+00 : f32
    %235 = vector.broadcast %cst_219 : f32 to vector<28x28xf32>
    %236 = arith.subf %235, %234 : vector<28x28xf32>
    %237 = math.exp %236 : vector<28x28xf32>
    %cst_220 = arith.constant 1.000000e+00 : f32
    %238 = vector.broadcast %cst_220 : f32 to vector<28x28xf32>
    %239 = arith.addf %238, %237 : vector<28x28xf32>
    %240 = tpu.reciprocal %239 : vector<28x28xf32> -> vector<28x28xf32>
    %c0_221 = arith.constant 0 : index
    %c0_222 = arith.constant 0 : index
    %c0_223 = arith.constant 0 : index
    %241 = vector.load %arg20[%c0_221, %c0_222, %c0_223] : memref<2x28x28xf32, #tpu.memory_space<vmem>>, vector<1x28x28xf32>
    %242 = vector.shape_cast %241 : vector<1x28x28xf32> to vector<28x28xf32>
    %243 = vector.shape_cast %240 : vector<28x28xf32> to vector<1x28x28xf32>
    tpu.vector_store %arg20[%c0_221, %c0_222, %c0_223], %243 {strides = array<i32>} : memref<2x28x28xf32, #tpu.memory_space<vmem>>, vector<1x28x28xf32>,
    %c1_224 = arith.constant 1 : index
    %c0_225 = arith.constant 0 : index
    %c0_226 = arith.constant 0 : index
    %244 = vector.load %arg1[%c1_224, %c0_225, %c0_226] : memref<2x28x28xf32, #tpu.memory_space<vmem>>, vector<1x28x28xf32>
    %245 = vector.shape_cast %244 : vector<1x28x28xf32> to vector<28x28xf32>
    %246 = arith.truncf %245 : vector<28x28xf32> to vector<28x28xbf16>
    %c0_227 = arith.constant 0 : index
    %c0_228 = arith.constant 0 : index
    %c0_229 = arith.constant 0 : index
    %247 = vector.load %arg2[%c0_227, %c0_228, %c0_229] : memref<3x14x28xbf16, #tpu.memory_space<vmem>>, vector<1x14x28xbf16>
    %248 = vector.shape_cast %247 : vector<1x14x28xbf16> to vector<14x28xbf16>
    %cst_230 = arith.constant dense<0.000000e+00> : vector<14x28xf32>
    %249 = tpu.matmul %248, %246, %cst_230 {dimension_numbers = #tpu.dot_dimension_numbers<[1], [0], [0], [1], [0, 0, 1, 1], [], []>} : vector<14x28xbf16>, vector<28x28xbf16>, vector<14x28xf32> -> vector<14x28xf32>
    %250 = arith.truncf %249 : vector<14x28xf32> to vector<14x28xbf16>
    %c0_231 = arith.constant 0 : index
    %c0_232 = arith.constant 0 : index
    %c0_233 = arith.constant 0 : index
    %251 = vector.load %arg3[%c0_231, %c0_232, %c0_233] : memref<3x28x224xbf16, #tpu.memory_space<vmem>>, vector<1x28x224xbf16>
    %252 = vector.shape_cast %251 : vector<1x28x224xbf16> to vector<28x224xbf16>
    %cst_234 = arith.constant dense<0.000000e+00> : vector<14x224xf32>
    %253 = tpu.matmul %250, %252, %cst_234 {dimension_numbers = #tpu.dot_dimension_numbers<[1], [0], [0], [1], [0, 0, 1, 1], [], []>} : vector<14x28xbf16>, vector<28x224xbf16>, vector<14x224xf32> -> vector<14x224xf32>
    %c1_235 = arith.constant 1 : index
    %c0_236 = arith.constant 0 : index
    %c0_237 = arith.constant 0 : index
    %254 = vector.load %arg2[%c1_235, %c0_236, %c0_237] : memref<3x14x28xbf16, #tpu.memory_space<vmem>>, vector<1x14x28xbf16>
    %255 = vector.shape_cast %254 : vector<1x14x28xbf16> to vector<14x28xbf16>
    %cst_238 = arith.constant dense<0.000000e+00> : vector<14x28xf32>
    %256 = tpu.matmul %255, %246, %cst_238 {dimension_numbers = #tpu.dot_dimension_numbers<[1], [0], [0], [1], [0, 0, 1, 1], [], []>} : vector<14x28xbf16>, vector<28x28xbf16>, vector<14x28xf32> -> vector<14x28xf32>
    %257 = arith.truncf %256 : vector<14x28xf32> to vector<14x28xbf16>
    %c1_239 = arith.constant 1 : index
    %c0_240 = arith.constant 0 : index
    %c0_241 = arith.constant 0 : index
    %258 = vector.load %arg3[%c1_239, %c0_240, %c0_241] : memref<3x28x224xbf16, #tpu.memory_space<vmem>>, vector<1x28x224xbf16>
    %259 = vector.shape_cast %258 : vector<1x28x224xbf16> to vector<28x224xbf16>
    %cst_242 = arith.constant dense<0.000000e+00> : vector<14x224xf32>
    %260 = tpu.matmul %257, %259, %cst_242 {dimension_numbers = #tpu.dot_dimension_numbers<[1], [0], [0], [1], [0, 0, 1, 1], [], []>} : vector<14x28xbf16>, vector<28x224xbf16>, vector<14x224xf32> -> vector<14x224xf32>
    %261 = arith.addf %253, %260 : vector<14x224xf32>
    %c2_243 = arith.constant 2 : index
    %c0_244 = arith.constant 0 : index
    %c0_245 = arith.constant 0 : index
    %262 = vector.load %arg2[%c2_243, %c0_244, %c0_245] : memref<3x14x28xbf16, #tpu.memory_space<vmem>>, vector<1x14x28xbf16>
    %263 = vector.shape_cast %262 : vector<1x14x28xbf16> to vector<14x28xbf16>
    %cst_246 = arith.constant dense<0.000000e+00> : vector<14x28xf32>
    %264 = tpu.matmul %263, %246, %cst_246 {dimension_numbers = #tpu.dot_dimension_numbers<[1], [0], [0], [1], [0, 0, 1, 1], [], []>} : vector<14x28xbf16>, vector<28x28xbf16>, vector<14x28xf32> -> vector<14x28xf32>
    %265 = arith.truncf %264 : vector<14x28xf32> to vector<14x28xbf16>
    %c2_247 = arith.constant 2 : index
    %c0_248 = arith.constant 0 : index
    %c0_249 = arith.constant 0 : index
    %266 = vector.load %arg3[%c2_247, %c0_248, %c0_249] : memref<3x28x224xbf16, #tpu.memory_space<vmem>>, vector<1x28x224xbf16>
    %267 = vector.shape_cast %266 : vector<1x28x224xbf16> to vector<28x224xbf16>
    %cst_250 = arith.constant dense<0.000000e+00> : vector<14x224xf32>
    %268 = tpu.matmul %265, %267, %cst_250 {dimension_numbers = #tpu.dot_dimension_numbers<[1], [0], [0], [1], [0, 0, 1, 1], [], []>} : vector<14x28xbf16>, vector<28x224xbf16>, vector<14x224xf32> -> vector<14x224xf32>
    %269 = arith.addf %261, %268 : vector<14x224xf32>
    %c0_251 = arith.constant 0 : index
    %c0_252 = arith.constant 0 : index
    %270 = vector.load %arg4[%c0_251, %c0_252] : memref<1x224xf32, #tpu.memory_space<vmem>>, vector<1x224xf32>
    %271 = vector.broadcast %270 : vector<1x224xf32> to vector<14x224xf32>
    %272 = arith.addf %269, %271 : vector<14x224xf32>
    %cst_253 = arith.constant 0.000000e+00 : f32
    %273 = vector.broadcast %cst_253 : f32 to vector<14x224xf32>
    %274 = arith.maximumf %272, %273 : vector<14x224xf32>
    %275 = arith.truncf %274 : vector<14x224xf32> to vector<14x224xbf16>
    %c0_254 = arith.constant 0 : index
    %c0_255 = arith.constant 0 : index
    %c0_256 = arith.constant 0 : index
    %276 = vector.load %arg5[%c0_254, %c0_255, %c0_256] : memref<3x7x14xbf16, #tpu.memory_space<vmem>>, vector<1x7x14xbf16>
    %277 = vector.shape_cast %276 : vector<1x7x14xbf16> to vector<7x14xbf16>
    %cst_257 = arith.constant dense<0.000000e+00> : vector<7x224xf32>
    %278 = tpu.matmul %277, %275, %cst_257 {dimension_numbers = #tpu.dot_dimension_numbers<[1], [0], [0], [1], [0, 0, 1, 1], [], []>} : vector<7x14xbf16>, vector<14x224xbf16>, vector<7x224xf32> -> vector<7x224xf32>
    %279 = arith.truncf %278 : vector<7x224xf32> to vector<7x224xbf16>
    %c0_258 = arith.constant 0 : index
    %c0_259 = arith.constant 0 : index
    %c0_260 = arith.constant 0 : index
    %280 = vector.load %arg6[%c0_258, %c0_259, %c0_260] : memref<3x224x224xbf16, #tpu.memory_space<vmem>>, vector<1x224x224xbf16>
    %281 = vector.shape_cast %280 : vector<1x224x224xbf16> to vector<224x224xbf16>
    %cst_261 = arith.constant dense<0.000000e+00> : vector<7x224xf32>
    %282 = tpu.matmul %279, %281, %cst_261 {dimension_numbers = #tpu.dot_dimension_numbers<[1], [0], [0], [1], [0, 0, 1, 1], [], []>} : vector<7x224xbf16>, vector<224x224xbf16>, vector<7x224xf32> -> vector<7x224xf32>
    %c1_262 = arith.constant 1 : index
    %c0_263 = arith.constant 0 : index
    %c0_264 = arith.constant 0 : index
    %283 = vector.load %arg5[%c1_262, %c0_263, %c0_264] : memref<3x7x14xbf16, #tpu.memory_space<vmem>>, vector<1x7x14xbf16>
    %284 = vector.shape_cast %283 : vector<1x7x14xbf16> to vector<7x14xbf16>
    %cst_265 = arith.constant dense<0.000000e+00> : vector<7x224xf32>
    %285 = tpu.matmul %284, %275, %cst_265 {dimension_numbers = #tpu.dot_dimension_numbers<[1], [0], [0], [1], [0, 0, 1, 1], [], []>} : vector<7x14xbf16>, vector<14x224xbf16>, vector<7x224xf32> -> vector<7x224xf32>
    %286 = arith.truncf %285 : vector<7x224xf32> to vector<7x224xbf16>
    %c1_266 = arith.constant 1 : index
    %c0_267 = arith.constant 0 : index
    %c0_268 = arith.constant 0 : index
    %287 = vector.load %arg6[%c1_266, %c0_267, %c0_268] : memref<3x224x224xbf16, #tpu.memory_space<vmem>>, vector<1x224x224xbf16>
    %288 = vector.shape_cast %287 : vector<1x224x224xbf16> to vector<224x224xbf16>
    %cst_269 = arith.constant dense<0.000000e+00> : vector<7x224xf32>
    %289 = tpu.matmul %286, %288, %cst_269 {dimension_numbers = #tpu.dot_dimension_numbers<[1], [0], [0], [1], [0, 0, 1, 1], [], []>} : vector<7x224xbf16>, vector<224x224xbf16>, vector<7x224xf32> -> vector<7x224xf32>
    %290 = arith.addf %282, %289 : vector<7x224xf32>
    %c2_270 = arith.constant 2 : index
    %c0_271 = arith.constant 0 : index
    %c0_272 = arith.constant 0 : index
    %291 = vector.load %arg5[%c2_270, %c0_271, %c0_272] : memref<3x7x14xbf16, #tpu.memory_space<vmem>>, vector<1x7x14xbf16>
    %292 = vector.shape_cast %291 : vector<1x7x14xbf16> to vector<7x14xbf16>
    %cst_273 = arith.constant dense<0.000000e+00> : vector<7x224xf32>
    %293 = tpu.matmul %292, %275, %cst_273 {dimension_numbers = #tpu.dot_dimension_numbers<[1], [0], [0], [1], [0, 0, 1, 1], [], []>} : vector<7x14xbf16>, vector<14x224xbf16>, vector<7x224xf32> -> vector<7x224xf32>
    %294 = arith.truncf %293 : vector<7x224xf32> to vector<7x224xbf16>
    %c2_274 = arith.constant 2 : index
    %c0_275 = arith.constant 0 : index
    %c0_276 = arith.constant 0 : index
    %295 = vector.load %arg6[%c2_274, %c0_275, %c0_276] : memref<3x224x224xbf16, #tpu.memory_space<vmem>>, vector<1x224x224xbf16>
    %296 = vector.shape_cast %295 : vector<1x224x224xbf16> to vector<224x224xbf16>
    %cst_277 = arith.constant dense<0.000000e+00> : vector<7x224xf32>
    %297 = tpu.matmul %294, %296, %cst_277 {dimension_numbers = #tpu.dot_dimension_numbers<[1], [0], [0], [1], [0, 0, 1, 1], [], []>} : vector<7x224xbf16>, vector<224x224xbf16>, vector<7x224xf32> -> vector<7x224xf32>
    %298 = arith.addf %290, %297 : vector<7x224xf32>
    %c0_278 = arith.constant 0 : index
    %c0_279 = arith.constant 0 : index
    %299 = vector.load %arg7[%c0_278, %c0_279] : memref<1x224xf32, #tpu.memory_space<vmem>>, vector<1x224xf32>
    %300 = vector.broadcast %299 : vector<1x224xf32> to vector<7x224xf32>
    %301 = arith.addf %298, %300 : vector<7x224xf32>
    %cst_280 = arith.constant 0.000000e+00 : f32
    %302 = vector.broadcast %cst_280 : f32 to vector<7x224xf32>
    %303 = arith.maximumf %301, %302 : vector<7x224xf32>
    %304 = arith.truncf %303 : vector<7x224xf32> to vector<7x224xbf16>
    %c0_281 = arith.constant 0 : index
    %c0_282 = arith.constant 0 : index
    %c0_283 = arith.constant 0 : index
    %305 = vector.load %arg8[%c0_281, %c0_282, %c0_283] : memref<7x1x7xbf16, #tpu.memory_space<vmem>>, vector<1x1x7xbf16>
    %306 = vector.shape_cast %305 : vector<1x1x7xbf16> to vector<1x7xbf16>
    %cst_284 = arith.constant dense<0.000000e+00> : vector<1x224xf32>
    %307 = tpu.matmul %306, %304, %cst_284 {dimension_numbers = #tpu.dot_dimension_numbers<[1], [0], [0], [1], [0, 0, 1, 1], [], []>} : vector<1x7xbf16>, vector<7x224xbf16>, vector<1x224xf32> -> vector<1x224xf32>
    %308 = arith.truncf %307 : vector<1x224xf32> to vector<1x224xbf16>
    %c0_285 = arith.constant 0 : index
    %c0_286 = arith.constant 0 : index
    %c0_287 = arith.constant 0 : index
    %309 = vector.load %arg9[%c0_285, %c0_286, %c0_287] : memref<7x224x64xbf16, #tpu.memory_space<vmem>>, vector<1x224x64xbf16>
    %310 = vector.shape_cast %309 : vector<1x224x64xbf16> to vector<224x64xbf16>
    %cst_288 = arith.constant dense<0.000000e+00> : vector<1x64xf32>
    %311 = tpu.matmul %308, %310, %cst_288 {dimension_numbers = #tpu.dot_dimension_numbers<[1], [0], [0], [1], [0, 0, 1, 1], [], []>} : vector<1x224xbf16>, vector<224x64xbf16>, vector<1x64xf32> -> vector<1x64xf32>
    %c1_289 = arith.constant 1 : index
    %c0_290 = arith.constant 0 : index
    %c0_291 = arith.constant 0 : index
    %312 = vector.load %arg8[%c1_289, %c0_290, %c0_291] : memref<7x1x7xbf16, #tpu.memory_space<vmem>>, vector<1x1x7xbf16>
    %313 = vector.shape_cast %312 : vector<1x1x7xbf16> to vector<1x7xbf16>
    %cst_292 = arith.constant dense<0.000000e+00> : vector<1x224xf32>
    %314 = tpu.matmul %313, %304, %cst_292 {dimension_numbers = #tpu.dot_dimension_numbers<[1], [0], [0], [1], [0, 0, 1, 1], [], []>} : vector<1x7xbf16>, vector<7x224xbf16>, vector<1x224xf32> -> vector<1x224xf32>
    %315 = arith.truncf %314 : vector<1x224xf32> to vector<1x224xbf16>
    %c1_293 = arith.constant 1 : index
    %c0_294 = arith.constant 0 : index
    %c0_295 = arith.constant 0 : index
    %316 = vector.load %arg9[%c1_293, %c0_294, %c0_295] : memref<7x224x64xbf16, #tpu.memory_space<vmem>>, vector<1x224x64xbf16>
    %317 = vector.shape_cast %316 : vector<1x224x64xbf16> to vector<224x64xbf16>
    %cst_296 = arith.constant dense<0.000000e+00> : vector<1x64xf32>
    %318 = tpu.matmul %315, %317, %cst_296 {dimension_numbers = #tpu.dot_dimension_numbers<[1], [0], [0], [1], [0, 0, 1, 1], [], []>} : vector<1x224xbf16>, vector<224x64xbf16>, vector<1x64xf32> -> vector<1x64xf32>
    %319 = arith.addf %311, %318 : vector<1x64xf32>
    %c2_297 = arith.constant 2 : index
    %c0_298 = arith.constant 0 : index
    %c0_299 = arith.constant 0 : index
    %320 = vector.load %arg8[%c2_297, %c0_298, %c0_299] : memref<7x1x7xbf16, #tpu.memory_space<vmem>>, vector<1x1x7xbf16>
    %321 = vector.shape_cast %320 : vector<1x1x7xbf16> to vector<1x7xbf16>
    %cst_300 = arith.constant dense<0.000000e+00> : vector<1x224xf32>
    %322 = tpu.matmul %321, %304, %cst_300 {dimension_numbers = #tpu.dot_dimension_numbers<[1], [0], [0], [1], [0, 0, 1, 1], [], []>} : vector<1x7xbf16>, vector<7x224xbf16>, vector<1x224xf32> -> vector<1x224xf32>
    %323 = arith.truncf %322 : vector<1x224xf32> to vector<1x224xbf16>
    %c2_301 = arith.constant 2 : index
    %c0_302 = arith.constant 0 : index
    %c0_303 = arith.constant 0 : index
    %324 = vector.load %arg9[%c2_301, %c0_302, %c0_303] : memref<7x224x64xbf16, #tpu.memory_space<vmem>>, vector<1x224x64xbf16>
    %325 = vector.shape_cast %324 : vector<1x224x64xbf16> to vector<224x64xbf16>
    %cst_304 = arith.constant dense<0.000000e+00> : vector<1x64xf32>
    %326 = tpu.matmul %323, %325, %cst_304 {dimension_numbers = #tpu.dot_dimension_numbers<[1], [0], [0], [1], [0, 0, 1, 1], [], []>} : vector<1x224xbf16>, vector<224x64xbf16>, vector<1x64xf32> -> vector<1x64xf32>
    %327 = arith.addf %319, %326 : vector<1x64xf32>
    %c3_305 = arith.constant 3 : index
    %c0_306 = arith.constant 0 : index
    %c0_307 = arith.constant 0 : index
    %328 = vector.load %arg8[%c3_305, %c0_306, %c0_307] : memref<7x1x7xbf16, #tpu.memory_space<vmem>>, vector<1x1x7xbf16>
    %329 = vector.shape_cast %328 : vector<1x1x7xbf16> to vector<1x7xbf16>
    %cst_308 = arith.constant dense<0.000000e+00> : vector<1x224xf32>
    %330 = tpu.matmul %329, %304, %cst_308 {dimension_numbers = #tpu.dot_dimension_numbers<[1], [0], [0], [1], [0, 0, 1, 1], [], []>} : vector<1x7xbf16>, vector<7x224xbf16>, vector<1x224xf32> -> vector<1x224xf32>
    %331 = arith.truncf %330 : vector<1x224xf32> to vector<1x224xbf16>
    %c3_309 = arith.constant 3 : index
    %c0_310 = arith.constant 0 : index
    %c0_311 = arith.constant 0 : index
    %332 = vector.load %arg9[%c3_309, %c0_310, %c0_311] : memref<7x224x64xbf16, #tpu.memory_space<vmem>>, vector<1x224x64xbf16>
    %333 = vector.shape_cast %332 : vector<1x224x64xbf16> to vector<224x64xbf16>
    %cst_312 = arith.constant dense<0.000000e+00> : vector<1x64xf32>
    %334 = tpu.matmul %331, %333, %cst_312 {dimension_numbers = #tpu.dot_dimension_numbers<[1], [0], [0], [1], [0, 0, 1, 1], [], []>} : vector<1x224xbf16>, vector<224x64xbf16>, vector<1x64xf32> -> vector<1x64xf32>
    %335 = arith.addf %327, %334 : vector<1x64xf32>
    %c4_313 = arith.constant 4 : index
    %c0_314 = arith.constant 0 : index
    %c0_315 = arith.constant 0 : index
    %336 = vector.load %arg8[%c4_313, %c0_314, %c0_315] : memref<7x1x7xbf16, #tpu.memory_space<vmem>>, vector<1x1x7xbf16>
    %337 = vector.shape_cast %336 : vector<1x1x7xbf16> to vector<1x7xbf16>
    %cst_316 = arith.constant dense<0.000000e+00> : vector<1x224xf32>
    %338 = tpu.matmul %337, %304, %cst_316 {dimension_numbers = #tpu.dot_dimension_numbers<[1], [0], [0], [1], [0, 0, 1, 1], [], []>} : vector<1x7xbf16>, vector<7x224xbf16>, vector<1x224xf32> -> vector<1x224xf32>
    %339 = arith.truncf %338 : vector<1x224xf32> to vector<1x224xbf16>
    %c4_317 = arith.constant 4 : index
    %c0_318 = arith.constant 0 : index
    %c0_319 = arith.constant 0 : index
    %340 = vector.load %arg9[%c4_317, %c0_318, %c0_319] : memref<7x224x64xbf16, #tpu.memory_space<vmem>>, vector<1x224x64xbf16>
    %341 = vector.shape_cast %340 : vector<1x224x64xbf16> to vector<224x64xbf16>
    %cst_320 = arith.constant dense<0.000000e+00> : vector<1x64xf32>
    %342 = tpu.matmul %339, %341, %cst_320 {dimension_numbers = #tpu.dot_dimension_numbers<[1], [0], [0], [1], [0, 0, 1, 1], [], []>} : vector<1x224xbf16>, vector<224x64xbf16>, vector<1x64xf32> -> vector<1x64xf32>
    %343 = arith.addf %335, %342 : vector<1x64xf32>
    %c5_321 = arith.constant 5 : index
    %c0_322 = arith.constant 0 : index
    %c0_323 = arith.constant 0 : index
    %344 = vector.load %arg8[%c5_321, %c0_322, %c0_323] : memref<7x1x7xbf16, #tpu.memory_space<vmem>>, vector<1x1x7xbf16>
    %345 = vector.shape_cast %344 : vector<1x1x7xbf16> to vector<1x7xbf16>
    %cst_324 = arith.constant dense<0.000000e+00> : vector<1x224xf32>
    %346 = tpu.matmul %345, %304, %cst_324 {dimension_numbers = #tpu.dot_dimension_numbers<[1], [0], [0], [1], [0, 0, 1, 1], [], []>} : vector<1x7xbf16>, vector<7x224xbf16>, vector<1x224xf32> -> vector<1x224xf32>
    %347 = arith.truncf %346 : vector<1x224xf32> to vector<1x224xbf16>
    %c5_325 = arith.constant 5 : index
    %c0_326 = arith.constant 0 : index
    %c0_327 = arith.constant 0 : index
    %348 = vector.load %arg9[%c5_325, %c0_326, %c0_327] : memref<7x224x64xbf16, #tpu.memory_space<vmem>>, vector<1x224x64xbf16>
    %349 = vector.shape_cast %348 : vector<1x224x64xbf16> to vector<224x64xbf16>
    %cst_328 = arith.constant dense<0.000000e+00> : vector<1x64xf32>
    %350 = tpu.matmul %347, %349, %cst_328 {dimension_numbers = #tpu.dot_dimension_numbers<[1], [0], [0], [1], [0, 0, 1, 1], [], []>} : vector<1x224xbf16>, vector<224x64xbf16>, vector<1x64xf32> -> vector<1x64xf32>
    %351 = arith.addf %343, %350 : vector<1x64xf32>
    %c6_329 = arith.constant 6 : index
    %c0_330 = arith.constant 0 : index
    %c0_331 = arith.constant 0 : index
    %352 = vector.load %arg8[%c6_329, %c0_330, %c0_331] : memref<7x1x7xbf16, #tpu.memory_space<vmem>>, vector<1x1x7xbf16>
    %353 = vector.shape_cast %352 : vector<1x1x7xbf16> to vector<1x7xbf16>
    %cst_332 = arith.constant dense<0.000000e+00> : vector<1x224xf32>
    %354 = tpu.matmul %353, %304, %cst_332 {dimension_numbers = #tpu.dot_dimension_numbers<[1], [0], [0], [1], [0, 0, 1, 1], [], []>} : vector<1x7xbf16>, vector<7x224xbf16>, vector<1x224xf32> -> vector<1x224xf32>
    %355 = arith.truncf %354 : vector<1x224xf32> to vector<1x224xbf16>
    %c6_333 = arith.constant 6 : index
    %c0_334 = arith.constant 0 : index
    %c0_335 = arith.constant 0 : index
    %356 = vector.load %arg9[%c6_333, %c0_334, %c0_335] : memref<7x224x64xbf16, #tpu.memory_space<vmem>>, vector<1x224x64xbf16>
    %357 = vector.shape_cast %356 : vector<1x224x64xbf16> to vector<224x64xbf16>
    %cst_336 = arith.constant dense<0.000000e+00> : vector<1x64xf32>
    %358 = tpu.matmul %355, %357, %cst_336 {dimension_numbers = #tpu.dot_dimension_numbers<[1], [0], [0], [1], [0, 0, 1, 1], [], []>} : vector<1x224xbf16>, vector<224x64xbf16>, vector<1x64xf32> -> vector<1x64xf32>
    %359 = arith.addf %351, %358 : vector<1x64xf32>
    %c0_337 = arith.constant 0 : index
    %c0_338 = arith.constant 0 : index
    %360 = vector.load %arg10[%c0_337, %c0_338] : memref<1x64xf32, #tpu.memory_space<vmem>>, vector<1x64xf32>
    %361 = arith.addf %359, %360 : vector<1x64xf32>
    %362 = arith.truncf %361 : vector<1x64xf32> to vector<1x64xbf16>
    %c0_339 = arith.constant 0 : index
    %c0_340 = arith.constant 0 : index
    %c0_341 = arith.constant 0 : index
    %363 = vector.load %arg12[%c0_339, %c0_340, %c0_341] : memref<7x64x224xbf16, #tpu.memory_space<vmem>>, vector<1x64x224xbf16>
    %364 = vector.shape_cast %363 : vector<1x64x224xbf16> to vector<64x224xbf16>
    %cst_342 = arith.constant dense<0.000000e+00> : vector<1x224xf32>
    %365 = tpu.matmul %362, %364, %cst_342 {dimension_numbers = #tpu.dot_dimension_numbers<[1], [0], [0], [1], [0, 0, 1, 1], [], []>} : vector<1x64xbf16>, vector<64x224xbf16>, vector<1x224xf32> -> vector<1x224xf32>
    %c0_343 = arith.constant 0 : index
    %c0_344 = arith.constant 0 : index
    %c0_345 = arith.constant 0 : index
    %366 = vector.load %arg11[%c0_343, %c0_344, %c0_345] : memref<7x7x1xbf16, #tpu.memory_space<vmem>>, vector<1x7x1xbf16>
    %367 = vector.shape_cast %366 : vector<1x7x1xbf16> to vector<7x1xbf16>
    %368 = arith.truncf %365 : vector<1x224xf32> to vector<1x224xbf16>
    %cst_346 = arith.constant dense<0.000000e+00> : vector<7x224xf32>
    %369 = tpu.matmul %367, %368, %cst_346 {dimension_numbers = #tpu.dot_dimension_numbers<[1], [0], [0], [1], [0, 0, 1, 1], [], []>} : vector<7x1xbf16>, vector<1x224xbf16>, vector<7x224xf32> -> vector<7x224xf32>
    %c1_347 = arith.constant 1 : index
    %c0_348 = arith.constant 0 : index
    %c0_349 = arith.constant 0 : index
    %370 = vector.load %arg12[%c1_347, %c0_348, %c0_349] : memref<7x64x224xbf16, #tpu.memory_space<vmem>>, vector<1x64x224xbf16>
    %371 = vector.shape_cast %370 : vector<1x64x224xbf16> to vector<64x224xbf16>
    %cst_350 = arith.constant dense<0.000000e+00> : vector<1x224xf32>
    %372 = tpu.matmul %362, %371, %cst_350 {dimension_numbers = #tpu.dot_dimension_numbers<[1], [0], [0], [1], [0, 0, 1, 1], [], []>} : vector<1x64xbf16>, vector<64x224xbf16>, vector<1x224xf32> -> vector<1x224xf32>
    %c1_351 = arith.constant 1 : index
    %c0_352 = arith.constant 0 : index
    %c0_353 = arith.constant 0 : index
    %373 = vector.load %arg11[%c1_351, %c0_352, %c0_353] : memref<7x7x1xbf16, #tpu.memory_space<vmem>>, vector<1x7x1xbf16>
    %374 = vector.shape_cast %373 : vector<1x7x1xbf16> to vector<7x1xbf16>
    %375 = arith.truncf %372 : vector<1x224xf32> to vector<1x224xbf16>
    %cst_354 = arith.constant dense<0.000000e+00> : vector<7x224xf32>
    %376 = tpu.matmul %374, %375, %cst_354 {dimension_numbers = #tpu.dot_dimension_numbers<[1], [0], [0], [1], [0, 0, 1, 1], [], []>} : vector<7x1xbf16>, vector<1x224xbf16>, vector<7x224xf32> -> vector<7x224xf32>
    %377 = arith.addf %369, %376 : vector<7x224xf32>
    %c2_355 = arith.constant 2 : index
    %c0_356 = arith.constant 0 : index
    %c0_357 = arith.constant 0 : index
    %378 = vector.load %arg12[%c2_355, %c0_356, %c0_357] : memref<7x64x224xbf16, #tpu.memory_space<vmem>>, vector<1x64x224xbf16>
    %379 = vector.shape_cast %378 : vector<1x64x224xbf16> to vector<64x224xbf16>
    %cst_358 = arith.constant dense<0.000000e+00> : vector<1x224xf32>
    %380 = tpu.matmul %362, %379, %cst_358 {dimension_numbers = #tpu.dot_dimension_numbers<[1], [0], [0], [1], [0, 0, 1, 1], [], []>} : vector<1x64xbf16>, vector<64x224xbf16>, vector<1x224xf32> -> vector<1x224xf32>
    %c2_359 = arith.constant 2 : index
    %c0_360 = arith.constant 0 : index
    %c0_361 = arith.constant 0 : index
    %381 = vector.load %arg11[%c2_359, %c0_360, %c0_361] : memref<7x7x1xbf16, #tpu.memory_space<vmem>>, vector<1x7x1xbf16>
    %382 = vector.shape_cast %381 : vector<1x7x1xbf16> to vector<7x1xbf16>
    %383 = arith.truncf %380 : vector<1x224xf32> to vector<1x224xbf16>
    %cst_362 = arith.constant dense<0.000000e+00> : vector<7x224xf32>
    %384 = tpu.matmul %382, %383, %cst_362 {dimension_numbers = #tpu.dot_dimension_numbers<[1], [0], [0], [1], [0, 0, 1, 1], [], []>} : vector<7x1xbf16>, vector<1x224xbf16>, vector<7x224xf32> -> vector<7x224xf32>
    %385 = arith.addf %377, %384 : vector<7x224xf32>
    %c3_363 = arith.constant 3 : index
    %c0_364 = arith.constant 0 : index
    %c0_365 = arith.constant 0 : index
    %386 = vector.load %arg12[%c3_363, %c0_364, %c0_365] : memref<7x64x224xbf16, #tpu.memory_space<vmem>>, vector<1x64x224xbf16>
    %387 = vector.shape_cast %386 : vector<1x64x224xbf16> to vector<64x224xbf16>
    %cst_366 = arith.constant dense<0.000000e+00> : vector<1x224xf32>
    %388 = tpu.matmul %362, %387, %cst_366 {dimension_numbers = #tpu.dot_dimension_numbers<[1], [0], [0], [1], [0, 0, 1, 1], [], []>} : vector<1x64xbf16>, vector<64x224xbf16>, vector<1x224xf32> -> vector<1x224xf32>
    %c3_367 = arith.constant 3 : index
    %c0_368 = arith.constant 0 : index
    %c0_369 = arith.constant 0 : index
    %389 = vector.load %arg11[%c3_367, %c0_368, %c0_369] : memref<7x7x1xbf16, #tpu.memory_space<vmem>>, vector<1x7x1xbf16>
    %390 = vector.shape_cast %389 : vector<1x7x1xbf16> to vector<7x1xbf16>
    %391 = arith.truncf %388 : vector<1x224xf32> to vector<1x224xbf16>
    %cst_370 = arith.constant dense<0.000000e+00> : vector<7x224xf32>
    %392 = tpu.matmul %390, %391, %cst_370 {dimension_numbers = #tpu.dot_dimension_numbers<[1], [0], [0], [1], [0, 0, 1, 1], [], []>} : vector<7x1xbf16>, vector<1x224xbf16>, vector<7x224xf32> -> vector<7x224xf32>
    %393 = arith.addf %385, %392 : vector<7x224xf32>
    %c4_371 = arith.constant 4 : index
    %c0_372 = arith.constant 0 : index
    %c0_373 = arith.constant 0 : index
    %394 = vector.load %arg12[%c4_371, %c0_372, %c0_373] : memref<7x64x224xbf16, #tpu.memory_space<vmem>>, vector<1x64x224xbf16>
    %395 = vector.shape_cast %394 : vector<1x64x224xbf16> to vector<64x224xbf16>
    %cst_374 = arith.constant dense<0.000000e+00> : vector<1x224xf32>
    %396 = tpu.matmul %362, %395, %cst_374 {dimension_numbers = #tpu.dot_dimension_numbers<[1], [0], [0], [1], [0, 0, 1, 1], [], []>} : vector<1x64xbf16>, vector<64x224xbf16>, vector<1x224xf32> -> vector<1x224xf32>
    %c4_375 = arith.constant 4 : index
    %c0_376 = arith.constant 0 : index
    %c0_377 = arith.constant 0 : index
    %397 = vector.load %arg11[%c4_375, %c0_376, %c0_377] : memref<7x7x1xbf16, #tpu.memory_space<vmem>>, vector<1x7x1xbf16>
    %398 = vector.shape_cast %397 : vector<1x7x1xbf16> to vector<7x1xbf16>
    %399 = arith.truncf %396 : vector<1x224xf32> to vector<1x224xbf16>
    %cst_378 = arith.constant dense<0.000000e+00> : vector<7x224xf32>
    %400 = tpu.matmul %398, %399, %cst_378 {dimension_numbers = #tpu.dot_dimension_numbers<[1], [0], [0], [1], [0, 0, 1, 1], [], []>} : vector<7x1xbf16>, vector<1x224xbf16>, vector<7x224xf32> -> vector<7x224xf32>
    %401 = arith.addf %393, %400 : vector<7x224xf32>
    %c5_379 = arith.constant 5 : index
    %c0_380 = arith.constant 0 : index
    %c0_381 = arith.constant 0 : index
    %402 = vector.load %arg12[%c5_379, %c0_380, %c0_381] : memref<7x64x224xbf16, #tpu.memory_space<vmem>>, vector<1x64x224xbf16>
    %403 = vector.shape_cast %402 : vector<1x64x224xbf16> to vector<64x224xbf16>
    %cst_382 = arith.constant dense<0.000000e+00> : vector<1x224xf32>
    %404 = tpu.matmul %362, %403, %cst_382 {dimension_numbers = #tpu.dot_dimension_numbers<[1], [0], [0], [1], [0, 0, 1, 1], [], []>} : vector<1x64xbf16>, vector<64x224xbf16>, vector<1x224xf32> -> vector<1x224xf32>
    %c5_383 = arith.constant 5 : index
    %c0_384 = arith.constant 0 : index
    %c0_385 = arith.constant 0 : index
    %405 = vector.load %arg11[%c5_383, %c0_384, %c0_385] : memref<7x7x1xbf16, #tpu.memory_space<vmem>>, vector<1x7x1xbf16>
    %406 = vector.shape_cast %405 : vector<1x7x1xbf16> to vector<7x1xbf16>
    %407 = arith.truncf %404 : vector<1x224xf32> to vector<1x224xbf16>
    %cst_386 = arith.constant dense<0.000000e+00> : vector<7x224xf32>
    %408 = tpu.matmul %406, %407, %cst_386 {dimension_numbers = #tpu.dot_dimension_numbers<[1], [0], [0], [1], [0, 0, 1, 1], [], []>} : vector<7x1xbf16>, vector<1x224xbf16>, vector<7x224xf32> -> vector<7x224xf32>
    %409 = arith.addf %401, %408 : vector<7x224xf32>
    %c6_387 = arith.constant 6 : index
    %c0_388 = arith.constant 0 : index
    %c0_389 = arith.constant 0 : index
    %410 = vector.load %arg12[%c6_387, %c0_388, %c0_389] : memref<7x64x224xbf16, #tpu.memory_space<vmem>>, vector<1x64x224xbf16>
    %411 = vector.shape_cast %410 : vector<1x64x224xbf16> to vector<64x224xbf16>
    %cst_390 = arith.constant dense<0.000000e+00> : vector<1x224xf32>
    %412 = tpu.matmul %362, %411, %cst_390 {dimension_numbers = #tpu.dot_dimension_numbers<[1], [0], [0], [1], [0, 0, 1, 1], [], []>} : vector<1x64xbf16>, vector<64x224xbf16>, vector<1x224xf32> -> vector<1x224xf32>
    %c6_391 = arith.constant 6 : index
    %c0_392 = arith.constant 0 : index
    %c0_393 = arith.constant 0 : index
    %413 = vector.load %arg11[%c6_391, %c0_392, %c0_393] : memref<7x7x1xbf16, #tpu.memory_space<vmem>>, vector<1x7x1xbf16>
    %414 = vector.shape_cast %413 : vector<1x7x1xbf16> to vector<7x1xbf16>
    %415 = arith.truncf %412 : vector<1x224xf32> to vector<1x224xbf16>
    %cst_394 = arith.constant dense<0.000000e+00> : vector<7x224xf32>
    %416 = tpu.matmul %414, %415, %cst_394 {dimension_numbers = #tpu.dot_dimension_numbers<[1], [0], [0], [1], [0, 0, 1, 1], [], []>} : vector<7x1xbf16>, vector<1x224xbf16>, vector<7x224xf32> -> vector<7x224xf32>
    %417 = arith.addf %409, %416 : vector<7x224xf32>
    %c0_395 = arith.constant 0 : index
    %c0_396 = arith.constant 0 : index
    %418 = vector.load %arg13[%c0_395, %c0_396] : memref<1x224xf32, #tpu.memory_space<vmem>>, vector<1x224xf32>
    %419 = vector.broadcast %418 : vector<1x224xf32> to vector<7x224xf32>
    %420 = arith.addf %417, %419 : vector<7x224xf32>
    %cst_397 = arith.constant 0.000000e+00 : f32
    %421 = vector.broadcast %cst_397 : f32 to vector<7x224xf32>
    %422 = arith.maximumf %420, %421 : vector<7x224xf32>
    %423 = arith.truncf %422 : vector<7x224xf32> to vector<7x224xbf16>
    %c0_398 = arith.constant 0 : index
    %c0_399 = arith.constant 0 : index
    %c0_400 = arith.constant 0 : index
    %424 = vector.load %arg15[%c0_398, %c0_399, %c0_400] : memref<3x224x224xbf16, #tpu.memory_space<vmem>>, vector<1x224x224xbf16>
    %425 = vector.shape_cast %424 : vector<1x224x224xbf16> to vector<224x224xbf16>
    %cst_401 = arith.constant dense<0.000000e+00> : vector<7x224xf32>
    %426 = tpu.matmul %423, %425, %cst_401 {dimension_numbers = #tpu.dot_dimension_numbers<[1], [0], [0], [1], [0, 0, 1, 1], [], []>} : vector<7x224xbf16>, vector<224x224xbf16>, vector<7x224xf32> -> vector<7x224xf32>
    %c0_402 = arith.constant 0 : index
    %c0_403 = arith.constant 0 : index
    %c0_404 = arith.constant 0 : index
    %427 = vector.load %arg14[%c0_402, %c0_403, %c0_404] : memref<3x14x7xbf16, #tpu.memory_space<vmem>>, vector<1x14x7xbf16>
    %428 = vector.shape_cast %427 : vector<1x14x7xbf16> to vector<14x7xbf16>
    %429 = arith.truncf %426 : vector<7x224xf32> to vector<7x224xbf16>
    %cst_405 = arith.constant dense<0.000000e+00> : vector<14x224xf32>
    %430 = tpu.matmul %428, %429, %cst_405 {dimension_numbers = #tpu.dot_dimension_numbers<[1], [0], [0], [1], [0, 0, 1, 1], [], []>} : vector<14x7xbf16>, vector<7x224xbf16>, vector<14x224xf32> -> vector<14x224xf32>
    %c1_406 = arith.constant 1 : index
    %c0_407 = arith.constant 0 : index
    %c0_408 = arith.constant 0 : index
    %431 = vector.load %arg15[%c1_406, %c0_407, %c0_408] : memref<3x224x224xbf16, #tpu.memory_space<vmem>>, vector<1x224x224xbf16>
    %432 = vector.shape_cast %431 : vector<1x224x224xbf16> to vector<224x224xbf16>
    %cst_409 = arith.constant dense<0.000000e+00> : vector<7x224xf32>
    %433 = tpu.matmul %423, %432, %cst_409 {dimension_numbers = #tpu.dot_dimension_numbers<[1], [0], [0], [1], [0, 0, 1, 1], [], []>} : vector<7x224xbf16>, vector<224x224xbf16>, vector<7x224xf32> -> vector<7x224xf32>
    %c1_410 = arith.constant 1 : index
    %c0_411 = arith.constant 0 : index
    %c0_412 = arith.constant 0 : index
    %434 = vector.load %arg14[%c1_410, %c0_411, %c0_412] : memref<3x14x7xbf16, #tpu.memory_space<vmem>>, vector<1x14x7xbf16>
    %435 = vector.shape_cast %434 : vector<1x14x7xbf16> to vector<14x7xbf16>
    %436 = arith.truncf %433 : vector<7x224xf32> to vector<7x224xbf16>
    %cst_413 = arith.constant dense<0.000000e+00> : vector<14x224xf32>
    %437 = tpu.matmul %435, %436, %cst_413 {dimension_numbers = #tpu.dot_dimension_numbers<[1], [0], [0], [1], [0, 0, 1, 1], [], []>} : vector<14x7xbf16>, vector<7x224xbf16>, vector<14x224xf32> -> vector<14x224xf32>
    %438 = arith.addf %430, %437 : vector<14x224xf32>
    %c2_414 = arith.constant 2 : index
    %c0_415 = arith.constant 0 : index
    %c0_416 = arith.constant 0 : index
    %439 = vector.load %arg15[%c2_414, %c0_415, %c0_416] : memref<3x224x224xbf16, #tpu.memory_space<vmem>>, vector<1x224x224xbf16>
    %440 = vector.shape_cast %439 : vector<1x224x224xbf16> to vector<224x224xbf16>
    %cst_417 = arith.constant dense<0.000000e+00> : vector<7x224xf32>
    %441 = tpu.matmul %423, %440, %cst_417 {dimension_numbers = #tpu.dot_dimension_numbers<[1], [0], [0], [1], [0, 0, 1, 1], [], []>} : vector<7x224xbf16>, vector<224x224xbf16>, vector<7x224xf32> -> vector<7x224xf32>
    %c2_418 = arith.constant 2 : index
    %c0_419 = arith.constant 0 : index
    %c0_420 = arith.constant 0 : index
    %442 = vector.load %arg14[%c2_418, %c0_419, %c0_420] : memref<3x14x7xbf16, #tpu.memory_space<vmem>>, vector<1x14x7xbf16>
    %443 = vector.shape_cast %442 : vector<1x14x7xbf16> to vector<14x7xbf16>
    %444 = arith.truncf %441 : vector<7x224xf32> to vector<7x224xbf16>
    %cst_421 = arith.constant dense<0.000000e+00> : vector<14x224xf32>
    %445 = tpu.matmul %443, %444, %cst_421 {dimension_numbers = #tpu.dot_dimension_numbers<[1], [0], [0], [1], [0, 0, 1, 1], [], []>} : vector<14x7xbf16>, vector<7x224xbf16>, vector<14x224xf32> -> vector<14x224xf32>
    %446 = arith.addf %438, %445 : vector<14x224xf32>
    %c0_422 = arith.constant 0 : index
    %c0_423 = arith.constant 0 : index
    %447 = vector.load %arg16[%c0_422, %c0_423] : memref<1x224xf32, #tpu.memory_space<vmem>>, vector<1x224xf32>
    %448 = vector.broadcast %447 : vector<1x224xf32> to vector<14x224xf32>
    %449 = arith.addf %446, %448 : vector<14x224xf32>
    %cst_424 = arith.constant 0.000000e+00 : f32
    %450 = vector.broadcast %cst_424 : f32 to vector<14x224xf32>
    %451 = arith.maximumf %449, %450 : vector<14x224xf32>
    %452 = arith.truncf %451 : vector<14x224xf32> to vector<14x224xbf16>
    %c0_425 = arith.constant 0 : index
    %c0_426 = arith.constant 0 : index
    %c0_427 = arith.constant 0 : index
    %453 = vector.load %arg18[%c0_425, %c0_426, %c0_427] : memref<3x224x28xbf16, #tpu.memory_space<vmem>>, vector<1x224x28xbf16>
    %454 = vector.shape_cast %453 : vector<1x224x28xbf16> to vector<224x28xbf16>
    %cst_428 = arith.constant dense<0.000000e+00> : vector<14x28xf32>
    %455 = tpu.matmul %452, %454, %cst_428 {dimension_numbers = #tpu.dot_dimension_numbers<[1], [0], [0], [1], [0, 0, 1, 1], [], []>} : vector<14x224xbf16>, vector<224x28xbf16>, vector<14x28xf32> -> vector<14x28xf32>
    %c0_429 = arith.constant 0 : index
    %c0_430 = arith.constant 0 : index
    %c0_431 = arith.constant 0 : index
    %456 = vector.load %arg17[%c0_429, %c0_430, %c0_431] : memref<3x28x14xbf16, #tpu.memory_space<vmem>>, vector<1x28x14xbf16>
    %457 = vector.shape_cast %456 : vector<1x28x14xbf16> to vector<28x14xbf16>
    %458 = arith.truncf %455 : vector<14x28xf32> to vector<14x28xbf16>
    %cst_432 = arith.constant dense<0.000000e+00> : vector<28x28xf32>
    %459 = tpu.matmul %457, %458, %cst_432 {dimension_numbers = #tpu.dot_dimension_numbers<[1], [0], [0], [1], [0, 0, 1, 1], [], []>} : vector<28x14xbf16>, vector<14x28xbf16>, vector<28x28xf32> -> vector<28x28xf32>
    %c1_433 = arith.constant 1 : index
    %c0_434 = arith.constant 0 : index
    %c0_435 = arith.constant 0 : index
    %460 = vector.load %arg18[%c1_433, %c0_434, %c0_435] : memref<3x224x28xbf16, #tpu.memory_space<vmem>>, vector<1x224x28xbf16>
    %461 = vector.shape_cast %460 : vector<1x224x28xbf16> to vector<224x28xbf16>
    %cst_436 = arith.constant dense<0.000000e+00> : vector<14x28xf32>
    %462 = tpu.matmul %452, %461, %cst_436 {dimension_numbers = #tpu.dot_dimension_numbers<[1], [0], [0], [1], [0, 0, 1, 1], [], []>} : vector<14x224xbf16>, vector<224x28xbf16>, vector<14x28xf32> -> vector<14x28xf32>
    %c1_437 = arith.constant 1 : index
    %c0_438 = arith.constant 0 : index
    %c0_439 = arith.constant 0 : index
    %463 = vector.load %arg17[%c1_437, %c0_438, %c0_439] : memref<3x28x14xbf16, #tpu.memory_space<vmem>>, vector<1x28x14xbf16>
    %464 = vector.shape_cast %463 : vector<1x28x14xbf16> to vector<28x14xbf16>
    %465 = arith.truncf %462 : vector<14x28xf32> to vector<14x28xbf16>
    %cst_440 = arith.constant dense<0.000000e+00> : vector<28x28xf32>
    %466 = tpu.matmul %464, %465, %cst_440 {dimension_numbers = #tpu.dot_dimension_numbers<[1], [0], [0], [1], [0, 0, 1, 1], [], []>} : vector<28x14xbf16>, vector<14x28xbf16>, vector<28x28xf32> -> vector<28x28xf32>
    %467 = arith.addf %459, %466 : vector<28x28xf32>
    %c2_441 = arith.constant 2 : index
    %c0_442 = arith.constant 0 : index
    %c0_443 = arith.constant 0 : index
    %468 = vector.load %arg18[%c2_441, %c0_442, %c0_443] : memref<3x224x28xbf16, #tpu.memory_space<vmem>>, vector<1x224x28xbf16>
    %469 = vector.shape_cast %468 : vector<1x224x28xbf16> to vector<224x28xbf16>
    %cst_444 = arith.constant dense<0.000000e+00> : vector<14x28xf32>
    %470 = tpu.matmul %452, %469, %cst_444 {dimension_numbers = #tpu.dot_dimension_numbers<[1], [0], [0], [1], [0, 0, 1, 1], [], []>} : vector<14x224xbf16>, vector<224x28xbf16>, vector<14x28xf32> -> vector<14x28xf32>
    %c2_445 = arith.constant 2 : index
    %c0_446 = arith.constant 0 : index
    %c0_447 = arith.constant 0 : index
    %471 = vector.load %arg17[%c2_445, %c0_446, %c0_447] : memref<3x28x14xbf16, #tpu.memory_space<vmem>>, vector<1x28x14xbf16>
    %472 = vector.shape_cast %471 : vector<1x28x14xbf16> to vector<28x14xbf16>
    %473 = arith.truncf %470 : vector<14x28xf32> to vector<14x28xbf16>
    %cst_448 = arith.constant dense<0.000000e+00> : vector<28x28xf32>
    %474 = tpu.matmul %472, %473, %cst_448 {dimension_numbers = #tpu.dot_dimension_numbers<[1], [0], [0], [1], [0, 0, 1, 1], [], []>} : vector<28x14xbf16>, vector<14x28xbf16>, vector<28x28xf32> -> vector<28x28xf32>
    %475 = arith.addf %467, %474 : vector<28x28xf32>
    %c0_449 = arith.constant 0 : index
    %c0_450 = arith.constant 0 : index
    %476 = vector.load %arg19[%c0_449, %c0_450] : memref<1x28xf32, #tpu.memory_space<vmem>>, vector<1x28xf32>
    %477 = vector.broadcast %476 : vector<1x28xf32> to vector<28x28xf32>
    %478 = arith.addf %475, %477 : vector<28x28xf32>
    %cst_451 = arith.constant 0.000000e+00 : f32
    %479 = vector.broadcast %cst_451 : f32 to vector<28x28xf32>
    %480 = arith.subf %479, %478 : vector<28x28xf32>
    %481 = math.exp %480 : vector<28x28xf32>
    %cst_452 = arith.constant 1.000000e+00 : f32
    %482 = vector.broadcast %cst_452 : f32 to vector<28x28xf32>
    %483 = arith.addf %482, %481 : vector<28x28xf32>
    %484 = tpu.reciprocal %483 : vector<28x28xf32> -> vector<28x28xf32>
    %c1_453 = arith.constant 1 : index
    %c0_454 = arith.constant 0 : index
    %c0_455 = arith.constant 0 : index
    %485 = vector.load %arg20[%c1_453, %c0_454, %c0_455] : memref<2x28x28xf32, #tpu.memory_space<vmem>>, vector<1x28x28xf32>
    %486 = vector.shape_cast %485 : vector<1x28x28xf32> to vector<28x28xf32>
    %487 = vector.shape_cast %484 : vector<28x28xf32> to vector<1x28x28xf32>
    tpu.vector_store %arg20[%c1_453, %c0_454, %c0_455], %487 {strides = array<i32>} : memref<2x28x28xf32, #tpu.memory_space<vmem>>, vector<1x28x28xf32>,
    return
  }
  func.func @transform_0(%arg0: i32) -> (i32, i32, i32) {
    %c0_i32 = arith.constant 0 : i32
    %c0_i32_0 = arith.constant 0 : i32
    %c0_i32_1 = arith.constant 0 : i32
    return %arg0, %c0_i32, %c0_i32_0 : i32, i32, i32
  }
  func.func @transform_1(%arg0: i32) -> (i32, i32, i32) {
    %c0_i32 = arith.constant 0 : i32
    %c0_i32_0 = arith.constant 0 : i32
    %c0_i32_1 = arith.constant 0 : i32
    %c0_i32_2 = arith.constant 0 : i32
    return %c0_i32, %c0_i32_0, %c0_i32_1 : i32, i32, i32
  }
  func.func @transform_2(%arg0: i32) -> (i32, i32, i32) {
    %c0_i32 = arith.constant 0 : i32
    %c0_i32_0 = arith.constant 0 : i32
    %c0_i32_1 = arith.constant 0 : i32
    %c0_i32_2 = arith.constant 0 : i32
    return %c0_i32, %c0_i32_0, %c0_i32_1 : i32, i32, i32
  }
  func.func @transform_3(%arg0: i32) -> (i32, i32) {
    %c0_i32 = arith.constant 0 : i32
    %c0_i32_0 = arith.constant 0 : i32
    %c0_i32_1 = arith.constant 0 : i32
    return %c0_i32, %c0_i32_0 : i32, i32
  }
  func.func @transform_4(%arg0: i32) -> (i32, i32, i32) {
    %c0_i32 = arith.constant 0 : i32
    %c0_i32_0 = arith.constant 0 : i32
    %c0_i32_1 = arith.constant 0 : i32
    %c0_i32_2 = arith.constant 0 : i32
    return %c0_i32, %c0_i32_0, %c0_i32_1 : i32, i32, i32
  }
  func.func @transform_5(%arg0: i32) -> (i32, i32, i32) {
    %c0_i32 = arith.constant 0 : i32
    %c0_i32_0 = arith.constant 0 : i32
    %c0_i32_1 = arith.constant 0 : i32
    %c0_i32_2 = arith.constant 0 : i32
    return %c0_i32, %c0_i32_0, %c0_i32_1 : i32, i32, i32
  }
  func.func @transform_6(%arg0: i32) -> (i32, i32) {
    %c0_i32 = arith.constant 0 : i32
    %c0_i32_0 = arith.constant 0 : i32
    %c0_i32_1 = arith.constant 0 : i32
    return %c0_i32, %c0_i32_0 : i32, i32
  }
  func.func @transform_7(%arg0: i32) -> (i32, i32, i32) {
    %c0_i32 = arith.constant 0 : i32
    %c0_i32_0 = arith.constant 0 : i32
    %c0_i32_1 = arith.constant 0 : i32
    %c0_i32_2 = arith.constant 0 : i32
    return %c0_i32, %c0_i32_0, %c0_i32_1 : i32, i32, i32
  }
  func.func @transform_8(%arg0: i32) -> (i32, i32, i32) {
    %c0_i32 = arith.constant 0 : i32
    %c0_i32_0 = arith.constant 0 : i32
    %c0_i32_1 = arith.constant 0 : i32
    %c0_i32_2 = arith.constant 0 : i32
    return %c0_i32, %c0_i32_0, %c0_i32_1 : i32, i32, i32
  }
  func.func @transform_9(%arg0: i32) -> (i32, i32) {
    %c0_i32 = arith.constant 0 : i32
    %c0_i32_0 = arith.constant 0 : i32
    %c0_i32_1 = arith.constant 0 : i32
    return %c0_i32, %c0_i32_0 : i32, i32
  }
  func.func @transform_10(%arg0: i32) -> (i32, i32, i32) {
    %c0_i32 = arith.constant 0 : i32
    %c0_i32_0 = arith.constant 0 : i32
    %c0_i32_1 = arith.constant 0 : i32
    %c0_i32_2 = arith.constant 0 : i32
    return %c0_i32, %c0_i32_0, %c0_i32_1 : i32, i32, i32
  }
  func.func @transform_11(%arg0: i32) -> (i32, i32, i32) {
    %c0_i32 = arith.constant 0 : i32
    %c0_i32_0 = arith.constant 0 : i32
    %c0_i32_1 = arith.constant 0 : i32
    %c0_i32_2 = arith.constant 0 : i32
    return %c0_i32, %c0_i32_0, %c0_i32_1 : i32, i32, i32
  }
  func.func @transform_12(%arg0: i32) -> (i32, i32) {
    %c0_i32 = arith.constant 0 : i32
    %c0_i32_0 = arith.constant 0 : i32
    %c0_i32_1 = arith.constant 0 : i32
    return %c0_i32, %c0_i32_0 : i32, i32
  }
  func.func @transform_13(%arg0: i32) -> (i32, i32, i32) {
    %c0_i32 = arith.constant 0 : i32
    %c0_i32_0 = arith.constant 0 : i32
    %c0_i32_1 = arith.constant 0 : i32
    %c0_i32_2 = arith.constant 0 : i32
    return %c0_i32, %c0_i32_0, %c0_i32_1 : i32, i32, i32
  }
  func.func @transform_14(%arg0: i32) -> (i32, i32, i32) {
    %c0_i32 = arith.constant 0 : i32
    %c0_i32_0 = arith.constant 0 : i32
    %c0_i32_1 = arith.constant 0 : i32
    %c0_i32_2 = arith.constant 0 : i32
    return %c0_i32, %c0_i32_0, %c0_i32_1 : i32, i32, i32
  }
  func.func @transform_15(%arg0: i32) -> (i32, i32) {
    %c0_i32 = arith.constant 0 : i32
    %c0_i32_0 = arith.constant 0 : i32
    %c0_i32_1 = arith.constant 0 : i32
    return %c0_i32, %c0_i32_0 : i32, i32
  }
  func.func @transform_16(%arg0: i32) -> (i32, i32, i32) {
    %c0_i32 = arith.constant 0 : i32
    %c0_i32_0 = arith.constant 0 : i32
    %c0_i32_1 = arith.constant 0 : i32
    %c0_i32_2 = arith.constant 0 : i32
    return %c0_i32, %c0_i32_0, %c0_i32_1 : i32, i32, i32
  }
  func.func @transform_17(%arg0: i32) -> (i32, i32, i32) {
    %c0_i32 = arith.constant 0 : i32
    %c0_i32_0 = arith.constant 0 : i32
    %c0_i32_1 = arith.constant 0 : i32
    %c0_i32_2 = arith.constant 0 : i32
    return %c0_i32, %c0_i32_0, %c0_i32_1 : i32, i32, i32
  }
  func.func @transform_18(%arg0: i32) -> (i32, i32) {
    %c0_i32 = arith.constant 0 : i32
    %c0_i32_0 = arith.constant 0 : i32
    %c0_i32_1 = arith.constant 0 : i32
    return %c0_i32, %c0_i32_0 : i32, i32
  }
  func.func @transform_19(%arg0: i32) -> (i32, i32, i32) {
    %c0_i32 = arith.constant 0 : i32
    %c0_i32_0 = arith.constant 0 : i32
    %c0_i32_1 = arith.constant 0 : i32
    return %arg0, %c0_i32, %c0_i32_0 : i32, i32, i32
  }
}

</mosaic_0001>

<llo_original>
// kernel: forward.1
$region0: #{forward.1}
  #allocation0 [shape = 'u32[]', space=smem, size = 0x4, offset = 0x4, fixed_abs, tag = 'smem constant byte address 0x4 - core index']
  #allocation1 [shape = 'u32[144,128]{1,0:T(1,128)}', space=vmem, size = 0x12000, scoped, tag = 'internal scratch']
  %s0 = inlined_call_operand.vmem [shape: f32[2,28,28], index: 0, kind: input, shape index: {}]
  %s1 = inlined_call_operand.vmem [shape: bf16[3,14,28], index: 1, kind: input, shape index: {}]
  %s2 = inlined_call_operand.vmem [shape: bf16[3,28,224], index: 2, kind: input, shape index: {}]
  %s3 = inlined_call_operand.hbm [shape: f32[1,224], index: 3, kind: input, shape index: {}]
  %s4 = inlined_call_operand.vmem [shape: bf16[3,7,14], index: 4, kind: input, shape index: {}]
  %s5 = inlined_call_operand.hbm [shape: bf16[3,224,224], index: 5, kind: input, shape index: {}]
  %s6 = inlined_call_operand.hbm [shape: f32[1,224], index: 6, kind: input, shape index: {}]
  %s7 = inlined_call_operand.vmem [shape: bf16[7,1,7], index: 7, kind: input, shape index: {}]
  %s8 = inlined_call_operand.hbm [shape: bf16[7,224,64], index: 8, kind: input, shape index: {}]
  %s9 = inlined_call_operand.vmem [shape: f32[1,64], index: 9, kind: input, shape index: {}]
  %s10 = inlined_call_operand.vmem [shape: bf16[7,7,1], index: 10, kind: input, shape index: {}]
  %s11 = inlined_call_operand.hbm [shape: bf16[7,64,224], index: 11, kind: input, shape index: {}]
  %s12 = inlined_call_operand.vmem [shape: f32[1,224], index: 12, kind: input, shape index: {}]
  %s13 = inlined_call_operand.vmem [shape: bf16[3,14,7], index: 13, kind: input, shape index: {}]
  %s14 = inlined_call_operand.hbm [shape: bf16[3,224,224], index: 14, kind: input, shape index: {}]
  %s15 = inlined_call_operand.vmem [shape: f32[1,224], index: 15, kind: input, shape index: {}]
  %s16 = inlined_call_operand.vmem [shape: bf16[3,28,14], index: 16, kind: input, shape index: {}]
  %s17 = inlined_call_operand.hbm [shape: bf16[3,224,28], index: 17, kind: input, shape index: {}]
  %s18 = inlined_call_operand.vmem [shape: f32[1,28], index: 18, kind: input, shape index: {}]
  %s19 = inlined_call_operand.vmem [shape: f32[2,28,28], index: 19, kind: output, shape index: {}]
  %s20 = sld [smem:[#allocation0]]
  $region114: #{forward.1} parent=0
    _
  %s22 = ssub.s32 1, %s20
  %s23 = scalar_select 0, %s22, %s20
  $region1: #{forward.1} parent=0
    #allocation2 [shape = 'u8[1024]{0}', space=vmem, size = 0x400, scoped, tag = 'input window, operand 3, single buffered']
    #allocation3 [shape = 's32[1]{0}', space=sflag, size = 0x4, scoped, tag = 'scoped memory for forward.1']
    #allocation4 [shape = 'u8[344064]{0}', space=vmem, size = 0x54000, scoped, tag = 'input window, operand 5, single buffered']
    #allocation5 [shape = 's32[1]{0}', space=sflag, size = 0x4, scoped, tag = 'scoped memory for forward.1']
    #allocation6 [shape = 'u8[1024]{0}', space=vmem, size = 0x400, scoped, tag = 'input window, operand 6, single buffered']
    #allocation7 [shape = 'u8[401408]{0}', space=vmem, size = 0x62000, scoped, tag = 'input window, operand 8, single buffered']
    #allocation8 [shape = 's32[1]{0}', space=sflag, size = 0x4, scoped, tag = 'scoped memory for forward.1']
    #allocation9 [shape = 'u8[229376]{0}', space=vmem, size = 0x38000, scoped, tag = 'input window, operand 11, single buffered']
    #allocation10 [shape = 'u8[344064]{0}', space=vmem, size = 0x54000, scoped, tag = 'input window, operand 14, single buffered']
    #allocation11 [shape = 's32[1]{0}', space=sflag, size = 0x4, scoped, tag = 'scoped memory for forward.1']
    #allocation12 [shape = 'u8[172032]{0}', space=vmem, size = 0x2a000, scoped, tag = 'input window, operand 17, single buffered']
    %24 = vsyncpa [#allocation3], 0
    %25 = vsyncpa [#allocation5], 0
    %26 = vsyncpa [#allocation8], 0
    %27 = vsyncpa [#allocation11], 0
    // Predicated region
    $region2: #{forward.1} parent=1 // pred_check
      _
    $region3: #{forward.1} parent=1 // pred_check_branch
      %29 = sbr.rel (0) target = $region5
    $region4: #{forward.1} parent=1 // pred_region
      _
    $region5: #{forward.1} parent=1 // pred_fallthru
      _
    // Predicated region
    $region6: #{forward.1} parent=1 // pred_check
      _
    $region7: #{forward.1} parent=1 // pred_check_branch
      %31 = sbr.rel (0) target = $region9
    $region8: #{forward.1} parent=1 // pred_region
      _
    $region9: #{forward.1} parent=1 // pred_fallthru
      _
    // Predicated region
    $region10: #{forward.1} parent=1 // pred_check
      _
    $region11: #{forward.1} parent=1 // pred_check_branch
      %33 = sbr.rel (0) target = $region13
    $region12: #{forward.1} parent=1 // pred_region
      _
    $region13: #{forward.1} parent=1 // pred_fallthru
      _
    // Predicated region
    $region14: #{forward.1} parent=1 // pred_check
      _
    $region15: #{forward.1} parent=1 // pred_check_branch
      %35 = sbr.rel (0) target = $region17
    $region16: #{forward.1} parent=1 // pred_region
      %s37 = ssub.s32 32, 32
      %38 = vsyncadd [#allocation3], %s37
      %s40 = sshll.u32 [#allocation2], 4
      %s41 = int_to_ptr.vmem [resolvable:$true] %s40
      %43 = dma.hbm_to_vmem [thread:$0]  %s3, 32, %s41, [#allocation3]
    $region17: #{forward.1} parent=1 // pred_fallthru
      _
    // Predicated region
    $region18: #{forward.1} parent=1 // pred_check
      _
    $region19: #{forward.1} parent=1 // pred_check_branch
      %45 = sbr.rel (0) target = $region21
    $region20: #{forward.1} parent=1 // pred_region
      _
    $region21: #{forward.1} parent=1 // pred_fallthru
      _
    // Predicated region
    $region22: #{forward.1} parent=1 // pred_check
      _
    $region23: #{forward.1} parent=1 // pred_check_branch
      %47 = sbr.rel (0) target = $region25
    $region24: #{forward.1} parent=1 // pred_region
      %s49 = ssub.s32 10752, 10752
      %50 = vsyncadd [#allocation5], %s49
      %s51 = sshll.u32 [#allocation4], 4
      %s52 = int_to_ptr.vmem [resolvable:$true] %s51
      %57 = dma.hbm_to_vmem [thread:$0]  %s5, 10752, %s52, [#allocation5], 128, 128, 8
    $region25: #{forward.1} parent=1 // pred_fallthru
      _
    // Predicated region
    $region26: #{forward.1} parent=1 // pred_check
      _
    $region27: #{forward.1} parent=1 // pred_check_branch
      %59 = sbr.rel (0) target = $region29
    $region28: #{forward.1} parent=1 // pred_region
      %s61 = ssub.s32 32, 32
      %62 = vsyncadd [#allocation5], %s61
      %s64 = sshll.u32 [#allocation6], 4
      %s65 = int_to_ptr.vmem [resolvable:$true] %s64
      %67 = dma.hbm_to_vmem [thread:$0]  %s6, 32, %s65, [#allocation5]
    $region29: #{forward.1} parent=1 // pred_fallthru
      _
    // Predicated region
    $region30: #{forward.1} parent=1 // pred_check
      _
    $region31: #{forward.1} parent=1 // pred_check_branch
      %69 = sbr.rel (0) target = $region33
    $region32: #{forward.1} parent=1 // pred_region
      _
    $region33: #{forward.1} parent=1 // pred_fallthru
      _
    // Predicated region
    $region34: #{forward.1} parent=1 // pred_check
      _
    $region35: #{forward.1} parent=1 // pred_check_branch
      %71 = sbr.rel (0) target = $region37
    $region36: #{forward.1} parent=1 // pred_region
      %s73 = ssub.s32 12544, 12544
      %74 = vsyncadd [#allocation8], %s73
      %s75 = sshll.u32 [#allocation7], 4
      %s76 = int_to_ptr.vmem [resolvable:$true] %s75
      %81 = dma.hbm_to_vmem [thread:$0]  %s8, 12544, %s76, [#allocation8], 64, 64, 4
    $region37: #{forward.1} parent=1 // pred_fallthru
      _
    // Predicated region
    $region38: #{forward.1} parent=1 // pred_check
      _
    $region39: #{forward.1} parent=1 // pred_check_branch
      %83 = sbr.rel (0) target = $region41
    $region40: #{forward.1} parent=1 // pred_region
      _
    $region41: #{forward.1} parent=1 // pred_fallthru
      _
    // Predicated region
    $region42: #{forward.1} parent=1 // pred_check
      _
    $region43: #{forward.1} parent=1 // pred_check_branch
      %85 = sbr.rel (0) target = $region45
    $region44: #{forward.1} parent=1 // pred_region
      _
    $region45: #{forward.1} parent=1 // pred_fallthru
      _
    // Predicated region
    $region46: #{forward.1} parent=1 // pred_check
      _
    $region47: #{forward.1} parent=1 // pred_check_branch
      %87 = sbr.rel (0) target = $region49
    $region48: #{forward.1} parent=1 // pred_region
      %s89 = ssub.s32 7168, 7168
      %90 = vsyncadd [#allocation8], %s89
      %s91 = sshll.u32 [#allocation9], 4
      %s92 = int_to_ptr.vmem [resolvable:$true] %s91
      %97 = dma.hbm_to_vmem [thread:$0]  %s11, 7168, %s92, [#allocation8], 128, 128, 8
    $region49: #{forward.1} parent=1 // pred_fallthru
      _
    // Predicated region
    $region50: #{forward.1} parent=1 // pred_check
      _
    $region51: #{forward.1} parent=1 // pred_check_branch
      %99 = sbr.rel (0) target = $region53
    $region52: #{forward.1} parent=1 // pred_region
      _
    $region53: #{forward.1} parent=1 // pred_fallthru
      _
    // Predicated region
    $region54: #{forward.1} parent=1 // pred_check
      _
    $region55: #{forward.1} parent=1 // pred_check_branch
      %101 = sbr.rel (0) target = $region57
    $region56: #{forward.1} parent=1 // pred_region
      _
    $region57: #{forward.1} parent=1 // pred_fallthru
      _
    // Predicated region
    $region58: #{forward.1} parent=1 // pred_check
      _
    $region59: #{forward.1} parent=1 // pred_check_branch
      %103 = sbr.rel (0) target = $region61
    $region60: #{forward.1} parent=1 // pred_region
      %s105 = ssub.s32 10752, 10752
      %106 = vsyncadd [#allocation11], %s105
      %s107 = sshll.u32 [#allocation10], 4
      %s108 = int_to_ptr.vmem [resolvable:$true] %s107
      %113 = dma.hbm_to_vmem [thread:$0]  %s14, 10752, %s108, [#allocation11], 128, 128, 8
    $region61: #{forward.1} parent=1 // pred_fallthru
      _
    // Predicated region
    $region62: #{forward.1} parent=1 // pred_check
      _
    $region63: #{forward.1} parent=1 // pred_check_branch
      %115 = sbr.rel (0) target = $region65
    $region64: #{forward.1} parent=1 // pred_region
      _
    $region65: #{forward.1} parent=1 // pred_fallthru
      _
    // Predicated region
    $region66: #{forward.1} parent=1 // pred_check
      _
    $region67: #{forward.1} parent=1 // pred_check_branch
      %117 = sbr.rel (0) target = $region69
    $region68: #{forward.1} parent=1 // pred_region
      _
    $region69: #{forward.1} parent=1 // pred_fallthru
      _
    // Predicated region
    $region70: #{forward.1} parent=1 // pred_check
      _
    $region71: #{forward.1} parent=1 // pred_check_branch
      %119 = sbr.rel (0) target = $region73
    $region72: #{forward.1} parent=1 // pred_region
      %s121 = ssub.s32 5376, 5376
      %122 = vsyncadd [#allocation11], %s121
      %s123 = sshll.u32 [#allocation12], 4
      %s124 = int_to_ptr.vmem [resolvable:$true] %s123
      %129 = dma.hbm_to_vmem [thread:$0]  %s17, 5376, %s124, [#allocation11], 64, 64, 4
    $region73: #{forward.1} parent=1 // pred_fallthru
      _
    // Predicated region
    $region74: #{forward.1} parent=1 // pred_check
      _
    $region75: #{forward.1} parent=1 // pred_check_branch
      %131 = sbr.rel (0) target = $region77
    $region76: #{forward.1} parent=1 // pred_region
      _
    $region77: #{forward.1} parent=1 // pred_fallthru
      _
    // Predicated region
    $region78: #{forward.1} parent=1 // pred_check
      _
    $region79: #{forward.1} parent=1 // pred_check_branch
      %133 = sbr.rel (0) target = $region81
    $region80: #{forward.1} parent=1 // pred_region
      %134 = dma.done [#allocation3], 32
    $region81: #{forward.1} parent=1 // pred_fallthru
      _
    // Predicated region
    $region82: #{forward.1} parent=1 // pred_check
      _
    $region83: #{forward.1} parent=1 // pred_check_branch
      %136 = sbr.rel (0) target = $region85
    $region84: #{forward.1} parent=1 // pred_region
      %137 = dma.done [#allocation5], 10752
    $region85: #{forward.1} parent=1 // pred_fallthru
      _
    // Predicated region
    $region86: #{forward.1} parent=1 // pred_check
      _
    $region87: #{forward.1} parent=1 // pred_check_branch
      %139 = sbr.rel (0) target = $region89
    $region88: #{forward.1} parent=1 // pred_region
      %140 = dma.done [#allocation5], 32
    $region89: #{forward.1} parent=1 // pred_fallthru
      _
    // Predicated region
    $region90: #{forward.1} parent=1 // pred_check
      _
    $region91: #{forward.1} parent=1 // pred_check_branch
      %142 = sbr.rel (0) target = $region93
    $region92: #{forward.1} parent=1 // pred_region
      %143 = dma.done [#allocation8], 12544
    $region93: #{forward.1} parent=1 // pred_fallthru
      _
    // Predicated region
    $region94: #{forward.1} parent=1 // pred_check
      _
    $region95: #{forward.1} parent=1 // pred_check_branch
      %145 = sbr.rel (0) target = $region97
    $region96: #{forward.1} parent=1 // pred_region
      %146 = dma.done [#allocation8], 7168
    $region97: #{forward.1} parent=1 // pred_fallthru
      _
    // Predicated region
    $region98: #{forward.1} parent=1 // pred_check
      _
    $region99: #{forward.1} parent=1 // pred_check_branch
      %148 = sbr.rel (0) target = $region101
    $region100: #{forward.1} parent=1 // pred_region
      %149 = dma.done [#allocation11], 10752
    $region101: #{forward.1} parent=1 // pred_fallthru
      _
    // Predicated region
    $region102: #{forward.1} parent=1 // pred_check
      _
    $region103: #{forward.1} parent=1 // pred_check_branch
      %151 = sbr.rel (0) target = $region105
    $region104: #{forward.1} parent=1 // pred_region
      %152 = dma.done [#allocation11], 5376
    $region105: #{forward.1} parent=1 // pred_fallthru
      _
    %v154 = vld [vmem:[%s0] sm:$0xff]
    %v155 = vld [vmem:[%s0 + $0x8] sm:$0xff]
    %v156 = vld [vmem:[%s0 + $0x10] sm:$0xff]
    %v157 = vld [vmem:[%s0 + $0x18] sm:$0xf]
    %v158 = vpack.c.bf16 %v155, %v154
    %v159 = vpack.c.bf16 %v157, %v156
    %v160 = vld [vmem:[%s1] sm:$0xf]
    %v161 = vld [vmem:[%s1 + $0x4] sm:$0x7]
    %v164 = vunpack.c.l.b16 %v160
    %v165 = vunpack.c.l.b16 %v161
    %v166 = vpack.c.b16 %v165, %v164
    %vm167 = vcmask 228352
    %v169 = vsel %vm167, %v166, 0
    %vm171 = vcmask 1045504
    %v173 = vsel %vm171, %v159, 0
    %175 = vmatprep.subr.bf16.mxu0 0
    %176 = vmatpush1.bf16.msra.mxu0 0
    %177 = vmatprep.subr.bf16.mxu0 0
    %178 = vmatpush1.bf16.msra.mxu0 0
    %179 = vmatprep.subr.bf16.mxu0 0
    %180 = vmatpush1.bf16.msra.mxu0 0
    %181 = vmatprep.subr.bf16.mxu0 0
    %182 = vmatpush1.bf16.msra.mxu0 0
    %183 = vmatprep.subr.bf16.mxu0 0
    %184 = vmatpush1.bf16.msra.mxu0 0
    %185 = vmatprep.subr.bf16.mxu0 0
    %186 = vmatpush1.bf16.msra.mxu0 0
    %187 = vmatprep.subr.bf16.mxu0 0
    %188 = vmatpush1.bf16.msra.mxu0 %v173
    %189 = vmatprep.subr.bf16.mxu0 0
    %190 = vmatpush1.bf16.msra.mxu0 %v158
    %191 = vmatprep.subr.bf16.mxu0 0
    %192 = vmatpush2.bf16.msra.mxu0 0
    %193 = vmatprep.subr.bf16.mxu0 0
    %194 = vmatpush2.bf16.msra.mxu0 0
    %195 = vmatprep.subr.bf16.mxu0 0
    %196 = vmatpush2.bf16.msra.mxu0 0
    %197 = vmatprep.subr.bf16.mxu0 0
    %198 = vmatpush2.bf16.msra.mxu0 0
    %199 = vmatprep.subr.bf16.mxu0 0
    %200 = vmatpush2.bf16.msra.mxu0 0
    %201 = vmatprep.subr.bf16.mxu0 0
    %202 = vmatpush2.bf16.msra.mxu0 0
    %203 = vmatprep.subr.bf16.mxu0 0
    %204 = vmatpush2.bf16.msra.mxu0 0
    %205 = vmatprep.subr.bf16.mxu0 0
    %206 = vmatpush2.bf16.msra.mxu0 0
    %207 = vmatprep.mubr.bf16.mxu0 0
    %208 = vmatmul.mubr.bf16.gmra.mxu0 %v169
    %v209 = vpop.f32.mrf.mxu0
    %v210 = vadd.f32 0.0, %v209
    %v211 = vpop.f32.mrf.mxu0
    %v212 = vpop.f32.mrf.mxu0
    %v213 = vadd.f32 0.0, %v212
    %v214 = vpop.f32.mrf.mxu0
    %215 = vdwg.mxu0
    %v216 = vpack.c.bf16 %v213, %v210
    %v217 = vld [vmem:[%s2] sm:$0xff]
    %v218 = vld [vmem:[%s2 + $0x8] sm:$0xff]
    %v219 = vld [vmem:[%s2 + $0x10] sm:$0xff]
    %v220 = vld [vmem:[%s2 + $0x18] sm:$0x33]
    %s221 = scalar_lea.vmem %s1, 8
    %v222 = vld [vmem:[%s221] sm:$0xf]
    %v223 = vld [vmem:[%s221 + $0x4] sm:$0x7]
    %v226 = vunpack.c.l.b16 %v222
    %v227 = vunpack.c.l.b16 %v223
    %v228 = vpack.c.b16 %v227, %v226
    %v230 = vsel %vm167, %v228, 0
    %232 = vmatprep.subr.bf16.mxu0 0
    %233 = vmatpush1.bf16.msra.mxu0 0
    %234 = vmatprep.subr.bf16.mxu0 0
    %235 = vmatpush1.bf16.msra.mxu0 0
    %236 = vmatprep.subr.bf16.mxu0 0
    %237 = vmatpush1.bf16.msra.mxu0 0
    %238 = vmatprep.subr.bf16.mxu0 0
    %239 = vmatpush1.bf16.msra.mxu0 0
    %240 = vmatprep.subr.bf16.mxu0 0
    %241 = vmatpush1.bf16.msra.mxu0 0
    %242 = vmatprep.subr.bf16.mxu0 0
    %243 = vmatpush1.bf16.msra.mxu0 0
    %244 = vmatprep.subr.bf16.mxu0 0
    %245 = vmatpush1.bf16.msra.mxu0 %v173
    %246 = vmatprep.subr.bf16.mxu0 0
    %247 = vmatpush1.bf16.msra.mxu0 %v158
    %248 = vmatprep.subr.bf16.mxu0 0
    %249 = vmatpush2.bf16.msra.mxu0 0
    %250 = vmatprep.subr.bf16.mxu0 0
    %251 = vmatpush2.bf16.msra.mxu0 0
    %252 = vmatprep.subr.bf16.mxu0 0
    %253 = vmatpush2.bf16.msra.mxu0 0
    %254 = vmatprep.subr.bf16.mxu0 0
    %255 = vmatpush2.bf16.msra.mxu0 0
    %256 = vmatprep.subr.bf16.mxu0 0
    %257 = vmatpush2.bf16.msra.mxu0 0
    %258 = vmatprep.subr.bf16.mxu0 0
    %259 = vmatpush2.bf16.msra.mxu0 0
    %260 = vmatprep.subr.bf16.mxu0 0
    %261 = vmatpush2.bf16.msra.mxu0 0
    %262 = vmatprep.subr.bf16.mxu0 0
    %263 = vmatpush2.bf16.msra.mxu0 0
    %264 = vmatprep.mubr.bf16.mxu0 0
    %265 = vmatmul.mubr.bf16.gmra.mxu0 %v230
    %v266 = vpop.f32.mrf.mxu0
    %v267 = vadd.f32 0.0, %v266
    %v268 = vpop.f32.mrf.mxu0
    %v269 = vpop.f32.mrf.mxu0
    %v270 = vadd.f32 0.0, %v269
    %v271 = vpop.f32.mrf.mxu0
    %272 = vdwg.mxu0
    %v273 = vpack.c.bf16 %v270, %v267
    %s274 = scalar_lea.vmem %s2, 32
    %v275 = vld [vmem:[%s274] sm:$0xff]
    %v276 = vld [vmem:[%s274 + $0x8] sm:$0xff]
    %v277 = vld [vmem:[%s274 + $0x10] sm:$0xff]
    %v278 = vld [vmem:[%s274 + $0x18] sm:$0x33]
    %v283 = vunpack.c.l.b16 %v275
    %v284 = vunpack.c.h.b16 %v275
    %v285 = vunpack.c.l.b16 %v276
    %v286 = vunpack.c.h.b16 %v276
    %v287 = vunpack.c.l.b16 %v277
    %v288 = vunpack.c.h.b16 %v277
    %v289 = vunpack.c.l.b16 %v278
    %v290 = vunpack.c.h.b16 %v278
    %v291 = vpack.c.b16 %v285, %v283
    %v292 = vpack.c.b16 %v286, %v284
    %v293 = vpack.c.b16 %v289, %v287
    %v294 = vpack.c.b16 %v290, %v288
    %v298 = vsel %vm167, %v273, 0
    %v301 = vsel %vm171, %v293, 0
    %v304 = vsel %vm171, %v294, 0
    %306 = vmatprep.subr.bf16.mxu0 0
    %307 = vmatpush1.bf16.msra.mxu0 0
    %308 = vmatprep.subr.bf16.mxu0 0
    %309 = vmatpush1.bf16.msra.mxu0 0
    %310 = vmatprep.subr.bf16.mxu0 0
    %311 = vmatpush1.bf16.msra.mxu0 0
    %312 = vmatprep.subr.bf16.mxu0 0
    %313 = vmatpush1.bf16.msra.mxu0 0
    %314 = vmatprep.subr.bf16.mxu0 0
    %315 = vmatpush1.bf16.msra.mxu0 0
    %316 = vmatprep.subr.bf16.mxu0 0
    %317 = vmatpush1.bf16.msra.mxu0 0
    %318 = vmatprep.subr.bf16.mxu0 %v304
    %319 = vmatpush1.bf16.msra.mxu0 %v301
    %320 = vmatprep.subr.bf16.mxu0 %v292
    %321 = vmatpush1.bf16.msra.mxu0 %v291
    %322 = vmatprep.subr.bf16.mxu0 0
    %323 = vmatpush2.bf16.msra.mxu0 0
    %324 = vmatprep.subr.bf16.mxu0 0
    %325 = vmatpush2.bf16.msra.mxu0 0
    %326 = vmatprep.subr.bf16.mxu0 0
    %327 = vmatpush2.bf16.msra.mxu0 0
    %328 = vmatprep.subr.bf16.mxu0 0
    %329 = vmatpush2.bf16.msra.mxu0 0
    %330 = vmatprep.subr.bf16.mxu0 0
    %331 = vmatpush2.bf16.msra.mxu0 0
    %332 = vmatprep.subr.bf16.mxu0 0
    %333 = vmatpush2.bf16.msra.mxu0 0
    %334 = vmatprep.subr.bf16.mxu0 0
    %335 = vmatpush2.bf16.msra.mxu0 0
    %336 = vmatprep.subr.bf16.mxu0 0
    %337 = vmatpush2.bf16.msra.mxu0 0
    %338 = vmatprep.mubr.bf16.mxu0 0
    %339 = vmatmul.mubr.bf16.gmra.mxu0 %v298
    %v340 = vpop.f32.mrf.mxu0
    %v341 = vadd.f32 0.0, %v340
    %v342 = vpop.f32.mrf.mxu0
    %v343 = vadd.f32 0.0, %v342
    %v344 = vpop.f32.mrf.mxu0
    %v345 = vadd.f32 0.0, %v344
    %v346 = vpop.f32.mrf.mxu0
    %v347 = vadd.f32 0.0, %v346
    %348 = vdwg.mxu0
    %v353 = vunpack.c.l.b16 %v217
    %v354 = vunpack.c.h.b16 %v217
    %v355 = vunpack.c.l.b16 %v218
    %v356 = vunpack.c.h.b16 %v218
    %v357 = vunpack.c.l.b16 %v219
    %v358 = vunpack.c.h.b16 %v219
    %v359 = vunpack.c.l.b16 %v220
    %v360 = vunpack.c.h.b16 %v220
    %v361 = vpack.c.b16 %v355, %v353
    %v362 = vpack.c.b16 %v356, %v354
    %v363 = vpack.c.b16 %v359, %v357
    %v364 = vpack.c.b16 %v360, %v358
    %v368 = vsel %vm167, %v216, 0
    %v371 = vsel %vm171, %v363, 0
    %v374 = vsel %vm171, %v364, 0
    %376 = vmatprep.subr.bf16.mxu0 0
    %377 = vmatpush1.bf16.msra.mxu0 0
    %378 = vmatprep.subr.bf16.mxu0 0
    %379 = vmatpush1.bf16.msra.mxu0 0
    %380 = vmatprep.subr.bf16.mxu0 0
    %381 = vmatpush1.bf16.msra.mxu0 0
    %382 = vmatprep.subr.bf16.mxu0 0
    %383 = vmatpush1.bf16.msra.mxu0 0
    %384 = vmatprep.subr.bf16.mxu0 0
    %385 = vmatpush1.bf16.msra.mxu0 0
    %386 = vmatprep.subr.bf16.mxu0 0
    %387 = vmatpush1.bf16.msra.mxu0 0
    %388 = vmatprep.subr.bf16.mxu0 %v374
    %389 = vmatpush1.bf16.msra.mxu0 %v371
    %390 = vmatprep.subr.bf16.mxu0 %v362
    %391 = vmatpush1.bf16.msra.mxu0 %v361
    %392 = vmatprep.subr.bf16.mxu0 0
    %393 = vmatpush2.bf16.msra.mxu0 0
    %394 = vmatprep.subr.bf16.mxu0 0
    %395 = vmatpush2.bf16.msra.mxu0 0
    %396 = vmatprep.subr.bf16.mxu0 0
    %397 = vmatpush2.bf16.msra.mxu0 0
    %398 = vmatprep.subr.bf16.mxu0 0
    %399 = vmatpush2.bf16.msra.mxu0 0
    %400 = vmatprep.subr.bf16.mxu0 0
    %401 = vmatpush2.bf16.msra.mxu0 0
    %402 = vmatprep.subr.bf16.mxu0 0
    %403 = vmatpush2.bf16.msra.mxu0 0
    %404 = vmatprep.subr.bf16.mxu0 0
    %405 = vmatpush2.bf16.msra.mxu0 0
    %406 = vmatprep.subr.bf16.mxu0 0
    %407 = vmatpush2.bf16.msra.mxu0 0
    %408 = vmatprep.mubr.bf16.mxu0 0
    %409 = vmatmul.mubr.bf16.gmra.mxu0 %v368
    %v410 = vpop.f32.mrf.mxu0
    %v411 = vadd.f32 %v341, %v410
    %v412 = vpop.f32.mrf.mxu0
    %v413 = vadd.f32 %v343, %v412
    %v414 = vpop.f32.mrf.mxu0
    %v415 = vadd.f32 %v345, %v414
    %v416 = vpop.f32.mrf.mxu0
    %v417 = vadd.f32 %v347, %v416
    %418 = vdwg.mxu0
    %s419 = scalar_lea.vmem %s1, 16
    %v420 = vld [vmem:[%s419] sm:$0xf]
    %v421 = vld [vmem:[%s419 + $0x4] sm:$0x7]
    %v424 = vunpack.c.l.b16 %v420
    %v425 = vunpack.c.l.b16 %v421
    %v426 = vpack.c.b16 %v425, %v424
    %v428 = vsel %vm167, %v426, 0
    %430 = vmatprep.subr.bf16.mxu0 0
    %431 = vmatpush1.bf16.msra.mxu0 0
    %432 = vmatprep.subr.bf16.mxu0 0
    %433 = vmatpush1.bf16.msra.mxu0 0
    %434 = vmatprep.subr.bf16.mxu0 0
    %435 = vmatpush1.bf16.msra.mxu0 0
    %436 = vmatprep.subr.bf16.mxu0 0
    %437 = vmatpush1.bf16.msra.mxu0 0
    %438 = vmatprep.subr.bf16.mxu0 0
    %439 = vmatpush1.bf16.msra.mxu0 0
    %440 = vmatprep.subr.bf16.mxu0 0
    %441 = vmatpush1.bf16.msra.mxu0 0
    %442 = vmatprep.subr.bf16.mxu0 0
    %443 = vmatpush1.bf16.msra.mxu0 %v173
    %444 = vmatprep.subr.bf16.mxu0 0
    %445 = vmatpush1.bf16.msra.mxu0 %v158
    %446 = vmatprep.subr.bf16.mxu0 0
    %447 = vmatpush2.bf16.msra.mxu0 0
    %448 = vmatprep.subr.bf16.mxu0 0
    %449 = vmatpush2.bf16.msra.mxu0 0
    %450 = vmatprep.subr.bf16.mxu0 0
    %451 = vmatpush2.bf16.msra.mxu0 0
    %452 = vmatprep.subr.bf16.mxu0 0
    %453 = vmatpush2.bf16.msra.mxu0 0
    %454 = vmatprep.subr.bf16.mxu0 0
    %455 = vmatpush2.bf16.msra.mxu0 0
    %456 = vmatprep.subr.bf16.mxu0 0
    %457 = vmatpush2.bf16.msra.mxu0 0
    %458 = vmatprep.subr.bf16.mxu0 0
    %459 = vmatpush2.bf16.msra.mxu0 0
    %460 = vmatprep.subr.bf16.mxu0 0
    %461 = vmatpush2.bf16.msra.mxu0 0
    %462 = vmatprep.mubr.bf16.mxu0 0
    %463 = vmatmul.mubr.bf16.gmra.mxu0 %v428
    %v464 = vpop.f32.mrf.mxu0
    %v465 = vadd.f32 0.0, %v464
    %v466 = vpop.f32.mrf.mxu0
    %v467 = vpop.f32.mrf.mxu0
    %v468 = vadd.f32 0.0, %v467
    %v469 = vpop.f32.mrf.mxu0
    %470 = vdwg.mxu0
    %v471 = vpack.c.bf16 %v468, %v465
    %s472 = scalar_lea.vmem %s2, 64
    %v473 = vld [vmem:[%s472] sm:$0xff]
    %v474 = vld [vmem:[%s472 + $0x8] sm:$0xff]
    %v475 = vld [vmem:[%s472 + $0x10] sm:$0xff]
    %v476 = vld [vmem:[%s472 + $0x18] sm:$0x33]
    %v481 = vunpack.c.l.b16 %v473
    %v482 = vunpack.c.h.b16 %v473
    %v483 = vunpack.c.l.b16 %v474
    %v484 = vunpack.c.h.b16 %v474
    %v485 = vunpack.c.l.b16 %v475
    %v486 = vunpack.c.h.b16 %v475
    %v487 = vunpack.c.l.b16 %v476
    %v488 = vunpack.c.h.b16 %v476
    %v489 = vpack.c.b16 %v483, %v481
    %v490 = vpack.c.b16 %v484, %v482
    %v491 = vpack.c.b16 %v487, %v485
    %v492 = vpack.c.b16 %v488, %v486
    %v496 = vsel %vm167, %v471, 0
    %v499 = vsel %vm171, %v491, 0
    %v502 = vsel %vm171, %v492, 0
    %504 = vmatprep.subr.bf16.mxu0 0
    %505 = vmatpush1.bf16.msra.mxu0 0
    %506 = vmatprep.subr.bf16.mxu0 0
    %507 = vmatpush1.bf16.msra.mxu0 0
    %508 = vmatprep.subr.bf16.mxu0 0
    %509 = vmatpush1.bf16.msra.mxu0 0
    %510 = vmatprep.subr.bf16.mxu0 0
    %511 = vmatpush1.bf16.msra.mxu0 0
    %512 = vmatprep.subr.bf16.mxu0 0
    %513 = vmatpush1.bf16.msra.mxu0 0
    %514 = vmatprep.subr.bf16.mxu0 0
    %515 = vmatpush1.bf16.msra.mxu0 0
    %516 = vmatprep.subr.bf16.mxu0 %v502
    %517 = vmatpush1.bf16.msra.mxu0 %v499
    %518 = vmatprep.subr.bf16.mxu0 %v490
    %519 = vmatpush1.bf16.msra.mxu0 %v489
    %520 = vmatprep.subr.bf16.mxu0 0
    %521 = vmatpush2.bf16.msra.mxu0 0
    %522 = vmatprep.subr.bf16.mxu0 0
    %523 = vmatpush2.bf16.msra.mxu0 0
    %524 = vmatprep.subr.bf16.mxu0 0
    %525 = vmatpush2.bf16.msra.mxu0 0
    %526 = vmatprep.subr.bf16.mxu0 0
    %527 = vmatpush2.bf16.msra.mxu0 0
    %528 = vmatprep.subr.bf16.mxu0 0
    %529 = vmatpush2.bf16.msra.mxu0 0
    %530 = vmatprep.subr.bf16.mxu0 0
    %531 = vmatpush2.bf16.msra.mxu0 0
    %532 = vmatprep.subr.bf16.mxu0 0
    %533 = vmatpush2.bf16.msra.mxu0 0
    %534 = vmatprep.subr.bf16.mxu0 0
    %535 = vmatpush2.bf16.msra.mxu0 0
    %536 = vmatprep.mubr.bf16.mxu0 0
    %537 = vmatmul.mubr.bf16.gmra.mxu0 %v496
    %v538 = vpop.f32.mrf.mxu0
    %v539 = vadd.f32 0.0, %v538
    %v540 = vpop.f32.mrf.mxu0
    %v541 = vadd.f32 0.0, %v540
    %v542 = vpop.f32.mrf.mxu0
    %v543 = vadd.f32 0.0, %v542
    %v544 = vpop.f32.mrf.mxu0
    %v545 = vadd.f32 0.0, %v544
    %546 = vdwg.mxu0
    %v547 = vadd.f32 %v411, %v539
    %v548 = vadd.f32 %v413, %v541
    %v549 = vadd.f32 %v415, %v543
    %v550 = vadd.f32 %v417, %v545
    %v551 = vld [vmem:[#allocation2] sm:$0x3]
    %v553 = vlaneseq
    %v554 = vshrl.u32 %v553, 7
    %v555 = vsub.s32 0, %v554
    %v556 = vrot.slane %v551, %v555
    %v557 = vlaneseq
    %v558 = vshrl.u32 %v557, 7
    %v559 = vsub.s32 1, %v558
    %v560 = vrot.slane %v551, %v559
    %v563 = vadd.f32 %v547, %v556
    %v564 = vadd.f32 %v548, %v560
    %v565 = vadd.f32 %v549, %v556
    %v566 = vadd.f32 %v550, %v560
    %v567 = vmax.f32 %v563, 0.0
    %v568 = vmax.f32 %v564, 0.0
    %v569 = vmax.f32 %v565, 0.0
    %v570 = vmax.f32 %v566, 0.0
    %v571 = vpack.c.bf16 %v569, %v567
    %v572 = vpack.c.bf16 %v570, %v568
    %v573 = vld [vmem:[%s4] sm:$0xf]
    %vm574 = vcmask 113664
    %v576 = vsel %vm574, %v573, 0
    %vm578 = vcmask 1046528
    %v580 = vsel %vm578, %v571, 0
    %v583 = vsel %vm578, %v572, 0
    %585 = vmatprep.subr.bf16.mxu0 0
    %586 = vmatpush1.bf16.msra.mxu0 0
    %587 = vmatprep.subr.bf16.mxu0 0
    %588 = vmatpush1.bf16.msra.mxu0 0
    %589 = vmatprep.subr.bf16.mxu0 0
    %590 = vmatpush1.bf16.msra.mxu0 0
    %591 = vmatprep.subr.bf16.mxu0 0
    %592 = vmatpush1.bf16.msra.mxu0 0
    %593 = vmatprep.subr.bf16.mxu0 0
    %594 = vmatpush1.bf16.msra.mxu0 0
    %595 = vmatprep.subr.bf16.mxu0 0
    %596 = vmatpush1.bf16.msra.mxu0 0
    %597 = vmatprep.subr.bf16.mxu0 0
    %598 = vmatpush1.bf16.msra.mxu0 0
    %599 = vmatprep.subr.bf16.mxu0 %v583
    %600 = vmatpush1.bf16.msra.mxu0 %v580
    %601 = vmatprep.subr.bf16.mxu0 0
    %602 = vmatpush2.bf16.msra.mxu0 0
    %603 = vmatprep.subr.bf16.mxu0 0
    %604 = vmatpush2.bf16.msra.mxu0 0
    %605 = vmatprep.subr.bf16.mxu0 0
    %606 = vmatpush2.bf16.msra.mxu0 0
    %607 = vmatprep.subr.bf16.mxu0 0
    %608 = vmatpush2.bf16.msra.mxu0 0
    %609 = vmatprep.subr.bf16.mxu0 0
    %610 = vmatpush2.bf16.msra.mxu0 0
    %611 = vmatprep.subr.bf16.mxu0 0
    %612 = vmatpush2.bf16.msra.mxu0 0
    %613 = vmatprep.subr.bf16.mxu0 0
    %614 = vmatpush2.bf16.msra.mxu0 0
    %615 = vmatprep.subr.bf16.mxu0 0
    %616 = vmatpush2.bf16.msra.mxu0 0
    %617 = vmatprep.mubr.bf16.mxu0 0
    %618 = vmatmul.mubr.bf16.gmra.mxu0 %v576
    %v619 = vpop.f32.mrf.mxu0
    %v620 = vadd.f32 0.0, %v619
    %v621 = vpop.f32.mrf.mxu0
    %v622 = vadd.f32 0.0, %v621
    %v623 = vpop.f32.mrf.mxu0
    %v624 = vpop.f32.mrf.mxu0
    %625 = vdwg.mxu0
    %v626 = vpack.c.bf16 %v620, %v620
    %v627 = vpack.c.bf16 %v622, %v622
    %v628 = vld [vmem:[#allocation4] sm:$0xff]
    %v629 = vld [vmem:[#allocation4 + $0x8] sm:$0xff]
    %v630 = vld [vmem:[#allocation4 + $0x10] sm:$0xff]
    %v631 = vld [vmem:[#allocation4 + $0x18] sm:$0xff]
    %v632 = vld [vmem:[#allocation4 + $0x20] sm:$0xff]
    %v633 = vld [vmem:[#allocation4 + $0x28] sm:$0xff]
    %v634 = vld [vmem:[#allocation4 + $0x30] sm:$0xff]
    %v635 = vld [vmem:[#allocation4 + $0x38] sm:$0xff]
    %v636 = vld [vmem:[#allocation4 + $0x40] sm:$0xff]
    %v637 = vld [vmem:[#allocation4 + $0x48] sm:$0xff]
    %v638 = vld [vmem:[#allocation4 + $0x50] sm:$0xff]
    %v639 = vld [vmem:[#allocation4 + $0x58] sm:$0xff]
    %v640 = vld [vmem:[#allocation4 + $0x60] sm:$0xff]
    %v641 = vld [vmem:[#allocation4 + $0x68] sm:$0xff]
    %v642 = vld [vmem:[#allocation4 + $0x70] sm:$0xff]
    %v643 = vld [vmem:[#allocation4 + $0x78] sm:$0xff]
    %v644 = vld [vmem:[#allocation4 + $0x80] sm:$0xff]
    %v645 = vld [vmem:[#allocation4 + $0x88] sm:$0xff]
    %v646 = vld [vmem:[#allocation4 + $0x90] sm:$0xff]
    %v647 = vld [vmem:[#allocation4 + $0x98] sm:$0xff]
    %v648 = vld [vmem:[#allocation4 + $0xa0] sm:$0xff]
    %v649 = vld [vmem:[#allocation4 + $0xa8] sm:$0xff]
    %v650 = vld [vmem:[#allocation4 + $0xb0] sm:$0xff]
    %v651 = vld [vmem:[#allocation4 + $0xb8] sm:$0xff]
    %v652 = vld [vmem:[#allocation4 + $0xc0] sm:$0xff]
    %v653 = vld [vmem:[#allocation4 + $0xc8] sm:$0xff]
    %v654 = vld [vmem:[#allocation4 + $0xd0] sm:$0xff]
    %v655 = vld [vmem:[#allocation4 + $0xd8] sm:$0xff]
    %s656 = scalar_lea.vmem %s4, 4
    %v657 = vld [vmem:[%s656] sm:$0xf]
    %v659 = vsel %vm574, %v657, 0
    %661 = vmatprep.subr.bf16.mxu0 0
    %662 = vmatpush1.bf16.msra.mxu0 0
    %663 = vmatprep.subr.bf16.mxu0 0
    %664 = vmatpush1.bf16.msra.mxu0 0
    %665 = vmatprep.subr.bf16.mxu0 0
    %666 = vmatpush1.bf16.msra.mxu0 0
    %667 = vmatprep.subr.bf16.mxu0 0
    %668 = vmatpush1.bf16.msra.mxu0 0
    %669 = vmatprep.subr.bf16.mxu0 0
    %670 = vmatpush1.bf16.msra.mxu0 0
    %671 = vmatprep.subr.bf16.mxu0 0
    %672 = vmatpush1.bf16.msra.mxu0 0
    %673 = vmatprep.subr.bf16.mxu0 0
    %674 = vmatpush1.bf16.msra.mxu0 0
    %675 = vmatprep.subr.bf16.mxu0 %v583
    %676 = vmatpush1.bf16.msra.mxu0 %v580
    %677 = vmatprep.subr.bf16.mxu0 0
    %678 = vmatpush2.bf16.msra.mxu0 0
    %679 = vmatprep.subr.bf16.mxu0 0
    %680 = vmatpush2.bf16.msra.mxu0 0
    %681 = vmatprep.subr.bf16.mxu0 0
    %682 = vmatpush2.bf16.msra.mxu0 0
    %683 = vmatprep.subr.bf16.mxu0 0
    %684 = vmatpush2.bf16.msra.mxu0 0
    %685 = vmatprep.subr.bf16.mxu0 0
    %686 = vmatpush2.bf16.msra.mxu0 0
    %687 = vmatprep.subr.bf16.mxu0 0
    %688 = vmatpush2.bf16.msra.mxu0 0
    %689 = vmatprep.subr.bf16.mxu0 0
    %690 = vmatpush2.bf16.msra.mxu0 0
    %691 = vmatprep.subr.bf16.mxu0 0
    %692 = vmatpush2.bf16.msra.mxu0 0
    %693 = vmatprep.mubr.bf16.mxu0 0
    %694 = vmatmul.mubr.bf16.gmra.mxu0 %v659
    %v695 = vpop.f32.mrf.mxu0
    %v696 = vadd.f32 0.0, %v695
    %v697 = vpop.f32.mrf.mxu0
    %v698 = vadd.f32 0.0, %v697
    %v699 = vpop.f32.mrf.mxu0
    %v700 = vpop.f32.mrf.mxu0
    %701 = vdwg.mxu0
    %v702 = vpack.c.bf16 %v696, %v696
    %v703 = vpack.c.bf16 %v698, %v698
    %s704 = scalar_lea.vmem [#allocation4], 224
    %v705 = vld [vmem:[%s704] sm:$0xff]
    %v706 = vld [vmem:[%s704 + $0x8] sm:$0xff]
    %v707 = vld [vmem:[%s704 + $0x10] sm:$0xff]
    %v708 = vld [vmem:[%s704 + $0x18] sm:$0xff]
    %v709 = vld [vmem:[%s704 + $0x20] sm:$0xff]
    %v710 = vld [vmem:[%s704 + $0x28] sm:$0xff]
    %v711 = vld [vmem:[%s704 + $0x30] sm:$0xff]
    %v712 = vld [vmem:[%s704 + $0x38] sm:$0xff]
    %v713 = vld [vmem:[%s704 + $0x40] sm:$0xff]
    %v714 = vld [vmem:[%s704 + $0x48] sm:$0xff]
    %v715 = vld [vmem:[%s704 + $0x50] sm:$0xff]
    %v716 = vld [vmem:[%s704 + $0x58] sm:$0xff]
    %v717 = vld [vmem:[%s704 + $0x60] sm:$0xff]
    %v718 = vld [vmem:[%s704 + $0x68] sm:$0xff]
    %v719 = vld [vmem:[%s704 + $0x70] sm:$0xff]
    %v720 = vld [vmem:[%s704 + $0x78] sm:$0xff]
    %v721 = vld [vmem:[%s704 + $0x80] sm:$0xff]
    %v722 = vld [vmem:[%s704 + $0x88] sm:$0xff]
    %v723 = vld [vmem:[%s704 + $0x90] sm:$0xff]
    %v724 = vld [vmem:[%s704 + $0x98] sm:$0xff]
    %v725 = vld [vmem:[%s704 + $0xa0] sm:$0xff]
    %v726 = vld [vmem:[%s704 + $0xa8] sm:$0xff]
    %v727 = vld [vmem:[%s704 + $0xb0] sm:$0xff]
    %v728 = vld [vmem:[%s704 + $0xb8] sm:$0xff]
    %v729 = vld [vmem:[%s704 + $0xc0] sm:$0xff]
    %v730 = vld [vmem:[%s704 + $0xc8] sm:$0xff]
    %v731 = vld [vmem:[%s704 + $0xd0] sm:$0xff]
    %v732 = vld [vmem:[%s704 + $0xd8] sm:$0xff]
    %v761 = vunpack.c.l.b16 %v705
    %v762 = vunpack.c.h.b16 %v705
    %v763 = vunpack.c.l.b16 %v706
    %v764 = vunpack.c.h.b16 %v706
    %v765 = vunpack.c.l.b16 %v707
    %v766 = vunpack.c.h.b16 %v707
    %v767 = vunpack.c.l.b16 %v708
    %v768 = vunpack.c.h.b16 %v708
    %v769 = vunpack.c.l.b16 %v709
    %v770 = vunpack.c.h.b16 %v709
    %v771 = vunpack.c.l.b16 %v710
    %v772 = vunpack.c.h.b16 %v710
    %v773 = vunpack.c.l.b16 %v711
    %v774 = vunpack.c.h.b16 %v711
    %v775 = vunpack.c.l.b16 %v712
    %v776 = vunpack.c.h.b16 %v712
    %v777 = vunpack.c.l.b16 %v713
    %v778 = vunpack.c.h.b16 %v713
    %v779 = vunpack.c.l.b16 %v714
    %v780 = vunpack.c.h.b16 %v714
    %v781 = vunpack.c.l.b16 %v715
    %v782 = vunpack.c.h.b16 %v715
    %v783 = vunpack.c.l.b16 %v716
    %v784 = vunpack.c.h.b16 %v716
    %v785 = vunpack.c.l.b16 %v717
    %v786 = vunpack.c.h.b16 %v717
    %v787 = vunpack.c.l.b16 %v718
    %v788 = vunpack.c.h.b16 %v718
    %v789 = vunpack.c.l.b16 %v719
    %v790 = vunpack.c.h.b16 %v719
    %v791 = vunpack.c.l.b16 %v720
    %v792 = vunpack.c.h.b16 %v720
    %v793 = vunpack.c.l.b16 %v721
    %v794 = vunpack.c.h.b16 %v721
    %v795 = vunpack.c.l.b16 %v722
    %v796 = vunpack.c.h.b16 %v722
    %v797 = vunpack.c.l.b16 %v723
    %v798 = vunpack.c.h.b16 %v723
    %v799 = vunpack.c.l.b16 %v724
    %v800 = vunpack.c.h.b16 %v724
    %v801 = vunpack.c.l.b16 %v725
    %v802 = vunpack.c.h.b16 %v725
    %v803 = vunpack.c.l.b16 %v726
    %v804 = vunpack.c.h.b16 %v726
    %v805 = vunpack.c.l.b16 %v727
    %v806 = vunpack.c.h.b16 %v727
    %v807 = vunpack.c.l.b16 %v728
    %v808 = vunpack.c.h.b16 %v728
    %v809 = vunpack.c.l.b16 %v729
    %v810 = vunpack.c.h.b16 %v729
    %v811 = vunpack.c.l.b16 %v730
    %v812 = vunpack.c.h.b16 %v730
    %v813 = vunpack.c.l.b16 %v731
    %v814 = vunpack.c.h.b16 %v731
    %v815 = vunpack.c.l.b16 %v732
    %v816 = vunpack.c.h.b16 %v732
    %v817 = vpack.c.b16 %v763, %v761
    %v818 = vpack.c.b16 %v764, %v762
    %v819 = vpack.c.b16 %v767, %v765
    %v820 = vpack.c.b16 %v768, %v766
    %v821 = vpack.c.b16 %v771, %v769
    %v822 = vpack.c.b16 %v772, %v770
    %v823 = vpack.c.b16 %v775, %v773
    %v824 = vpack.c.b16 %v776, %v774
    %v825 = vpack.c.b16 %v779, %v777
    %v826 = vpack.c.b16 %v780, %v778
    %v827 = vpack.c.b16 %v783, %v781
    %v828 = vpack.c.b16 %v784, %v782
    %v829 = vpack.c.b16 %v787, %v785
    %v830 = vpack.c.b16 %v788, %v786
    %v831 = vpack.c.b16 %v791, %v789
    %v832 = vpack.c.b16 %v792, %v790
    %v833 = vpack.c.b16 %v795, %v793
    %v834 = vpack.c.b16 %v796, %v794
    %v835 = vpack.c.b16 %v799, %v797
    %v836 = vpack.c.b16 %v800, %v798
    %v837 = vpack.c.b16 %v803, %v801
    %v838 = vpack.c.b16 %v804, %v802
    %v839 = vpack.c.b16 %v807, %v805
    %v840 = vpack.c.b16 %v808, %v806
    %v841 = vpack.c.b16 %v811, %v809
    %v842 = vpack.c.b16 %v812, %v810
    %v843 = vpack.c.b16 %v815, %v813
    %v844 = vpack.c.b16 %v816, %v814
    %vm873 = vcmask 785408
    %v875 = vsel %vm873, %v703, 0
    %877 = vmatprep.subr.bf16.mxu0 %v832
    %878 = vmatpush1.bf16.msra.mxu0 %v831
    %879 = vmatprep.subr.bf16.mxu0 %v830
    %880 = vmatpush1.bf16.msra.mxu0 %v829
    %881 = vmatprep.subr.bf16.mxu0 %v828
    %882 = vmatpush1.bf16.msra.mxu0 %v827
    %883 = vmatprep.subr.bf16.mxu0 %v826
    %884 = vmatpush1.bf16.msra.mxu0 %v825
    %885 = vmatprep.subr.bf16.mxu0 %v824
    %886 = vmatpush1.bf16.msra.mxu0 %v823
    %887 = vmatprep.subr.bf16.mxu0 %v822
    %888 = vmatpush1.bf16.msra.mxu0 %v821
    %889 = vmatprep.subr.bf16.mxu0 %v820
    %890 = vmatpush1.bf16.msra.mxu0 %v819
    %891 = vmatprep.subr.bf16.mxu0 %v818
    %892 = vmatpush1.bf16.msra.mxu0 %v817
    %893 = vmatprep.subr.bf16.mxu0 0
    %894 = vmatpush2.bf16.msra.mxu0 0
    %895 = vmatprep.subr.bf16.mxu0 0
    %896 = vmatpush2.bf16.msra.mxu0 0
    %897 = vmatprep.subr.bf16.mxu0 %v844
    %898 = vmatpush2.bf16.msra.mxu0 %v843
    %899 = vmatprep.subr.bf16.mxu0 %v842
    %900 = vmatpush2.bf16.msra.mxu0 %v841
    %901 = vmatprep.subr.bf16.mxu0 %v840
    %902 = vmatpush2.bf16.msra.mxu0 %v839
    %903 = vmatprep.subr.bf16.mxu0 %v838
    %904 = vmatpush2.bf16.msra.mxu0 %v837
    %905 = vmatprep.subr.bf16.mxu0 %v836
    %906 = vmatpush2.bf16.msra.mxu0 %v835
    %907 = vmatprep.subr.bf16.mxu0 %v834
    %908 = vmatpush2.bf16.msra.mxu0 %v833
    %909 = vmatprep.mubr.bf16.mxu0 %v875
    %910 = vmatmul.mubr.bf16.gmra.mxu0 %v702
    %v911 = vpop.f32.mrf.mxu0
    %v912 = vadd.f32 0.0, %v911
    %v913 = vpop.f32.mrf.mxu0
    %v914 = vadd.f32 0.0, %v913
    %v915 = vpop.f32.mrf.mxu0
    %v916 = vpop.f32.mrf.mxu0
    %917 = vdwg.mxu0
    %v946 = vunpack.c.l.b16 %v628
    %v947 = vunpack.c.h.b16 %v628
    %v948 = vunpack.c.l.b16 %v629
    %v949 = vunpack.c.h.b16 %v629
    %v950 = vunpack.c.l.b16 %v630
    %v951 = vunpack.c.h.b16 %v630
    %v952 = vunpack.c.l.b16 %v631
    %v953 = vunpack.c.h.b16 %v631
    %v954 = vunpack.c.l.b16 %v632
    %v955 = vunpack.c.h.b16 %v632
    %v956 = vunpack.c.l.b16 %v633
    %v957 = vunpack.c.h.b16 %v633
    %v958 = vunpack.c.l.b16 %v634
    %v959 = vunpack.c.h.b16 %v634
    %v960 = vunpack.c.l.b16 %v635
    %v961 = vunpack.c.h.b16 %v635
    %v962 = vunpack.c.l.b16 %v636
    %v963 = vunpack.c.h.b16 %v636
    %v964 = vunpack.c.l.b16 %v637
    %v965 = vunpack.c.h.b16 %v637
    %v966 = vunpack.c.l.b16 %v638
    %v967 = vunpack.c.h.b16 %v638
    %v968 = vunpack.c.l.b16 %v639
    %v969 = vunpack.c.h.b16 %v639
    %v970 = vunpack.c.l.b16 %v640
    %v971 = vunpack.c.h.b16 %v640
    %v972 = vunpack.c.l.b16 %v641
    %v973 = vunpack.c.h.b16 %v641
    %v974 = vunpack.c.l.b16 %v642
    %v975 = vunpack.c.h.b16 %v642
    %v976 = vunpack.c.l.b16 %v643
    %v977 = vunpack.c.h.b16 %v643
    %v978 = vunpack.c.l.b16 %v644
    %v979 = vunpack.c.h.b16 %v644
    %v980 = vunpack.c.l.b16 %v645
    %v981 = vunpack.c.h.b16 %v645
    %v982 = vunpack.c.l.b16 %v646
    %v983 = vunpack.c.h.b16 %v646
    %v984 = vunpack.c.l.b16 %v647
    %v985 = vunpack.c.h.b16 %v647
    %v986 = vunpack.c.l.b16 %v648
    %v987 = vunpack.c.h.b16 %v648
    %v988 = vunpack.c.l.b16 %v649
    %v989 = vunpack.c.h.b16 %v649
    %v990 = vunpack.c.l.b16 %v650
    %v991 = vunpack.c.h.b16 %v650
    %v992 = vunpack.c.l.b16 %v651
    %v993 = vunpack.c.h.b16 %v651
    %v994 = vunpack.c.l.b16 %v652
    %v995 = vunpack.c.h.b16 %v652
    %v996 = vunpack.c.l.b16 %v653
    %v997 = vunpack.c.h.b16 %v653
    %v998 = vunpack.c.l.b16 %v654
    %v999 = vunpack.c.h.b16 %v654
    %v1000 = vunpack.c.l.b16 %v655
    %v1001 = vunpack.c.h.b16 %v655
    %v1002 = vpack.c.b16 %v948, %v946
    %v1003 = vpack.c.b16 %v949, %v947
    %v1004 = vpack.c.b16 %v952, %v950
    %v1005 = vpack.c.b16 %v953, %v951
    %v1006 = vpack.c.b16 %v956, %v954
    %v1007 = vpack.c.b16 %v957, %v955
    %v1008 = vpack.c.b16 %v960, %v958
    %v1009 = vpack.c.b16 %v961, %v959
    %v1010 = vpack.c.b16 %v964, %v962
    %v1011 = vpack.c.b16 %v965, %v963
    %v1012 = vpack.c.b16 %v968, %v966
    %v1013 = vpack.c.b16 %v969, %v967
    %v1014 = vpack.c.b16 %v972, %v970
    %v1015 = vpack.c.b16 %v973, %v971
    %v1016 = vpack.c.b16 %v976, %v974
    %v1017 = vpack.c.b16 %v977, %v975
    %v1018 = vpack.c.b16 %v980, %v978
    %v1019 = vpack.c.b16 %v981, %v979
    %v1020 = vpack.c.b16 %v984, %v982
    %v1021 = vpack.c.b16 %v985, %v983
    %v1022 = vpack.c.b16 %v988, %v986
    %v1023 = vpack.c.b16 %v989, %v987
    %v1024 = vpack.c.b16 %v992, %v990
    %v1025 = vpack.c.b16 %v993, %v991
    %v1026 = vpack.c.b16 %v996, %v994
    %v1027 = vpack.c.b16 %v997, %v995
    %v1028 = vpack.c.b16 %v1000, %v998
    %v1029 = vpack.c.b16 %v1001, %v999
    %v1059 = vsel %vm873, %v627, 0
    %1061 = vmatprep.subr.bf16.mxu0 %v1017
    %1062 = vmatpush1.bf16.msra.mxu0 %v1016
    %1063 = vmatprep.subr.bf16.mxu0 %v1015
    %1064 = vmatpush1.bf16.msra.mxu0 %v1014
    %1065 = vmatprep.subr.bf16.mxu0 %v1013
    %1066 = vmatpush1.bf16.msra.mxu0 %v1012
    %1067 = vmatprep.subr.bf16.mxu0 %v1011
    %1068 = vmatpush1.bf16.msra.mxu0 %v1010
    %1069 = vmatprep.subr.bf16.mxu0 %v1009
    %1070 = vmatpush1.bf16.msra.mxu0 %v1008
    %1071 = vmatprep.subr.bf16.mxu0 %v1007
    %1072 = vmatpush1.bf16.msra.mxu0 %v1006
    %1073 = vmatprep.subr.bf16.mxu0 %v1005
    %1074 = vmatpush1.bf16.msra.mxu0 %v1004
    %1075 = vmatprep.subr.bf16.mxu0 %v1003
    %1076 = vmatpush1.bf16.msra.mxu0 %v1002
    %1077 = vmatprep.subr.bf16.mxu0 0
    %1078 = vmatpush2.bf16.msra.mxu0 0
    %1079 = vmatprep.subr.bf16.mxu0 0
    %1080 = vmatpush2.bf16.msra.mxu0 0
    %1081 = vmatprep.subr.bf16.mxu0 %v1029
    %1082 = vmatpush2.bf16.msra.mxu0 %v1028
    %1083 = vmatprep.subr.bf16.mxu0 %v1027
    %1084 = vmatpush2.bf16.msra.mxu0 %v1026
    %1085 = vmatprep.subr.bf16.mxu0 %v1025
    %1086 = vmatpush2.bf16.msra.mxu0 %v1024
    %1087 = vmatprep.subr.bf16.mxu0 %v1023
    %1088 = vmatpush2.bf16.msra.mxu0 %v1022
    %1089 = vmatprep.subr.bf16.mxu0 %v1021
    %1090 = vmatpush2.bf16.msra.mxu0 %v1020
    %1091 = vmatprep.subr.bf16.mxu0 %v1019
    %1092 = vmatpush2.bf16.msra.mxu0 %v1018
    %1093 = vmatprep.mubr.bf16.mxu0 %v1059
    %1094 = vmatmul.mubr.bf16.gmra.mxu0 %v626
    %v1095 = vpop.f32.mrf.mxu0
    %v1096 = vadd.f32 %v912, %v1095
    %v1097 = vpop.f32.mrf.mxu0
    %v1098 = vadd.f32 %v914, %v1097
    %v1099 = vpop.f32.mrf.mxu0
    %v1100 = vpop.f32.mrf.mxu0
    %1101 = vdwg.mxu0
    %s1102 = scalar_lea.vmem %s4, 8
    %v1103 = vld [vmem:[%s1102] sm:$0xf]
    %v1105 = vsel %vm574, %v1103, 0
    %1107 = vmatprep.subr.bf16.mxu0 0
    %1108 = vmatpush1.bf16.msra.mxu0 0
    %1109 = vmatprep.subr.bf16.mxu0 0
    %1110 = vmatpush1.bf16.msra.mxu0 0
    %1111 = vmatprep.subr.bf16.mxu0 0
    %1112 = vmatpush1.bf16.msra.mxu0 0
    %1113 = vmatprep.subr.bf16.mxu0 0
    %1114 = vmatpush1.bf16.msra.mxu0 0
    %1115 = vmatprep.subr.bf16.mxu0 0
    %1116 = vmatpush1.bf16.msra.mxu0 0
    %1117 = vmatprep.subr.bf16.mxu0 0
    %1118 = vmatpush1.bf16.msra.mxu0 0
    %1119 = vmatprep.subr.bf16.mxu0 0
    %1120 = vmatpush1.bf16.msra.mxu0 0
    %1121 = vmatprep.subr.bf16.mxu0 %v583
    %1122 = vmatpush1.bf16.msra.mxu0 %v580
    %1123 = vmatprep.subr.bf16.mxu0 0
    %1124 = vmatpush2.bf16.msra.mxu0 0
    %1125 = vmatprep.subr.bf16.mxu0 0
    %1126 = vmatpush2.bf16.msra.mxu0 0
    %1127 = vmatprep.subr.bf16.mxu0 0
    %1128 = vmatpush2.bf16.msra.mxu0 0
    %1129 = vmatprep.subr.bf16.mxu0 0
    %1130 = vmatpush2.bf16.msra.mxu0 0
    %1131 = vmatprep.subr.bf16.mxu0 0
    %1132 = vmatpush2.bf16.msra.mxu0 0
    %1133 = vmatprep.subr.bf16.mxu0 0
    %1134 = vmatpush2.bf16.msra.mxu0 0
    %1135 = vmatprep.subr.bf16.mxu0 0
    %1136 = vmatpush2.bf16.msra.mxu0 0
    %1137 = vmatprep.subr.bf16.mxu0 0
    %1138 = vmatpush2.bf16.msra.mxu0 0
    %1139 = vmatprep.mubr.bf16.mxu0 0
    %1140 = vmatmul.mubr.bf16.gmra.mxu0 %v1105
    %v1141 = vpop.f32.mrf.mxu0
    %v1142 = vadd.f32 0.0, %v1141
    %v1143 = vpop.f32.mrf.mxu0
    %v1144 = vadd.f32 0.0, %v1143
    %v1145 = vpop.f32.mrf.mxu0
    %v1146 = vpop.f32.mrf.mxu0
    %1147 = vdwg.mxu0
    %v1148 = vpack.c.bf16 %v1142, %v1142
    %v1149 = vpack.c.bf16 %v1144, %v1144
    %s1150 = scalar_lea.vmem [#allocation4], 448
    %v1151 = vld [vmem:[%s1150] sm:$0xff]
    %v1152 = vld [vmem:[%s1150 + $0x8] sm:$0xff]
    %v1153 = vld [vmem:[%s1150 + $0x10] sm:$0xff]
    %v1154 = vld [vmem:[%s1150 + $0x18] sm:$0xff]
    %v1155 = vld [vmem:[%s1150 + $0x20] sm:$0xff]
    %v1156 = vld [vmem:[%s1150 + $0x28] sm:$0xff]
    %v1157 = vld [vmem:[%s1150 + $0x30] sm:$0xff]
    %v1158 = vld [vmem:[%s1150 + $0x38] sm:$0xff]
    %v1159 = vld [vmem:[%s1150 + $0x40] sm:$0xff]
    %v1160 = vld [vmem:[%s1150 + $0x48] sm:$0xff]
    %v1161 = vld [vmem:[%s1150 + $0x50] sm:$0xff]
    %v1162 = vld [vmem:[%s1150 + $0x58] sm:$0xff]
    %v1163 = vld [vmem:[%s1150 + $0x60] sm:$0xff]
    %v1164 = vld [vmem:[%s1150 + $0x68] sm:$0xff]
    %v1165 = vld [vmem:[%s1150 + $0x70] sm:$0xff]
    %v1166 = vld [vmem:[%s1150 + $0x78] sm:$0xff]
    %v1167 = vld [vmem:[%s1150 + $0x80] sm:$0xff]
    %v1168 = vld [vmem:[%s1150 + $0x88] sm:$0xff]
    %v1169 = vld [vmem:[%s1150 + $0x90] sm:$0xff]
    %v1170 = vld [vmem:[%s1150 + $0x98] sm:$0xff]
    %v1171 = vld [vmem:[%s1150 + $0xa0] sm:$0xff]
    %v1172 = vld [vmem:[%s1150 + $0xa8] sm:$0xff]
    %v1173 = vld [vmem:[%s1150 + $0xb0] sm:$0xff]
    %v1174 = vld [vmem:[%s1150 + $0xb8] sm:$0xff]
    %v1175 = vld [vmem:[%s1150 + $0xc0] sm:$0xff]
    %v1176 = vld [vmem:[%s1150 + $0xc8] sm:$0xff]
    %v1177 = vld [vmem:[%s1150 + $0xd0] sm:$0xff]
    %v1178 = vld [vmem:[%s1150 + $0xd8] sm:$0xff]
    %v1207 = vunpack.c.l.b16 %v1151
    %v1208 = vunpack.c.h.b16 %v1151
    %v1209 = vunpack.c.l.b16 %v1152
    %v1210 = vunpack.c.h.b16 %v1152
    %v1211 = vunpack.c.l.b16 %v1153
    %v1212 = vunpack.c.h.b16 %v1153
    %v1213 = vunpack.c.l.b16 %v1154
    %v1214 = vunpack.c.h.b16 %v1154
    %v1215 = vunpack.c.l.b16 %v1155
    %v1216 = vunpack.c.h.b16 %v1155
    %v1217 = vunpack.c.l.b16 %v1156
    %v1218 = vunpack.c.h.b16 %v1156
    %v1219 = vunpack.c.l.b16 %v1157
    %v1220 = vunpack.c.h.b16 %v1157
    %v1221 = vunpack.c.l.b16 %v1158
    %v1222 = vunpack.c.h.b16 %v1158
    %v1223 = vunpack.c.l.b16 %v1159
    %v1224 = vunpack.c.h.b16 %v1159
    %v1225 = vunpack.c.l.b16 %v1160
    %v1226 = vunpack.c.h.b16 %v1160
    %v1227 = vunpack.c.l.b16 %v1161
    %v1228 = vunpack.c.h.b16 %v1161
    %v1229 = vunpack.c.l.b16 %v1162
    %v1230 = vunpack.c.h.b16 %v1162
    %v1231 = vunpack.c.l.b16 %v1163
    %v1232 = vunpack.c.h.b16 %v1163
    %v1233 = vunpack.c.l.b16 %v1164
    %v1234 = vunpack.c.h.b16 %v1164
    %v1235 = vunpack.c.l.b16 %v1165
    %v1236 = vunpack.c.h.b16 %v1165
    %v1237 = vunpack.c.l.b16 %v1166
    %v1238 = vunpack.c.h.b16 %v1166
    %v1239 = vunpack.c.l.b16 %v1167
    %v1240 = vunpack.c.h.b16 %v1167
    %v1241 = vunpack.c.l.b16 %v1168
    %v1242 = vunpack.c.h.b16 %v1168
    %v1243 = vunpack.c.l.b16 %v1169
    %v1244 = vunpack.c.h.b16 %v1169
    %v1245 = vunpack.c.l.b16 %v1170
    %v1246 = vunpack.c.h.b16 %v1170
    %v1247 = vunpack.c.l.b16 %v1171
    %v1248 = vunpack.c.h.b16 %v1171
    %v1249 = vunpack.c.l.b16 %v1172
    %v1250 = vunpack.c.h.b16 %v1172
    %v1251 = vunpack.c.l.b16 %v1173
    %v1252 = vunpack.c.h.b16 %v1173
    %v1253 = vunpack.c.l.b16 %v1174
    %v1254 = vunpack.c.h.b16 %v1174
    %v1255 = vunpack.c.l.b16 %v1175
    %v1256 = vunpack.c.h.b16 %v1175
    %v1257 = vunpack.c.l.b16 %v1176
    %v1258 = vunpack.c.h.b16 %v1176
    %v1259 = vunpack.c.l.b16 %v1177
    %v1260 = vunpack.c.h.b16 %v1177
    %v1261 = vunpack.c.l.b16 %v1178
    %v1262 = vunpack.c.h.b16 %v1178
    %v1263 = vpack.c.b16 %v1209, %v1207
    %v1264 = vpack.c.b16 %v1210, %v1208
    %v1265 = vpack.c.b16 %v1213, %v1211
    %v1266 = vpack.c.b16 %v1214, %v1212
    %v1267 = vpack.c.b16 %v1217, %v1215
    %v1268 = vpack.c.b16 %v1218, %v1216
    %v1269 = vpack.c.b16 %v1221, %v1219
    %v1270 = vpack.c.b16 %v1222, %v1220
    %v1271 = vpack.c.b16 %v1225, %v1223
    %v1272 = vpack.c.b16 %v1226, %v1224
    %v1273 = vpack.c.b16 %v1229, %v1227
    %v1274 = vpack.c.b16 %v1230, %v1228
    %v1275 = vpack.c.b16 %v1233, %v1231
    %v1276 = vpack.c.b16 %v1234, %v1232
    %v1277 = vpack.c.b16 %v1237, %v1235
    %v1278 = vpack.c.b16 %v1238, %v1236
    %v1279 = vpack.c.b16 %v1241, %v1239
    %v1280 = vpack.c.b16 %v1242, %v1240
    %v1281 = vpack.c.b16 %v1245, %v1243
    %v1282 = vpack.c.b16 %v1246, %v1244
    %v1283 = vpack.c.b16 %v1249, %v1247
    %v1284 = vpack.c.b16 %v1250, %v1248
    %v1285 = vpack.c.b16 %v1253, %v1251
    %v1286 = vpack.c.b16 %v1254, %v1252
    %v1287 = vpack.c.b16 %v1257, %v1255
    %v1288 = vpack.c.b16 %v1258, %v1256
    %v1289 = vpack.c.b16 %v1261, %v1259
    %v1290 = vpack.c.b16 %v1262, %v1260
    %v1320 = vsel %vm873, %v1149, 0
    %1322 = vmatprep.subr.bf16.mxu0 %v1278
    %1323 = vmatpush1.bf16.msra.mxu0 %v1277
    %1324 = vmatprep.subr.bf16.mxu0 %v1276
    %1325 = vmatpush1.bf16.msra.mxu0 %v1275
    %1326 = vmatprep.subr.bf16.mxu0 %v1274
    %1327 = vmatpush1.bf16.msra.mxu0 %v1273
    %1328 = vmatprep.subr.bf16.mxu0 %v1272
    %1329 = vmatpush1.bf16.msra.mxu0 %v1271
    %1330 = vmatprep.subr.bf16.mxu0 %v1270
    %1331 = vmatpush1.bf16.msra.mxu0 %v1269
    %1332 = vmatprep.subr.bf16.mxu0 %v1268
    %1333 = vmatpush1.bf16.msra.mxu0 %v1267
    %1334 = vmatprep.subr.bf16.mxu0 %v1266
    %1335 = vmatpush1.bf16.msra.mxu0 %v1265
    %1336 = vmatprep.subr.bf16.mxu0 %v1264
    %1337 = vmatpush1.bf16.msra.mxu0 %v1263
    %1338 = vmatprep.subr.bf16.mxu0 0
    %1339 = vmatpush2.bf16.msra.mxu0 0
    %1340 = vmatprep.subr.bf16.mxu0 0
    %1341 = vmatpush2.bf16.msra.mxu0 0
    %1342 = vmatprep.subr.bf16.mxu0 %v1290
    %1343 = vmatpush2.bf16.msra.mxu0 %v1289
    %1344 = vmatprep.subr.bf16.mxu0 %v1288
    %1345 = vmatpush2.bf16.msra.mxu0 %v1287
    %1346 = vmatprep.subr.bf16.mxu0 %v1286
    %1347 = vmatpush2.bf16.msra.mxu0 %v1285
    %1348 = vmatprep.subr.bf16.mxu0 %v1284
    %1349 = vmatpush2.bf16.msra.mxu0 %v1283
    %1350 = vmatprep.subr.bf16.mxu0 %v1282
    %1351 = vmatpush2.bf16.msra.mxu0 %v1281
    %1352 = vmatprep.subr.bf16.mxu0 %v1280
    %1353 = vmatpush2.bf16.msra.mxu0 %v1279
    %1354 = vmatprep.mubr.bf16.mxu0 %v1320
    %1355 = vmatmul.mubr.bf16.gmra.mxu0 %v1148
    %v1356 = vpop.f32.mrf.mxu0
    %v1357 = vadd.f32 0.0, %v1356
    %v1358 = vpop.f32.mrf.mxu0
    %v1359 = vadd.f32 0.0, %v1358
    %v1360 = vpop.f32.mrf.mxu0
    %v1361 = vpop.f32.mrf.mxu0
    %1362 = vdwg.mxu0
    %v1363 = vadd.f32 %v1096, %v1357
    %v1364 = vadd.f32 %v1098, %v1359
    %v1365 = vld [vmem:[#allocation6] sm:$0x3]
    %v1367 = vlaneseq
    %v1368 = vshrl.u32 %v1367, 7
    %v1369 = vsub.s32 0, %v1368
    %v1370 = vrot.slane %v1365, %v1369
    %v1371 = vlaneseq
    %v1372 = vshrl.u32 %v1371, 7
    %v1373 = vsub.s32 1, %v1372
    %v1374 = vrot.slane %v1365, %v1373
    %v1377 = vadd.f32 %v1363, %v1370
    %v1378 = vadd.f32 %v1364, %v1374
    %v1379 = vmax.f32 %v1377, 0.0
    %v1380 = vmax.f32 %v1378, 0.0
    %v1381 = vpack.c.bf16 %v1379, %v1379
    %v1382 = vpack.c.bf16 %v1380, %v1380
    %v1383 = vld [vmem:[%s7] sm:$0x1]
    %vm1384 = vcmask 56320
    %v1386 = vsel %vm1384, %v1383, 0
    %vm1388 = vcmask 1042432
    %vm1389 = vcmask 1043456
    %v1390 = vsel %vm1388, 4294967295, 65535
    %v1391 = vsel %vm1389, %v1390, 0
    %v1393 = vand.u32 %v1381, %v1391
    %v1396 = vand.u32 %v1382, %v1391
    %1398 = vmatprep.subr.bf16.mxu0 0
    %1399 = vmatpush1.bf16.msra.mxu0 0
    %1400 = vmatprep.subr.bf16.mxu0 0
    %1401 = vmatpush1.bf16.msra.mxu0 0
    %1402 = vmatprep.subr.bf16.mxu0 0
    %1403 = vmatpush1.bf16.msra.mxu0 0
    %1404 = vmatprep.subr.bf16.mxu0 0
    %1405 = vmatpush1.bf16.msra.mxu0 0
    %1406 = vmatprep.subr.bf16.mxu0 0
    %1407 = vmatpush1.bf16.msra.mxu0 0
    %1408 = vmatprep.subr.bf16.mxu0 0
    %1409 = vmatpush1.bf16.msra.mxu0 0
    %1410 = vmatprep.subr.bf16.mxu0 0
    %1411 = vmatpush1.bf16.msra.mxu0 0
    %1412 = vmatprep.subr.bf16.mxu0 %v1396
    %1413 = vmatpush1.bf16.msra.mxu0 %v1393
    %1414 = vmatprep.subr.bf16.mxu0 0
    %1415 = vmatpush2.bf16.msra.mxu0 0
    %1416 = vmatprep.subr.bf16.mxu0 0
    %1417 = vmatpush2.bf16.msra.mxu0 0
    %1418 = vmatprep.subr.bf16.mxu0 0
    %1419 = vmatpush2.bf16.msra.mxu0 0
    %1420 = vmatprep.subr.bf16.mxu0 0
    %1421 = vmatpush2.bf16.msra.mxu0 0
    %1422 = vmatprep.subr.bf16.mxu0 0
    %1423 = vmatpush2.bf16.msra.mxu0 0
    %1424 = vmatprep.subr.bf16.mxu0 0
    %1425 = vmatpush2.bf16.msra.mxu0 0
    %1426 = vmatprep.subr.bf16.mxu0 0
    %1427 = vmatpush2.bf16.msra.mxu0 0
    %1428 = vmatprep.subr.bf16.mxu0 0
    %1429 = vmatpush2.bf16.msra.mxu0 0
    %1430 = vmatprep.mubr.bf16.mxu0 0
    %1431 = vmatmul.mubr.bf16.gmra.mxu0 %v1386
    %v1432 = vpop.f32.mrf.mxu0
    %v1433 = vadd.f32 0.0, %v1432
    %v1434 = vpop.f32.mrf.mxu0
    %v1435 = vadd.f32 0.0, %v1434
    %v1436 = vpop.f32.mrf.mxu0
    %v1437 = vpop.f32.mrf.mxu0
    %1438 = vdwg.mxu0
    %v1439 = vpack.c.bf16 %v1433, %v1433
    %v1440 = vpack.c.bf16 %v1435, %v1435
    %v1441 = vld [vmem:[#allocation7] sm:$0xf]
    %v1442 = vld [vmem:[#allocation7 + $0x4] sm:$0xf]
    %v1443 = vld [vmem:[#allocation7 + $0x8] sm:$0xf]
    %v1444 = vld [vmem:[#allocation7 + $0xc] sm:$0xf]
    %v1445 = vld [vmem:[#allocation7 + $0x10] sm:$0xf]
    %v1446 = vld [vmem:[#allocation7 + $0x14] sm:$0xf]
    %v1447 = vld [vmem:[#allocation7 + $0x18] sm:$0xf]
    %v1448 = vld [vmem:[#allocation7 + $0x1c] sm:$0xf]
    %v1449 = vld [vmem:[#allocation7 + $0x20] sm:$0xf]
    %v1450 = vld [vmem:[#allocation7 + $0x24] sm:$0xf]
    %v1451 = vld [vmem:[#allocation7 + $0x28] sm:$0xf]
    %v1452 = vld [vmem:[#allocation7 + $0x2c] sm:$0xf]
    %v1453 = vld [vmem:[#allocation7 + $0x30] sm:$0xf]
    %v1454 = vld [vmem:[#allocation7 + $0x34] sm:$0xf]
    %v1455 = vld [vmem:[#allocation7 + $0x38] sm:$0xf]
    %v1456 = vld [vmem:[#allocation7 + $0x3c] sm:$0xf]
    %v1457 = vld [vmem:[#allocation7 + $0x40] sm:$0xf]
    %v1458 = vld [vmem:[#allocation7 + $0x44] sm:$0xf]
    %v1459 = vld [vmem:[#allocation7 + $0x48] sm:$0xf]
    %v1460 = vld [vmem:[#allocation7 + $0x4c] sm:$0xf]
    %v1461 = vld [vmem:[#allocation7 + $0x50] sm:$0xf]
    %v1462 = vld [vmem:[#allocation7 + $0x54] sm:$0xf]
    %v1463 = vld [vmem:[#allocation7 + $0x58] sm:$0xf]
    %v1464 = vld [vmem:[#allocation7 + $0x5c] sm:$0xf]
    %v1465 = vld [vmem:[#allocation7 + $0x60] sm:$0xf]
    %v1466 = vld [vmem:[#allocation7 + $0x64] sm:$0xf]
    %v1467 = vld [vmem:[#allocation7 + $0x68] sm:$0xf]
    %v1468 = vld [vmem:[#allocation7 + $0x6c] sm:$0xf]
    %s1469 = scalar_lea.vmem %s7, 1
    %v1470 = vld [vmem:[%s1469] sm:$0x1]
    %v1472 = vsel %vm1384, %v1470, 0
    %1474 = vmatprep.subr.bf16.mxu0 0
    %1475 = vmatpush1.bf16.msra.mxu0 0
    %1476 = vmatprep.subr.bf16.mxu0 0
    %1477 = vmatpush1.bf16.msra.mxu0 0
    %1478 = vmatprep.subr.bf16.mxu0 0
    %1479 = vmatpush1.bf16.msra.mxu0 0
    %1480 = vmatprep.subr.bf16.mxu0 0
    %1481 = vmatpush1.bf16.msra.mxu0 0
    %1482 = vmatprep.subr.bf16.mxu0 0
    %1483 = vmatpush1.bf16.msra.mxu0 0
    %1484 = vmatprep.subr.bf16.mxu0 0
    %1485 = vmatpush1.bf16.msra.mxu0 0
    %1486 = vmatprep.subr.bf16.mxu0 0
    %1487 = vmatpush1.bf16.msra.mxu0 0
    %1488 = vmatprep.subr.bf16.mxu0 %v1396
    %1489 = vmatpush1.bf16.msra.mxu0 %v1393
    %1490 = vmatprep.subr.bf16.mxu0 0
    %1491 = vmatpush2.bf16.msra.mxu0 0
    %1492 = vmatprep.subr.bf16.mxu0 0
    %1493 = vmatpush2.bf16.msra.mxu0 0
    %1494 = vmatprep.subr.bf16.mxu0 0
    %1495 = vmatpush2.bf16.msra.mxu0 0
    %1496 = vmatprep.subr.bf16.mxu0 0
    %1497 = vmatpush2.bf16.msra.mxu0 0
    %1498 = vmatprep.subr.bf16.mxu0 0
    %1499 = vmatpush2.bf16.msra.mxu0 0
    %1500 = vmatprep.subr.bf16.mxu0 0
    %1501 = vmatpush2.bf16.msra.mxu0 0
    %1502 = vmatprep.subr.bf16.mxu0 0
    %1503 = vmatpush2.bf16.msra.mxu0 0
    %1504 = vmatprep.subr.bf16.mxu0 0
    %1505 = vmatpush2.bf16.msra.mxu0 0
    %1506 = vmatprep.mubr.bf16.mxu0 0
    %1507 = vmatmul.mubr.bf16.gmra.mxu0 %v1472
    %v1508 = vpop.f32.mrf.mxu0
    %v1509 = vadd.f32 0.0, %v1508
    %v1510 = vpop.f32.mrf.mxu0
    %v1511 = vadd.f32 0.0, %v1510
    %v1512 = vpop.f32.mrf.mxu0
    %v1513 = vpop.f32.mrf.mxu0
    %1514 = vdwg.mxu0
    %v1515 = vpack.c.bf16 %v1509, %v1509
    %v1516 = vpack.c.bf16 %v1511, %v1511
    %s1517 = scalar_lea.vmem [#allocation7], 112
    %v1518 = vld [vmem:[%s1517] sm:$0xf]
    %v1519 = vld [vmem:[%s1517 + $0x4] sm:$0xf]
    %v1520 = vld [vmem:[%s1517 + $0x8] sm:$0xf]
    %v1521 = vld [vmem:[%s1517 + $0xc] sm:$0xf]
    %v1522 = vld [vmem:[%s1517 + $0x10] sm:$0xf]
    %v1523 = vld [vmem:[%s1517 + $0x14] sm:$0xf]
    %v1524 = vld [vmem:[%s1517 + $0x18] sm:$0xf]
    %v1525 = vld [vmem:[%s1517 + $0x1c] sm:$0xf]
    %v1526 = vld [vmem:[%s1517 + $0x20] sm:$0xf]
    %v1527 = vld [vmem:[%s1517 + $0x24] sm:$0xf]
    %v1528 = vld [vmem:[%s1517 + $0x28] sm:$0xf]
    %v1529 = vld [vmem:[%s1517 + $0x2c] sm:$0xf]
    %v1530 = vld [vmem:[%s1517 + $0x30] sm:$0xf]
    %v1531 = vld [vmem:[%s1517 + $0x34] sm:$0xf]
    %v1532 = vld [vmem:[%s1517 + $0x38] sm:$0xf]
    %v1533 = vld [vmem:[%s1517 + $0x3c] sm:$0xf]
    %v1534 = vld [vmem:[%s1517 + $0x40] sm:$0xf]
    %v1535 = vld [vmem:[%s1517 + $0x44] sm:$0xf]
    %v1536 = vld [vmem:[%s1517 + $0x48] sm:$0xf]
    %v1537 = vld [vmem:[%s1517 + $0x4c] sm:$0xf]
    %v1538 = vld [vmem:[%s1517 + $0x50] sm:$0xf]
    %v1539 = vld [vmem:[%s1517 + $0x54] sm:$0xf]
    %v1540 = vld [vmem:[%s1517 + $0x58] sm:$0xf]
    %v1541 = vld [vmem:[%s1517 + $0x5c] sm:$0xf]
    %v1542 = vld [vmem:[%s1517 + $0x60] sm:$0xf]
    %v1543 = vld [vmem:[%s1517 + $0x64] sm:$0xf]
    %v1544 = vld [vmem:[%s1517 + $0x68] sm:$0xf]
    %v1545 = vld [vmem:[%s1517 + $0x6c] sm:$0xf]
    %v1574 = vunpack.c.l.b16 %v1518
    %v1575 = vunpack.c.l.b16 %v1519
    %v1576 = vunpack.c.l.b16 %v1520
    %v1577 = vunpack.c.l.b16 %v1521
    %v1578 = vunpack.c.l.b16 %v1522
    %v1579 = vunpack.c.l.b16 %v1523
    %v1580 = vunpack.c.l.b16 %v1524
    %v1581 = vunpack.c.l.b16 %v1525
    %v1582 = vunpack.c.l.b16 %v1526
    %v1583 = vunpack.c.l.b16 %v1527
    %v1584 = vunpack.c.l.b16 %v1528
    %v1585 = vunpack.c.l.b16 %v1529
    %v1586 = vunpack.c.l.b16 %v1530
    %v1587 = vunpack.c.l.b16 %v1531
    %v1588 = vunpack.c.l.b16 %v1532
    %v1589 = vunpack.c.l.b16 %v1533
    %v1590 = vunpack.c.l.b16 %v1534
    %v1591 = vunpack.c.l.b16 %v1535
    %v1592 = vunpack.c.l.b16 %v1536
    %v1593 = vunpack.c.l.b16 %v1537
    %v1594 = vunpack.c.l.b16 %v1538
    %v1595 = vunpack.c.l.b16 %v1539
    %v1596 = vunpack.c.l.b16 %v1540
    %v1597 = vunpack.c.l.b16 %v1541
    %v1598 = vunpack.c.l.b16 %v1542
    %v1599 = vunpack.c.l.b16 %v1543
    %v1600 = vunpack.c.l.b16 %v1544
    %v1601 = vunpack.c.l.b16 %v1545
    %v1602 = vpack.c.b16 %v1575, %v1574
    %v1603 = vpack.c.b16 %v1577, %v1576
    %v1604 = vpack.c.b16 %v1579, %v1578
    %v1605 = vpack.c.b16 %v1581, %v1580
    %v1606 = vpack.c.b16 %v1583, %v1582
    %v1607 = vpack.c.b16 %v1585, %v1584
    %v1608 = vpack.c.b16 %v1587, %v1586
    %v1609 = vpack.c.b16 %v1589, %v1588
    %v1610 = vpack.c.b16 %v1591, %v1590
    %v1611 = vpack.c.b16 %v1593, %v1592
    %v1612 = vpack.c.b16 %v1595, %v1594
    %v1613 = vpack.c.b16 %v1597, %v1596
    %v1614 = vpack.c.b16 %v1599, %v1598
    %v1615 = vpack.c.b16 %v1601, %v1600
    %v1631 = vsel %vm873, %v1516, 0
    %1633 = vmatprep.subr.bf16.mxu0 0
    %1634 = vmatpush1.bf16.msra.mxu0 %v1609
    %1635 = vmatprep.subr.bf16.mxu0 0
    %1636 = vmatpush1.bf16.msra.mxu0 %v1608
    %1637 = vmatprep.subr.bf16.mxu0 0
    %1638 = vmatpush1.bf16.msra.mxu0 %v1607
    %1639 = vmatprep.subr.bf16.mxu0 0
    %1640 = vmatpush1.bf16.msra.mxu0 %v1606
    %1641 = vmatprep.subr.bf16.mxu0 0
    %1642 = vmatpush1.bf16.msra.mxu0 %v1605
    %1643 = vmatprep.subr.bf16.mxu0 0
    %1644 = vmatpush1.bf16.msra.mxu0 %v1604
    %1645 = vmatprep.subr.bf16.mxu0 0
    %1646 = vmatpush1.bf16.msra.mxu0 %v1603
    %1647 = vmatprep.subr.bf16.mxu0 0
    %1648 = vmatpush1.bf16.msra.mxu0 %v1602
    %1649 = vmatprep.subr.bf16.mxu0 0
    %1650 = vmatpush2.bf16.msra.mxu0 0
    %1651 = vmatprep.subr.bf16.mxu0 0
    %1652 = vmatpush2.bf16.msra.mxu0 0
    %1653 = vmatprep.subr.bf16.mxu0 0
    %1654 = vmatpush2.bf16.msra.mxu0 %v1615
    %1655 = vmatprep.subr.bf16.mxu0 0
    %1656 = vmatpush2.bf16.msra.mxu0 %v1614
    %1657 = vmatprep.subr.bf16.mxu0 0
    %1658 = vmatpush2.bf16.msra.mxu0 %v1613
    %1659 = vmatprep.subr.bf16.mxu0 0
    %1660 = vmatpush2.bf16.msra.mxu0 %v1612
    %1661 = vmatprep.subr.bf16.mxu0 0
    %1662 = vmatpush2.bf16.msra.mxu0 %v1611
    %1663 = vmatprep.subr.bf16.mxu0 0
    %1664 = vmatpush2.bf16.msra.mxu0 %v1610
    %1665 = vmatprep.mubr.bf16.mxu0 %v1631
    %1666 = vmatmul.mubr.bf16.gmra.mxu0 %v1515
    %v1667 = vpop.f32.mrf.mxu0
    %v1668 = vadd.f32 0.0, %v1667
    %v1669 = vpop.f32.mrf.mxu0
    %v1670 = vpop.f32.mrf.mxu0
    %v1671 = vpop.f32.mrf.mxu0
    %1672 = vdwg.mxu0
    %v1701 = vunpack.c.l.b16 %v1441
    %v1702 = vunpack.c.l.b16 %v1442
    %v1703 = vunpack.c.l.b16 %v1443
    %v1704 = vunpack.c.l.b16 %v1444
    %v1705 = vunpack.c.l.b16 %v1445
    %v1706 = vunpack.c.l.b16 %v1446
    %v1707 = vunpack.c.l.b16 %v1447
    %v1708 = vunpack.c.l.b16 %v1448
    %v1709 = vunpack.c.l.b16 %v1449
    %v1710 = vunpack.c.l.b16 %v1450
    %v1711 = vunpack.c.l.b16 %v1451
    %v1712 = vunpack.c.l.b16 %v1452
    %v1713 = vunpack.c.l.b16 %v1453
    %v1714 = vunpack.c.l.b16 %v1454
    %v1715 = vunpack.c.l.b16 %v1455
    %v1716 = vunpack.c.l.b16 %v1456
    %v1717 = vunpack.c.l.b16 %v1457
    %v1718 = vunpack.c.l.b16 %v1458
    %v1719 = vunpack.c.l.b16 %v1459
    %v1720 = vunpack.c.l.b16 %v1460
    %v1721 = vunpack.c.l.b16 %v1461
    %v1722 = vunpack.c.l.b16 %v1462
    %v1723 = vunpack.c.l.b16 %v1463
    %v1724 = vunpack.c.l.b16 %v1464
    %v1725 = vunpack.c.l.b16 %v1465
    %v1726 = vunpack.c.l.b16 %v1466
    %v1727 = vunpack.c.l.b16 %v1467
    %v1728 = vunpack.c.l.b16 %v1468
    %v1729 = vpack.c.b16 %v1702, %v1701
    %v1730 = vpack.c.b16 %v1704, %v1703
    %v1731 = vpack.c.b16 %v1706, %v1705
    %v1732 = vpack.c.b16 %v1708, %v1707
    %v1733 = vpack.c.b16 %v1710, %v1709
    %v1734 = vpack.c.b16 %v1712, %v1711
    %v1735 = vpack.c.b16 %v1714, %v1713
    %v1736 = vpack.c.b16 %v1716, %v1715
    %v1737 = vpack.c.b16 %v1718, %v1717
    %v1738 = vpack.c.b16 %v1720, %v1719
    %v1739 = vpack.c.b16 %v1722, %v1721
    %v1740 = vpack.c.b16 %v1724, %v1723
    %v1741 = vpack.c.b16 %v1726, %v1725
    %v1742 = vpack.c.b16 %v1728, %v1727
    %v1758 = vsel %vm873, %v1440, 0
    %1760 = vmatprep.subr.bf16.mxu0 0
    %1761 = vmatpush1.bf16.msra.mxu0 %v1736
    %1762 = vmatprep.subr.bf16.mxu0 0
    %1763 = vmatpush1.bf16.msra.mxu0 %v1735
    %1764 = vmatprep.subr.bf16.mxu0 0
    %1765 = vmatpush1.bf16.msra.mxu0 %v1734
    %1766 = vmatprep.subr.bf16.mxu0 0
    %1767 = vmatpush1.bf16.msra.mxu0 %v1733
    %1768 = vmatprep.subr.bf16.mxu0 0
    %1769 = vmatpush1.bf16.msra.mxu0 %v1732
    %1770 = vmatprep.subr.bf16.mxu0 0
    %1771 = vmatpush1.bf16.msra.mxu0 %v1731
    %1772 = vmatprep.subr.bf16.mxu0 0
    %1773 = vmatpush1.bf16.msra.mxu0 %v1730
    %1774 = vmatprep.subr.bf16.mxu0 0
    %1775 = vmatpush1.bf16.msra.mxu0 %v1729
    %1776 = vmatprep.subr.bf16.mxu0 0
    %1777 = vmatpush2.bf16.msra.mxu0 0
    %1778 = vmatprep.subr.bf16.mxu0 0
    %1779 = vmatpush2.bf16.msra.mxu0 0
    %1780 = vmatprep.subr.bf16.mxu0 0
    %1781 = vmatpush2.bf16.msra.mxu0 %v1742
    %1782 = vmatprep.subr.bf16.mxu0 0
    %1783 = vmatpush2.bf16.msra.mxu0 %v1741
    %1784 = vmatprep.subr.bf16.mxu0 0
    %1785 = vmatpush2.bf16.msra.mxu0 %v1740
    %1786 = vmatprep.subr.bf16.mxu0 0
    %1787 = vmatpush2.bf16.msra.mxu0 %v1739
    %1788 = vmatprep.subr.bf16.mxu0 0
    %1789 = vmatpush2.bf16.msra.mxu0 %v1738
    %1790 = vmatprep.subr.bf16.mxu0 0
    %1791 = vmatpush2.bf16.msra.mxu0 %v1737
    %1792 = vmatprep.mubr.bf16.mxu0 %v1758
    %1793 = vmatmul.mubr.bf16.gmra.mxu0 %v1439
    %v1794 = vpop.f32.mrf.mxu0
    %v1795 = vadd.f32 %v1668, %v1794
    %v1796 = vpop.f32.mrf.mxu0
    %v1797 = vpop.f32.mrf.mxu0
    %v1798 = vpop.f32.mrf.mxu0
    %1799 = vdwg.mxu0
    %s1800 = scalar_lea.vmem %s7, 2
    %v1801 = vld [vmem:[%s1800] sm:$0x1]
    %v1803 = vsel %vm1384, %v1801, 0
    %1805 = vmatprep.subr.bf16.mxu0 0
    %1806 = vmatpush1.bf16.msra.mxu0 0
    %1807 = vmatprep.subr.bf16.mxu0 0
    %1808 = vmatpush1.bf16.msra.mxu0 0
    %1809 = vmatprep.subr.bf16.mxu0 0
    %1810 = vmatpush1.bf16.msra.mxu0 0
    %1811 = vmatprep.subr.bf16.mxu0 0
    %1812 = vmatpush1.bf16.msra.mxu0 0
    %1813 = vmatprep.subr.bf16.mxu0 0
    %1814 = vmatpush1.bf16.msra.mxu0 0
    %1815 = vmatprep.subr.bf16.mxu0 0
    %1816 = vmatpush1.bf16.msra.mxu0 0
    %1817 = vmatprep.subr.bf16.mxu0 0
    %1818 = vmatpush1.bf16.msra.mxu0 0
    %1819 = vmatprep.subr.bf16.mxu0 %v1396
    %1820 = vmatpush1.bf16.msra.mxu0 %v1393
    %1821 = vmatprep.subr.bf16.mxu0 0
    %1822 = vmatpush2.bf16.msra.mxu0 0
    %1823 = vmatprep.subr.bf16.mxu0 0
    %1824 = vmatpush2.bf16.msra.mxu0 0
    %1825 = vmatprep.subr.bf16.mxu0 0
    %1826 = vmatpush2.bf16.msra.mxu0 0
    %1827 = vmatprep.subr.bf16.mxu0 0
    %1828 = vmatpush2.bf16.msra.mxu0 0
    %1829 = vmatprep.subr.bf16.mxu0 0
    %1830 = vmatpush2.bf16.msra.mxu0 0
    %1831 = vmatprep.subr.bf16.mxu0 0
    %1832 = vmatpush2.bf16.msra.mxu0 0
    %1833 = vmatprep.subr.bf16.mxu0 0
    %1834 = vmatpush2.bf16.msra.mxu0 0
    %1835 = vmatprep.subr.bf16.mxu0 0
    %1836 = vmatpush2.bf16.msra.mxu0 0
    %1837 = vmatprep.mubr.bf16.mxu0 0
    %1838 = vmatmul.mubr.bf16.gmra.mxu0 %v1803
    %v1839 = vpop.f32.mrf.mxu0
    %v1840 = vadd.f32 0.0, %v1839
    %v1841 = vpop.f32.mrf.mxu0
    %v1842 = vadd.f32 0.0, %v1841
    %v1843 = vpop.f32.mrf.mxu0
    %v1844 = vpop.f32.mrf.mxu0
    %1845 = vdwg.mxu0
    %v1846 = vpack.c.bf16 %v1840, %v1840
    %v1847 = vpack.c.bf16 %v1842, %v1842
    %s1848 = scalar_lea.vmem [#allocation7], 224
    %v1849 = vld [vmem:[%s1848] sm:$0xf]
    %v1850 = vld [vmem:[%s1848 + $0x4] sm:$0xf]
    %v1851 = vld [vmem:[%s1848 + $0x8] sm:$0xf]
    %v1852 = vld [vmem:[%s1848 + $0xc] sm:$0xf]
    %v1853 = vld [vmem:[%s1848 + $0x10] sm:$0xf]
    %v1854 = vld [vmem:[%s1848 + $0x14] sm:$0xf]
    %v1855 = vld [vmem:[%s1848 + $0x18] sm:$0xf]
    %v1856 = vld [vmem:[%s1848 + $0x1c] sm:$0xf]
    %v1857 = vld [vmem:[%s1848 + $0x20] sm:$0xf]
    %v1858 = vld [vmem:[%s1848 + $0x24] sm:$0xf]
    %v1859 = vld [vmem:[%s1848 + $0x28] sm:$0xf]
    %v1860 = vld [vmem:[%s1848 + $0x2c] sm:$0xf]
    %v1861 = vld [vmem:[%s1848 + $0x30] sm:$0xf]
    %v1862 = vld [vmem:[%s1848 + $0x34] sm:$0xf]
    %v1863 = vld [vmem:[%s1848 + $0x38] sm:$0xf]
    %v1864 = vld [vmem:[%s1848 + $0x3c] sm:$0xf]
    %v1865 = vld [vmem:[%s1848 + $0x40] sm:$0xf]
    %v1866 = vld [vmem:[%s1848 + $0x44] sm:$0xf]
    %v1867 = vld [vmem:[%s1848 + $0x48] sm:$0xf]
    %v1868 = vld [vmem:[%s1848 + $0x4c] sm:$0xf]
    %v1869 = vld [vmem:[%s1848 + $0x50] sm:$0xf]
    %v1870 = vld [vmem:[%s1848 + $0x54] sm:$0xf]
    %v1871 = vld [vmem:[%s1848 + $0x58] sm:$0xf]
    %v1872 = vld [vmem:[%s1848 + $0x5c] sm:$0xf]
    %v1873 = vld [vmem:[%s1848 + $0x60] sm:$0xf]
    %v1874 = vld [vmem:[%s1848 + $0x64] sm:$0xf]
    %v1875 = vld [vmem:[%s1848 + $0x68] sm:$0xf]
    %v1876 = vld [vmem:[%s1848 + $0x6c] sm:$0xf]
    %v1905 = vunpack.c.l.b16 %v1849
    %v1906 = vunpack.c.l.b16 %v1850
    %v1907 = vunpack.c.l.b16 %v1851
    %v1908 = vunpack.c.l.b16 %v1852
    %v1909 = vunpack.c.l.b16 %v1853
    %v1910 = vunpack.c.l.b16 %v1854
    %v1911 = vunpack.c.l.b16 %v1855
    %v1912 = vunpack.c.l.b16 %v1856
    %v1913 = vunpack.c.l.b16 %v1857
    %v1914 = vunpack.c.l.b16 %v1858
    %v1915 = vunpack.c.l.b16 %v1859
    %v1916 = vunpack.c.l.b16 %v1860
    %v1917 = vunpack.c.l.b16 %v1861
    %v1918 = vunpack.c.l.b16 %v1862
    %v1919 = vunpack.c.l.b16 %v1863
    %v1920 = vunpack.c.l.b16 %v1864
    %v1921 = vunpack.c.l.b16 %v1865
    %v1922 = vunpack.c.l.b16 %v1866
    %v1923 = vunpack.c.l.b16 %v1867
    %v1924 = vunpack.c.l.b16 %v1868
    %v1925 = vunpack.c.l.b16 %v1869
    %v1926 = vunpack.c.l.b16 %v1870
    %v1927 = vunpack.c.l.b16 %v1871
    %v1928 = vunpack.c.l.b16 %v1872
    %v1929 = vunpack.c.l.b16 %v1873
    %v1930 = vunpack.c.l.b16 %v1874
    %v1931 = vunpack.c.l.b16 %v1875
    %v1932 = vunpack.c.l.b16 %v1876
    %v1933 = vpack.c.b16 %v1906, %v1905
    %v1934 = vpack.c.b16 %v1908, %v1907
    %v1935 = vpack.c.b16 %v1910, %v1909
    %v1936 = vpack.c.b16 %v1912, %v1911
    %v1937 = vpack.c.b16 %v1914, %v1913
    %v1938 = vpack.c.b16 %v1916, %v1915
    %v1939 = vpack.c.b16 %v1918, %v1917
    %v1940 = vpack.c.b16 %v1920, %v1919
    %v1941 = vpack.c.b16 %v1922, %v1921
    %v1942 = vpack.c.b16 %v1924, %v1923
    %v1943 = vpack.c.b16 %v1926, %v1925
    %v1944 = vpack.c.b16 %v1928, %v1927
    %v1945 = vpack.c.b16 %v1930, %v1929
    %v1946 = vpack.c.b16 %v1932, %v1931
    %v1962 = vsel %vm873, %v1847, 0
    %1964 = vmatprep.subr.bf16.mxu0 0
    %1965 = vmatpush1.bf16.msra.mxu0 %v1940
    %1966 = vmatprep.subr.bf16.mxu0 0
    %1967 = vmatpush1.bf16.msra.mxu0 %v1939
    %1968 = vmatprep.subr.bf16.mxu0 0
    %1969 = vmatpush1.bf16.msra.mxu0 %v1938
    %1970 = vmatprep.subr.bf16.mxu0 0
    %1971 = vmatpush1.bf16.msra.mxu0 %v1937
    %1972 = vmatprep.subr.bf16.mxu0 0
    %1973 = vmatpush1.bf16.msra.mxu0 %v1936
    %1974 = vmatprep.subr.bf16.mxu0 0
    %1975 = vmatpush1.bf16.msra.mxu0 %v1935
    %1976 = vmatprep.subr.bf16.mxu0 0
    %1977 = vmatpush1.bf16.msra.mxu0 %v1934
    %1978 = vmatprep.subr.bf16.mxu0 0
    %1979 = vmatpush1.bf16.msra.mxu0 %v1933
    %1980 = vmatprep.subr.bf16.mxu0 0
    %1981 = vmatpush2.bf16.msra.mxu0 0
    %1982 = vmatprep.subr.bf16.mxu0 0
    %1983 = vmatpush2.bf16.msra.mxu0 0
    %1984 = vmatprep.subr.bf16.mxu0 0
    %1985 = vmatpush2.bf16.msra.mxu0 %v1946
    %1986 = vmatprep.subr.bf16.mxu0 0
    %1987 = vmatpush2.bf16.msra.mxu0 %v1945
    %1988 = vmatprep.subr.bf16.mxu0 0
    %1989 = vmatpush2.bf16.msra.mxu0 %v1944
    %1990 = vmatprep.subr.bf16.mxu0 0
    %1991 = vmatpush2.bf16.msra.mxu0 %v1943
    %1992 = vmatprep.subr.bf16.mxu0 0
    %1993 = vmatpush2.bf16.msra.mxu0 %v1942
    %1994 = vmatprep.subr.bf16.mxu0 0
    %1995 = vmatpush2.bf16.msra.mxu0 %v1941
    %1996 = vmatprep.mubr.bf16.mxu0 %v1962
    %1997 = vmatmul.mubr.bf16.gmra.mxu0 %v1846
    %v1998 = vpop.f32.mrf.mxu0
    %v1999 = vadd.f32 0.0, %v1998
    %v2000 = vpop.f32.mrf.mxu0
    %v2001 = vpop.f32.mrf.mxu0
    %v2002 = vpop.f32.mrf.mxu0
    %2003 = vdwg.mxu0
    %v2004 = vadd.f32 %v1795, %v1999
    %s2005 = scalar_lea.vmem %s7, 3
    %v2006 = vld [vmem:[%s2005] sm:$0x1]
    %v2008 = vsel %vm1384, %v2006, 0
    %2010 = vmatprep.subr.bf16.mxu0 0
    %2011 = vmatpush1.bf16.msra.mxu0 0
    %2012 = vmatprep.subr.bf16.mxu0 0
    %2013 = vmatpush1.bf16.msra.mxu0 0
    %2014 = vmatprep.subr.bf16.mxu0 0
    %2015 = vmatpush1.bf16.msra.mxu0 0
    %2016 = vmatprep.subr.bf16.mxu0 0
    %2017 = vmatpush1.bf16.msra.mxu0 0
    %2018 = vmatprep.subr.bf16.mxu0 0
    %2019 = vmatpush1.bf16.msra.mxu0 0
    %2020 = vmatprep.subr.bf16.mxu0 0
    %2021 = vmatpush1.bf16.msra.mxu0 0
    %2022 = vmatprep.subr.bf16.mxu0 0
    %2023 = vmatpush1.bf16.msra.mxu0 0
    %2024 = vmatprep.subr.bf16.mxu0 %v1396
    %2025 = vmatpush1.bf16.msra.mxu0 %v1393
    %2026 = vmatprep.subr.bf16.mxu0 0
    %2027 = vmatpush2.bf16.msra.mxu0 0
    %2028 = vmatprep.subr.bf16.mxu0 0
    %2029 = vmatpush2.bf16.msra.mxu0 0
    %2030 = vmatprep.subr.bf16.mxu0 0
    %2031 = vmatpush2.bf16.msra.mxu0 0
    %2032 = vmatprep.subr.bf16.mxu0 0
    %2033 = vmatpush2.bf16.msra.mxu0 0
    %2034 = vmatprep.subr.bf16.mxu0 0
    %2035 = vmatpush2.bf16.msra.mxu0 0
    %2036 = vmatprep.subr.bf16.mxu0 0
    %2037 = vmatpush2.bf16.msra.mxu0 0
    %2038 = vmatprep.subr.bf16.mxu0 0
    %2039 = vmatpush2.bf16.msra.mxu0 0
    %2040 = vmatprep.subr.bf16.mxu0 0
    %2041 = vmatpush2.bf16.msra.mxu0 0
    %2042 = vmatprep.mubr.bf16.mxu0 0
    %2043 = vmatmul.mubr.bf16.gmra.mxu0 %v2008
    %v2044 = vpop.f32.mrf.mxu0
    %v2045 = vadd.f32 0.0, %v2044
    %v2046 = vpop.f32.mrf.mxu0
    %v2047 = vadd.f32 0.0, %v2046
    %v2048 = vpop.f32.mrf.mxu0
    %v2049 = vpop.f32.mrf.mxu0
    %2050 = vdwg.mxu0
    %v2051 = vpack.c.bf16 %v2045, %v2045
    %v2052 = vpack.c.bf16 %v2047, %v2047
    %s2053 = scalar_lea.vmem [#allocation7], 336
    %v2054 = vld [vmem:[%s2053] sm:$0xf]
    %v2055 = vld [vmem:[%s2053 + $0x4] sm:$0xf]
    %v2056 = vld [vmem:[%s2053 + $0x8] sm:$0xf]
    %v2057 = vld [vmem:[%s2053 + $0xc] sm:$0xf]
    %v2058 = vld [vmem:[%s2053 + $0x10] sm:$0xf]
    %v2059 = vld [vmem:[%s2053 + $0x14] sm:$0xf]
    %v2060 = vld [vmem:[%s2053 + $0x18] sm:$0xf]
    %v2061 = vld [vmem:[%s2053 + $0x1c] sm:$0xf]
    %v2062 = vld [vmem:[%s2053 + $0x20] sm:$0xf]
    %v2063 = vld [vmem:[%s2053 + $0x24] sm:$0xf]
    %v2064 = vld [vmem:[%s2053 + $0x28] sm:$0xf]
    %v2065 = vld [vmem:[%s2053 + $0x2c] sm:$0xf]
    %v2066 = vld [vmem:[%s2053 + $0x30] sm:$0xf]
    %v2067 = vld [vmem:[%s2053 + $0x34] sm:$0xf]
    %v2068 = vld [vmem:[%s2053 + $0x38] sm:$0xf]
    %v2069 = vld [vmem:[%s2053 + $0x3c] sm:$0xf]
    %v2070 = vld [vmem:[%s2053 + $0x40] sm:$0xf]
    %v2071 = vld [vmem:[%s2053 + $0x44] sm:$0xf]
    %v2072 = vld [vmem:[%s2053 + $0x48] sm:$0xf]
    %v2073 = vld [vmem:[%s2053 + $0x4c] sm:$0xf]
    %v2074 = vld [vmem:[%s2053 + $0x50] sm:$0xf]
    %v2075 = vld [vmem:[%s2053 + $0x54] sm:$0xf]
    %v2076 = vld [vmem:[%s2053 + $0x58] sm:$0xf]
    %v2077 = vld [vmem:[%s2053 + $0x5c] sm:$0xf]
    %v2078 = vld [vmem:[%s2053 + $0x60] sm:$0xf]
    %v2079 = vld [vmem:[%s2053 + $0x64] sm:$0xf]
    %v2080 = vld [vmem:[%s2053 + $0x68] sm:$0xf]
    %v2081 = vld [vmem:[%s2053 + $0x6c] sm:$0xf]
    %v2110 = vunpack.c.l.b16 %v2054
    %v2111 = vunpack.c.l.b16 %v2055
    %v2112 = vunpack.c.l.b16 %v2056
    %v2113 = vunpack.c.l.b16 %v2057
    %v2114 = vunpack.c.l.b16 %v2058
    %v2115 = vunpack.c.l.b16 %v2059
    %v2116 = vunpack.c.l.b16 %v2060
    %v2117 = vunpack.c.l.b16 %v2061
    %v2118 = vunpack.c.l.b16 %v2062
    %v2119 = vunpack.c.l.b16 %v2063
    %v2120 = vunpack.c.l.b16 %v2064
    %v2121 = vunpack.c.l.b16 %v2065
    %v2122 = vunpack.c.l.b16 %v2066
    %v2123 = vunpack.c.l.b16 %v2067
    %v2124 = vunpack.c.l.b16 %v2068
    %v2125 = vunpack.c.l.b16 %v2069
    %v2126 = vunpack.c.l.b16 %v2070
    %v2127 = vunpack.c.l.b16 %v2071
    %v2128 = vunpack.c.l.b16 %v2072
    %v2129 = vunpack.c.l.b16 %v2073
    %v2130 = vunpack.c.l.b16 %v2074
    %v2131 = vunpack.c.l.b16 %v2075
    %v2132 = vunpack.c.l.b16 %v2076
    %v2133 = vunpack.c.l.b16 %v2077
    %v2134 = vunpack.c.l.b16 %v2078
    %v2135 = vunpack.c.l.b16 %v2079
    %v2136 = vunpack.c.l.b16 %v2080
    %v2137 = vunpack.c.l.b16 %v2081
    %v2138 = vpack.c.b16 %v2111, %v2110
    %v2139 = vpack.c.b16 %v2113, %v2112
    %v2140 = vpack.c.b16 %v2115, %v2114
    %v2141 = vpack.c.b16 %v2117, %v2116
    %v2142 = vpack.c.b16 %v2119, %v2118
    %v2143 = vpack.c.b16 %v2121, %v2120
    %v2144 = vpack.c.b16 %v2123, %v2122
    %v2145 = vpack.c.b16 %v2125, %v2124
    %v2146 = vpack.c.b16 %v2127, %v2126
    %v2147 = vpack.c.b16 %v2129, %v2128
    %v2148 = vpack.c.b16 %v2131, %v2130
    %v2149 = vpack.c.b16 %v2133, %v2132
    %v2150 = vpack.c.b16 %v2135, %v2134
    %v2151 = vpack.c.b16 %v2137, %v2136
    %v2167 = vsel %vm873, %v2052, 0
    %2169 = vmatprep.subr.bf16.mxu0 0
    %2170 = vmatpush1.bf16.msra.mxu0 %v2145
    %2171 = vmatprep.subr.bf16.mxu0 0
    %2172 = vmatpush1.bf16.msra.mxu0 %v2144
    %2173 = vmatprep.subr.bf16.mxu0 0
    %2174 = vmatpush1.bf16.msra.mxu0 %v2143
    %2175 = vmatprep.subr.bf16.mxu0 0
    %2176 = vmatpush1.bf16.msra.mxu0 %v2142
    %2177 = vmatprep.subr.bf16.mxu0 0
    %2178 = vmatpush1.bf16.msra.mxu0 %v2141
    %2179 = vmatprep.subr.bf16.mxu0 0
    %2180 = vmatpush1.bf16.msra.mxu0 %v2140
    %2181 = vmatprep.subr.bf16.mxu0 0
    %2182 = vmatpush1.bf16.msra.mxu0 %v2139
    %2183 = vmatprep.subr.bf16.mxu0 0
    %2184 = vmatpush1.bf16.msra.mxu0 %v2138
    %2185 = vmatprep.subr.bf16.mxu0 0
    %2186 = vmatpush2.bf16.msra.mxu0 0
    %2187 = vmatprep.subr.bf16.mxu0 0
    %2188 = vmatpush2.bf16.msra.mxu0 0
    %2189 = vmatprep.subr.bf16.mxu0 0
    %2190 = vmatpush2.bf16.msra.mxu0 %v2151
    %2191 = vmatprep.subr.bf16.mxu0 0
    %2192 = vmatpush2.bf16.msra.mxu0 %v2150
    %2193 = vmatprep.subr.bf16.mxu0 0
    %2194 = vmatpush2.bf16.msra.mxu0 %v2149
    %2195 = vmatprep.subr.bf16.mxu0 0
    %2196 = vmatpush2.bf16.msra.mxu0 %v2148
    %2197 = vmatprep.subr.bf16.mxu0 0
    %2198 = vmatpush2.bf16.msra.mxu0 %v2147
    %2199 = vmatprep.subr.bf16.mxu0 0
    %2200 = vmatpush2.bf16.msra.mxu0 %v2146
    %2201 = vmatprep.mubr.bf16.mxu0 %v2167
    %2202 = vmatmul.mubr.bf16.gmra.mxu0 %v2051
    %v2203 = vpop.f32.mrf.mxu0
    %v2204 = vadd.f32 0.0, %v2203
    %v2205 = vpop.f32.mrf.mxu0
    %v2206 = vpop.f32.mrf.mxu0
    %v2207 = vpop.f32.mrf.mxu0
    %2208 = vdwg.mxu0
    %v2209 = vadd.f32 %v2004, %v2204
    %s2210 = scalar_lea.vmem %s7, 4
    %v2211 = vld [vmem:[%s2210] sm:$0x1]
    %v2213 = vsel %vm1384, %v2211, 0
    %2215 = vmatprep.subr.bf16.mxu0 0
    %2216 = vmatpush1.bf16.msra.mxu0 0
    %2217 = vmatprep.subr.bf16.mxu0 0
    %2218 = vmatpush1.bf16.msra.mxu0 0
    %2219 = vmatprep.subr.bf16.mxu0 0
    %2220 = vmatpush1.bf16.msra.mxu0 0
    %2221 = vmatprep.subr.bf16.mxu0 0
    %2222 = vmatpush1.bf16.msra.mxu0 0
    %2223 = vmatprep.subr.bf16.mxu0 0
    %2224 = vmatpush1.bf16.msra.mxu0 0
    %2225 = vmatprep.subr.bf16.mxu0 0
    %2226 = vmatpush1.bf16.msra.mxu0 0
    %2227 = vmatprep.subr.bf16.mxu0 0
    %2228 = vmatpush1.bf16.msra.mxu0 0
    %2229 = vmatprep.subr.bf16.mxu0 %v1396
    %2230 = vmatpush1.bf16.msra.mxu0 %v1393
    %2231 = vmatprep.subr.bf16.mxu0 0
    %2232 = vmatpush2.bf16.msra.mxu0 0
    %2233 = vmatprep.subr.bf16.mxu0 0
    %2234 = vmatpush2.bf16.msra.mxu0 0
    %2235 = vmatprep.subr.bf16.mxu0 0
    %2236 = vmatpush2.bf16.msra.mxu0 0
    %2237 = vmatprep.subr.bf16.mxu0 0
    %2238 = vmatpush2.bf16.msra.mxu0 0
    %2239 = vmatprep.subr.bf16.mxu0 0
    %2240 = vmatpush2.bf16.msra.mxu0 0
    %2241 = vmatprep.subr.bf16.mxu0 0
    %2242 = vmatpush2.bf16.msra.mxu0 0
    %2243 = vmatprep.subr.bf16.mxu0 0
    %2244 = vmatpush2.bf16.msra.mxu0 0
    %2245 = vmatprep.subr.bf16.mxu0 0
    %2246 = vmatpush2.bf16.msra.mxu0 0
    %2247 = vmatprep.mubr.bf16.mxu0 0
    %2248 = vmatmul.mubr.bf16.gmra.mxu0 %v2213
    %v2249 = vpop.f32.mrf.mxu0
    %v2250 = vadd.f32 0.0, %v2249
    %v2251 = vpop.f32.mrf.mxu0
    %v2252 = vadd.f32 0.0, %v2251
    %v2253 = vpop.f32.mrf.mxu0
    %v2254 = vpop.f32.mrf.mxu0
    %2255 = vdwg.mxu0
    %v2256 = vpack.c.bf16 %v2250, %v2250
    %v2257 = vpack.c.bf16 %v2252, %v2252
    %s2258 = scalar_lea.vmem [#allocation7], 448
    %v2259 = vld [vmem:[%s2258] sm:$0xf]
    %v2260 = vld [vmem:[%s2258 + $0x4] sm:$0xf]
    %v2261 = vld [vmem:[%s2258 + $0x8] sm:$0xf]
    %v2262 = vld [vmem:[%s2258 + $0xc] sm:$0xf]
    %v2263 = vld [vmem:[%s2258 + $0x10] sm:$0xf]
    %v2264 = vld [vmem:[%s2258 + $0x14] sm:$0xf]
    %v2265 = vld [vmem:[%s2258 + $0x18] sm:$0xf]
    %v2266 = vld [vmem:[%s2258 + $0x1c] sm:$0xf]
    %v2267 = vld [vmem:[%s2258 + $0x20] sm:$0xf]
    %v2268 = vld [vmem:[%s2258 + $0x24] sm:$0xf]
    %v2269 = vld [vmem:[%s2258 + $0x28] sm:$0xf]
    %v2270 = vld [vmem:[%s2258 + $0x2c] sm:$0xf]
    %v2271 = vld [vmem:[%s2258 + $0x30] sm:$0xf]
    %v2272 = vld [vmem:[%s2258 + $0x34] sm:$0xf]
    %v2273 = vld [vmem:[%s2258 + $0x38] sm:$0xf]
    %v2274 = vld [vmem:[%s2258 + $0x3c] sm:$0xf]
    %v2275 = vld [vmem:[%s2258 + $0x40] sm:$0xf]
    %v2276 = vld [vmem:[%s2258 + $0x44] sm:$0xf]
    %v2277 = vld [vmem:[%s2258 + $0x48] sm:$0xf]
    %v2278 = vld [vmem:[%s2258 + $0x4c] sm:$0xf]
    %v2279 = vld [vmem:[%s2258 + $0x50] sm:$0xf]
    %v2280 = vld [vmem:[%s2258 + $0x54] sm:$0xf]
    %v2281 = vld [vmem:[%s2258 + $0x58] sm:$0xf]
    %v2282 = vld [vmem:[%s2258 + $0x5c] sm:$0xf]
    %v2283 = vld [vmem:[%s2258 + $0x60] sm:$0xf]
    %v2284 = vld [vmem:[%s2258 + $0x64] sm:$0xf]
    %v2285 = vld [vmem:[%s2258 + $0x68] sm:$0xf]
    %v2286 = vld [vmem:[%s2258 + $0x6c] sm:$0xf]
    %v2315 = vunpack.c.l.b16 %v2259
    %v2316 = vunpack.c.l.b16 %v2260
    %v2317 = vunpack.c.l.b16 %v2261
    %v2318 = vunpack.c.l.b16 %v2262
    %v2319 = vunpack.c.l.b16 %v2263
    %v2320 = vunpack.c.l.b16 %v2264
    %v2321 = vunpack.c.l.b16 %v2265
    %v2322 = vunpack.c.l.b16 %v2266
    %v2323 = vunpack.c.l.b16 %v2267
    %v2324 = vunpack.c.l.b16 %v2268
    %v2325 = vunpack.c.l.b16 %v2269
    %v2326 = vunpack.c.l.b16 %v2270
    %v2327 = vunpack.c.l.b16 %v2271
    %v2328 = vunpack.c.l.b16 %v2272
    %v2329 = vunpack.c.l.b16 %v2273
    %v2330 = vunpack.c.l.b16 %v2274
    %v2331 = vunpack.c.l.b16 %v2275
    %v2332 = vunpack.c.l.b16 %v2276
    %v2333 = vunpack.c.l.b16 %v2277
    %v2334 = vunpack.c.l.b16 %v2278
    %v2335 = vunpack.c.l.b16 %v2279
    %v2336 = vunpack.c.l.b16 %v2280
    %v2337 = vunpack.c.l.b16 %v2281
    %v2338 = vunpack.c.l.b16 %v2282
    %v2339 = vunpack.c.l.b16 %v2283
    %v2340 = vunpack.c.l.b16 %v2284
    %v2341 = vunpack.c.l.b16 %v2285
    %v2342 = vunpack.c.l.b16 %v2286
    %v2343 = vpack.c.b16 %v2316, %v2315
    %v2344 = vpack.c.b16 %v2318, %v2317
    %v2345 = vpack.c.b16 %v2320, %v2319
    %v2346 = vpack.c.b16 %v2322, %v2321
    %v2347 = vpack.c.b16 %v2324, %v2323
    %v2348 = vpack.c.b16 %v2326, %v2325
    %v2349 = vpack.c.b16 %v2328, %v2327
    %v2350 = vpack.c.b16 %v2330, %v2329
    %v2351 = vpack.c.b16 %v2332, %v2331
    %v2352 = vpack.c.b16 %v2334, %v2333
    %v2353 = vpack.c.b16 %v2336, %v2335
    %v2354 = vpack.c.b16 %v2338, %v2337
    %v2355 = vpack.c.b16 %v2340, %v2339
    %v2356 = vpack.c.b16 %v2342, %v2341
    %v2372 = vsel %vm873, %v2257, 0
    %2374 = vmatprep.subr.bf16.mxu0 0
    %2375 = vmatpush1.bf16.msra.mxu0 %v2350
    %2376 = vmatprep.subr.bf16.mxu0 0
    %2377 = vmatpush1.bf16.msra.mxu0 %v2349
    %2378 = vmatprep.subr.bf16.mxu0 0
    %2379 = vmatpush1.bf16.msra.mxu0 %v2348
    %2380 = vmatprep.subr.bf16.mxu0 0
    %2381 = vmatpush1.bf16.msra.mxu0 %v2347
    %2382 = vmatprep.subr.bf16.mxu0 0
    %2383 = vmatpush1.bf16.msra.mxu0 %v2346
    %2384 = vmatprep.subr.bf16.mxu0 0
    %2385 = vmatpush1.bf16.msra.mxu0 %v2345
    %2386 = vmatprep.subr.bf16.mxu0 0
    %2387 = vmatpush1.bf16.msra.mxu0 %v2344
    %2388 = vmatprep.subr.bf16.mxu0 0
    %2389 = vmatpush1.bf16.msra.mxu0 %v2343
    %2390 = vmatprep.subr.bf16.mxu0 0
    %2391 = vmatpush2.bf16.msra.mxu0 0
    %2392 = vmatprep.subr.bf16.mxu0 0
    %2393 = vmatpush2.bf16.msra.mxu0 0
    %2394 = vmatprep.subr.bf16.mxu0 0
    %2395 = vmatpush2.bf16.msra.mxu0 %v2356
    %2396 = vmatprep.subr.bf16.mxu0 0
    %2397 = vmatpush2.bf16.msra.mxu0 %v2355
    %2398 = vmatprep.subr.bf16.mxu0 0
    %2399 = vmatpush2.bf16.msra.mxu0 %v2354
    %2400 = vmatprep.subr.bf16.mxu0 0
    %2401 = vmatpush2.bf16.msra.mxu0 %v2353
    %2402 = vmatprep.subr.bf16.mxu0 0
    %2403 = vmatpush2.bf16.msra.mxu0 %v2352
    %2404 = vmatprep.subr.bf16.mxu0 0
    %2405 = vmatpush2.bf16.msra.mxu0 %v2351
    %2406 = vmatprep.mubr.bf16.mxu0 %v2372
    %2407 = vmatmul.mubr.bf16.gmra.mxu0 %v2256
    %v2408 = vpop.f32.mrf.mxu0
    %v2409 = vadd.f32 0.0, %v2408
    %v2410 = vpop.f32.mrf.mxu0
    %v2411 = vpop.f32.mrf.mxu0
    %v2412 = vpop.f32.mrf.mxu0
    %2413 = vdwg.mxu0
    %v2414 = vadd.f32 %v2209, %v2409
    %s2415 = scalar_lea.vmem %s7, 5
    %v2416 = vld [vmem:[%s2415] sm:$0x1]
    %v2418 = vsel %vm1384, %v2416, 0
    %2420 = vmatprep.subr.bf16.mxu0 0
    %2421 = vmatpush1.bf16.msra.mxu0 0
    %2422 = vmatprep.subr.bf16.mxu0 0
    %2423 = vmatpush1.bf16.msra.mxu0 0
    %2424 = vmatprep.subr.bf16.mxu0 0
    %2425 = vmatpush1.bf16.msra.mxu0 0
    %2426 = vmatprep.subr.bf16.mxu0 0
    %2427 = vmatpush1.bf16.msra.mxu0 0
    %2428 = vmatprep.subr.bf16.mxu0 0
    %2429 = vmatpush1.bf16.msra.mxu0 0
    %2430 = vmatprep.subr.bf16.mxu0 0
    %2431 = vmatpush1.bf16.msra.mxu0 0
    %2432 = vmatprep.subr.bf16.mxu0 0
    %2433 = vmatpush1.bf16.msra.mxu0 0
    %2434 = vmatprep.subr.bf16.mxu0 %v1396
    %2435 = vmatpush1.bf16.msra.mxu0 %v1393
    %2436 = vmatprep.subr.bf16.mxu0 0
    %2437 = vmatpush2.bf16.msra.mxu0 0
    %2438 = vmatprep.subr.bf16.mxu0 0
    %2439 = vmatpush2.bf16.msra.mxu0 0
    %2440 = vmatprep.subr.bf16.mxu0 0
    %2441 = vmatpush2.bf16.msra.mxu0 0
    %2442 = vmatprep.subr.bf16.mxu0 0
    %2443 = vmatpush2.bf16.msra.mxu0 0
    %2444 = vmatprep.subr.bf16.mxu0 0
    %2445 = vmatpush2.bf16.msra.mxu0 0
    %2446 = vmatprep.subr.bf16.mxu0 0
    %2447 = vmatpush2.bf16.msra.mxu0 0
    %2448 = vmatprep.subr.bf16.mxu0 0
    %2449 = vmatpush2.bf16.msra.mxu0 0
    %2450 = vmatprep.subr.bf16.mxu0 0
    %2451 = vmatpush2.bf16.msra.mxu0 0
    %2452 = vmatprep.mubr.bf16.mxu0 0
    %2453 = vmatmul.mubr.bf16.gmra.mxu0 %v2418
    %v2454 = vpop.f32.mrf.mxu0
    %v2455 = vadd.f32 0.0, %v2454
    %v2456 = vpop.f32.mrf.mxu0
    %v2457 = vadd.f32 0.0, %v2456
    %v2458 = vpop.f32.mrf.mxu0
    %v2459 = vpop.f32.mrf.mxu0
    %2460 = vdwg.mxu0
    %v2461 = vpack.c.bf16 %v2455, %v2455
    %v2462 = vpack.c.bf16 %v2457, %v2457
    %s2463 = scalar_lea.vmem [#allocation7], 560
    %v2464 = vld [vmem:[%s2463] sm:$0xf]
    %v2465 = vld [vmem:[%s2463 + $0x4] sm:$0xf]
    %v2466 = vld [vmem:[%s2463 + $0x8] sm:$0xf]
    %v2467 = vld [vmem:[%s2463 + $0xc] sm:$0xf]
    %v2468 = vld [vmem:[%s2463 + $0x10] sm:$0xf]
    %v2469 = vld [vmem:[%s2463 + $0x14] sm:$0xf]
    %v2470 = vld [vmem:[%s2463 + $0x18] sm:$0xf]
    %v2471 = vld [vmem:[%s2463 + $0x1c] sm:$0xf]
    %v2472 = vld [vmem:[%s2463 + $0x20] sm:$0xf]
    %v2473 = vld [vmem:[%s2463 + $0x24] sm:$0xf]
    %v2474 = vld [vmem:[%s2463 + $0x28] sm:$0xf]
    %v2475 = vld [vmem:[%s2463 + $0x2c] sm:$0xf]
    %v2476 = vld [vmem:[%s2463 + $0x30] sm:$0xf]
    %v2477 = vld [vmem:[%s2463 + $0x34] sm:$0xf]
    %v2478 = vld [vmem:[%s2463 + $0x38] sm:$0xf]
    %v2479 = vld [vmem:[%s2463 + $0x3c] sm:$0xf]
    %v2480 = vld [vmem:[%s2463 + $0x40] sm:$0xf]
    %v2481 = vld [vmem:[%s2463 + $0x44] sm:$0xf]
    %v2482 = vld [vmem:[%s2463 + $0x48] sm:$0xf]
    %v2483 = vld [vmem:[%s2463 + $0x4c] sm:$0xf]
    %v2484 = vld [vmem:[%s2463 + $0x50] sm:$0xf]
    %v2485 = vld [vmem:[%s2463 + $0x54] sm:$0xf]
    %v2486 = vld [vmem:[%s2463 + $0x58] sm:$0xf]
    %v2487 = vld [vmem:[%s2463 + $0x5c] sm:$0xf]
    %v2488 = vld [vmem:[%s2463 + $0x60] sm:$0xf]
    %v2489 = vld [vmem:[%s2463 + $0x64] sm:$0xf]
    %v2490 = vld [vmem:[%s2463 + $0x68] sm:$0xf]
    %v2491 = vld [vmem:[%s2463 + $0x6c] sm:$0xf]
    %v2520 = vunpack.c.l.b16 %v2464
    %v2521 = vunpack.c.l.b16 %v2465
    %v2522 = vunpack.c.l.b16 %v2466
    %v2523 = vunpack.c.l.b16 %v2467
    %v2524 = vunpack.c.l.b16 %v2468
    %v2525 = vunpack.c.l.b16 %v2469
    %v2526 = vunpack.c.l.b16 %v2470
    %v2527 = vunpack.c.l.b16 %v2471
    %v2528 = vunpack.c.l.b16 %v2472
    %v2529 = vunpack.c.l.b16 %v2473
    %v2530 = vunpack.c.l.b16 %v2474
    %v2531 = vunpack.c.l.b16 %v2475
    %v2532 = vunpack.c.l.b16 %v2476
    %v2533 = vunpack.c.l.b16 %v2477
    %v2534 = vunpack.c.l.b16 %v2478
    %v2535 = vunpack.c.l.b16 %v2479
    %v2536 = vunpack.c.l.b16 %v2480
    %v2537 = vunpack.c.l.b16 %v2481
    %v2538 = vunpack.c.l.b16 %v2482
    %v2539 = vunpack.c.l.b16 %v2483
    %v2540 = vunpack.c.l.b16 %v2484
    %v2541 = vunpack.c.l.b16 %v2485
    %v2542 = vunpack.c.l.b16 %v2486
    %v2543 = vunpack.c.l.b16 %v2487
    %v2544 = vunpack.c.l.b16 %v2488
    %v2545 = vunpack.c.l.b16 %v2489
    %v2546 = vunpack.c.l.b16 %v2490
    %v2547 = vunpack.c.l.b16 %v2491
    %v2548 = vpack.c.b16 %v2521, %v2520
    %v2549 = vpack.c.b16 %v2523, %v2522
    %v2550 = vpack.c.b16 %v2525, %v2524
    %v2551 = vpack.c.b16 %v2527, %v2526
    %v2552 = vpack.c.b16 %v2529, %v2528
    %v2553 = vpack.c.b16 %v2531, %v2530
    %v2554 = vpack.c.b16 %v2533, %v2532
    %v2555 = vpack.c.b16 %v2535, %v2534
    %v2556 = vpack.c.b16 %v2537, %v2536
    %v2557 = vpack.c.b16 %v2539, %v2538
    %v2558 = vpack.c.b16 %v2541, %v2540
    %v2559 = vpack.c.b16 %v2543, %v2542
    %v2560 = vpack.c.b16 %v2545, %v2544
    %v2561 = vpack.c.b16 %v2547, %v2546
    %v2577 = vsel %vm873, %v2462, 0
    %2579 = vmatprep.subr.bf16.mxu0 0
    %2580 = vmatpush1.bf16.msra.mxu0 %v2555
    %2581 = vmatprep.subr.bf16.mxu0 0
    %2582 = vmatpush1.bf16.msra.mxu0 %v2554
    %2583 = vmatprep.subr.bf16.mxu0 0
    %2584 = vmatpush1.bf16.msra.mxu0 %v2553
    %2585 = vmatprep.subr.bf16.mxu0 0
    %2586 = vmatpush1.bf16.msra.mxu0 %v2552
    %2587 = vmatprep.subr.bf16.mxu0 0
    %2588 = vmatpush1.bf16.msra.mxu0 %v2551
    %2589 = vmatprep.subr.bf16.mxu0 0
    %2590 = vmatpush1.bf16.msra.mxu0 %v2550
    %2591 = vmatprep.subr.bf16.mxu0 0
    %2592 = vmatpush1.bf16.msra.mxu0 %v2549
    %2593 = vmatprep.subr.bf16.mxu0 0
    %2594 = vmatpush1.bf16.msra.mxu0 %v2548
    %2595 = vmatprep.subr.bf16.mxu0 0
    %2596 = vmatpush2.bf16.msra.mxu0 0
    %2597 = vmatprep.subr.bf16.mxu0 0
    %2598 = vmatpush2.bf16.msra.mxu0 0
    %2599 = vmatprep.subr.bf16.mxu0 0
    %2600 = vmatpush2.bf16.msra.mxu0 %v2561
    %2601 = vmatprep.subr.bf16.mxu0 0
    %2602 = vmatpush2.bf16.msra.mxu0 %v2560
    %2603 = vmatprep.subr.bf16.mxu0 0
    %2604 = vmatpush2.bf16.msra.mxu0 %v2559
    %2605 = vmatprep.subr.bf16.mxu0 0
    %2606 = vmatpush2.bf16.msra.mxu0 %v2558
    %2607 = vmatprep.subr.bf16.mxu0 0
    %2608 = vmatpush2.bf16.msra.mxu0 %v2557
    %2609 = vmatprep.subr.bf16.mxu0 0
    %2610 = vmatpush2.bf16.msra.mxu0 %v2556
    %2611 = vmatprep.mubr.bf16.mxu0 %v2577
    %2612 = vmatmul.mubr.bf16.gmra.mxu0 %v2461
    %v2613 = vpop.f32.mrf.mxu0
    %v2614 = vadd.f32 0.0, %v2613
    %v2615 = vpop.f32.mrf.mxu0
    %v2616 = vpop.f32.mrf.mxu0
    %v2617 = vpop.f32.mrf.mxu0
    %2618 = vdwg.mxu0
    %v2619 = vadd.f32 %v2414, %v2614
    %s2620 = scalar_lea.vmem %s7, 6
    %v2621 = vld [vmem:[%s2620] sm:$0x1]
    %v2623 = vsel %vm1384, %v2621, 0
    %2625 = vmatprep.subr.bf16.mxu0 0
    %2626 = vmatpush1.bf16.msra.mxu0 0
    %2627 = vmatprep.subr.bf16.mxu0 0
    %2628 = vmatpush1.bf16.msra.mxu0 0
    %2629 = vmatprep.subr.bf16.mxu0 0
    %2630 = vmatpush1.bf16.msra.mxu0 0
    %2631 = vmatprep.subr.bf16.mxu0 0
    %2632 = vmatpush1.bf16.msra.mxu0 0
    %2633 = vmatprep.subr.bf16.mxu0 0
    %2634 = vmatpush1.bf16.msra.mxu0 0
    %2635 = vmatprep.subr.bf16.mxu0 0
    %2636 = vmatpush1.bf16.msra.mxu0 0
    %2637 = vmatprep.subr.bf16.mxu0 0
    %2638 = vmatpush1.bf16.msra.mxu0 0
    %2639 = vmatprep.subr.bf16.mxu0 %v1396
    %2640 = vmatpush1.bf16.msra.mxu0 %v1393
    %2641 = vmatprep.subr.bf16.mxu0 0
    %2642 = vmatpush2.bf16.msra.mxu0 0
    %2643 = vmatprep.subr.bf16.mxu0 0
    %2644 = vmatpush2.bf16.msra.mxu0 0
    %2645 = vmatprep.subr.bf16.mxu0 0
    %2646 = vmatpush2.bf16.msra.mxu0 0
    %2647 = vmatprep.subr.bf16.mxu0 0
    %2648 = vmatpush2.bf16.msra.mxu0 0
    %2649 = vmatprep.subr.bf16.mxu0 0
    %2650 = vmatpush2.bf16.msra.mxu0 0
    %2651 = vmatprep.subr.bf16.mxu0 0
    %2652 = vmatpush2.bf16.msra.mxu0 0
    %2653 = vmatprep.subr.bf16.mxu0 0
    %2654 = vmatpush2.bf16.msra.mxu0 0
    %2655 = vmatprep.subr.bf16.mxu0 0
    %2656 = vmatpush2.bf16.msra.mxu0 0
    %2657 = vmatprep.mubr.bf16.mxu0 0
    %2658 = vmatmul.mubr.bf16.gmra.mxu0 %v2623
    %v2659 = vpop.f32.mrf.mxu0
    %v2660 = vadd.f32 0.0, %v2659
    %v2661 = vpop.f32.mrf.mxu0
    %v2662 = vadd.f32 0.0, %v2661
    %v2663 = vpop.f32.mrf.mxu0
    %v2664 = vpop.f32.mrf.mxu0
    %2665 = vdwg.mxu0
    %v2666 = vpack.c.bf16 %v2660, %v2660
    %v2667 = vpack.c.bf16 %v2662, %v2662
    %s2668 = scalar_lea.vmem [#allocation7], 672
    %v2669 = vld [vmem:[%s2668] sm:$0xf]
    %v2670 = vld [vmem:[%s2668 + $0x4] sm:$0xf]
    %v2671 = vld [vmem:[%s2668 + $0x8] sm:$0xf]
    %v2672 = vld [vmem:[%s2668 + $0xc] sm:$0xf]
    %v2673 = vld [vmem:[%s2668 + $0x10] sm:$0xf]
    %v2674 = vld [vmem:[%s2668 + $0x14] sm:$0xf]
    %v2675 = vld [vmem:[%s2668 + $0x18] sm:$0xf]
    %v2676 = vld [vmem:[%s2668 + $0x1c] sm:$0xf]
    %v2677 = vld [vmem:[%s2668 + $0x20] sm:$0xf]
    %v2678 = vld [vmem:[%s2668 + $0x24] sm:$0xf]
    %v2679 = vld [vmem:[%s2668 + $0x28] sm:$0xf]
    %v2680 = vld [vmem:[%s2668 + $0x2c] sm:$0xf]
    %v2681 = vld [vmem:[%s2668 + $0x30] sm:$0xf]
    %v2682 = vld [vmem:[%s2668 + $0x34] sm:$0xf]
    %v2683 = vld [vmem:[%s2668 + $0x38] sm:$0xf]
    %v2684 = vld [vmem:[%s2668 + $0x3c] sm:$0xf]
    %v2685 = vld [vmem:[%s2668 + $0x40] sm:$0xf]
    %v2686 = vld [vmem:[%s2668 + $0x44] sm:$0xf]
    %v2687 = vld [vmem:[%s2668 + $0x48] sm:$0xf]
    %v2688 = vld [vmem:[%s2668 + $0x4c] sm:$0xf]
    %v2689 = vld [vmem:[%s2668 + $0x50] sm:$0xf]
    %v2690 = vld [vmem:[%s2668 + $0x54] sm:$0xf]
    %v2691 = vld [vmem:[%s2668 + $0x58] sm:$0xf]
    %v2692 = vld [vmem:[%s2668 + $0x5c] sm:$0xf]
    %v2693 = vld [vmem:[%s2668 + $0x60] sm:$0xf]
    %v2694 = vld [vmem:[%s2668 + $0x64] sm:$0xf]
    %v2695 = vld [vmem:[%s2668 + $0x68] sm:$0xf]
    %v2696 = vld [vmem:[%s2668 + $0x6c] sm:$0xf]
    %v2725 = vunpack.c.l.b16 %v2669
    %v2726 = vunpack.c.l.b16 %v2670
    %v2727 = vunpack.c.l.b16 %v2671
    %v2728 = vunpack.c.l.b16 %v2672
    %v2729 = vunpack.c.l.b16 %v2673
    %v2730 = vunpack.c.l.b16 %v2674
    %v2731 = vunpack.c.l.b16 %v2675
    %v2732 = vunpack.c.l.b16 %v2676
    %v2733 = vunpack.c.l.b16 %v2677
    %v2734 = vunpack.c.l.b16 %v2678
    %v2735 = vunpack.c.l.b16 %v2679
    %v2736 = vunpack.c.l.b16 %v2680
    %v2737 = vunpack.c.l.b16 %v2681
    %v2738 = vunpack.c.l.b16 %v2682
    %v2739 = vunpack.c.l.b16 %v2683
    %v2740 = vunpack.c.l.b16 %v2684
    %v2741 = vunpack.c.l.b16 %v2685
    %v2742 = vunpack.c.l.b16 %v2686
    %v2743 = vunpack.c.l.b16 %v2687
    %v2744 = vunpack.c.l.b16 %v2688
    %v2745 = vunpack.c.l.b16 %v2689
    %v2746 = vunpack.c.l.b16 %v2690
    %v2747 = vunpack.c.l.b16 %v2691
    %v2748 = vunpack.c.l.b16 %v2692
    %v2749 = vunpack.c.l.b16 %v2693
    %v2750 = vunpack.c.l.b16 %v2694
    %v2751 = vunpack.c.l.b16 %v2695
    %v2752 = vunpack.c.l.b16 %v2696
    %v2753 = vpack.c.b16 %v2726, %v2725
    %v2754 = vpack.c.b16 %v2728, %v2727
    %v2755 = vpack.c.b16 %v2730, %v2729
    %v2756 = vpack.c.b16 %v2732, %v2731
    %v2757 = vpack.c.b16 %v2734, %v2733
    %v2758 = vpack.c.b16 %v2736, %v2735
    %v2759 = vpack.c.b16 %v2738, %v2737
    %v2760 = vpack.c.b16 %v2740, %v2739
    %v2761 = vpack.c.b16 %v2742, %v2741
    %v2762 = vpack.c.b16 %v2744, %v2743
    %v2763 = vpack.c.b16 %v2746, %v2745
    %v2764 = vpack.c.b16 %v2748, %v2747
    %v2765 = vpack.c.b16 %v2750, %v2749
    %v2766 = vpack.c.b16 %v2752, %v2751
    %v2782 = vsel %vm873, %v2667, 0
    %2784 = vmatprep.subr.bf16.mxu0 0
    %2785 = vmatpush1.bf16.msra.mxu0 %v2760
    %2786 = vmatprep.subr.bf16.mxu0 0
    %2787 = vmatpush1.bf16.msra.mxu0 %v2759
    %2788 = vmatprep.subr.bf16.mxu0 0
    %2789 = vmatpush1.bf16.msra.mxu0 %v2758
    %2790 = vmatprep.subr.bf16.mxu0 0
    %2791 = vmatpush1.bf16.msra.mxu0 %v2757
    %2792 = vmatprep.subr.bf16.mxu0 0
    %2793 = vmatpush1.bf16.msra.mxu0 %v2756
    %2794 = vmatprep.subr.bf16.mxu0 0
    %2795 = vmatpush1.bf16.msra.mxu0 %v2755
    %2796 = vmatprep.subr.bf16.mxu0 0
    %2797 = vmatpush1.bf16.msra.mxu0 %v2754
    %2798 = vmatprep.subr.bf16.mxu0 0
    %2799 = vmatpush1.bf16.msra.mxu0 %v2753
    %2800 = vmatprep.subr.bf16.mxu0 0
    %2801 = vmatpush2.bf16.msra.mxu0 0
    %2802 = vmatprep.subr.bf16.mxu0 0
    %2803 = vmatpush2.bf16.msra.mxu0 0
    %2804 = vmatprep.subr.bf16.mxu0 0
    %2805 = vmatpush2.bf16.msra.mxu0 %v2766
    %2806 = vmatprep.subr.bf16.mxu0 0
    %2807 = vmatpush2.bf16.msra.mxu0 %v2765
    %2808 = vmatprep.subr.bf16.mxu0 0
    %2809 = vmatpush2.bf16.msra.mxu0 %v2764
    %2810 = vmatprep.subr.bf16.mxu0 0
    %2811 = vmatpush2.bf16.msra.mxu0 %v2763
    %2812 = vmatprep.subr.bf16.mxu0 0
    %2813 = vmatpush2.bf16.msra.mxu0 %v2762
    %2814 = vmatprep.subr.bf16.mxu0 0
    %2815 = vmatpush2.bf16.msra.mxu0 %v2761
    %2816 = vmatprep.mubr.bf16.mxu0 %v2782
    %2817 = vmatmul.mubr.bf16.gmra.mxu0 %v2666
    %v2818 = vpop.f32.mrf.mxu0
    %v2819 = vadd.f32 0.0, %v2818
    %v2820 = vpop.f32.mrf.mxu0
    %v2821 = vpop.f32.mrf.mxu0
    %v2822 = vpop.f32.mrf.mxu0
    %2823 = vdwg.mxu0
    %v2824 = vadd.f32 %v2619, %v2819
    %v2825 = vld [vmem:[%s9] sm:$0x1]
    %v2826 = vadd.f32 %v2824, %v2825
    %v2827 = vpack.c.bf16 %v2826, %v2826
    %v2828 = vld [vmem:[#allocation9] sm:$0xff]
    %v2829 = vld [vmem:[#allocation9 + $0x8] sm:$0xff]
    %v2830 = vld [vmem:[#allocation9 + $0x10] sm:$0xff]
    %v2831 = vld [vmem:[#allocation9 + $0x18] sm:$0xff]
    %v2832 = vld [vmem:[#allocation9 + $0x20] sm:$0xff]
    %v2833 = vld [vmem:[#allocation9 + $0x28] sm:$0xff]
    %v2834 = vld [vmem:[#allocation9 + $0x30] sm:$0xff]
    %v2835 = vld [vmem:[#allocation9 + $0x38] sm:$0xff]
    %v2844 = vunpack.c.l.b16 %v2828
    %v2845 = vunpack.c.h.b16 %v2828
    %v2846 = vunpack.c.l.b16 %v2829
    %v2847 = vunpack.c.h.b16 %v2829
    %v2848 = vunpack.c.l.b16 %v2830
    %v2849 = vunpack.c.h.b16 %v2830
    %v2850 = vunpack.c.l.b16 %v2831
    %v2851 = vunpack.c.h.b16 %v2831
    %v2852 = vunpack.c.l.b16 %v2832
    %v2853 = vunpack.c.h.b16 %v2832
    %v2854 = vunpack.c.l.b16 %v2833
    %v2855 = vunpack.c.h.b16 %v2833
    %v2856 = vunpack.c.l.b16 %v2834
    %v2857 = vunpack.c.h.b16 %v2834
    %v2858 = vunpack.c.l.b16 %v2835
    %v2859 = vunpack.c.h.b16 %v2835
    %v2860 = vpack.c.b16 %v2846, %v2844
    %v2861 = vpack.c.b16 %v2847, %v2845
    %v2862 = vpack.c.b16 %v2850, %v2848
    %v2863 = vpack.c.b16 %v2851, %v2849
    %v2864 = vpack.c.b16 %v2854, %v2852
    %v2865 = vpack.c.b16 %v2855, %v2853
    %v2866 = vpack.c.b16 %v2858, %v2856
    %v2867 = vpack.c.b16 %v2859, %v2857
    %vm2876 = vcmask 523264
    %v2878 = vsel %vm2876, %v2827, 0
    %2880 = vmatprep.subr.bf16.mxu0 0
    %2881 = vmatpush1.bf16.msra.mxu0 0
    %2882 = vmatprep.subr.bf16.mxu0 0
    %2883 = vmatpush1.bf16.msra.mxu0 0
    %2884 = vmatprep.subr.bf16.mxu0 0
    %2885 = vmatpush1.bf16.msra.mxu0 0
    %2886 = vmatprep.subr.bf16.mxu0 0
    %2887 = vmatpush1.bf16.msra.mxu0 0
    %2888 = vmatprep.subr.bf16.mxu0 %v2867
    %2889 = vmatpush1.bf16.msra.mxu0 %v2866
    %2890 = vmatprep.subr.bf16.mxu0 %v2865
    %2891 = vmatpush1.bf16.msra.mxu0 %v2864
    %2892 = vmatprep.subr.bf16.mxu0 %v2863
    %2893 = vmatpush1.bf16.msra.mxu0 %v2862
    %2894 = vmatprep.subr.bf16.mxu0 %v2861
    %2895 = vmatpush1.bf16.msra.mxu0 %v2860
    %2896 = vmatprep.subr.bf16.mxu0 0
    %2897 = vmatpush2.bf16.msra.mxu0 0
    %2898 = vmatprep.subr.bf16.mxu0 0
    %2899 = vmatpush2.bf16.msra.mxu0 0
    %2900 = vmatprep.subr.bf16.mxu0 0
    %2901 = vmatpush2.bf16.msra.mxu0 0
    %2902 = vmatprep.subr.bf16.mxu0 0
    %2903 = vmatpush2.bf16.msra.mxu0 0
    %2904 = vmatprep.subr.bf16.mxu0 0
    %2905 = vmatpush2.bf16.msra.mxu0 0
    %2906 = vmatprep.subr.bf16.mxu0 0
    %2907 = vmatpush2.bf16.msra.mxu0 0
    %2908 = vmatprep.subr.bf16.mxu0 0
    %2909 = vmatpush2.bf16.msra.mxu0 0
    %2910 = vmatprep.subr.bf16.mxu0 0
    %2911 = vmatpush2.bf16.msra.mxu0 0
    %2912 = vmatprep.mubr.bf16.mxu0 0
    %2913 = vmatmul.mubr.bf16.gmra.mxu0 %v2878
    %v2914 = vpop.f32.mrf.mxu0
    %v2915 = vadd.f32 0.0, %v2914
    %v2916 = vpop.f32.mrf.mxu0
    %v2917 = vadd.f32 0.0, %v2916
    %v2918 = vpop.f32.mrf.mxu0
    %v2919 = vpop.f32.mrf.mxu0
    %2920 = vdwg.mxu0
    %v2921 = vld [vmem:[%s10] sm:$0xf]
    %v2922 = vpack.c.bf16 %v2915, %v2915
    %v2923 = vpack.c.bf16 %v2917, %v2917
    %s2924 = scalar_lea.vmem [#allocation9], 64
    %v2925 = vld [vmem:[%s2924] sm:$0xff]
    %v2926 = vld [vmem:[%s2924 + $0x8] sm:$0xff]
    %v2927 = vld [vmem:[%s2924 + $0x10] sm:$0xff]
    %v2928 = vld [vmem:[%s2924 + $0x18] sm:$0xff]
    %v2929 = vld [vmem:[%s2924 + $0x20] sm:$0xff]
    %v2930 = vld [vmem:[%s2924 + $0x28] sm:$0xff]
    %v2931 = vld [vmem:[%s2924 + $0x30] sm:$0xff]
    %v2932 = vld [vmem:[%s2924 + $0x38] sm:$0xff]
    %v2941 = vunpack.c.l.b16 %v2925
    %v2942 = vunpack.c.h.b16 %v2925
    %v2943 = vunpack.c.l.b16 %v2926
    %v2944 = vunpack.c.h.b16 %v2926
    %v2945 = vunpack.c.l.b16 %v2927
    %v2946 = vunpack.c.h.b16 %v2927
    %v2947 = vunpack.c.l.b16 %v2928
    %v2948 = vunpack.c.h.b16 %v2928
    %v2949 = vunpack.c.l.b16 %v2929
    %v2950 = vunpack.c.h.b16 %v2929
    %v2951 = vunpack.c.l.b16 %v2930
    %v2952 = vunpack.c.h.b16 %v2930
    %v2953 = vunpack.c.l.b16 %v2931
    %v2954 = vunpack.c.h.b16 %v2931
    %v2955 = vunpack.c.l.b16 %v2932
    %v2956 = vunpack.c.h.b16 %v2932
    %v2957 = vpack.c.b16 %v2943, %v2941
    %v2958 = vpack.c.b16 %v2944, %v2942
    %v2959 = vpack.c.b16 %v2947, %v2945
    %v2960 = vpack.c.b16 %v2948, %v2946
    %v2961 = vpack.c.b16 %v2951, %v2949
    %v2962 = vpack.c.b16 %v2952, %v2950
    %v2963 = vpack.c.b16 %v2955, %v2953
    %v2964 = vpack.c.b16 %v2956, %v2954
    %2973 = vmatprep.subr.bf16.mxu0 0
    %2974 = vmatpush1.bf16.msra.mxu0 0
    %2975 = vmatprep.subr.bf16.mxu0 0
    %2976 = vmatpush1.bf16.msra.mxu0 0
    %2977 = vmatprep.subr.bf16.mxu0 0
    %2978 = vmatpush1.bf16.msra.mxu0 0
    %2979 = vmatprep.subr.bf16.mxu0 0
    %2980 = vmatpush1.bf16.msra.mxu0 0
    %2981 = vmatprep.subr.bf16.mxu0 %v2964
    %2982 = vmatpush1.bf16.msra.mxu0 %v2963
    %2983 = vmatprep.subr.bf16.mxu0 %v2962
    %2984 = vmatpush1.bf16.msra.mxu0 %v2961
    %2985 = vmatprep.subr.bf16.mxu0 %v2960
    %2986 = vmatpush1.bf16.msra.mxu0 %v2959
    %2987 = vmatprep.subr.bf16.mxu0 %v2958
    %2988 = vmatpush1.bf16.msra.mxu0 %v2957
    %2989 = vmatprep.subr.bf16.mxu0 0
    %2990 = vmatpush2.bf16.msra.mxu0 0
    %2991 = vmatprep.subr.bf16.mxu0 0
    %2992 = vmatpush2.bf16.msra.mxu0 0
    %2993 = vmatprep.subr.bf16.mxu0 0
    %2994 = vmatpush2.bf16.msra.mxu0 0
    %2995 = vmatprep.subr.bf16.mxu0 0
    %2996 = vmatpush2.bf16.msra.mxu0 0
    %2997 = vmatprep.subr.bf16.mxu0 0
    %2998 = vmatpush2.bf16.msra.mxu0 0
    %2999 = vmatprep.subr.bf16.mxu0 0
    %3000 = vmatpush2.bf16.msra.mxu0 0
    %3001 = vmatprep.subr.bf16.mxu0 0
    %3002 = vmatpush2.bf16.msra.mxu0 0
    %3003 = vmatprep.subr.bf16.mxu0 0
    %3004 = vmatpush2.bf16.msra.mxu0 0
    %3005 = vmatprep.mubr.bf16.mxu0 0
    %3006 = vmatmul.mubr.bf16.gmra.mxu0 %v2878
    %v3007 = vpop.f32.mrf.mxu0
    %v3008 = vadd.f32 0.0, %v3007
    %v3009 = vpop.f32.mrf.mxu0
    %v3010 = vadd.f32 0.0, %v3009
    %v3011 = vpop.f32.mrf.mxu0
    %v3012 = vpop.f32.mrf.mxu0
    %3013 = vdwg.mxu0
    %s3014 = scalar_lea.vmem %s10, 4
    %v3015 = vld [vmem:[%s3014] sm:$0xf]
    %v3016 = vpack.c.bf16 %v3008, %v3008
    %v3017 = vpack.c.bf16 %v3010, %v3010
    %vm3018 = vcmask 7168
    %v3020 = vsel %vm3018, %v3015, 0
    %vm3022 = vcmask 1040384
    %v3023 = vsel 0, 4294967295, 65535
    %v3024 = vsel %vm3022, %v3023, 0
    %v3026 = vand.u32 %v3016, %v3024
    %v3029 = vand.u32 %v3017, %v3024
    %3031 = vmatprep.subr.bf16.mxu0 0
    %3032 = vmatpush1.bf16.msra.mxu0 0
    %3033 = vmatprep.subr.bf16.mxu0 0
    %3034 = vmatpush1.bf16.msra.mxu0 0
    %3035 = vmatprep.subr.bf16.mxu0 0
    %3036 = vmatpush1.bf16.msra.mxu0 0
    %3037 = vmatprep.subr.bf16.mxu0 0
    %3038 = vmatpush1.bf16.msra.mxu0 0
    %3039 = vmatprep.subr.bf16.mxu0 0
    %3040 = vmatpush1.bf16.msra.mxu0 0
    %3041 = vmatprep.subr.bf16.mxu0 0
    %3042 = vmatpush1.bf16.msra.mxu0 0
    %3043 = vmatprep.subr.bf16.mxu0 0
    %3044 = vmatpush1.bf16.msra.mxu0 0
    %3045 = vmatprep.subr.bf16.mxu0 %v3029
    %3046 = vmatpush1.bf16.msra.mxu0 %v3026
    %3047 = vmatprep.subr.bf16.mxu0 0
    %3048 = vmatpush2.bf16.msra.mxu0 0
    %3049 = vmatprep.subr.bf16.mxu0 0
    %3050 = vmatpush2.bf16.msra.mxu0 0
    %3051 = vmatprep.subr.bf16.mxu0 0
    %3052 = vmatpush2.bf16.msra.mxu0 0
    %3053 = vmatprep.subr.bf16.mxu0 0
    %3054 = vmatpush2.bf16.msra.mxu0 0
    %3055 = vmatprep.subr.bf16.mxu0 0
    %3056 = vmatpush2.bf16.msra.mxu0 0
    %3057 = vmatprep.subr.bf16.mxu0 0
    %3058 = vmatpush2.bf16.msra.mxu0 0
    %3059 = vmatprep.subr.bf16.mxu0 0
    %3060 = vmatpush2.bf16.msra.mxu0 0
    %3061 = vmatprep.subr.bf16.mxu0 0
    %3062 = vmatpush2.bf16.msra.mxu0 0
    %3063 = vmatprep.mubr.bf16.mxu0 0
    %3064 = vmatmul.mubr.bf16.gmra.mxu0 %v3020
    %v3065 = vpop.f32.mrf.mxu0
    %v3066 = vadd.f32 0.0, %v3065
    %v3067 = vpop.f32.mrf.mxu0
    %v3068 = vadd.f32 0.0, %v3067
    %v3069 = vpop.f32.mrf.mxu0
    %v3070 = vpop.f32.mrf.mxu0
    %3071 = vdwg.mxu0
    %v3073 = vsel %vm3018, %v2921, 0
    %v3076 = vand.u32 %v2922, %v3024
    %v3079 = vand.u32 %v2923, %v3024
    %3081 = vmatprep.subr.bf16.mxu0 0
    %3082 = vmatpush1.bf16.msra.mxu0 0
    %3083 = vmatprep.subr.bf16.mxu0 0
    %3084 = vmatpush1.bf16.msra.mxu0 0
    %3085 = vmatprep.subr.bf16.mxu0 0
    %3086 = vmatpush1.bf16.msra.mxu0 0
    %3087 = vmatprep.subr.bf16.mxu0 0
    %3088 = vmatpush1.bf16.msra.mxu0 0
    %3089 = vmatprep.subr.bf16.mxu0 0
    %3090 = vmatpush1.bf16.msra.mxu0 0
    %3091 = vmatprep.subr.bf16.mxu0 0
    %3092 = vmatpush1.bf16.msra.mxu0 0
    %3093 = vmatprep.subr.bf16.mxu0 0
    %3094 = vmatpush1.bf16.msra.mxu0 0
    %3095 = vmatprep.subr.bf16.mxu0 %v3079
    %3096 = vmatpush1.bf16.msra.mxu0 %v3076
    %3097 = vmatprep.subr.bf16.mxu0 0
    %3098 = vmatpush2.bf16.msra.mxu0 0
    %3099 = vmatprep.subr.bf16.mxu0 0
    %3100 = vmatpush2.bf16.msra.mxu0 0
    %3101 = vmatprep.subr.bf16.mxu0 0
    %3102 = vmatpush2.bf16.msra.mxu0 0
    %3103 = vmatprep.subr.bf16.mxu0 0
    %3104 = vmatpush2.bf16.msra.mxu0 0
    %3105 = vmatprep.subr.bf16.mxu0 0
    %3106 = vmatpush2.bf16.msra.mxu0 0
    %3107 = vmatprep.subr.bf16.mxu0 0
    %3108 = vmatpush2.bf16.msra.mxu0 0
    %3109 = vmatprep.subr.bf16.mxu0 0
    %3110 = vmatpush2.bf16.msra.mxu0 0
    %3111 = vmatprep.subr.bf16.mxu0 0
    %3112 = vmatpush2.bf16.msra.mxu0 0
    %3113 = vmatprep.mubr.bf16.mxu0 0
    %3114 = vmatmul.mubr.bf16.gmra.mxu0 %v3073
    %v3115 = vpop.f32.mrf.mxu0
    %v3116 = vadd.f32 %v3066, %v3115
    %v3117 = vpop.f32.mrf.mxu0
    %v3118 = vadd.f32 %v3068, %v3117
    %v3119 = vpop.f32.mrf.mxu0
    %v3120 = vpop.f32.mrf.mxu0
    %3121 = vdwg.mxu0
    %s3122 = scalar_lea.vmem [#allocation9], 128
    %v3123 = vld [vmem:[%s3122] sm:$0xff]
    %v3124 = vld [vmem:[%s3122 + $0x8] sm:$0xff]
    %v3125 = vld [vmem:[%s3122 + $0x10] sm:$0xff]
    %v3126 = vld [vmem:[%s3122 + $0x18] sm:$0xff]
    %v3127 = vld [vmem:[%s3122 + $0x20] sm:$0xff]
    %v3128 = vld [vmem:[%s3122 + $0x28] sm:$0xff]
    %v3129 = vld [vmem:[%s3122 + $0x30] sm:$0xff]
    %v3130 = vld [vmem:[%s3122 + $0x38] sm:$0xff]
    %v3139 = vunpack.c.l.b16 %v3123
    %v3140 = vunpack.c.h.b16 %v3123
    %v3141 = vunpack.c.l.b16 %v3124
    %v3142 = vunpack.c.h.b16 %v3124
    %v3143 = vunpack.c.l.b16 %v3125
    %v3144 = vunpack.c.h.b16 %v3125
    %v3145 = vunpack.c.l.b16 %v3126
    %v3146 = vunpack.c.h.b16 %v3126
    %v3147 = vunpack.c.l.b16 %v3127
    %v3148 = vunpack.c.h.b16 %v3127
    %v3149 = vunpack.c.l.b16 %v3128
    %v3150 = vunpack.c.h.b16 %v3128
    %v3151 = vunpack.c.l.b16 %v3129
    %v3152 = vunpack.c.h.b16 %v3129
    %v3153 = vunpack.c.l.b16 %v3130
    %v3154 = vunpack.c.h.b16 %v3130
    %v3155 = vpack.c.b16 %v3141, %v3139
    %v3156 = vpack.c.b16 %v3142, %v3140
    %v3157 = vpack.c.b16 %v3145, %v3143
    %v3158 = vpack.c.b16 %v3146, %v3144
    %v3159 = vpack.c.b16 %v3149, %v3147
    %v3160 = vpack.c.b16 %v3150, %v3148
    %v3161 = vpack.c.b16 %v3153, %v3151
    %v3162 = vpack.c.b16 %v3154, %v3152
    %3171 = vmatprep.subr.bf16.mxu0 0
    %3172 = vmatpush1.bf16.msra.mxu0 0
    %3173 = vmatprep.subr.bf16.mxu0 0
    %3174 = vmatpush1.bf16.msra.mxu0 0
    %3175 = vmatprep.subr.bf16.mxu0 0
    %3176 = vmatpush1.bf16.msra.mxu0 0
    %3177 = vmatprep.subr.bf16.mxu0 0
    %3178 = vmatpush1.bf16.msra.mxu0 0
    %3179 = vmatprep.subr.bf16.mxu0 %v3162
    %3180 = vmatpush1.bf16.msra.mxu0 %v3161
    %3181 = vmatprep.subr.bf16.mxu0 %v3160
    %3182 = vmatpush1.bf16.msra.mxu0 %v3159
    %3183 = vmatprep.subr.bf16.mxu0 %v3158
    %3184 = vmatpush1.bf16.msra.mxu0 %v3157
    %3185 = vmatprep.subr.bf16.mxu0 %v3156
    %3186 = vmatpush1.bf16.msra.mxu0 %v3155
    %3187 = vmatprep.subr.bf16.mxu0 0
    %3188 = vmatpush2.bf16.msra.mxu0 0
    %3189 = vmatprep.subr.bf16.mxu0 0
    %3190 = vmatpush2.bf16.msra.mxu0 0
    %3191 = vmatprep.subr.bf16.mxu0 0
    %3192 = vmatpush2.bf16.msra.mxu0 0
    %3193 = vmatprep.subr.bf16.mxu0 0
    %3194 = vmatpush2.bf16.msra.mxu0 0
    %3195 = vmatprep.subr.bf16.mxu0 0
    %3196 = vmatpush2.bf16.msra.mxu0 0
    %3197 = vmatprep.subr.bf16.mxu0 0
    %3198 = vmatpush2.bf16.msra.mxu0 0
    %3199 = vmatprep.subr.bf16.mxu0 0
    %3200 = vmatpush2.bf16.msra.mxu0 0
    %3201 = vmatprep.subr.bf16.mxu0 0
    %3202 = vmatpush2.bf16.msra.mxu0 0
    %3203 = vmatprep.mubr.bf16.mxu0 0
    %3204 = vmatmul.mubr.bf16.gmra.mxu0 %v2878
    %v3205 = vpop.f32.mrf.mxu0
    %v3206 = vadd.f32 0.0, %v3205
    %v3207 = vpop.f32.mrf.mxu0
    %v3208 = vadd.f32 0.0, %v3207
    %v3209 = vpop.f32.mrf.mxu0
    %v3210 = vpop.f32.mrf.mxu0
    %3211 = vdwg.mxu0
    %s3212 = scalar_lea.vmem %s10, 8
    %v3213 = vld [vmem:[%s3212] sm:$0xf]
    %v3214 = vpack.c.bf16 %v3206, %v3206
    %v3215 = vpack.c.bf16 %v3208, %v3208
    %v3217 = vsel %vm3018, %v3213, 0
    %v3220 = vand.u32 %v3214, %v3024
    %v3223 = vand.u32 %v3215, %v3024
    %3225 = vmatprep.subr.bf16.mxu0 0
    %3226 = vmatpush1.bf16.msra.mxu0 0
    %3227 = vmatprep.subr.bf16.mxu0 0
    %3228 = vmatpush1.bf16.msra.mxu0 0
    %3229 = vmatprep.subr.bf16.mxu0 0
    %3230 = vmatpush1.bf16.msra.mxu0 0
    %3231 = vmatprep.subr.bf16.mxu0 0
    %3232 = vmatpush1.bf16.msra.mxu0 0
    %3233 = vmatprep.subr.bf16.mxu0 0
    %3234 = vmatpush1.bf16.msra.mxu0 0
    %3235 = vmatprep.subr.bf16.mxu0 0
    %3236 = vmatpush1.bf16.msra.mxu0 0
    %3237 = vmatprep.subr.bf16.mxu0 0
    %3238 = vmatpush1.bf16.msra.mxu0 0
    %3239 = vmatprep.subr.bf16.mxu0 %v3223
    %3240 = vmatpush1.bf16.msra.mxu0 %v3220
    %3241 = vmatprep.subr.bf16.mxu0 0
    %3242 = vmatpush2.bf16.msra.mxu0 0
    %3243 = vmatprep.subr.bf16.mxu0 0
    %3244 = vmatpush2.bf16.msra.mxu0 0
    %3245 = vmatprep.subr.bf16.mxu0 0
    %3246 = vmatpush2.bf16.msra.mxu0 0
    %3247 = vmatprep.subr.bf16.mxu0 0
    %3248 = vmatpush2.bf16.msra.mxu0 0
    %3249 = vmatprep.subr.bf16.mxu0 0
    %3250 = vmatpush2.bf16.msra.mxu0 0
    %3251 = vmatprep.subr.bf16.mxu0 0
    %3252 = vmatpush2.bf16.msra.mxu0 0
    %3253 = vmatprep.subr.bf16.mxu0 0
    %3254 = vmatpush2.bf16.msra.mxu0 0
    %3255 = vmatprep.subr.bf16.mxu0 0
    %3256 = vmatpush2.bf16.msra.mxu0 0
    %3257 = vmatprep.mubr.bf16.mxu0 0
    %3258 = vmatmul.mubr.bf16.gmra.mxu0 %v3217
    %v3259 = vpop.f32.mrf.mxu0
    %v3260 = vadd.f32 0.0, %v3259
    %v3261 = vpop.f32.mrf.mxu0
    %v3262 = vadd.f32 0.0, %v3261
    %v3263 = vpop.f32.mrf.mxu0
    %v3264 = vpop.f32.mrf.mxu0
    %3265 = vdwg.mxu0
    %v3266 = vadd.f32 %v3116, %v3260
    %v3267 = vadd.f32 %v3118, %v3262
    %s3268 = scalar_lea.vmem [#allocation9], 192
    %v3269 = vld [vmem:[%s3268] sm:$0xff]
    %v3270 = vld [vmem:[%s3268 + $0x8] sm:$0xff]
    %v3271 = vld [vmem:[%s3268 + $0x10] sm:$0xff]
    %v3272 = vld [vmem:[%s3268 + $0x18] sm:$0xff]
    %v3273 = vld [vmem:[%s3268 + $0x20] sm:$0xff]
    %v3274 = vld [vmem:[%s3268 + $0x28] sm:$0xff]
    %v3275 = vld [vmem:[%s3268 + $0x30] sm:$0xff]
    %v3276 = vld [vmem:[%s3268 + $0x38] sm:$0xff]
    %v3285 = vunpack.c.l.b16 %v3269
    %v3286 = vunpack.c.h.b16 %v3269
    %v3287 = vunpack.c.l.b16 %v3270
    %v3288 = vunpack.c.h.b16 %v3270
    %v3289 = vunpack.c.l.b16 %v3271
    %v3290 = vunpack.c.h.b16 %v3271
    %v3291 = vunpack.c.l.b16 %v3272
    %v3292 = vunpack.c.h.b16 %v3272
    %v3293 = vunpack.c.l.b16 %v3273
    %v3294 = vunpack.c.h.b16 %v3273
    %v3295 = vunpack.c.l.b16 %v3274
    %v3296 = vunpack.c.h.b16 %v3274
    %v3297 = vunpack.c.l.b16 %v3275
    %v3298 = vunpack.c.h.b16 %v3275
    %v3299 = vunpack.c.l.b16 %v3276
    %v3300 = vunpack.c.h.b16 %v3276
    %v3301 = vpack.c.b16 %v3287, %v3285
    %v3302 = vpack.c.b16 %v3288, %v3286
    %v3303 = vpack.c.b16 %v3291, %v3289
    %v3304 = vpack.c.b16 %v3292, %v3290
    %v3305 = vpack.c.b16 %v3295, %v3293
    %v3306 = vpack.c.b16 %v3296, %v3294
    %v3307 = vpack.c.b16 %v3299, %v3297
    %v3308 = vpack.c.b16 %v3300, %v3298
    %3317 = vmatprep.subr.bf16.mxu0 0
    %3318 = vmatpush1.bf16.msra.mxu0 0
    %3319 = vmatprep.subr.bf16.mxu0 0
    %3320 = vmatpush1.bf16.msra.mxu0 0
    %3321 = vmatprep.subr.bf16.mxu0 0
    %3322 = vmatpush1.bf16.msra.mxu0 0
    %3323 = vmatprep.subr.bf16.mxu0 0
    %3324 = vmatpush1.bf16.msra.mxu0 0
    %3325 = vmatprep.subr.bf16.mxu0 %v3308
    %3326 = vmatpush1.bf16.msra.mxu0 %v3307
    %3327 = vmatprep.subr.bf16.mxu0 %v3306
    %3328 = vmatpush1.bf16.msra.mxu0 %v3305
    %3329 = vmatprep.subr.bf16.mxu0 %v3304
    %3330 = vmatpush1.bf16.msra.mxu0 %v3303
    %3331 = vmatprep.subr.bf16.mxu0 %v3302
    %3332 = vmatpush1.bf16.msra.mxu0 %v3301
    %3333 = vmatprep.subr.bf16.mxu0 0
    %3334 = vmatpush2.bf16.msra.mxu0 0
    %3335 = vmatprep.subr.bf16.mxu0 0
    %3336 = vmatpush2.bf16.msra.mxu0 0
    %3337 = vmatprep.subr.bf16.mxu0 0
    %3338 = vmatpush2.bf16.msra.mxu0 0
    %3339 = vmatprep.subr.bf16.mxu0 0
    %3340 = vmatpush2.bf16.msra.mxu0 0
    %3341 = vmatprep.subr.bf16.mxu0 0
    %3342 = vmatpush2.bf16.msra.mxu0 0
    %3343 = vmatprep.subr.bf16.mxu0 0
    %3344 = vmatpush2.bf16.msra.mxu0 0
    %3345 = vmatprep.subr.bf16.mxu0 0
    %3346 = vmatpush2.bf16.msra.mxu0 0
    %3347 = vmatprep.subr.bf16.mxu0 0
    %3348 = vmatpush2.bf16.msra.mxu0 0
    %3349 = vmatprep.mubr.bf16.mxu0 0
    %3350 = vmatmul.mubr.bf16.gmra.mxu0 %v2878
    %v3351 = vpop.f32.mrf.mxu0
    %v3352 = vadd.f32 0.0, %v3351
    %v3353 = vpop.f32.mrf.mxu0
    %v3354 = vadd.f32 0.0, %v3353
    %v3355 = vpop.f32.mrf.mxu0
    %v3356 = vpop.f32.mrf.mxu0
    %3357 = vdwg.mxu0
    %s3358 = scalar_lea.vmem %s10, 12
    %v3359 = vld [vmem:[%s3358] sm:$0xf]
    %v3360 = vpack.c.bf16 %v3352, %v3352
    %v3361 = vpack.c.bf16 %v3354, %v3354
    %v3363 = vsel %vm3018, %v3359, 0
    %v3366 = vand.u32 %v3360, %v3024
    %v3369 = vand.u32 %v3361, %v3024
    %3371 = vmatprep.subr.bf16.mxu0 0
    %3372 = vmatpush1.bf16.msra.mxu0 0
    %3373 = vmatprep.subr.bf16.mxu0 0
    %3374 = vmatpush1.bf16.msra.mxu0 0
    %3375 = vmatprep.subr.bf16.mxu0 0
    %3376 = vmatpush1.bf16.msra.mxu0 0
    %3377 = vmatprep.subr.bf16.mxu0 0
    %3378 = vmatpush1.bf16.msra.mxu0 0
    %3379 = vmatprep.subr.bf16.mxu0 0
    %3380 = vmatpush1.bf16.msra.mxu0 0
    %3381 = vmatprep.subr.bf16.mxu0 0
    %3382 = vmatpush1.bf16.msra.mxu0 0
    %3383 = vmatprep.subr.bf16.mxu0 0
    %3384 = vmatpush1.bf16.msra.mxu0 0
    %3385 = vmatprep.subr.bf16.mxu0 %v3369
    %3386 = vmatpush1.bf16.msra.mxu0 %v3366
    %3387 = vmatprep.subr.bf16.mxu0 0
    %3388 = vmatpush2.bf16.msra.mxu0 0
    %3389 = vmatprep.subr.bf16.mxu0 0
    %3390 = vmatpush2.bf16.msra.mxu0 0
    %3391 = vmatprep.subr.bf16.mxu0 0
    %3392 = vmatpush2.bf16.msra.mxu0 0
    %3393 = vmatprep.subr.bf16.mxu0 0
    %3394 = vmatpush2.bf16.msra.mxu0 0
    %3395 = vmatprep.subr.bf16.mxu0 0
    %3396 = vmatpush2.bf16.msra.mxu0 0
    %3397 = vmatprep.subr.bf16.mxu0 0
    %3398 = vmatpush2.bf16.msra.mxu0 0
    %3399 = vmatprep.subr.bf16.mxu0 0
    %3400 = vmatpush2.bf16.msra.mxu0 0
    %3401 = vmatprep.subr.bf16.mxu0 0
    %3402 = vmatpush2.bf16.msra.mxu0 0
    %3403 = vmatprep.mubr.bf16.mxu0 0
    %3404 = vmatmul.mubr.bf16.gmra.mxu0 %v3363
    %v3405 = vpop.f32.mrf.mxu0
    %v3406 = vadd.f32 0.0, %v3405
    %v3407 = vpop.f32.mrf.mxu0
    %v3408 = vadd.f32 0.0, %v3407
    %v3409 = vpop.f32.mrf.mxu0
    %v3410 = vpop.f32.mrf.mxu0
    %3411 = vdwg.mxu0
    %v3412 = vadd.f32 %v3266, %v3406
    %v3413 = vadd.f32 %v3267, %v3408
    %s3414 = scalar_lea.vmem [#allocation9], 256
    %v3415 = vld [vmem:[%s3414] sm:$0xff]
    %v3416 = vld [vmem:[%s3414 + $0x8] sm:$0xff]
    %v3417 = vld [vmem:[%s3414 + $0x10] sm:$0xff]
    %v3418 = vld [vmem:[%s3414 + $0x18] sm:$0xff]
    %v3419 = vld [vmem:[%s3414 + $0x20] sm:$0xff]
    %v3420 = vld [vmem:[%s3414 + $0x28] sm:$0xff]
    %v3421 = vld [vmem:[%s3414 + $0x30] sm:$0xff]
    %v3422 = vld [vmem:[%s3414 + $0x38] sm:$0xff]
    %v3431 = vunpack.c.l.b16 %v3415
    %v3432 = vunpack.c.h.b16 %v3415
    %v3433 = vunpack.c.l.b16 %v3416
    %v3434 = vunpack.c.h.b16 %v3416
    %v3435 = vunpack.c.l.b16 %v3417
    %v3436 = vunpack.c.h.b16 %v3417
    %v3437 = vunpack.c.l.b16 %v3418
    %v3438 = vunpack.c.h.b16 %v3418
    %v3439 = vunpack.c.l.b16 %v3419
    %v3440 = vunpack.c.h.b16 %v3419
    %v3441 = vunpack.c.l.b16 %v3420
    %v3442 = vunpack.c.h.b16 %v3420
    %v3443 = vunpack.c.l.b16 %v3421
    %v3444 = vunpack.c.h.b16 %v3421
    %v3445 = vunpack.c.l.b16 %v3422
    %v3446 = vunpack.c.h.b16 %v3422
    %v3447 = vpack.c.b16 %v3433, %v3431
    %v3448 = vpack.c.b16 %v3434, %v3432
    %v3449 = vpack.c.b16 %v3437, %v3435
    %v3450 = vpack.c.b16 %v3438, %v3436
    %v3451 = vpack.c.b16 %v3441, %v3439
    %v3452 = vpack.c.b16 %v3442, %v3440
    %v3453 = vpack.c.b16 %v3445, %v3443
    %v3454 = vpack.c.b16 %v3446, %v3444
    %3463 = vmatprep.subr.bf16.mxu0 0
    %3464 = vmatpush1.bf16.msra.mxu0 0
    %3465 = vmatprep.subr.bf16.mxu0 0
    %3466 = vmatpush1.bf16.msra.mxu0 0
    %3467 = vmatprep.subr.bf16.mxu0 0
    %3468 = vmatpush1.bf16.msra.mxu0 0
    %3469 = vmatprep.subr.bf16.mxu0 0
    %3470 = vmatpush1.bf16.msra.mxu0 0
    %3471 = vmatprep.subr.bf16.mxu0 %v3454
    %3472 = vmatpush1.bf16.msra.mxu0 %v3453
    %3473 = vmatprep.subr.bf16.mxu0 %v3452
    %3474 = vmatpush1.bf16.msra.mxu0 %v3451
    %3475 = vmatprep.subr.bf16.mxu0 %v3450
    %3476 = vmatpush1.bf16.msra.mxu0 %v3449
    %3477 = vmatprep.subr.bf16.mxu0 %v3448
    %3478 = vmatpush1.bf16.msra.mxu0 %v3447
    %3479 = vmatprep.subr.bf16.mxu0 0
    %3480 = vmatpush2.bf16.msra.mxu0 0
    %3481 = vmatprep.subr.bf16.mxu0 0
    %3482 = vmatpush2.bf16.msra.mxu0 0
    %3483 = vmatprep.subr.bf16.mxu0 0
    %3484 = vmatpush2.bf16.msra.mxu0 0
    %3485 = vmatprep.subr.bf16.mxu0 0
    %3486 = vmatpush2.bf16.msra.mxu0 0
    %3487 = vmatprep.subr.bf16.mxu0 0
    %3488 = vmatpush2.bf16.msra.mxu0 0
    %3489 = vmatprep.subr.bf16.mxu0 0
    %3490 = vmatpush2.bf16.msra.mxu0 0
    %3491 = vmatprep.subr.bf16.mxu0 0
    %3492 = vmatpush2.bf16.msra.mxu0 0
    %3493 = vmatprep.subr.bf16.mxu0 0
    %3494 = vmatpush2.bf16.msra.mxu0 0
    %3495 = vmatprep.mubr.bf16.mxu0 0
    %3496 = vmatmul.mubr.bf16.gmra.mxu0 %v2878
    %v3497 = vpop.f32.mrf.mxu0
    %v3498 = vadd.f32 0.0, %v3497
    %v3499 = vpop.f32.mrf.mxu0
    %v3500 = vadd.f32 0.0, %v3499
    %v3501 = vpop.f32.mrf.mxu0
    %v3502 = vpop.f32.mrf.mxu0
    %3503 = vdwg.mxu0
    %s3504 = scalar_lea.vmem %s10, 16
    %v3505 = vld [vmem:[%s3504] sm:$0xf]
    %v3506 = vpack.c.bf16 %v3498, %v3498
    %v3507 = vpack.c.bf16 %v3500, %v3500
    %v3509 = vsel %vm3018, %v3505, 0
    %v3512 = vand.u32 %v3506, %v3024
    %v3515 = vand.u32 %v3507, %v3024
    %3517 = vmatprep.subr.bf16.mxu0 0
    %3518 = vmatpush1.bf16.msra.mxu0 0
    %3519 = vmatprep.subr.bf16.mxu0 0
    %3520 = vmatpush1.bf16.msra.mxu0 0
    %3521 = vmatprep.subr.bf16.mxu0 0
    %3522 = vmatpush1.bf16.msra.mxu0 0
    %3523 = vmatprep.subr.bf16.mxu0 0
    %3524 = vmatpush1.bf16.msra.mxu0 0
    %3525 = vmatprep.subr.bf16.mxu0 0
    %3526 = vmatpush1.bf16.msra.mxu0 0
    %3527 = vmatprep.subr.bf16.mxu0 0
    %3528 = vmatpush1.bf16.msra.mxu0 0
    %3529 = vmatprep.subr.bf16.mxu0 0
    %3530 = vmatpush1.bf16.msra.mxu0 0
    %3531 = vmatprep.subr.bf16.mxu0 %v3515
    %3532 = vmatpush1.bf16.msra.mxu0 %v3512
    %3533 = vmatprep.subr.bf16.mxu0 0
    %3534 = vmatpush2.bf16.msra.mxu0 0
    %3535 = vmatprep.subr.bf16.mxu0 0
    %3536 = vmatpush2.bf16.msra.mxu0 0
    %3537 = vmatprep.subr.bf16.mxu0 0
    %3538 = vmatpush2.bf16.msra.mxu0 0
    %3539 = vmatprep.subr.bf16.mxu0 0
    %3540 = vmatpush2.bf16.msra.mxu0 0
    %3541 = vmatprep.subr.bf16.mxu0 0
    %3542 = vmatpush2.bf16.msra.mxu0 0
    %3543 = vmatprep.subr.bf16.mxu0 0
    %3544 = vmatpush2.bf16.msra.mxu0 0
    %3545 = vmatprep.subr.bf16.mxu0 0
    %3546 = vmatpush2.bf16.msra.mxu0 0
    %3547 = vmatprep.subr.bf16.mxu0 0
    %3548 = vmatpush2.bf16.msra.mxu0 0
    %3549 = vmatprep.mubr.bf16.mxu0 0
    %3550 = vmatmul.mubr.bf16.gmra.mxu0 %v3509
    %v3551 = vpop.f32.mrf.mxu0
    %v3552 = vadd.f32 0.0, %v3551
    %v3553 = vpop.f32.mrf.mxu0
    %v3554 = vadd.f32 0.0, %v3553
    %v3555 = vpop.f32.mrf.mxu0
    %v3556 = vpop.f32.mrf.mxu0
    %3557 = vdwg.mxu0
    %v3558 = vadd.f32 %v3412, %v3552
    %v3559 = vadd.f32 %v3413, %v3554
    %s3560 = scalar_lea.vmem [#allocation9], 320
    %v3561 = vld [vmem:[%s3560] sm:$0xff]
    %v3562 = vld [vmem:[%s3560 + $0x8] sm:$0xff]
    %v3563 = vld [vmem:[%s3560 + $0x10] sm:$0xff]
    %v3564 = vld [vmem:[%s3560 + $0x18] sm:$0xff]
    %v3565 = vld [vmem:[%s3560 + $0x20] sm:$0xff]
    %v3566 = vld [vmem:[%s3560 + $0x28] sm:$0xff]
    %v3567 = vld [vmem:[%s3560 + $0x30] sm:$0xff]
    %v3568 = vld [vmem:[%s3560 + $0x38] sm:$0xff]
    %v3577 = vunpack.c.l.b16 %v3561
    %v3578 = vunpack.c.h.b16 %v3561
    %v3579 = vunpack.c.l.b16 %v3562
    %v3580 = vunpack.c.h.b16 %v3562
    %v3581 = vunpack.c.l.b16 %v3563
    %v3582 = vunpack.c.h.b16 %v3563
    %v3583 = vunpack.c.l.b16 %v3564
    %v3584 = vunpack.c.h.b16 %v3564
    %v3585 = vunpack.c.l.b16 %v3565
    %v3586 = vunpack.c.h.b16 %v3565
    %v3587 = vunpack.c.l.b16 %v3566
    %v3588 = vunpack.c.h.b16 %v3566
    %v3589 = vunpack.c.l.b16 %v3567
    %v3590 = vunpack.c.h.b16 %v3567
    %v3591 = vunpack.c.l.b16 %v3568
    %v3592 = vunpack.c.h.b16 %v3568
    %v3593 = vpack.c.b16 %v3579, %v3577
    %v3594 = vpack.c.b16 %v3580, %v3578
    %v3595 = vpack.c.b16 %v3583, %v3581
    %v3596 = vpack.c.b16 %v3584, %v3582
    %v3597 = vpack.c.b16 %v3587, %v3585
    %v3598 = vpack.c.b16 %v3588, %v3586
    %v3599 = vpack.c.b16 %v3591, %v3589
    %v3600 = vpack.c.b16 %v3592, %v3590
    %3609 = vmatprep.subr.bf16.mxu0 0
    %3610 = vmatpush1.bf16.msra.mxu0 0
    %3611 = vmatprep.subr.bf16.mxu0 0
    %3612 = vmatpush1.bf16.msra.mxu0 0
    %3613 = vmatprep.subr.bf16.mxu0 0
    %3614 = vmatpush1.bf16.msra.mxu0 0
    %3615 = vmatprep.subr.bf16.mxu0 0
    %3616 = vmatpush1.bf16.msra.mxu0 0
    %3617 = vmatprep.subr.bf16.mxu0 %v3600
    %3618 = vmatpush1.bf16.msra.mxu0 %v3599
    %3619 = vmatprep.subr.bf16.mxu0 %v3598
    %3620 = vmatpush1.bf16.msra.mxu0 %v3597
    %3621 = vmatprep.subr.bf16.mxu0 %v3596
    %3622 = vmatpush1.bf16.msra.mxu0 %v3595
    %3623 = vmatprep.subr.bf16.mxu0 %v3594
    %3624 = vmatpush1.bf16.msra.mxu0 %v3593
    %3625 = vmatprep.subr.bf16.mxu0 0
    %3626 = vmatpush2.bf16.msra.mxu0 0
    %3627 = vmatprep.subr.bf16.mxu0 0
    %3628 = vmatpush2.bf16.msra.mxu0 0
    %3629 = vmatprep.subr.bf16.mxu0 0
    %3630 = vmatpush2.bf16.msra.mxu0 0
    %3631 = vmatprep.subr.bf16.mxu0 0
    %3632 = vmatpush2.bf16.msra.mxu0 0
    %3633 = vmatprep.subr.bf16.mxu0 0
    %3634 = vmatpush2.bf16.msra.mxu0 0
    %3635 = vmatprep.subr.bf16.mxu0 0
    %3636 = vmatpush2.bf16.msra.mxu0 0
    %3637 = vmatprep.subr.bf16.mxu0 0
    %3638 = vmatpush2.bf16.msra.mxu0 0
    %3639 = vmatprep.subr.bf16.mxu0 0
    %3640 = vmatpush2.bf16.msra.mxu0 0
    %3641 = vmatprep.mubr.bf16.mxu0 0
    %3642 = vmatmul.mubr.bf16.gmra.mxu0 %v2878
    %v3643 = vpop.f32.mrf.mxu0
    %v3644 = vadd.f32 0.0, %v3643
    %v3645 = vpop.f32.mrf.mxu0
    %v3646 = vadd.f32 0.0, %v3645
    %v3647 = vpop.f32.mrf.mxu0
    %v3648 = vpop.f32.mrf.mxu0
    %3649 = vdwg.mxu0
    %s3650 = scalar_lea.vmem %s10, 20
    %v3651 = vld [vmem:[%s3650] sm:$0xf]
    %v3652 = vpack.c.bf16 %v3644, %v3644
    %v3653 = vpack.c.bf16 %v3646, %v3646
    %v3655 = vsel %vm3018, %v3651, 0
    %v3658 = vand.u32 %v3652, %v3024
    %v3661 = vand.u32 %v3653, %v3024
    %3663 = vmatprep.subr.bf16.mxu0 0
    %3664 = vmatpush1.bf16.msra.mxu0 0
    %3665 = vmatprep.subr.bf16.mxu0 0
    %3666 = vmatpush1.bf16.msra.mxu0 0
    %3667 = vmatprep.subr.bf16.mxu0 0
    %3668 = vmatpush1.bf16.msra.mxu0 0
    %3669 = vmatprep.subr.bf16.mxu0 0
    %3670 = vmatpush1.bf16.msra.mxu0 0
    %3671 = vmatprep.subr.bf16.mxu0 0
    %3672 = vmatpush1.bf16.msra.mxu0 0
    %3673 = vmatprep.subr.bf16.mxu0 0
    %3674 = vmatpush1.bf16.msra.mxu0 0
    %3675 = vmatprep.subr.bf16.mxu0 0
    %3676 = vmatpush1.bf16.msra.mxu0 0
    %3677 = vmatprep.subr.bf16.mxu0 %v3661
    %3678 = vmatpush1.bf16.msra.mxu0 %v3658
    %3679 = vmatprep.subr.bf16.mxu0 0
    %3680 = vmatpush2.bf16.msra.mxu0 0
    %3681 = vmatprep.subr.bf16.mxu0 0
    %3682 = vmatpush2.bf16.msra.mxu0 0
    %3683 = vmatprep.subr.bf16.mxu0 0
    %3684 = vmatpush2.bf16.msra.mxu0 0
    %3685 = vmatprep.subr.bf16.mxu0 0
    %3686 = vmatpush2.bf16.msra.mxu0 0
    %3687 = vmatprep.subr.bf16.mxu0 0
    %3688 = vmatpush2.bf16.msra.mxu0 0
    %3689 = vmatprep.subr.bf16.mxu0 0
    %3690 = vmatpush2.bf16.msra.mxu0 0
    %3691 = vmatprep.subr.bf16.mxu0 0
    %3692 = vmatpush2.bf16.msra.mxu0 0
    %3693 = vmatprep.subr.bf16.mxu0 0
    %3694 = vmatpush2.bf16.msra.mxu0 0
    %3695 = vmatprep.mubr.bf16.mxu0 0
    %3696 = vmatmul.mubr.bf16.gmra.mxu0 %v3655
    %v3697 = vpop.f32.mrf.mxu0
    %v3698 = vadd.f32 0.0, %v3697
    %v3699 = vpop.f32.mrf.mxu0
    %v3700 = vadd.f32 0.0, %v3699
    %v3701 = vpop.f32.mrf.mxu0
    %v3702 = vpop.f32.mrf.mxu0
    %3703 = vdwg.mxu0
    %v3704 = vadd.f32 %v3558, %v3698
    %v3705 = vadd.f32 %v3559, %v3700
    %s3706 = scalar_lea.vmem [#allocation9], 384
    %v3707 = vld [vmem:[%s3706] sm:$0xff]
    %v3708 = vld [vmem:[%s3706 + $0x8] sm:$0xff]
    %v3709 = vld [vmem:[%s3706 + $0x10] sm:$0xff]
    %v3710 = vld [vmem:[%s3706 + $0x18] sm:$0xff]
    %v3711 = vld [vmem:[%s3706 + $0x20] sm:$0xff]
    %v3712 = vld [vmem:[%s3706 + $0x28] sm:$0xff]
    %v3713 = vld [vmem:[%s3706 + $0x30] sm:$0xff]
    %v3714 = vld [vmem:[%s3706 + $0x38] sm:$0xff]
    %v3723 = vunpack.c.l.b16 %v3707
    %v3724 = vunpack.c.h.b16 %v3707
    %v3725 = vunpack.c.l.b16 %v3708
    %v3726 = vunpack.c.h.b16 %v3708
    %v3727 = vunpack.c.l.b16 %v3709
    %v3728 = vunpack.c.h.b16 %v3709
    %v3729 = vunpack.c.l.b16 %v3710
    %v3730 = vunpack.c.h.b16 %v3710
    %v3731 = vunpack.c.l.b16 %v3711
    %v3732 = vunpack.c.h.b16 %v3711
    %v3733 = vunpack.c.l.b16 %v3712
    %v3734 = vunpack.c.h.b16 %v3712
    %v3735 = vunpack.c.l.b16 %v3713
    %v3736 = vunpack.c.h.b16 %v3713
    %v3737 = vunpack.c.l.b16 %v3714
    %v3738 = vunpack.c.h.b16 %v3714
    %v3739 = vpack.c.b16 %v3725, %v3723
    %v3740 = vpack.c.b16 %v3726, %v3724
    %v3741 = vpack.c.b16 %v3729, %v3727
    %v3742 = vpack.c.b16 %v3730, %v3728
    %v3743 = vpack.c.b16 %v3733, %v3731
    %v3744 = vpack.c.b16 %v3734, %v3732
    %v3745 = vpack.c.b16 %v3737, %v3735
    %v3746 = vpack.c.b16 %v3738, %v3736
    %3755 = vmatprep.subr.bf16.mxu0 0
    %3756 = vmatpush1.bf16.msra.mxu0 0
    %3757 = vmatprep.subr.bf16.mxu0 0
    %3758 = vmatpush1.bf16.msra.mxu0 0
    %3759 = vmatprep.subr.bf16.mxu0 0
    %3760 = vmatpush1.bf16.msra.mxu0 0
    %3761 = vmatprep.subr.bf16.mxu0 0
    %3762 = vmatpush1.bf16.msra.mxu0 0
    %3763 = vmatprep.subr.bf16.mxu0 %v3746
    %3764 = vmatpush1.bf16.msra.mxu0 %v3745
    %3765 = vmatprep.subr.bf16.mxu0 %v3744
    %3766 = vmatpush1.bf16.msra.mxu0 %v3743
    %3767 = vmatprep.subr.bf16.mxu0 %v3742
    %3768 = vmatpush1.bf16.msra.mxu0 %v3741
    %3769 = vmatprep.subr.bf16.mxu0 %v3740
    %3770 = vmatpush1.bf16.msra.mxu0 %v3739
    %3771 = vmatprep.subr.bf16.mxu0 0
    %3772 = vmatpush2.bf16.msra.mxu0 0
    %3773 = vmatprep.subr.bf16.mxu0 0
    %3774 = vmatpush2.bf16.msra.mxu0 0
    %3775 = vmatprep.subr.bf16.mxu0 0
    %3776 = vmatpush2.bf16.msra.mxu0 0
    %3777 = vmatprep.subr.bf16.mxu0 0
    %3778 = vmatpush2.bf16.msra.mxu0 0
    %3779 = vmatprep.subr.bf16.mxu0 0
    %3780 = vmatpush2.bf16.msra.mxu0 0
    %3781 = vmatprep.subr.bf16.mxu0 0
    %3782 = vmatpush2.bf16.msra.mxu0 0
    %3783 = vmatprep.subr.bf16.mxu0 0
    %3784 = vmatpush2.bf16.msra.mxu0 0
    %3785 = vmatprep.subr.bf16.mxu0 0
    %3786 = vmatpush2.bf16.msra.mxu0 0
    %3787 = vmatprep.mubr.bf16.mxu0 0
    %3788 = vmatmul.mubr.bf16.gmra.mxu0 %v2878
    %v3789 = vpop.f32.mrf.mxu0
    %v3790 = vadd.f32 0.0, %v3789
    %v3791 = vpop.f32.mrf.mxu0
    %v3792 = vadd.f32 0.0, %v3791
    %v3793 = vpop.f32.mrf.mxu0
    %v3794 = vpop.f32.mrf.mxu0
    %3795 = vdwg.mxu0
    %s3796 = scalar_lea.vmem %s10, 24
    %v3797 = vld [vmem:[%s3796] sm:$0xf]
    %v3798 = vpack.c.bf16 %v3790, %v3790
    %v3799 = vpack.c.bf16 %v3792, %v3792
    %v3801 = vsel %vm3018, %v3797, 0
    %v3804 = vand.u32 %v3798, %v3024
    %v3807 = vand.u32 %v3799, %v3024
    %3809 = vmatprep.subr.bf16.mxu0 0
    %3810 = vmatpush1.bf16.msra.mxu0 0
    %3811 = vmatprep.subr.bf16.mxu0 0
    %3812 = vmatpush1.bf16.msra.mxu0 0
    %3813 = vmatprep.subr.bf16.mxu0 0
    %3814 = vmatpush1.bf16.msra.mxu0 0
    %3815 = vmatprep.subr.bf16.mxu0 0
    %3816 = vmatpush1.bf16.msra.mxu0 0
    %3817 = vmatprep.subr.bf16.mxu0 0
    %3818 = vmatpush1.bf16.msra.mxu0 0
    %3819 = vmatprep.subr.bf16.mxu0 0
    %3820 = vmatpush1.bf16.msra.mxu0 0
    %3821 = vmatprep.subr.bf16.mxu0 0
    %3822 = vmatpush1.bf16.msra.mxu0 0
    %3823 = vmatprep.subr.bf16.mxu0 %v3807
    %3824 = vmatpush1.bf16.msra.mxu0 %v3804
    %3825 = vmatprep.subr.bf16.mxu0 0
    %3826 = vmatpush2.bf16.msra.mxu0 0
    %3827 = vmatprep.subr.bf16.mxu0 0
    %3828 = vmatpush2.bf16.msra.mxu0 0
    %3829 = vmatprep.subr.bf16.mxu0 0
    %3830 = vmatpush2.bf16.msra.mxu0 0
    %3831 = vmatprep.subr.bf16.mxu0 0
    %3832 = vmatpush2.bf16.msra.mxu0 0
    %3833 = vmatprep.subr.bf16.mxu0 0
    %3834 = vmatpush2.bf16.msra.mxu0 0
    %3835 = vmatprep.subr.bf16.mxu0 0
    %3836 = vmatpush2.bf16.msra.mxu0 0
    %3837 = vmatprep.subr.bf16.mxu0 0
    %3838 = vmatpush2.bf16.msra.mxu0 0
    %3839 = vmatprep.subr.bf16.mxu0 0
    %3840 = vmatpush2.bf16.msra.mxu0 0
    %3841 = vmatprep.mubr.bf16.mxu0 0
    %3842 = vmatmul.mubr.bf16.gmra.mxu0 %v3801
    %v3843 = vpop.f32.mrf.mxu0
    %v3844 = vadd.f32 0.0, %v3843
    %v3845 = vpop.f32.mrf.mxu0
    %v3846 = vadd.f32 0.0, %v3845
    %v3847 = vpop.f32.mrf.mxu0
    %v3848 = vpop.f32.mrf.mxu0
    %3849 = vdwg.mxu0
    %v3850 = vadd.f32 %v3704, %v3844
    %v3851 = vadd.f32 %v3705, %v3846
    %v3852 = vld [vmem:[%s12] sm:$0x3]
    %v3854 = vlaneseq
    %v3855 = vshrl.u32 %v3854, 7
    %v3856 = vsub.s32 0, %v3855
    %v3857 = vrot.slane %v3852, %v3856
    %v3858 = vlaneseq
    %v3859 = vshrl.u32 %v3858, 7
    %v3860 = vsub.s32 1, %v3859
    %v3861 = vrot.slane %v3852, %v3860
    %v3864 = vadd.f32 %v3850, %v3857
    %v3865 = vadd.f32 %v3851, %v3861
    %v3866 = vmax.f32 %v3864, 0.0
    %v3867 = vmax.f32 %v3865, 0.0
    %v3868 = vpack.c.bf16 %v3866, %v3866
    %v3869 = vpack.c.bf16 %v3867, %v3867
    %v3870 = vld [vmem:[#allocation10] sm:$0xff]
    %v3871 = vld [vmem:[#allocation10 + $0x8] sm:$0xff]
    %v3872 = vld [vmem:[#allocation10 + $0x10] sm:$0xff]
    %v3873 = vld [vmem:[#allocation10 + $0x18] sm:$0xff]
    %v3874 = vld [vmem:[#allocation10 + $0x20] sm:$0xff]
    %v3875 = vld [vmem:[#allocation10 + $0x28] sm:$0xff]
    %v3876 = vld [vmem:[#allocation10 + $0x30] sm:$0xff]
    %v3877 = vld [vmem:[#allocation10 + $0x38] sm:$0xff]
    %v3878 = vld [vmem:[#allocation10 + $0x40] sm:$0xff]
    %v3879 = vld [vmem:[#allocation10 + $0x48] sm:$0xff]
    %v3880 = vld [vmem:[#allocation10 + $0x50] sm:$0xff]
    %v3881 = vld [vmem:[#allocation10 + $0x58] sm:$0xff]
    %v3882 = vld [vmem:[#allocation10 + $0x60] sm:$0xff]
    %v3883 = vld [vmem:[#allocation10 + $0x68] sm:$0xff]
    %v3884 = vld [vmem:[#allocation10 + $0x70] sm:$0xff]
    %v3885 = vld [vmem:[#allocation10 + $0x78] sm:$0xff]
    %v3886 = vld [vmem:[#allocation10 + $0x80] sm:$0xff]
    %v3887 = vld [vmem:[#allocation10 + $0x88] sm:$0xff]
    %v3888 = vld [vmem:[#allocation10 + $0x90] sm:$0xff]
    %v3889 = vld [vmem:[#allocation10 + $0x98] sm:$0xff]
    %v3890 = vld [vmem:[#allocation10 + $0xa0] sm:$0xff]
    %v3891 = vld [vmem:[#allocation10 + $0xa8] sm:$0xff]
    %v3892 = vld [vmem:[#allocation10 + $0xb0] sm:$0xff]
    %v3893 = vld [vmem:[#allocation10 + $0xb8] sm:$0xff]
    %v3894 = vld [vmem:[#allocation10 + $0xc0] sm:$0xff]
    %v3895 = vld [vmem:[#allocation10 + $0xc8] sm:$0xff]
    %v3896 = vld [vmem:[#allocation10 + $0xd0] sm:$0xff]
    %v3897 = vld [vmem:[#allocation10 + $0xd8] sm:$0xff]
    %v3926 = vunpack.c.l.b16 %v3870
    %v3927 = vunpack.c.h.b16 %v3870
    %v3928 = vunpack.c.l.b16 %v3871
    %v3929 = vunpack.c.h.b16 %v3871
    %v3930 = vunpack.c.l.b16 %v3872
    %v3931 = vunpack.c.h.b16 %v3872
    %v3932 = vunpack.c.l.b16 %v3873
    %v3933 = vunpack.c.h.b16 %v3873
    %v3934 = vunpack.c.l.b16 %v3874
    %v3935 = vunpack.c.h.b16 %v3874
    %v3936 = vunpack.c.l.b16 %v3875
    %v3937 = vunpack.c.h.b16 %v3875
    %v3938 = vunpack.c.l.b16 %v3876
    %v3939 = vunpack.c.h.b16 %v3876
    %v3940 = vunpack.c.l.b16 %v3877
    %v3941 = vunpack.c.h.b16 %v3877
    %v3942 = vunpack.c.l.b16 %v3878
    %v3943 = vunpack.c.h.b16 %v3878
    %v3944 = vunpack.c.l.b16 %v3879
    %v3945 = vunpack.c.h.b16 %v3879
    %v3946 = vunpack.c.l.b16 %v3880
    %v3947 = vunpack.c.h.b16 %v3880
    %v3948 = vunpack.c.l.b16 %v3881
    %v3949 = vunpack.c.h.b16 %v3881
    %v3950 = vunpack.c.l.b16 %v3882
    %v3951 = vunpack.c.h.b16 %v3882
    %v3952 = vunpack.c.l.b16 %v3883
    %v3953 = vunpack.c.h.b16 %v3883
    %v3954 = vunpack.c.l.b16 %v3884
    %v3955 = vunpack.c.h.b16 %v3884
    %v3956 = vunpack.c.l.b16 %v3885
    %v3957 = vunpack.c.h.b16 %v3885
    %v3958 = vunpack.c.l.b16 %v3886
    %v3959 = vunpack.c.h.b16 %v3886
    %v3960 = vunpack.c.l.b16 %v3887
    %v3961 = vunpack.c.h.b16 %v3887
    %v3962 = vunpack.c.l.b16 %v3888
    %v3963 = vunpack.c.h.b16 %v3888
    %v3964 = vunpack.c.l.b16 %v3889
    %v3965 = vunpack.c.h.b16 %v3889
    %v3966 = vunpack.c.l.b16 %v3890
    %v3967 = vunpack.c.h.b16 %v3890
    %v3968 = vunpack.c.l.b16 %v3891
    %v3969 = vunpack.c.h.b16 %v3891
    %v3970 = vunpack.c.l.b16 %v3892
    %v3971 = vunpack.c.h.b16 %v3892
    %v3972 = vunpack.c.l.b16 %v3893
    %v3973 = vunpack.c.h.b16 %v3893
    %v3974 = vunpack.c.l.b16 %v3894
    %v3975 = vunpack.c.h.b16 %v3894
    %v3976 = vunpack.c.l.b16 %v3895
    %v3977 = vunpack.c.h.b16 %v3895
    %v3978 = vunpack.c.l.b16 %v3896
    %v3979 = vunpack.c.h.b16 %v3896
    %v3980 = vunpack.c.l.b16 %v3897
    %v3981 = vunpack.c.h.b16 %v3897
    %v3982 = vpack.c.b16 %v3928, %v3926
    %v3983 = vpack.c.b16 %v3929, %v3927
    %v3984 = vpack.c.b16 %v3932, %v3930
    %v3985 = vpack.c.b16 %v3933, %v3931
    %v3986 = vpack.c.b16 %v3936, %v3934
    %v3987 = vpack.c.b16 %v3937, %v3935
    %v3988 = vpack.c.b16 %v3940, %v3938
    %v3989 = vpack.c.b16 %v3941, %v3939
    %v3990 = vpack.c.b16 %v3944, %v3942
    %v3991 = vpack.c.b16 %v3945, %v3943
    %v3992 = vpack.c.b16 %v3948, %v3946
    %v3993 = vpack.c.b16 %v3949, %v3947
    %v3994 = vpack.c.b16 %v3952, %v3950
    %v3995 = vpack.c.b16 %v3953, %v3951
    %v3996 = vpack.c.b16 %v3956, %v3954
    %v3997 = vpack.c.b16 %v3957, %v3955
    %v3998 = vpack.c.b16 %v3960, %v3958
    %v3999 = vpack.c.b16 %v3961, %v3959
    %v4000 = vpack.c.b16 %v3964, %v3962
    %v4001 = vpack.c.b16 %v3965, %v3963
    %v4002 = vpack.c.b16 %v3968, %v3966
    %v4003 = vpack.c.b16 %v3969, %v3967
    %v4004 = vpack.c.b16 %v3972, %v3970
    %v4005 = vpack.c.b16 %v3973, %v3971
    %v4006 = vpack.c.b16 %v3976, %v3974
    %v4007 = vpack.c.b16 %v3977, %v3975
    %v4008 = vpack.c.b16 %v3980, %v3978
    %v4009 = vpack.c.b16 %v3981, %v3979
    %v4039 = vsel %vm873, %v3869, 0
    %4041 = vmatprep.subr.bf16.mxu0 %v3997
    %4042 = vmatpush1.bf16.msra.mxu0 %v3996
    %4043 = vmatprep.subr.bf16.mxu0 %v3995
    %4044 = vmatpush1.bf16.msra.mxu0 %v3994
    %4045 = vmatprep.subr.bf16.mxu0 %v3993
    %4046 = vmatpush1.bf16.msra.mxu0 %v3992
    %4047 = vmatprep.subr.bf16.mxu0 %v3991
    %4048 = vmatpush1.bf16.msra.mxu0 %v3990
    %4049 = vmatprep.subr.bf16.mxu0 %v3989
    %4050 = vmatpush1.bf16.msra.mxu0 %v3988
    %4051 = vmatprep.subr.bf16.mxu0 %v3987
    %4052 = vmatpush1.bf16.msra.mxu0 %v3986
    %4053 = vmatprep.subr.bf16.mxu0 %v3985
    %4054 = vmatpush1.bf16.msra.mxu0 %v3984
    %4055 = vmatprep.subr.bf16.mxu0 %v3983
    %4056 = vmatpush1.bf16.msra.mxu0 %v3982
    %4057 = vmatprep.subr.bf16.mxu0 0
    %4058 = vmatpush2.bf16.msra.mxu0 0
    %4059 = vmatprep.subr.bf16.mxu0 0
    %4060 = vmatpush2.bf16.msra.mxu0 0
    %4061 = vmatprep.subr.bf16.mxu0 %v4009
    %4062 = vmatpush2.bf16.msra.mxu0 %v4008
    %4063 = vmatprep.subr.bf16.mxu0 %v4007
    %4064 = vmatpush2.bf16.msra.mxu0 %v4006
    %4065 = vmatprep.subr.bf16.mxu0 %v4005
    %4066 = vmatpush2.bf16.msra.mxu0 %v4004
    %4067 = vmatprep.subr.bf16.mxu0 %v4003
    %4068 = vmatpush2.bf16.msra.mxu0 %v4002
    %4069 = vmatprep.subr.bf16.mxu0 %v4001
    %4070 = vmatpush2.bf16.msra.mxu0 %v4000
    %4071 = vmatprep.subr.bf16.mxu0 %v3999
    %4072 = vmatpush2.bf16.msra.mxu0 %v3998
    %4073 = vmatprep.mubr.bf16.mxu0 %v4039
    %4074 = vmatmul.mubr.bf16.gmra.mxu0 %v3868
    %v4075 = vpop.f32.mrf.mxu0
    %v4076 = vadd.f32 0.0, %v4075
    %v4077 = vpop.f32.mrf.mxu0
    %v4078 = vadd.f32 0.0, %v4077
    %v4079 = vpop.f32.mrf.mxu0
    %v4080 = vpop.f32.mrf.mxu0
    %4081 = vdwg.mxu0
    %v4082 = vld [vmem:[%s13] sm:$0xf]
    %v4083 = vld [vmem:[%s13 + $0x4] sm:$0x7]
    %v4084 = vpack.c.bf16 %v4076, %v4076
    %v4085 = vpack.c.bf16 %v4078, %v4078
    %s4086 = scalar_lea.vmem [#allocation10], 224
    %v4087 = vld [vmem:[%s4086] sm:$0xff]
    %v4088 = vld [vmem:[%s4086 + $0x8] sm:$0xff]
    %v4089 = vld [vmem:[%s4086 + $0x10] sm:$0xff]
    %v4090 = vld [vmem:[%s4086 + $0x18] sm:$0xff]
    %v4091 = vld [vmem:[%s4086 + $0x20] sm:$0xff]
    %v4092 = vld [vmem:[%s4086 + $0x28] sm:$0xff]
    %v4093 = vld [vmem:[%s4086 + $0x30] sm:$0xff]
    %v4094 = vld [vmem:[%s4086 + $0x38] sm:$0xff]
    %v4095 = vld [vmem:[%s4086 + $0x40] sm:$0xff]
    %v4096 = vld [vmem:[%s4086 + $0x48] sm:$0xff]
    %v4097 = vld [vmem:[%s4086 + $0x50] sm:$0xff]
    %v4098 = vld [vmem:[%s4086 + $0x58] sm:$0xff]
    %v4099 = vld [vmem:[%s4086 + $0x60] sm:$0xff]
    %v4100 = vld [vmem:[%s4086 + $0x68] sm:$0xff]
    %v4101 = vld [vmem:[%s4086 + $0x70] sm:$0xff]
    %v4102 = vld [vmem:[%s4086 + $0x78] sm:$0xff]
    %v4103 = vld [vmem:[%s4086 + $0x80] sm:$0xff]
    %v4104 = vld [vmem:[%s4086 + $0x88] sm:$0xff]
    %v4105 = vld [vmem:[%s4086 + $0x90] sm:$0xff]
    %v4106 = vld [vmem:[%s4086 + $0x98] sm:$0xff]
    %v4107 = vld [vmem:[%s4086 + $0xa0] sm:$0xff]
    %v4108 = vld [vmem:[%s4086 + $0xa8] sm:$0xff]
    %v4109 = vld [vmem:[%s4086 + $0xb0] sm:$0xff]
    %v4110 = vld [vmem:[%s4086 + $0xb8] sm:$0xff]
    %v4111 = vld [vmem:[%s4086 + $0xc0] sm:$0xff]
    %v4112 = vld [vmem:[%s4086 + $0xc8] sm:$0xff]
    %v4113 = vld [vmem:[%s4086 + $0xd0] sm:$0xff]
    %v4114 = vld [vmem:[%s4086 + $0xd8] sm:$0xff]
    %v4143 = vunpack.c.l.b16 %v4087
    %v4144 = vunpack.c.h.b16 %v4087
    %v4145 = vunpack.c.l.b16 %v4088
    %v4146 = vunpack.c.h.b16 %v4088
    %v4147 = vunpack.c.l.b16 %v4089
    %v4148 = vunpack.c.h.b16 %v4089
    %v4149 = vunpack.c.l.b16 %v4090
    %v4150 = vunpack.c.h.b16 %v4090
    %v4151 = vunpack.c.l.b16 %v4091
    %v4152 = vunpack.c.h.b16 %v4091
    %v4153 = vunpack.c.l.b16 %v4092
    %v4154 = vunpack.c.h.b16 %v4092
    %v4155 = vunpack.c.l.b16 %v4093
    %v4156 = vunpack.c.h.b16 %v4093
    %v4157 = vunpack.c.l.b16 %v4094
    %v4158 = vunpack.c.h.b16 %v4094
    %v4159 = vunpack.c.l.b16 %v4095
    %v4160 = vunpack.c.h.b16 %v4095
    %v4161 = vunpack.c.l.b16 %v4096
    %v4162 = vunpack.c.h.b16 %v4096
    %v4163 = vunpack.c.l.b16 %v4097
    %v4164 = vunpack.c.h.b16 %v4097
    %v4165 = vunpack.c.l.b16 %v4098
    %v4166 = vunpack.c.h.b16 %v4098
    %v4167 = vunpack.c.l.b16 %v4099
    %v4168 = vunpack.c.h.b16 %v4099
    %v4169 = vunpack.c.l.b16 %v4100
    %v4170 = vunpack.c.h.b16 %v4100
    %v4171 = vunpack.c.l.b16 %v4101
    %v4172 = vunpack.c.h.b16 %v4101
    %v4173 = vunpack.c.l.b16 %v4102
    %v4174 = vunpack.c.h.b16 %v4102
    %v4175 = vunpack.c.l.b16 %v4103
    %v4176 = vunpack.c.h.b16 %v4103
    %v4177 = vunpack.c.l.b16 %v4104
    %v4178 = vunpack.c.h.b16 %v4104
    %v4179 = vunpack.c.l.b16 %v4105
    %v4180 = vunpack.c.h.b16 %v4105
    %v4181 = vunpack.c.l.b16 %v4106
    %v4182 = vunpack.c.h.b16 %v4106
    %v4183 = vunpack.c.l.b16 %v4107
    %v4184 = vunpack.c.h.b16 %v4107
    %v4185 = vunpack.c.l.b16 %v4108
    %v4186 = vunpack.c.h.b16 %v4108
    %v4187 = vunpack.c.l.b16 %v4109
    %v4188 = vunpack.c.h.b16 %v4109
    %v4189 = vunpack.c.l.b16 %v4110
    %v4190 = vunpack.c.h.b16 %v4110
    %v4191 = vunpack.c.l.b16 %v4111
    %v4192 = vunpack.c.h.b16 %v4111
    %v4193 = vunpack.c.l.b16 %v4112
    %v4194 = vunpack.c.h.b16 %v4112
    %v4195 = vunpack.c.l.b16 %v4113
    %v4196 = vunpack.c.h.b16 %v4113
    %v4197 = vunpack.c.l.b16 %v4114
    %v4198 = vunpack.c.h.b16 %v4114
    %v4199 = vpack.c.b16 %v4145, %v4143
    %v4200 = vpack.c.b16 %v4146, %v4144
    %v4201 = vpack.c.b16 %v4149, %v4147
    %v4202 = vpack.c.b16 %v4150, %v4148
    %v4203 = vpack.c.b16 %v4153, %v4151
    %v4204 = vpack.c.b16 %v4154, %v4152
    %v4205 = vpack.c.b16 %v4157, %v4155
    %v4206 = vpack.c.b16 %v4158, %v4156
    %v4207 = vpack.c.b16 %v4161, %v4159
    %v4208 = vpack.c.b16 %v4162, %v4160
    %v4209 = vpack.c.b16 %v4165, %v4163
    %v4210 = vpack.c.b16 %v4166, %v4164
    %v4211 = vpack.c.b16 %v4169, %v4167
    %v4212 = vpack.c.b16 %v4170, %v4168
    %v4213 = vpack.c.b16 %v4173, %v4171
    %v4214 = vpack.c.b16 %v4174, %v4172
    %v4215 = vpack.c.b16 %v4177, %v4175
    %v4216 = vpack.c.b16 %v4178, %v4176
    %v4217 = vpack.c.b16 %v4181, %v4179
    %v4218 = vpack.c.b16 %v4182, %v4180
    %v4219 = vpack.c.b16 %v4185, %v4183
    %v4220 = vpack.c.b16 %v4186, %v4184
    %v4221 = vpack.c.b16 %v4189, %v4187
    %v4222 = vpack.c.b16 %v4190, %v4188
    %v4223 = vpack.c.b16 %v4193, %v4191
    %v4224 = vpack.c.b16 %v4194, %v4192
    %v4225 = vpack.c.b16 %v4197, %v4195
    %v4226 = vpack.c.b16 %v4198, %v4196
    %4255 = vmatprep.subr.bf16.mxu0 %v4214
    %4256 = vmatpush1.bf16.msra.mxu0 %v4213
    %4257 = vmatprep.subr.bf16.mxu0 %v4212
    %4258 = vmatpush1.bf16.msra.mxu0 %v4211
    %4259 = vmatprep.subr.bf16.mxu0 %v4210
    %4260 = vmatpush1.bf16.msra.mxu0 %v4209
    %4261 = vmatprep.subr.bf16.mxu0 %v4208
    %4262 = vmatpush1.bf16.msra.mxu0 %v4207
    %4263 = vmatprep.subr.bf16.mxu0 %v4206
    %4264 = vmatpush1.bf16.msra.mxu0 %v4205
    %4265 = vmatprep.subr.bf16.mxu0 %v4204
    %4266 = vmatpush1.bf16.msra.mxu0 %v4203
    %4267 = vmatprep.subr.bf16.mxu0 %v4202
    %4268 = vmatpush1.bf16.msra.mxu0 %v4201
    %4269 = vmatprep.subr.bf16.mxu0 %v4200
    %4270 = vmatpush1.bf16.msra.mxu0 %v4199
    %4271 = vmatprep.subr.bf16.mxu0 0
    %4272 = vmatpush2.bf16.msra.mxu0 0
    %4273 = vmatprep.subr.bf16.mxu0 0
    %4274 = vmatpush2.bf16.msra.mxu0 0
    %4275 = vmatprep.subr.bf16.mxu0 %v4226
    %4276 = vmatpush2.bf16.msra.mxu0 %v4225
    %4277 = vmatprep.subr.bf16.mxu0 %v4224
    %4278 = vmatpush2.bf16.msra.mxu0 %v4223
    %4279 = vmatprep.subr.bf16.mxu0 %v4222
    %4280 = vmatpush2.bf16.msra.mxu0 %v4221
    %4281 = vmatprep.subr.bf16.mxu0 %v4220
    %4282 = vmatpush2.bf16.msra.mxu0 %v4219
    %4283 = vmatprep.subr.bf16.mxu0 %v4218
    %4284 = vmatpush2.bf16.msra.mxu0 %v4217
    %4285 = vmatprep.subr.bf16.mxu0 %v4216
    %4286 = vmatpush2.bf16.msra.mxu0 %v4215
    %4287 = vmatprep.mubr.bf16.mxu0 %v4039
    %4288 = vmatmul.mubr.bf16.gmra.mxu0 %v3868
    %v4289 = vpop.f32.mrf.mxu0
    %v4290 = vadd.f32 0.0, %v4289
    %v4291 = vpop.f32.mrf.mxu0
    %v4292 = vadd.f32 0.0, %v4291
    %v4293 = vpop.f32.mrf.mxu0
    %v4294 = vpop.f32.mrf.mxu0
    %4295 = vdwg.mxu0
    %s4296 = scalar_lea.vmem %s13, 8
    %v4297 = vld [vmem:[%s4296] sm:$0xf]
    %v4298 = vld [vmem:[%s4296 + $0x4] sm:$0x7]
    %v4299 = vpack.c.bf16 %v4290, %v4290
    %v4300 = vpack.c.bf16 %v4292, %v4292
    %v4303 = vunpack.c.l.b16 %v4297
    %v4304 = vunpack.c.l.b16 %v4298
    %v4305 = vpack.c.b16 %v4304, %v4303
    %v4307 = vsel %vm1384, %v4305, 0
    %v4310 = vand.u32 %v4299, %v1391
    %v4313 = vand.u32 %v4300, %v1391
    %4315 = vmatprep.subr.bf16.mxu0 0
    %4316 = vmatpush1.bf16.msra.mxu0 0
    %4317 = vmatprep.subr.bf16.mxu0 0
    %4318 = vmatpush1.bf16.msra.mxu0 0
    %4319 = vmatprep.subr.bf16.mxu0 0
    %4320 = vmatpush1.bf16.msra.mxu0 0
    %4321 = vmatprep.subr.bf16.mxu0 0
    %4322 = vmatpush1.bf16.msra.mxu0 0
    %4323 = vmatprep.subr.bf16.mxu0 0
    %4324 = vmatpush1.bf16.msra.mxu0 0
    %4325 = vmatprep.subr.bf16.mxu0 0
    %4326 = vmatpush1.bf16.msra.mxu0 0
    %4327 = vmatprep.subr.bf16.mxu0 0
    %4328 = vmatpush1.bf16.msra.mxu0 0
    %4329 = vmatprep.subr.bf16.mxu0 %v4313
    %4330 = vmatpush1.bf16.msra.mxu0 %v4310
    %4331 = vmatprep.subr.bf16.mxu0 0
    %4332 = vmatpush2.bf16.msra.mxu0 0
    %4333 = vmatprep.subr.bf16.mxu0 0
    %4334 = vmatpush2.bf16.msra.mxu0 0
    %4335 = vmatprep.subr.bf16.mxu0 0
    %4336 = vmatpush2.bf16.msra.mxu0 0
    %4337 = vmatprep.subr.bf16.mxu0 0
    %4338 = vmatpush2.bf16.msra.mxu0 0
    %4339 = vmatprep.subr.bf16.mxu0 0
    %4340 = vmatpush2.bf16.msra.mxu0 0
    %4341 = vmatprep.subr.bf16.mxu0 0
    %4342 = vmatpush2.bf16.msra.mxu0 0
    %4343 = vmatprep.subr.bf16.mxu0 0
    %4344 = vmatpush2.bf16.msra.mxu0 0
    %4345 = vmatprep.subr.bf16.mxu0 0
    %4346 = vmatpush2.bf16.msra.mxu0 0
    %4347 = vmatprep.mubr.bf16.mxu0 0
    %4348 = vmatmul.mubr.bf16.gmra.mxu0 %v4307
    %v4349 = vpop.f32.mrf.mxu0
    %v4350 = vadd.f32 0.0, %v4349
    %v4351 = vpop.f32.mrf.mxu0
    %v4352 = vadd.f32 0.0, %v4351
    %v4353 = vpop.f32.mrf.mxu0
    %v4354 = vadd.f32 0.0, %v4353
    %v4355 = vpop.f32.mrf.mxu0
    %v4356 = vadd.f32 0.0, %v4355
    %4357 = vdwg.mxu0
    %v4360 = vunpack.c.l.b16 %v4082
    %v4361 = vunpack.c.l.b16 %v4083
    %v4362 = vpack.c.b16 %v4361, %v4360
    %v4364 = vsel %vm1384, %v4362, 0
    %v4367 = vand.u32 %v4084, %v1391
    %v4370 = vand.u32 %v4085, %v1391
    %4372 = vmatprep.subr.bf16.mxu0 0
    %4373 = vmatpush1.bf16.msra.mxu0 0
    %4374 = vmatprep.subr.bf16.mxu0 0
    %4375 = vmatpush1.bf16.msra.mxu0 0
    %4376 = vmatprep.subr.bf16.mxu0 0
    %4377 = vmatpush1.bf16.msra.mxu0 0
    %4378 = vmatprep.subr.bf16.mxu0 0
    %4379 = vmatpush1.bf16.msra.mxu0 0
    %4380 = vmatprep.subr.bf16.mxu0 0
    %4381 = vmatpush1.bf16.msra.mxu0 0
    %4382 = vmatprep.subr.bf16.mxu0 0
    %4383 = vmatpush1.bf16.msra.mxu0 0
    %4384 = vmatprep.subr.bf16.mxu0 0
    %4385 = vmatpush1.bf16.msra.mxu0 0
    %4386 = vmatprep.subr.bf16.mxu0 %v4370
    %4387 = vmatpush1.bf16.msra.mxu0 %v4367
    %4388 = vmatprep.subr.bf16.mxu0 0
    %4389 = vmatpush2.bf16.msra.mxu0 0
    %4390 = vmatprep.subr.bf16.mxu0 0
    %4391 = vmatpush2.bf16.msra.mxu0 0
    %4392 = vmatprep.subr.bf16.mxu0 0
    %4393 = vmatpush2.bf16.msra.mxu0 0
    %4394 = vmatprep.subr.bf16.mxu0 0
    %4395 = vmatpush2.bf16.msra.mxu0 0
    %4396 = vmatprep.subr.bf16.mxu0 0
    %4397 = vmatpush2.bf16.msra.mxu0 0
    %4398 = vmatprep.subr.bf16.mxu0 0
    %4399 = vmatpush2.bf16.msra.mxu0 0
    %4400 = vmatprep.subr.bf16.mxu0 0
    %4401 = vmatpush2.bf16.msra.mxu0 0
    %4402 = vmatprep.subr.bf16.mxu0 0
    %4403 = vmatpush2.bf16.msra.mxu0 0
    %4404 = vmatprep.mubr.bf16.mxu0 0
    %4405 = vmatmul.mubr.bf16.gmra.mxu0 %v4364
    %v4406 = vpop.f32.mrf.mxu0
    %v4407 = vadd.f32 %v4350, %v4406
    %v4408 = vpop.f32.mrf.mxu0
    %v4409 = vadd.f32 %v4352, %v4408
    %v4410 = vpop.f32.mrf.mxu0
    %v4411 = vadd.f32 %v4354, %v4410
    %v4412 = vpop.f32.mrf.mxu0
    %v4413 = vadd.f32 %v4356, %v4412
    %4414 = vdwg.mxu0
    %s4415 = scalar_lea.vmem [#allocation10], 448
    %v4416 = vld [vmem:[%s4415] sm:$0xff]
    %v4417 = vld [vmem:[%s4415 + $0x8] sm:$0xff]
    %v4418 = vld [vmem:[%s4415 + $0x10] sm:$0xff]
    %v4419 = vld [vmem:[%s4415 + $0x18] sm:$0xff]
    %v4420 = vld [vmem:[%s4415 + $0x20] sm:$0xff]
    %v4421 = vld [vmem:[%s4415 + $0x28] sm:$0xff]
    %v4422 = vld [vmem:[%s4415 + $0x30] sm:$0xff]
    %v4423 = vld [vmem:[%s4415 + $0x38] sm:$0xff]
    %v4424 = vld [vmem:[%s4415 + $0x40] sm:$0xff]
    %v4425 = vld [vmem:[%s4415 + $0x48] sm:$0xff]
    %v4426 = vld [vmem:[%s4415 + $0x50] sm:$0xff]
    %v4427 = vld [vmem:[%s4415 + $0x58] sm:$0xff]
    %v4428 = vld [vmem:[%s4415 + $0x60] sm:$0xff]
    %v4429 = vld [vmem:[%s4415 + $0x68] sm:$0xff]
    %v4430 = vld [vmem:[%s4415 + $0x70] sm:$0xff]
    %v4431 = vld [vmem:[%s4415 + $0x78] sm:$0xff]
    %v4432 = vld [vmem:[%s4415 + $0x80] sm:$0xff]
    %v4433 = vld [vmem:[%s4415 + $0x88] sm:$0xff]
    %v4434 = vld [vmem:[%s4415 + $0x90] sm:$0xff]
    %v4435 = vld [vmem:[%s4415 + $0x98] sm:$0xff]
    %v4436 = vld [vmem:[%s4415 + $0xa0] sm:$0xff]
    %v4437 = vld [vmem:[%s4415 + $0xa8] sm:$0xff]
    %v4438 = vld [vmem:[%s4415 + $0xb0] sm:$0xff]
    %v4439 = vld [vmem:[%s4415 + $0xb8] sm:$0xff]
    %v4440 = vld [vmem:[%s4415 + $0xc0] sm:$0xff]
    %v4441 = vld [vmem:[%s4415 + $0xc8] sm:$0xff]
    %v4442 = vld [vmem:[%s4415 + $0xd0] sm:$0xff]
    %v4443 = vld [vmem:[%s4415 + $0xd8] sm:$0xff]
    %v4472 = vunpack.c.l.b16 %v4416
    %v4473 = vunpack.c.h.b16 %v4416
    %v4474 = vunpack.c.l.b16 %v4417
    %v4475 = vunpack.c.h.b16 %v4417
    %v4476 = vunpack.c.l.b16 %v4418
    %v4477 = vunpack.c.h.b16 %v4418
    %v4478 = vunpack.c.l.b16 %v4419
    %v4479 = vunpack.c.h.b16 %v4419
    %v4480 = vunpack.c.l.b16 %v4420
    %v4481 = vunpack.c.h.b16 %v4420
    %v4482 = vunpack.c.l.b16 %v4421
    %v4483 = vunpack.c.h.b16 %v4421
    %v4484 = vunpack.c.l.b16 %v4422
    %v4485 = vunpack.c.h.b16 %v4422
    %v4486 = vunpack.c.l.b16 %v4423
    %v4487 = vunpack.c.h.b16 %v4423
    %v4488 = vunpack.c.l.b16 %v4424
    %v4489 = vunpack.c.h.b16 %v4424
    %v4490 = vunpack.c.l.b16 %v4425
    %v4491 = vunpack.c.h.b16 %v4425
    %v4492 = vunpack.c.l.b16 %v4426
    %v4493 = vunpack.c.h.b16 %v4426
    %v4494 = vunpack.c.l.b16 %v4427
    %v4495 = vunpack.c.h.b16 %v4427
    %v4496 = vunpack.c.l.b16 %v4428
    %v4497 = vunpack.c.h.b16 %v4428
    %v4498 = vunpack.c.l.b16 %v4429
    %v4499 = vunpack.c.h.b16 %v4429
    %v4500 = vunpack.c.l.b16 %v4430
    %v4501 = vunpack.c.h.b16 %v4430
    %v4502 = vunpack.c.l.b16 %v4431
    %v4503 = vunpack.c.h.b16 %v4431
    %v4504 = vunpack.c.l.b16 %v4432
    %v4505 = vunpack.c.h.b16 %v4432
    %v4506 = vunpack.c.l.b16 %v4433
    %v4507 = vunpack.c.h.b16 %v4433
    %v4508 = vunpack.c.l.b16 %v4434
    %v4509 = vunpack.c.h.b16 %v4434
    %v4510 = vunpack.c.l.b16 %v4435
    %v4511 = vunpack.c.h.b16 %v4435
    %v4512 = vunpack.c.l.b16 %v4436
    %v4513 = vunpack.c.h.b16 %v4436
    %v4514 = vunpack.c.l.b16 %v4437
    %v4515 = vunpack.c.h.b16 %v4437
    %v4516 = vunpack.c.l.b16 %v4438
    %v4517 = vunpack.c.h.b16 %v4438
    %v4518 = vunpack.c.l.b16 %v4439
    %v4519 = vunpack.c.h.b16 %v4439
    %v4520 = vunpack.c.l.b16 %v4440
    %v4521 = vunpack.c.h.b16 %v4440
    %v4522 = vunpack.c.l.b16 %v4441
    %v4523 = vunpack.c.h.b16 %v4441
    %v4524 = vunpack.c.l.b16 %v4442
    %v4525 = vunpack.c.h.b16 %v4442
    %v4526 = vunpack.c.l.b16 %v4443
    %v4527 = vunpack.c.h.b16 %v4443
    %v4528 = vpack.c.b16 %v4474, %v4472
    %v4529 = vpack.c.b16 %v4475, %v4473
    %v4530 = vpack.c.b16 %v4478, %v4476
    %v4531 = vpack.c.b16 %v4479, %v4477
    %v4532 = vpack.c.b16 %v4482, %v4480
    %v4533 = vpack.c.b16 %v4483, %v4481
    %v4534 = vpack.c.b16 %v4486, %v4484
    %v4535 = vpack.c.b16 %v4487, %v4485
    %v4536 = vpack.c.b16 %v4490, %v4488
    %v4537 = vpack.c.b16 %v4491, %v4489
    %v4538 = vpack.c.b16 %v4494, %v4492
    %v4539 = vpack.c.b16 %v4495, %v4493
    %v4540 = vpack.c.b16 %v4498, %v4496
    %v4541 = vpack.c.b16 %v4499, %v4497
    %v4542 = vpack.c.b16 %v4502, %v4500
    %v4543 = vpack.c.b16 %v4503, %v4501
    %v4544 = vpack.c.b16 %v4506, %v4504
    %v4545 = vpack.c.b16 %v4507, %v4505
    %v4546 = vpack.c.b16 %v4510, %v4508
    %v4547 = vpack.c.b16 %v4511, %v4509
    %v4548 = vpack.c.b16 %v4514, %v4512
    %v4549 = vpack.c.b16 %v4515, %v4513
    %v4550 = vpack.c.b16 %v4518, %v4516
    %v4551 = vpack.c.b16 %v4519, %v4517
    %v4552 = vpack.c.b16 %v4522, %v4520
    %v4553 = vpack.c.b16 %v4523, %v4521
    %v4554 = vpack.c.b16 %v4526, %v4524
    %v4555 = vpack.c.b16 %v4527, %v4525
    %4584 = vmatprep.subr.bf16.mxu0 %v4543
    %4585 = vmatpush1.bf16.msra.mxu0 %v4542
    %4586 = vmatprep.subr.bf16.mxu0 %v4541
    %4587 = vmatpush1.bf16.msra.mxu0 %v4540
    %4588 = vmatprep.subr.bf16.mxu0 %v4539
    %4589 = vmatpush1.bf16.msra.mxu0 %v4538
    %4590 = vmatprep.subr.bf16.mxu0 %v4537
    %4591 = vmatpush1.bf16.msra.mxu0 %v4536
    %4592 = vmatprep.subr.bf16.mxu0 %v4535
    %4593 = vmatpush1.bf16.msra.mxu0 %v4534
    %4594 = vmatprep.subr.bf16.mxu0 %v4533
    %4595 = vmatpush1.bf16.msra.mxu0 %v4532
    %4596 = vmatprep.subr.bf16.mxu0 %v4531
    %4597 = vmatpush1.bf16.msra.mxu0 %v4530
    %4598 = vmatprep.subr.bf16.mxu0 %v4529
    %4599 = vmatpush1.bf16.msra.mxu0 %v4528
    %4600 = vmatprep.subr.bf16.mxu0 0
    %4601 = vmatpush2.bf16.msra.mxu0 0
    %4602 = vmatprep.subr.bf16.mxu0 0
    %4603 = vmatpush2.bf16.msra.mxu0 0
    %4604 = vmatprep.subr.bf16.mxu0 %v4555
    %4605 = vmatpush2.bf16.msra.mxu0 %v4554
    %4606 = vmatprep.subr.bf16.mxu0 %v4553
    %4607 = vmatpush2.bf16.msra.mxu0 %v4552
    %4608 = vmatprep.subr.bf16.mxu0 %v4551
    %4609 = vmatpush2.bf16.msra.mxu0 %v4550
    %4610 = vmatprep.subr.bf16.mxu0 %v4549
    %4611 = vmatpush2.bf16.msra.mxu0 %v4548
    %4612 = vmatprep.subr.bf16.mxu0 %v4547
    %4613 = vmatpush2.bf16.msra.mxu0 %v4546
    %4614 = vmatprep.subr.bf16.mxu0 %v4545
    %4615 = vmatpush2.bf16.msra.mxu0 %v4544
    %4616 = vmatprep.mubr.bf16.mxu0 %v4039
    %4617 = vmatmul.mubr.bf16.gmra.mxu0 %v3868
    %v4618 = vpop.f32.mrf.mxu0
    %v4619 = vadd.f32 0.0, %v4618
    %v4620 = vpop.f32.mrf.mxu0
    %v4621 = vadd.f32 0.0, %v4620
    %v4622 = vpop.f32.mrf.mxu0
    %v4623 = vpop.f32.mrf.mxu0
    %4624 = vdwg.mxu0
    %s4625 = scalar_lea.vmem %s13, 16
    %v4626 = vld [vmem:[%s4625] sm:$0xf]
    %v4627 = vld [vmem:[%s4625 + $0x4] sm:$0x7]
    %v4628 = vpack.c.bf16 %v4619, %v4619
    %v4629 = vpack.c.bf16 %v4621, %v4621
    %v4632 = vunpack.c.l.b16 %v4626
    %v4633 = vunpack.c.l.b16 %v4627
    %v4634 = vpack.c.b16 %v4633, %v4632
    %v4636 = vsel %vm1384, %v4634, 0
    %v4639 = vand.u32 %v4628, %v1391
    %v4642 = vand.u32 %v4629, %v1391
    %4644 = vmatprep.subr.bf16.mxu0 0
    %4645 = vmatpush1.bf16.msra.mxu0 0
    %4646 = vmatprep.subr.bf16.mxu0 0
    %4647 = vmatpush1.bf16.msra.mxu0 0
    %4648 = vmatprep.subr.bf16.mxu0 0
    %4649 = vmatpush1.bf16.msra.mxu0 0
    %4650 = vmatprep.subr.bf16.mxu0 0
    %4651 = vmatpush1.bf16.msra.mxu0 0
    %4652 = vmatprep.subr.bf16.mxu0 0
    %4653 = vmatpush1.bf16.msra.mxu0 0
    %4654 = vmatprep.subr.bf16.mxu0 0
    %4655 = vmatpush1.bf16.msra.mxu0 0
    %4656 = vmatprep.subr.bf16.mxu0 0
    %4657 = vmatpush1.bf16.msra.mxu0 0
    %4658 = vmatprep.subr.bf16.mxu0 %v4642
    %4659 = vmatpush1.bf16.msra.mxu0 %v4639
    %4660 = vmatprep.subr.bf16.mxu0 0
    %4661 = vmatpush2.bf16.msra.mxu0 0
    %4662 = vmatprep.subr.bf16.mxu0 0
    %4663 = vmatpush2.bf16.msra.mxu0 0
    %4664 = vmatprep.subr.bf16.mxu0 0
    %4665 = vmatpush2.bf16.msra.mxu0 0
    %4666 = vmatprep.subr.bf16.mxu0 0
    %4667 = vmatpush2.bf16.msra.mxu0 0
    %4668 = vmatprep.subr.bf16.mxu0 0
    %4669 = vmatpush2.bf16.msra.mxu0 0
    %4670 = vmatprep.subr.bf16.mxu0 0
    %4671 = vmatpush2.bf16.msra.mxu0 0
    %4672 = vmatprep.subr.bf16.mxu0 0
    %4673 = vmatpush2.bf16.msra.mxu0 0
    %4674 = vmatprep.subr.bf16.mxu0 0
    %4675 = vmatpush2.bf16.msra.mxu0 0
    %4676 = vmatprep.mubr.bf16.mxu0 0
    %4677 = vmatmul.mubr.bf16.gmra.mxu0 %v4636
    %v4678 = vpop.f32.mrf.mxu0
    %v4679 = vadd.f32 0.0, %v4678
    %v4680 = vpop.f32.mrf.mxu0
    %v4681 = vadd.f32 0.0, %v4680
    %v4682 = vpop.f32.mrf.mxu0
    %v4683 = vadd.f32 0.0, %v4682
    %v4684 = vpop.f32.mrf.mxu0
    %v4685 = vadd.f32 0.0, %v4684
    %4686 = vdwg.mxu0
    %v4687 = vadd.f32 %v4407, %v4679
    %v4688 = vadd.f32 %v4409, %v4681
    %v4689 = vadd.f32 %v4411, %v4683
    %v4690 = vadd.f32 %v4413, %v4685
    %v4691 = vld [vmem:[%s15] sm:$0x3]
    %v4693 = vlaneseq
    %v4694 = vshrl.u32 %v4693, 7
    %v4695 = vsub.s32 0, %v4694
    %v4696 = vrot.slane %v4691, %v4695
    %v4697 = vlaneseq
    %v4698 = vshrl.u32 %v4697, 7
    %v4699 = vsub.s32 1, %v4698
    %v4700 = vrot.slane %v4691, %v4699
    %v4703 = vadd.f32 %v4687, %v4696
    %v4704 = vadd.f32 %v4688, %v4700
    %v4705 = vadd.f32 %v4689, %v4696
    %v4706 = vadd.f32 %v4690, %v4700
    %v4707 = vmax.f32 %v4703, 0.0
    %v4708 = vmax.f32 %v4704, 0.0
    %v4709 = vmax.f32 %v4705, 0.0
    %v4710 = vmax.f32 %v4706, 0.0
    %v4711 = vpack.c.bf16 %v4709, %v4707
    %v4712 = vpack.c.bf16 %v4710, %v4708
    %v4713 = vld [vmem:[#allocation12] sm:$0xf]
    %v4714 = vld [vmem:[#allocation12 + $0x4] sm:$0xf]
    %v4715 = vld [vmem:[#allocation12 + $0x8] sm:$0xf]
    %v4716 = vld [vmem:[#allocation12 + $0xc] sm:$0xf]
    %v4717 = vld [vmem:[#allocation12 + $0x10] sm:$0xf]
    %v4718 = vld [vmem:[#allocation12 + $0x14] sm:$0xf]
    %v4719 = vld [vmem:[#allocation12 + $0x18] sm:$0xf]
    %v4720 = vld [vmem:[#allocation12 + $0x1c] sm:$0xf]
    %v4721 = vld [vmem:[#allocation12 + $0x20] sm:$0xf]
    %v4722 = vld [vmem:[#allocation12 + $0x24] sm:$0xf]
    %v4723 = vld [vmem:[#allocation12 + $0x28] sm:$0xf]
    %v4724 = vld [vmem:[#allocation12 + $0x2c] sm:$0xf]
    %v4725 = vld [vmem:[#allocation12 + $0x30] sm:$0xf]
    %v4726 = vld [vmem:[#allocation12 + $0x34] sm:$0xf]
    %v4727 = vld [vmem:[#allocation12 + $0x38] sm:$0xf]
    %v4728 = vld [vmem:[#allocation12 + $0x3c] sm:$0xf]
    %v4729 = vld [vmem:[#allocation12 + $0x40] sm:$0xf]
    %v4730 = vld [vmem:[#allocation12 + $0x44] sm:$0xf]
    %v4731 = vld [vmem:[#allocation12 + $0x48] sm:$0xf]
    %v4732 = vld [vmem:[#allocation12 + $0x4c] sm:$0xf]
    %v4733 = vld [vmem:[#allocation12 + $0x50] sm:$0xf]
    %v4734 = vld [vmem:[#allocation12 + $0x54] sm:$0xf]
    %v4735 = vld [vmem:[#allocation12 + $0x58] sm:$0xf]
    %v4736 = vld [vmem:[#allocation12 + $0x5c] sm:$0xf]
    %v4737 = vld [vmem:[#allocation12 + $0x60] sm:$0xf]
    %v4738 = vld [vmem:[#allocation12 + $0x64] sm:$0xf]
    %v4739 = vld [vmem:[#allocation12 + $0x68] sm:$0xf]
    %v4740 = vld [vmem:[#allocation12 + $0x6c] sm:$0xf]
    %v4769 = vunpack.c.l.b16 %v4713
    %v4770 = vunpack.c.l.b16 %v4714
    %v4771 = vunpack.c.l.b16 %v4715
    %v4772 = vunpack.c.l.b16 %v4716
    %v4773 = vunpack.c.l.b16 %v4717
    %v4774 = vunpack.c.l.b16 %v4718
    %v4775 = vunpack.c.l.b16 %v4719
    %v4776 = vunpack.c.l.b16 %v4720
    %v4777 = vunpack.c.l.b16 %v4721
    %v4778 = vunpack.c.l.b16 %v4722
    %v4779 = vunpack.c.l.b16 %v4723
    %v4780 = vunpack.c.l.b16 %v4724
    %v4781 = vunpack.c.l.b16 %v4725
    %v4782 = vunpack.c.l.b16 %v4726
    %v4783 = vunpack.c.l.b16 %v4727
    %v4784 = vunpack.c.l.b16 %v4728
    %v4785 = vunpack.c.l.b16 %v4729
    %v4786 = vunpack.c.l.b16 %v4730
    %v4787 = vunpack.c.l.b16 %v4731
    %v4788 = vunpack.c.l.b16 %v4732
    %v4789 = vunpack.c.l.b16 %v4733
    %v4790 = vunpack.c.l.b16 %v4734
    %v4791 = vunpack.c.l.b16 %v4735
    %v4792 = vunpack.c.l.b16 %v4736
    %v4793 = vunpack.c.l.b16 %v4737
    %v4794 = vunpack.c.l.b16 %v4738
    %v4795 = vunpack.c.l.b16 %v4739
    %v4796 = vunpack.c.l.b16 %v4740
    %v4797 = vpack.c.b16 %v4770, %v4769
    %v4798 = vpack.c.b16 %v4772, %v4771
    %v4799 = vpack.c.b16 %v4774, %v4773
    %v4800 = vpack.c.b16 %v4776, %v4775
    %v4801 = vpack.c.b16 %v4778, %v4777
    %v4802 = vpack.c.b16 %v4780, %v4779
    %v4803 = vpack.c.b16 %v4782, %v4781
    %v4804 = vpack.c.b16 %v4784, %v4783
    %v4805 = vpack.c.b16 %v4786, %v4785
    %v4806 = vpack.c.b16 %v4788, %v4787
    %v4807 = vpack.c.b16 %v4790, %v4789
    %v4808 = vpack.c.b16 %v4792, %v4791
    %v4809 = vpack.c.b16 %v4794, %v4793
    %v4810 = vpack.c.b16 %v4796, %v4795
    %v4826 = vsel %vm873, %v4712, 0
    %4828 = vmatprep.subr.bf16.mxu0 0
    %4829 = vmatpush1.bf16.msra.mxu0 %v4804
    %4830 = vmatprep.subr.bf16.mxu0 0
    %4831 = vmatpush1.bf16.msra.mxu0 %v4803
    %4832 = vmatprep.subr.bf16.mxu0 0
    %4833 = vmatpush1.bf16.msra.mxu0 %v4802
    %4834 = vmatprep.subr.bf16.mxu0 0
    %4835 = vmatpush1.bf16.msra.mxu0 %v4801
    %4836 = vmatprep.subr.bf16.mxu0 0
    %4837 = vmatpush1.bf16.msra.mxu0 %v4800
    %4838 = vmatprep.subr.bf16.mxu0 0
    %4839 = vmatpush1.bf16.msra.mxu0 %v4799
    %4840 = vmatprep.subr.bf16.mxu0 0
    %4841 = vmatpush1.bf16.msra.mxu0 %v4798
    %4842 = vmatprep.subr.bf16.mxu0 0
    %4843 = vmatpush1.bf16.msra.mxu0 %v4797
    %4844 = vmatprep.subr.bf16.mxu0 0
    %4845 = vmatpush2.bf16.msra.mxu0 0
    %4846 = vmatprep.subr.bf16.mxu0 0
    %4847 = vmatpush2.bf16.msra.mxu0 0
    %4848 = vmatprep.subr.bf16.mxu0 0
    %4849 = vmatpush2.bf16.msra.mxu0 %v4810
    %4850 = vmatprep.subr.bf16.mxu0 0
    %4851 = vmatpush2.bf16.msra.mxu0 %v4809
    %4852 = vmatprep.subr.bf16.mxu0 0
    %4853 = vmatpush2.bf16.msra.mxu0 %v4808
    %4854 = vmatprep.subr.bf16.mxu0 0
    %4855 = vmatpush2.bf16.msra.mxu0 %v4807
    %4856 = vmatprep.subr.bf16.mxu0 0
    %4857 = vmatpush2.bf16.msra.mxu0 %v4806
    %4858 = vmatprep.subr.bf16.mxu0 0
    %4859 = vmatpush2.bf16.msra.mxu0 %v4805
    %4860 = vmatprep.mubr.bf16.mxu0 %v4826
    %4861 = vmatmul.mubr.bf16.gmra.mxu0 %v4711
    %v4862 = vpop.f32.mrf.mxu0
    %v4863 = vadd.f32 0.0, %v4862
    %v4864 = vpop.f32.mrf.mxu0
    %v4865 = vpop.f32.mrf.mxu0
    %v4866 = vadd.f32 0.0, %v4865
    %v4867 = vpop.f32.mrf.mxu0
    %4868 = vdwg.mxu0
    %v4869 = vld [vmem:[%s16] sm:$0xf]
    %v4870 = vld [vmem:[%s16 + $0x4] sm:$0xf]
    %v4871 = vld [vmem:[%s16 + $0x8] sm:$0xf]
    %v4872 = vld [vmem:[%s16 + $0xc] sm:$0x3]
    %v4873 = vpack.c.bf16 %v4866, %v4863
    %s4874 = scalar_lea.vmem [#allocation12], 112
    %v4875 = vld [vmem:[%s4874] sm:$0xf]
    %v4876 = vld [vmem:[%s4874 + $0x4] sm:$0xf]
    %v4877 = vld [vmem:[%s4874 + $0x8] sm:$0xf]
    %v4878 = vld [vmem:[%s4874 + $0xc] sm:$0xf]
    %v4879 = vld [vmem:[%s4874 + $0x10] sm:$0xf]
    %v4880 = vld [vmem:[%s4874 + $0x14] sm:$0xf]
    %v4881 = vld [vmem:[%s4874 + $0x18] sm:$0xf]
    %v4882 = vld [vmem:[%s4874 + $0x1c] sm:$0xf]
    %v4883 = vld [vmem:[%s4874 + $0x20] sm:$0xf]
    %v4884 = vld [vmem:[%s4874 + $0x24] sm:$0xf]
    %v4885 = vld [vmem:[%s4874 + $0x28] sm:$0xf]
    %v4886 = vld [vmem:[%s4874 + $0x2c] sm:$0xf]
    %v4887 = vld [vmem:[%s4874 + $0x30] sm:$0xf]
    %v4888 = vld [vmem:[%s4874 + $0x34] sm:$0xf]
    %v4889 = vld [vmem:[%s4874 + $0x38] sm:$0xf]
    %v4890 = vld [vmem:[%s4874 + $0x3c] sm:$0xf]
    %v4891 = vld [vmem:[%s4874 + $0x40] sm:$0xf]
    %v4892 = vld [vmem:[%s4874 + $0x44] sm:$0xf]
    %v4893 = vld [vmem:[%s4874 + $0x48] sm:$0xf]
    %v4894 = vld [vmem:[%s4874 + $0x4c] sm:$0xf]
    %v4895 = vld [vmem:[%s4874 + $0x50] sm:$0xf]
    %v4896 = vld [vmem:[%s4874 + $0x54] sm:$0xf]
    %v4897 = vld [vmem:[%s4874 + $0x58] sm:$0xf]
    %v4898 = vld [vmem:[%s4874 + $0x5c] sm:$0xf]
    %v4899 = vld [vmem:[%s4874 + $0x60] sm:$0xf]
    %v4900 = vld [vmem:[%s4874 + $0x64] sm:$0xf]
    %v4901 = vld [vmem:[%s4874 + $0x68] sm:$0xf]
    %v4902 = vld [vmem:[%s4874 + $0x6c] sm:$0xf]
    %v4931 = vunpack.c.l.b16 %v4875
    %v4932 = vunpack.c.l.b16 %v4876
    %v4933 = vunpack.c.l.b16 %v4877
    %v4934 = vunpack.c.l.b16 %v4878
    %v4935 = vunpack.c.l.b16 %v4879
    %v4936 = vunpack.c.l.b16 %v4880
    %v4937 = vunpack.c.l.b16 %v4881
    %v4938 = vunpack.c.l.b16 %v4882
    %v4939 = vunpack.c.l.b16 %v4883
    %v4940 = vunpack.c.l.b16 %v4884
    %v4941 = vunpack.c.l.b16 %v4885
    %v4942 = vunpack.c.l.b16 %v4886
    %v4943 = vunpack.c.l.b16 %v4887
    %v4944 = vunpack.c.l.b16 %v4888
    %v4945 = vunpack.c.l.b16 %v4889
    %v4946 = vunpack.c.l.b16 %v4890
    %v4947 = vunpack.c.l.b16 %v4891
    %v4948 = vunpack.c.l.b16 %v4892
    %v4949 = vunpack.c.l.b16 %v4893
    %v4950 = vunpack.c.l.b16 %v4894
    %v4951 = vunpack.c.l.b16 %v4895
    %v4952 = vunpack.c.l.b16 %v4896
    %v4953 = vunpack.c.l.b16 %v4897
    %v4954 = vunpack.c.l.b16 %v4898
    %v4955 = vunpack.c.l.b16 %v4899
    %v4956 = vunpack.c.l.b16 %v4900
    %v4957 = vunpack.c.l.b16 %v4901
    %v4958 = vunpack.c.l.b16 %v4902
    %v4959 = vpack.c.b16 %v4932, %v4931
    %v4960 = vpack.c.b16 %v4934, %v4933
    %v4961 = vpack.c.b16 %v4936, %v4935
    %v4962 = vpack.c.b16 %v4938, %v4937
    %v4963 = vpack.c.b16 %v4940, %v4939
    %v4964 = vpack.c.b16 %v4942, %v4941
    %v4965 = vpack.c.b16 %v4944, %v4943
    %v4966 = vpack.c.b16 %v4946, %v4945
    %v4967 = vpack.c.b16 %v4948, %v4947
    %v4968 = vpack.c.b16 %v4950, %v4949
    %v4969 = vpack.c.b16 %v4952, %v4951
    %v4970 = vpack.c.b16 %v4954, %v4953
    %v4971 = vpack.c.b16 %v4956, %v4955
    %v4972 = vpack.c.b16 %v4958, %v4957
    %4987 = vmatprep.subr.bf16.mxu0 0
    %4988 = vmatpush1.bf16.msra.mxu0 %v4966
    %4989 = vmatprep.subr.bf16.mxu0 0
    %4990 = vmatpush1.bf16.msra.mxu0 %v4965
    %4991 = vmatprep.subr.bf16.mxu0 0
    %4992 = vmatpush1.bf16.msra.mxu0 %v4964
    %4993 = vmatprep.subr.bf16.mxu0 0
    %4994 = vmatpush1.bf16.msra.mxu0 %v4963
    %4995 = vmatprep.subr.bf16.mxu0 0
    %4996 = vmatpush1.bf16.msra.mxu0 %v4962
    %4997 = vmatprep.subr.bf16.mxu0 0
    %4998 = vmatpush1.bf16.msra.mxu0 %v4961
    %4999 = vmatprep.subr.bf16.mxu0 0
    %5000 = vmatpush1.bf16.msra.mxu0 %v4960
    %5001 = vmatprep.subr.bf16.mxu0 0
    %5002 = vmatpush1.bf16.msra.mxu0 %v4959
    %5003 = vmatprep.subr.bf16.mxu0 0
    %5004 = vmatpush2.bf16.msra.mxu0 0
    %5005 = vmatprep.subr.bf16.mxu0 0
    %5006 = vmatpush2.bf16.msra.mxu0 0
    %5007 = vmatprep.subr.bf16.mxu0 0
    %5008 = vmatpush2.bf16.msra.mxu0 %v4972
    %5009 = vmatprep.subr.bf16.mxu0 0
    %5010 = vmatpush2.bf16.msra.mxu0 %v4971
    %5011 = vmatprep.subr.bf16.mxu0 0
    %5012 = vmatpush2.bf16.msra.mxu0 %v4970
    %5013 = vmatprep.subr.bf16.mxu0 0
    %5014 = vmatpush2.bf16.msra.mxu0 %v4969
    %5015 = vmatprep.subr.bf16.mxu0 0
    %5016 = vmatpush2.bf16.msra.mxu0 %v4968
    %5017 = vmatprep.subr.bf16.mxu0 0
    %5018 = vmatpush2.bf16.msra.mxu0 %v4967
    %5019 = vmatprep.mubr.bf16.mxu0 %v4826
    %5020 = vmatmul.mubr.bf16.gmra.mxu0 %v4711
    %v5021 = vpop.f32.mrf.mxu0
    %v5022 = vadd.f32 0.0, %v5021
    %v5023 = vpop.f32.mrf.mxu0
    %v5024 = vpop.f32.mrf.mxu0
    %v5025 = vadd.f32 0.0, %v5024
    %v5026 = vpop.f32.mrf.mxu0
    %5027 = vdwg.mxu0
    %s5028 = scalar_lea.vmem %s16, 16
    %v5029 = vld [vmem:[%s5028] sm:$0xf]
    %v5030 = vld [vmem:[%s5028 + $0x4] sm:$0xf]
    %v5031 = vld [vmem:[%s5028 + $0x8] sm:$0xf]
    %v5032 = vld [vmem:[%s5028 + $0xc] sm:$0x3]
    %v5033 = vpack.c.bf16 %v5025, %v5022
    %v5038 = vunpack.c.l.b16 %v5029
    %v5039 = vunpack.c.l.b16 %v5030
    %v5040 = vunpack.c.l.b16 %v5031
    %v5041 = vunpack.c.l.b16 %v5032
    %v5042 = vpack.c.b16 %v5039, %v5038
    %v5043 = vpack.c.b16 %v5041, %v5040
    %v5045 = vsel %vm574, %v5042, 0
    %v5048 = vsel %vm574, %v5043, 0
    %v5051 = vsel %vm578, %v5033, 0
    %5053 = vmatprep.subr.bf16.mxu0 0
    %5054 = vmatpush1.bf16.msra.mxu0 0
    %5055 = vmatprep.subr.bf16.mxu0 0
    %5056 = vmatpush1.bf16.msra.mxu0 0
    %5057 = vmatprep.subr.bf16.mxu0 0
    %5058 = vmatpush1.bf16.msra.mxu0 0
    %5059 = vmatprep.subr.bf16.mxu0 0
    %5060 = vmatpush1.bf16.msra.mxu0 0
    %5061 = vmatprep.subr.bf16.mxu0 0
    %5062 = vmatpush1.bf16.msra.mxu0 0
    %5063 = vmatprep.subr.bf16.mxu0 0
    %5064 = vmatpush1.bf16.msra.mxu0 0
    %5065 = vmatprep.subr.bf16.mxu0 0
    %5066 = vmatpush1.bf16.msra.mxu0 0
    %5067 = vmatprep.subr.bf16.mxu0 0
    %5068 = vmatpush1.bf16.msra.mxu0 %v5051
    %5069 = vmatprep.subr.bf16.mxu0 0
    %5070 = vmatpush2.bf16.msra.mxu0 0
    %5071 = vmatprep.subr.bf16.mxu0 0
    %5072 = vmatpush2.bf16.msra.mxu0 0
    %5073 = vmatprep.subr.bf16.mxu0 0
    %5074 = vmatpush2.bf16.msra.mxu0 0
    %5075 = vmatprep.subr.bf16.mxu0 0
    %5076 = vmatpush2.bf16.msra.mxu0 0
    %5077 = vmatprep.subr.bf16.mxu0 0
    %5078 = vmatpush2.bf16.msra.mxu0 0
    %5079 = vmatprep.subr.bf16.mxu0 0
    %5080 = vmatpush2.bf16.msra.mxu0 0
    %5081 = vmatprep.subr.bf16.mxu0 0
    %5082 = vmatpush2.bf16.msra.mxu0 0
    %5083 = vmatprep.subr.bf16.mxu0 0
    %5084 = vmatpush2.bf16.msra.mxu0 0
    %5085 = vmatprep.mubr.bf16.mxu0 0
    %5086 = vmatmul.mubr.bf16.gmra.mxu0 %v5045
    %v5087 = vpop.f32.mrf.mxu0
    %v5088 = vadd.f32 0.0, %v5087
    %v5089 = vpop.f32.mrf.mxu0
    %v5090 = vpop.f32.mrf.mxu0
    %v5091 = vadd.f32 0.0, %v5090
    %v5092 = vpop.f32.mrf.mxu0
    %5093 = vmatprep.mubr.bf16.mxu0 0
    %5094 = vmatmul.mubr.bf16.gmra.mxu0 %v5048
    %v5095 = vpop.f32.mrf.mxu0
    %v5096 = vadd.f32 0.0, %v5095
    %v5097 = vpop.f32.mrf.mxu0
    %v5098 = vpop.f32.mrf.mxu0
    %v5099 = vadd.f32 0.0, %v5098
    %v5100 = vpop.f32.mrf.mxu0
    %5101 = vdwg.mxu0
    %v5106 = vunpack.c.l.b16 %v4869
    %v5107 = vunpack.c.l.b16 %v4870
    %v5108 = vunpack.c.l.b16 %v4871
    %v5109 = vunpack.c.l.b16 %v4872
    %v5110 = vpack.c.b16 %v5107, %v5106
    %v5111 = vpack.c.b16 %v5109, %v5108
    %v5113 = vsel %vm574, %v5110, 0
    %v5116 = vsel %vm574, %v5111, 0
    %v5119 = vsel %vm578, %v4873, 0
    %5121 = vmatprep.subr.bf16.mxu0 0
    %5122 = vmatpush1.bf16.msra.mxu0 0
    %5123 = vmatprep.subr.bf16.mxu0 0
    %5124 = vmatpush1.bf16.msra.mxu0 0
    %5125 = vmatprep.subr.bf16.mxu0 0
    %5126 = vmatpush1.bf16.msra.mxu0 0
    %5127 = vmatprep.subr.bf16.mxu0 0
    %5128 = vmatpush1.bf16.msra.mxu0 0
    %5129 = vmatprep.subr.bf16.mxu0 0
    %5130 = vmatpush1.bf16.msra.mxu0 0
    %5131 = vmatprep.subr.bf16.mxu0 0
    %5132 = vmatpush1.bf16.msra.mxu0 0
    %5133 = vmatprep.subr.bf16.mxu0 0
    %5134 = vmatpush1.bf16.msra.mxu0 0
    %5135 = vmatprep.subr.bf16.mxu0 0
    %5136 = vmatpush1.bf16.msra.mxu0 %v5119
    %5137 = vmatprep.subr.bf16.mxu0 0
    %5138 = vmatpush2.bf16.msra.mxu0 0
    %5139 = vmatprep.subr.bf16.mxu0 0
    %5140 = vmatpush2.bf16.msra.mxu0 0
    %5141 = vmatprep.subr.bf16.mxu0 0
    %5142 = vmatpush2.bf16.msra.mxu0 0
    %5143 = vmatprep.subr.bf16.mxu0 0
    %5144 = vmatpush2.bf16.msra.mxu0 0
    %5145 = vmatprep.subr.bf16.mxu0 0
    %5146 = vmatpush2.bf16.msra.mxu0 0
    %5147 = vmatprep.subr.bf16.mxu0 0
    %5148 = vmatpush2.bf16.msra.mxu0 0
    %5149 = vmatprep.subr.bf16.mxu0 0
    %5150 = vmatpush2.bf16.msra.mxu0 0
    %5151 = vmatprep.subr.bf16.mxu0 0
    %5152 = vmatpush2.bf16.msra.mxu0 0
    %5153 = vmatprep.mubr.bf16.mxu0 0
    %5154 = vmatmul.mubr.bf16.gmra.mxu0 %v5113
    %v5155 = vpop.f32.mrf.mxu0
    %v5156 = vadd.f32 %v5088, %v5155
    %v5157 = vpop.f32.mrf.mxu0
    %v5158 = vpop.f32.mrf.mxu0
    %v5159 = vadd.f32 %v5091, %v5158
    %v5160 = vpop.f32.mrf.mxu0
    %5161 = vmatprep.mubr.bf16.mxu0 0
    %5162 = vmatmul.mubr.bf16.gmra.mxu0 %v5116
    %v5163 = vpop.f32.mrf.mxu0
    %v5164 = vadd.f32 %v5096, %v5163
    %v5165 = vpop.f32.mrf.mxu0
    %v5166 = vpop.f32.mrf.mxu0
    %v5167 = vadd.f32 %v5099, %v5166
    %v5168 = vpop.f32.mrf.mxu0
    %5169 = vdwg.mxu0
    %s5170 = scalar_lea.vmem [#allocation12], 224
    %v5171 = vld [vmem:[%s5170] sm:$0xf]
    %v5172 = vld [vmem:[%s5170 + $0x4] sm:$0xf]
    %v5173 = vld [vmem:[%s5170 + $0x8] sm:$0xf]
    %v5174 = vld [vmem:[%s5170 + $0xc] sm:$0xf]
    %v5175 = vld [vmem:[%s5170 + $0x10] sm:$0xf]
    %v5176 = vld [vmem:[%s5170 + $0x14] sm:$0xf]
    %v5177 = vld [vmem:[%s5170 + $0x18] sm:$0xf]
    %v5178 = vld [vmem:[%s5170 + $0x1c] sm:$0xf]
    %v5179 = vld [vmem:[%s5170 + $0x20] sm:$0xf]
    %v5180 = vld [vmem:[%s5170 + $0x24] sm:$0xf]
    %v5181 = vld [vmem:[%s5170 + $0x28] sm:$0xf]
    %v5182 = vld [vmem:[%s5170 + $0x2c] sm:$0xf]
    %v5183 = vld [vmem:[%s5170 + $0x30] sm:$0xf]
    %v5184 = vld [vmem:[%s5170 + $0x34] sm:$0xf]
    %v5185 = vld [vmem:[%s5170 + $0x38] sm:$0xf]
    %v5186 = vld [vmem:[%s5170 + $0x3c] sm:$0xf]
    %v5187 = vld [vmem:[%s5170 + $0x40] sm:$0xf]
    %v5188 = vld [vmem:[%s5170 + $0x44] sm:$0xf]
    %v5189 = vld [vmem:[%s5170 + $0x48] sm:$0xf]
    %v5190 = vld [vmem:[%s5170 + $0x4c] sm:$0xf]
    %v5191 = vld [vmem:[%s5170 + $0x50] sm:$0xf]
    %v5192 = vld [vmem:[%s5170 + $0x54] sm:$0xf]
    %v5193 = vld [vmem:[%s5170 + $0x58] sm:$0xf]
    %v5194 = vld [vmem:[%s5170 + $0x5c] sm:$0xf]
    %v5195 = vld [vmem:[%s5170 + $0x60] sm:$0xf]
    %v5196 = vld [vmem:[%s5170 + $0x64] sm:$0xf]
    %v5197 = vld [vmem:[%s5170 + $0x68] sm:$0xf]
    %v5198 = vld [vmem:[%s5170 + $0x6c] sm:$0xf]
    %v5227 = vunpack.c.l.b16 %v5171
    %v5228 = vunpack.c.l.b16 %v5172
    %v5229 = vunpack.c.l.b16 %v5173
    %v5230 = vunpack.c.l.b16 %v5174
    %v5231 = vunpack.c.l.b16 %v5175
    %v5232 = vunpack.c.l.b16 %v5176
    %v5233 = vunpack.c.l.b16 %v5177
    %v5234 = vunpack.c.l.b16 %v5178
    %v5235 = vunpack.c.l.b16 %v5179
    %v5236 = vunpack.c.l.b16 %v5180
    %v5237 = vunpack.c.l.b16 %v5181
    %v5238 = vunpack.c.l.b16 %v5182
    %v5239 = vunpack.c.l.b16 %v5183
    %v5240 = vunpack.c.l.b16 %v5184
    %v5241 = vunpack.c.l.b16 %v5185
    %v5242 = vunpack.c.l.b16 %v5186
    %v5243 = vunpack.c.l.b16 %v5187
    %v5244 = vunpack.c.l.b16 %v5188
    %v5245 = vunpack.c.l.b16 %v5189
    %v5246 = vunpack.c.l.b16 %v5190
    %v5247 = vunpack.c.l.b16 %v5191
    %v5248 = vunpack.c.l.b16 %v5192
    %v5249 = vunpack.c.l.b16 %v5193
    %v5250 = vunpack.c.l.b16 %v5194
    %v5251 = vunpack.c.l.b16 %v5195
    %v5252 = vunpack.c.l.b16 %v5196
    %v5253 = vunpack.c.l.b16 %v5197
    %v5254 = vunpack.c.l.b16 %v5198
    %v5255 = vpack.c.b16 %v5228, %v5227
    %v5256 = vpack.c.b16 %v5230, %v5229
    %v5257 = vpack.c.b16 %v5232, %v5231
    %v5258 = vpack.c.b16 %v5234, %v5233
    %v5259 = vpack.c.b16 %v5236, %v5235
    %v5260 = vpack.c.b16 %v5238, %v5237
    %v5261 = vpack.c.b16 %v5240, %v5239
    %v5262 = vpack.c.b16 %v5242, %v5241
    %v5263 = vpack.c.b16 %v5244, %v5243
    %v5264 = vpack.c.b16 %v5246, %v5245
    %v5265 = vpack.c.b16 %v5248, %v5247
    %v5266 = vpack.c.b16 %v5250, %v5249
    %v5267 = vpack.c.b16 %v5252, %v5251
    %v5268 = vpack.c.b16 %v5254, %v5253
    %5283 = vmatprep.subr.bf16.mxu0 0
    %5284 = vmatpush1.bf16.msra.mxu0 %v5262
    %5285 = vmatprep.subr.bf16.mxu0 0
    %5286 = vmatpush1.bf16.msra.mxu0 %v5261
    %5287 = vmatprep.subr.bf16.mxu0 0
    %5288 = vmatpush1.bf16.msra.mxu0 %v5260
    %5289 = vmatprep.subr.bf16.mxu0 0
    %5290 = vmatpush1.bf16.msra.mxu0 %v5259
    %5291 = vmatprep.subr.bf16.mxu0 0
    %5292 = vmatpush1.bf16.msra.mxu0 %v5258
    %5293 = vmatprep.subr.bf16.mxu0 0
    %5294 = vmatpush1.bf16.msra.mxu0 %v5257
    %5295 = vmatprep.subr.bf16.mxu0 0
    %5296 = vmatpush1.bf16.msra.mxu0 %v5256
    %5297 = vmatprep.subr.bf16.mxu0 0
    %5298 = vmatpush1.bf16.msra.mxu0 %v5255
    %5299 = vmatprep.subr.bf16.mxu0 0
    %5300 = vmatpush2.bf16.msra.mxu0 0
    %5301 = vmatprep.subr.bf16.mxu0 0
    %5302 = vmatpush2.bf16.msra.mxu0 0
    %5303 = vmatprep.subr.bf16.mxu0 0
    %5304 = vmatpush2.bf16.msra.mxu0 %v5268
    %5305 = vmatprep.subr.bf16.mxu0 0
    %5306 = vmatpush2.bf16.msra.mxu0 %v5267
    %5307 = vmatprep.subr.bf16.mxu0 0
    %5308 = vmatpush2.bf16.msra.mxu0 %v5266
    %5309 = vmatprep.subr.bf16.mxu0 0
    %5310 = vmatpush2.bf16.msra.mxu0 %v5265
    %5311 = vmatprep.subr.bf16.mxu0 0
    %5312 = vmatpush2.bf16.msra.mxu0 %v5264
    %5313 = vmatprep.subr.bf16.mxu0 0
    %5314 = vmatpush2.bf16.msra.mxu0 %v5263
    %5315 = vmatprep.mubr.bf16.mxu0 %v4826
    %5316 = vmatmul.mubr.bf16.gmra.mxu0 %v4711
    %v5317 = vpop.f32.mrf.mxu0
    %v5318 = vadd.f32 0.0, %v5317
    %v5319 = vpop.f32.mrf.mxu0
    %v5320 = vpop.f32.mrf.mxu0
    %v5321 = vadd.f32 0.0, %v5320
    %v5322 = vpop.f32.mrf.mxu0
    %5323 = vdwg.mxu0
    %s5324 = scalar_lea.vmem %s16, 32
    %v5325 = vld [vmem:[%s5324] sm:$0xf]
    %v5326 = vld [vmem:[%s5324 + $0x4] sm:$0xf]
    %v5327 = vld [vmem:[%s5324 + $0x8] sm:$0xf]
    %v5328 = vld [vmem:[%s5324 + $0xc] sm:$0x3]
    %v5329 = vpack.c.bf16 %v5321, %v5318
    %v5334 = vunpack.c.l.b16 %v5325
    %v5335 = vunpack.c.l.b16 %v5326
    %v5336 = vunpack.c.l.b16 %v5327
    %v5337 = vunpack.c.l.b16 %v5328
    %v5338 = vpack.c.b16 %v5335, %v5334
    %v5339 = vpack.c.b16 %v5337, %v5336
    %v5341 = vsel %vm574, %v5338, 0
    %v5344 = vsel %vm574, %v5339, 0
    %v5347 = vsel %vm578, %v5329, 0
    %5349 = vmatprep.subr.bf16.mxu0 0
    %5350 = vmatpush1.bf16.msra.mxu0 0
    %5351 = vmatprep.subr.bf16.mxu0 0
    %5352 = vmatpush1.bf16.msra.mxu0 0
    %5353 = vmatprep.subr.bf16.mxu0 0
    %5354 = vmatpush1.bf16.msra.mxu0 0
    %5355 = vmatprep.subr.bf16.mxu0 0
    %5356 = vmatpush1.bf16.msra.mxu0 0
    %5357 = vmatprep.subr.bf16.mxu0 0
    %5358 = vmatpush1.bf16.msra.mxu0 0
    %5359 = vmatprep.subr.bf16.mxu0 0
    %5360 = vmatpush1.bf16.msra.mxu0 0
    %5361 = vmatprep.subr.bf16.mxu0 0
    %5362 = vmatpush1.bf16.msra.mxu0 0
    %5363 = vmatprep.subr.bf16.mxu0 0
    %5364 = vmatpush1.bf16.msra.mxu0 %v5347
    %5365 = vmatprep.subr.bf16.mxu0 0
    %5366 = vmatpush2.bf16.msra.mxu0 0
    %5367 = vmatprep.subr.bf16.mxu0 0
    %5368 = vmatpush2.bf16.msra.mxu0 0
    %5369 = vmatprep.subr.bf16.mxu0 0
    %5370 = vmatpush2.bf16.msra.mxu0 0
    %5371 = vmatprep.subr.bf16.mxu0 0
    %5372 = vmatpush2.bf16.msra.mxu0 0
    %5373 = vmatprep.subr.bf16.mxu0 0
    %5374 = vmatpush2.bf16.msra.mxu0 0
    %5375 = vmatprep.subr.bf16.mxu0 0
    %5376 = vmatpush2.bf16.msra.mxu0 0
    %5377 = vmatprep.subr.bf16.mxu0 0
    %5378 = vmatpush2.bf16.msra.mxu0 0
    %5379 = vmatprep.subr.bf16.mxu0 0
    %5380 = vmatpush2.bf16.msra.mxu0 0
    %5381 = vmatprep.mubr.bf16.mxu0 0
    %5382 = vmatmul.mubr.bf16.gmra.mxu0 %v5341
    %v5383 = vpop.f32.mrf.mxu0
    %v5384 = vadd.f32 0.0, %v5383
    %v5385 = vpop.f32.mrf.mxu0
    %v5386 = vpop.f32.mrf.mxu0
    %v5387 = vadd.f32 0.0, %v5386
    %v5388 = vpop.f32.mrf.mxu0
    %5389 = vmatprep.mubr.bf16.mxu0 0
    %5390 = vmatmul.mubr.bf16.gmra.mxu0 %v5344
    %v5391 = vpop.f32.mrf.mxu0
    %v5392 = vadd.f32 0.0, %v5391
    %v5393 = vpop.f32.mrf.mxu0
    %v5394 = vpop.f32.mrf.mxu0
    %v5395 = vadd.f32 0.0, %v5394
    %v5396 = vpop.f32.mrf.mxu0
    %5397 = vdwg.mxu0
    %v5398 = vadd.f32 %v5156, %v5384
    %v5399 = vadd.f32 %v5159, %v5387
    %v5400 = vadd.f32 %v5164, %v5392
    %v5401 = vadd.f32 %v5167, %v5395
    %v5402 = vld [vmem:[%s18] sm:$0x1]
    %v5404 = vlaneseq
    %v5405 = vshrl.u32 %v5404, 7
    %v5406 = vsub.s32 0, %v5405
    %v5407 = vrot.slane %v5402, %v5406
    %v5409 = vadd.f32 %v5398, %v5407
    %v5410 = vadd.f32 %v5399, %v5407
    %v5411 = vadd.f32 %v5400, %v5407
    %v5412 = vadd.f32 %v5401, %v5407
    %v5413 = vsub.f32 0.0, %v5409
    %v5414 = vsub.f32 0.0, %v5410
    %v5415 = vsub.f32 0.0, %v5411
    %v5416 = vsub.f32 0.0, %v5412
    %v5417 = vmul.f32 %v5413, 1.442695
    %v5418 = vpow.pop %v5417
    %v5419 = vmul.f32 %v5414, 1.442695
    %v5420 = vpow.pop %v5419
    %v5421 = vmul.f32 %v5415, 1.442695
    %v5422 = vpow.pop %v5421
    %v5423 = vmul.f32 %v5416, 1.442695
    %v5424 = vpow.pop %v5423
    %v5425 = vadd.f32 %v5418, 1.0
    %v5426 = vadd.f32 %v5420, 1.0
    %v5427 = vadd.f32 %v5422, 1.0
    %v5428 = vadd.f32 %v5424, 1.0
    %v5429 = vrcp.pop %v5425
    %v5430 = vrcp.pop %v5426
    %v5431 = vrcp.pop %v5427
    %v5432 = vrcp.pop %v5428
    %5433 = vst.msk [vmem:[%s19] sm:$0xff] %vm167, %v5429
    %5434 = vst.msk [vmem:[%s19 + $0x8] sm:$0xff] %vm167, %v5430
    %5435 = vst.msk [vmem:[%s19 + $0x10] sm:$0xff] %vm167, %v5431
    %vm5436 = vcmask 224256
    %5437 = vst.msk [vmem:[%s19 + $0x18] sm:$0xf] %vm5436, %v5432
    %s5438 = scalar_lea.vmem %s0, 32
    %v5439 = vld [vmem:[%s5438] sm:$0xff]
    %v5440 = vld [vmem:[%s5438 + $0x8] sm:$0xff]
    %v5441 = vld [vmem:[%s5438 + $0x10] sm:$0xff]
    %v5442 = vld [vmem:[%s5438 + $0x18] sm:$0xf]
    %v5443 = vpack.c.bf16 %v5440, %v5439
    %v5444 = vpack.c.bf16 %v5442, %v5441
    %v5445 = vld [vmem:[%s1] sm:$0xf]
    %v5446 = vld [vmem:[%s1 + $0x4] sm:$0x7]
    %v5449 = vunpack.c.l.b16 %v5445
    %v5450 = vunpack.c.l.b16 %v5446
    %v5451 = vpack.c.b16 %v5450, %v5449
    %v5453 = vsel %vm167, %v5451, 0
    %v5456 = vsel %vm171, %v5444, 0
    %5458 = vmatprep.subr.bf16.mxu0 0
    %5459 = vmatpush1.bf16.msra.mxu0 0
    %5460 = vmatprep.subr.bf16.mxu0 0
    %5461 = vmatpush1.bf16.msra.mxu0 0
    %5462 = vmatprep.subr.bf16.mxu0 0
    %5463 = vmatpush1.bf16.msra.mxu0 0
    %5464 = vmatprep.subr.bf16.mxu0 0
    %5465 = vmatpush1.bf16.msra.mxu0 0
    %5466 = vmatprep.subr.bf16.mxu0 0
    %5467 = vmatpush1.bf16.msra.mxu0 0
    %5468 = vmatprep.subr.bf16.mxu0 0
    %5469 = vmatpush1.bf16.msra.mxu0 0
    %5470 = vmatprep.subr.bf16.mxu0 0
    %5471 = vmatpush1.bf16.msra.mxu0 %v5456
    %5472 = vmatprep.subr.bf16.mxu0 0
    %5473 = vmatpush1.bf16.msra.mxu0 %v5443
    %5474 = vmatprep.subr.bf16.mxu0 0
    %5475 = vmatpush2.bf16.msra.mxu0 0
    %5476 = vmatprep.subr.bf16.mxu0 0
    %5477 = vmatpush2.bf16.msra.mxu0 0
    %5478 = vmatprep.subr.bf16.mxu0 0
    %5479 = vmatpush2.bf16.msra.mxu0 0
    %5480 = vmatprep.subr.bf16.mxu0 0
    %5481 = vmatpush2.bf16.msra.mxu0 0
    %5482 = vmatprep.subr.bf16.mxu0 0
    %5483 = vmatpush2.bf16.msra.mxu0 0
    %5484 = vmatprep.subr.bf16.mxu0 0
    %5485 = vmatpush2.bf16.msra.mxu0 0
    %5486 = vmatprep.subr.bf16.mxu0 0
    %5487 = vmatpush2.bf16.msra.mxu0 0
    %5488 = vmatprep.subr.bf16.mxu0 0
    %5489 = vmatpush2.bf16.msra.mxu0 0
    %5490 = vmatprep.mubr.bf16.mxu0 0
    %5491 = vmatmul.mubr.bf16.gmra.mxu0 %v5453
    %v5492 = vpop.f32.mrf.mxu0
    %v5493 = vadd.f32 0.0, %v5492
    %v5494 = vpop.f32.mrf.mxu0
    %v5495 = vpop.f32.mrf.mxu0
    %v5496 = vadd.f32 0.0, %v5495
    %v5497 = vpop.f32.mrf.mxu0
    %5498 = vdwg.mxu0
    %v5499 = vpack.c.bf16 %v5496, %v5493
    %v5500 = vld [vmem:[%s2] sm:$0xff]
    %v5501 = vld [vmem:[%s2 + $0x8] sm:$0xff]
    %v5502 = vld [vmem:[%s2 + $0x10] sm:$0xff]
    %v5503 = vld [vmem:[%s2 + $0x18] sm:$0x33]
    %v5504 = vld [vmem:[%s221] sm:$0xf]
    %v5505 = vld [vmem:[%s221 + $0x4] sm:$0x7]
    %v5508 = vunpack.c.l.b16 %v5504
    %v5509 = vunpack.c.l.b16 %v5505
    %v5510 = vpack.c.b16 %v5509, %v5508
    %v5512 = vsel %vm167, %v5510, 0
    %5514 = vmatprep.subr.bf16.mxu0 0
    %5515 = vmatpush1.bf16.msra.mxu0 0
    %5516 = vmatprep.subr.bf16.mxu0 0
    %5517 = vmatpush1.bf16.msra.mxu0 0
    %5518 = vmatprep.subr.bf16.mxu0 0
    %5519 = vmatpush1.bf16.msra.mxu0 0
    %5520 = vmatprep.subr.bf16.mxu0 0
    %5521 = vmatpush1.bf16.msra.mxu0 0
    %5522 = vmatprep.subr.bf16.mxu0 0
    %5523 = vmatpush1.bf16.msra.mxu0 0
    %5524 = vmatprep.subr.bf16.mxu0 0
    %5525 = vmatpush1.bf16.msra.mxu0 0
    %5526 = vmatprep.subr.bf16.mxu0 0
    %5527 = vmatpush1.bf16.msra.mxu0 %v5456
    %5528 = vmatprep.subr.bf16.mxu0 0
    %5529 = vmatpush1.bf16.msra.mxu0 %v5443
    %5530 = vmatprep.subr.bf16.mxu0 0
    %5531 = vmatpush2.bf16.msra.mxu0 0
    %5532 = vmatprep.subr.bf16.mxu0 0
    %5533 = vmatpush2.bf16.msra.mxu0 0
    %5534 = vmatprep.subr.bf16.mxu0 0
    %5535 = vmatpush2.bf16.msra.mxu0 0
    %5536 = vmatprep.subr.bf16.mxu0 0
    %5537 = vmatpush2.bf16.msra.mxu0 0
    %5538 = vmatprep.subr.bf16.mxu0 0
    %5539 = vmatpush2.bf16.msra.mxu0 0
    %5540 = vmatprep.subr.bf16.mxu0 0
    %5541 = vmatpush2.bf16.msra.mxu0 0
    %5542 = vmatprep.subr.bf16.mxu0 0
    %5543 = vmatpush2.bf16.msra.mxu0 0
    %5544 = vmatprep.subr.bf16.mxu0 0
    %5545 = vmatpush2.bf16.msra.mxu0 0
    %5546 = vmatprep.mubr.bf16.mxu0 0
    %5547 = vmatmul.mubr.bf16.gmra.mxu0 %v5512
    %v5548 = vpop.f32.mrf.mxu0
    %v5549 = vadd.f32 0.0, %v5548
    %v5550 = vpop.f32.mrf.mxu0
    %v5551 = vpop.f32.mrf.mxu0
    %v5552 = vadd.f32 0.0, %v5551
    %v5553 = vpop.f32.mrf.mxu0
    %5554 = vdwg.mxu0
    %v5555 = vpack.c.bf16 %v5552, %v5549
    %v5556 = vld [vmem:[%s274] sm:$0xff]
    %v5557 = vld [vmem:[%s274 + $0x8] sm:$0xff]
    %v5558 = vld [vmem:[%s274 + $0x10] sm:$0xff]
    %v5559 = vld [vmem:[%s274 + $0x18] sm:$0x33]
    %v5564 = vunpack.c.l.b16 %v5556
    %v5565 = vunpack.c.h.b16 %v5556
    %v5566 = vunpack.c.l.b16 %v5557
    %v5567 = vunpack.c.h.b16 %v5557
    %v5568 = vunpack.c.l.b16 %v5558
    %v5569 = vunpack.c.h.b16 %v5558
    %v5570 = vunpack.c.l.b16 %v5559
    %v5571 = vunpack.c.h.b16 %v5559
    %v5572 = vpack.c.b16 %v5566, %v5564
    %v5573 = vpack.c.b16 %v5567, %v5565
    %v5574 = vpack.c.b16 %v5570, %v5568
    %v5575 = vpack.c.b16 %v5571, %v5569
    %v5579 = vsel %vm167, %v5555, 0
    %v5582 = vsel %vm171, %v5574, 0
    %v5585 = vsel %vm171, %v5575, 0
    %5587 = vmatprep.subr.bf16.mxu0 0
    %5588 = vmatpush1.bf16.msra.mxu0 0
    %5589 = vmatprep.subr.bf16.mxu0 0
    %5590 = vmatpush1.bf16.msra.mxu0 0
    %5591 = vmatprep.subr.bf16.mxu0 0
    %5592 = vmatpush1.bf16.msra.mxu0 0
    %5593 = vmatprep.subr.bf16.mxu0 0
    %5594 = vmatpush1.bf16.msra.mxu0 0
    %5595 = vmatprep.subr.bf16.mxu0 0
    %5596 = vmatpush1.bf16.msra.mxu0 0
    %5597 = vmatprep.subr.bf16.mxu0 0
    %5598 = vmatpush1.bf16.msra.mxu0 0
    %5599 = vmatprep.subr.bf16.mxu0 %v5585
    %5600 = vmatpush1.bf16.msra.mxu0 %v5582
    %5601 = vmatprep.subr.bf16.mxu0 %v5573
    %5602 = vmatpush1.bf16.msra.mxu0 %v5572
    %5603 = vmatprep.subr.bf16.mxu0 0
    %5604 = vmatpush2.bf16.msra.mxu0 0
    %5605 = vmatprep.subr.bf16.mxu0 0
    %5606 = vmatpush2.bf16.msra.mxu0 0
    %5607 = vmatprep.subr.bf16.mxu0 0
    %5608 = vmatpush2.bf16.msra.mxu0 0
    %5609 = vmatprep.subr.bf16.mxu0 0
    %5610 = vmatpush2.bf16.msra.mxu0 0
    %5611 = vmatprep.subr.bf16.mxu0 0
    %5612 = vmatpush2.bf16.msra.mxu0 0
    %5613 = vmatprep.subr.bf16.mxu0 0
    %5614 = vmatpush2.bf16.msra.mxu0 0
    %5615 = vmatprep.subr.bf16.mxu0 0
    %5616 = vmatpush2.bf16.msra.mxu0 0
    %5617 = vmatprep.subr.bf16.mxu0 0
    %5618 = vmatpush2.bf16.msra.mxu0 0
    %5619 = vmatprep.mubr.bf16.mxu0 0
    %5620 = vmatmul.mubr.bf16.gmra.mxu0 %v5579
    %v5621 = vpop.f32.mrf.mxu0
    %v5622 = vadd.f32 0.0, %v5621
    %v5623 = vpop.f32.mrf.mxu0
    %v5624 = vadd.f32 0.0, %v5623
    %v5625 = vpop.f32.mrf.mxu0
    %v5626 = vadd.f32 0.0, %v5625
    %v5627 = vpop.f32.mrf.mxu0
    %v5628 = vadd.f32 0.0, %v5627
    %5629 = vdwg.mxu0
    %v5634 = vunpack.c.l.b16 %v5500
    %v5635 = vunpack.c.h.b16 %v5500
    %v5636 = vunpack.c.l.b16 %v5501
    %v5637 = vunpack.c.h.b16 %v5501
    %v5638 = vunpack.c.l.b16 %v5502
    %v5639 = vunpack.c.h.b16 %v5502
    %v5640 = vunpack.c.l.b16 %v5503
    %v5641 = vunpack.c.h.b16 %v5503
    %v5642 = vpack.c.b16 %v5636, %v5634
    %v5643 = vpack.c.b16 %v5637, %v5635
    %v5644 = vpack.c.b16 %v5640, %v5638
    %v5645 = vpack.c.b16 %v5641, %v5639
    %v5649 = vsel %vm167, %v5499, 0
    %v5652 = vsel %vm171, %v5644, 0
    %v5655 = vsel %vm171, %v5645, 0
    %5657 = vmatprep.subr.bf16.mxu0 0
    %5658 = vmatpush1.bf16.msra.mxu0 0
    %5659 = vmatprep.subr.bf16.mxu0 0
    %5660 = vmatpush1.bf16.msra.mxu0 0
    %5661 = vmatprep.subr.bf16.mxu0 0
    %5662 = vmatpush1.bf16.msra.mxu0 0
    %5663 = vmatprep.subr.bf16.mxu0 0
    %5664 = vmatpush1.bf16.msra.mxu0 0
    %5665 = vmatprep.subr.bf16.mxu0 0
    %5666 = vmatpush1.bf16.msra.mxu0 0
    %5667 = vmatprep.subr.bf16.mxu0 0
    %5668 = vmatpush1.bf16.msra.mxu0 0
    %5669 = vmatprep.subr.bf16.mxu0 %v5655
    %5670 = vmatpush1.bf16.msra.mxu0 %v5652
    %5671 = vmatprep.subr.bf16.mxu0 %v5643
    %5672 = vmatpush1.bf16.msra.mxu0 %v5642
    %5673 = vmatprep.subr.bf16.mxu0 0
    %5674 = vmatpush2.bf16.msra.mxu0 0
    %5675 = vmatprep.subr.bf16.mxu0 0
    %5676 = vmatpush2.bf16.msra.mxu0 0
    %5677 = vmatprep.subr.bf16.mxu0 0
    %5678 = vmatpush2.bf16.msra.mxu0 0
    %5679 = vmatprep.subr.bf16.mxu0 0
    %5680 = vmatpush2.bf16.msra.mxu0 0
    %5681 = vmatprep.subr.bf16.mxu0 0
    %5682 = vmatpush2.bf16.msra.mxu0 0
    %5683 = vmatprep.subr.bf16.mxu0 0
    %5684 = vmatpush2.bf16.msra.mxu0 0
    %5685 = vmatprep.subr.bf16.mxu0 0
    %5686 = vmatpush2.bf16.msra.mxu0 0
    %5687 = vmatprep.subr.bf16.mxu0 0
    %5688 = vmatpush2.bf16.msra.mxu0 0
    %5689 = vmatprep.mubr.bf16.mxu0 0
    %5690 = vmatmul.mubr.bf16.gmra.mxu0 %v5649
    %v5691 = vpop.f32.mrf.mxu0
    %v5692 = vadd.f32 %v5622, %v5691
    %v5693 = vpop.f32.mrf.mxu0
    %v5694 = vadd.f32 %v5624, %v5693
    %v5695 = vpop.f32.mrf.mxu0
    %v5696 = vadd.f32 %v5626, %v5695
    %v5697 = vpop.f32.mrf.mxu0
    %v5698 = vadd.f32 %v5628, %v5697
    %5699 = vdwg.mxu0
    %v5700 = vld [vmem:[%s419] sm:$0xf]
    %v5701 = vld [vmem:[%s419 + $0x4] sm:$0x7]
    %v5704 = vunpack.c.l.b16 %v5700
    %v5705 = vunpack.c.l.b16 %v5701
    %v5706 = vpack.c.b16 %v5705, %v5704
    %v5708 = vsel %vm167, %v5706, 0
    %5710 = vmatprep.subr.bf16.mxu0 0
    %5711 = vmatpush1.bf16.msra.mxu0 0
    %5712 = vmatprep.subr.bf16.mxu0 0
    %5713 = vmatpush1.bf16.msra.mxu0 0
    %5714 = vmatprep.subr.bf16.mxu0 0
    %5715 = vmatpush1.bf16.msra.mxu0 0
    %5716 = vmatprep.subr.bf16.mxu0 0
    %5717 = vmatpush1.bf16.msra.mxu0 0
    %5718 = vmatprep.subr.bf16.mxu0 0
    %5719 = vmatpush1.bf16.msra.mxu0 0
    %5720 = vmatprep.subr.bf16.mxu0 0
    %5721 = vmatpush1.bf16.msra.mxu0 0
    %5722 = vmatprep.subr.bf16.mxu0 0
    %5723 = vmatpush1.bf16.msra.mxu0 %v5456
    %5724 = vmatprep.subr.bf16.mxu0 0
    %5725 = vmatpush1.bf16.msra.mxu0 %v5443
    %5726 = vmatprep.subr.bf16.mxu0 0
    %5727 = vmatpush2.bf16.msra.mxu0 0
    %5728 = vmatprep.subr.bf16.mxu0 0
    %5729 = vmatpush2.bf16.msra.mxu0 0
    %5730 = vmatprep.subr.bf16.mxu0 0
    %5731 = vmatpush2.bf16.msra.mxu0 0
    %5732 = vmatprep.subr.bf16.mxu0 0
    %5733 = vmatpush2.bf16.msra.mxu0 0
    %5734 = vmatprep.subr.bf16.mxu0 0
    %5735 = vmatpush2.bf16.msra.mxu0 0
    %5736 = vmatprep.subr.bf16.mxu0 0
    %5737 = vmatpush2.bf16.msra.mxu0 0
    %5738 = vmatprep.subr.bf16.mxu0 0
    %5739 = vmatpush2.bf16.msra.mxu0 0
    %5740 = vmatprep.subr.bf16.mxu0 0
    %5741 = vmatpush2.bf16.msra.mxu0 0
    %5742 = vmatprep.mubr.bf16.mxu0 0
    %5743 = vmatmul.mubr.bf16.gmra.mxu0 %v5708
    %v5744 = vpop.f32.mrf.mxu0
    %v5745 = vadd.f32 0.0, %v5744
    %v5746 = vpop.f32.mrf.mxu0
    %v5747 = vpop.f32.mrf.mxu0
    %v5748 = vadd.f32 0.0, %v5747
    %v5749 = vpop.f32.mrf.mxu0
    %5750 = vdwg.mxu0
    %v5751 = vpack.c.bf16 %v5748, %v5745
    %v5752 = vld [vmem:[%s472] sm:$0xff]
    %v5753 = vld [vmem:[%s472 + $0x8] sm:$0xff]
    %v5754 = vld [vmem:[%s472 + $0x10] sm:$0xff]
    %v5755 = vld [vmem:[%s472 + $0x18] sm:$0x33]
    %v5760 = vunpack.c.l.b16 %v5752
    %v5761 = vunpack.c.h.b16 %v5752
    %v5762 = vunpack.c.l.b16 %v5753
    %v5763 = vunpack.c.h.b16 %v5753
    %v5764 = vunpack.c.l.b16 %v5754
    %v5765 = vunpack.c.h.b16 %v5754
    %v5766 = vunpack.c.l.b16 %v5755
    %v5767 = vunpack.c.h.b16 %v5755
    %v5768 = vpack.c.b16 %v5762, %v5760
    %v5769 = vpack.c.b16 %v5763, %v5761
    %v5770 = vpack.c.b16 %v5766, %v5764
    %v5771 = vpack.c.b16 %v5767, %v5765
    %v5775 = vsel %vm167, %v5751, 0
    %v5778 = vsel %vm171, %v5770, 0
    %v5781 = vsel %vm171, %v5771, 0
    %5783 = vmatprep.subr.bf16.mxu0 0
    %5784 = vmatpush1.bf16.msra.mxu0 0
    %5785 = vmatprep.subr.bf16.mxu0 0
    %5786 = vmatpush1.bf16.msra.mxu0 0
    %5787 = vmatprep.subr.bf16.mxu0 0
    %5788 = vmatpush1.bf16.msra.mxu0 0
    %5789 = vmatprep.subr.bf16.mxu0 0
    %5790 = vmatpush1.bf16.msra.mxu0 0
    %5791 = vmatprep.subr.bf16.mxu0 0
    %5792 = vmatpush1.bf16.msra.mxu0 0
    %5793 = vmatprep.subr.bf16.mxu0 0
    %5794 = vmatpush1.bf16.msra.mxu0 0
    %5795 = vmatprep.subr.bf16.mxu0 %v5781
    %5796 = vmatpush1.bf16.msra.mxu0 %v5778
    %5797 = vmatprep.subr.bf16.mxu0 %v5769
    %5798 = vmatpush1.bf16.msra.mxu0 %v5768
    %5799 = vmatprep.subr.bf16.mxu0 0
    %5800 = vmatpush2.bf16.msra.mxu0 0
    %5801 = vmatprep.subr.bf16.mxu0 0
    %5802 = vmatpush2.bf16.msra.mxu0 0
    %5803 = vmatprep.subr.bf16.mxu0 0
    %5804 = vmatpush2.bf16.msra.mxu0 0
    %5805 = vmatprep.subr.bf16.mxu0 0
    %5806 = vmatpush2.bf16.msra.mxu0 0
    %5807 = vmatprep.subr.bf16.mxu0 0
    %5808 = vmatpush2.bf16.msra.mxu0 0
    %5809 = vmatprep.subr.bf16.mxu0 0
    %5810 = vmatpush2.bf16.msra.mxu0 0
    %5811 = vmatprep.subr.bf16.mxu0 0
    %5812 = vmatpush2.bf16.msra.mxu0 0
    %5813 = vmatprep.subr.bf16.mxu0 0
    %5814 = vmatpush2.bf16.msra.mxu0 0
    %5815 = vmatprep.mubr.bf16.mxu0 0
    %5816 = vmatmul.mubr.bf16.gmra.mxu0 %v5775
    %v5817 = vpop.f32.mrf.mxu0
    %v5818 = vadd.f32 0.0, %v5817
    %v5819 = vpop.f32.mrf.mxu0
    %v5820 = vadd.f32 0.0, %v5819
    %v5821 = vpop.f32.mrf.mxu0
    %v5822 = vadd.f32 0.0, %v5821
    %v5823 = vpop.f32.mrf.mxu0
    %v5824 = vadd.f32 0.0, %v5823
    %5825 = vdwg.mxu0
    %v5826 = vadd.f32 %v5692, %v5818
    %v5827 = vadd.f32 %v5694, %v5820
    %v5828 = vadd.f32 %v5696, %v5822
    %v5829 = vadd.f32 %v5698, %v5824
    %v5830 = vld [vmem:[#allocation2] sm:$0x3]
    %v5832 = vlaneseq
    %v5833 = vshrl.u32 %v5832, 7
    %v5834 = vsub.s32 0, %v5833
    %v5835 = vrot.slane %v5830, %v5834
    %v5836 = vlaneseq
    %v5837 = vshrl.u32 %v5836, 7
    %v5838 = vsub.s32 1, %v5837
    %v5839 = vrot.slane %v5830, %v5838
    %v5842 = vadd.f32 %v5826, %v5835
    %v5843 = vadd.f32 %v5827, %v5839
    %v5844 = vadd.f32 %v5828, %v5835
    %v5845 = vadd.f32 %v5829, %v5839
    %v5846 = vmax.f32 %v5842, 0.0
    %v5847 = vmax.f32 %v5843, 0.0
    %v5848 = vmax.f32 %v5844, 0.0
    %v5849 = vmax.f32 %v5845, 0.0
    %v5850 = vpack.c.bf16 %v5848, %v5846
    %v5851 = vpack.c.bf16 %v5849, %v5847
    %v5852 = vld [vmem:[%s4] sm:$0xf]
    %v5854 = vsel %vm574, %v5852, 0
    %v5857 = vsel %vm578, %v5850, 0
    %v5860 = vsel %vm578, %v5851, 0
    %5862 = vmatprep.subr.bf16.mxu0 0
    %5863 = vmatpush1.bf16.msra.mxu0 0
    %5864 = vmatprep.subr.bf16.mxu0 0
    %5865 = vmatpush1.bf16.msra.mxu0 0
    %5866 = vmatprep.subr.bf16.mxu0 0
    %5867 = vmatpush1.bf16.msra.mxu0 0
    %5868 = vmatprep.subr.bf16.mxu0 0
    %5869 = vmatpush1.bf16.msra.mxu0 0
    %5870 = vmatprep.subr.bf16.mxu0 0
    %5871 = vmatpush1.bf16.msra.mxu0 0
    %5872 = vmatprep.subr.bf16.mxu0 0
    %5873 = vmatpush1.bf16.msra.mxu0 0
    %5874 = vmatprep.subr.bf16.mxu0 0
    %5875 = vmatpush1.bf16.msra.mxu0 0
    %5876 = vmatprep.subr.bf16.mxu0 %v5860
    %5877 = vmatpush1.bf16.msra.mxu0 %v5857
    %5878 = vmatprep.subr.bf16.mxu0 0
    %5879 = vmatpush2.bf16.msra.mxu0 0
    %5880 = vmatprep.subr.bf16.mxu0 0
    %5881 = vmatpush2.bf16.msra.mxu0 0
    %5882 = vmatprep.subr.bf16.mxu0 0
    %5883 = vmatpush2.bf16.msra.mxu0 0
    %5884 = vmatprep.subr.bf16.mxu0 0
    %5885 = vmatpush2.bf16.msra.mxu0 0
    %5886 = vmatprep.subr.bf16.mxu0 0
    %5887 = vmatpush2.bf16.msra.mxu0 0
    %5888 = vmatprep.subr.bf16.mxu0 0
    %5889 = vmatpush2.bf16.msra.mxu0 0
    %5890 = vmatprep.subr.bf16.mxu0 0
    %5891 = vmatpush2.bf16.msra.mxu0 0
    %5892 = vmatprep.subr.bf16.mxu0 0
    %5893 = vmatpush2.bf16.msra.mxu0 0
    %5894 = vmatprep.mubr.bf16.mxu0 0
    %5895 = vmatmul.mubr.bf16.gmra.mxu0 %v5854
    %v5896 = vpop.f32.mrf.mxu0
    %v5897 = vadd.f32 0.0, %v5896
    %v5898 = vpop.f32.mrf.mxu0
    %v5899 = vadd.f32 0.0, %v5898
    %v5900 = vpop.f32.mrf.mxu0
    %v5901 = vpop.f32.mrf.mxu0
    %5902 = vdwg.mxu0
    %v5903 = vpack.c.bf16 %v5897, %v5897
    %v5904 = vpack.c.bf16 %v5899, %v5899
    %v5905 = vld [vmem:[#allocation4] sm:$0xff]
    %v5906 = vld [vmem:[#allocation4 + $0x8] sm:$0xff]
    %v5907 = vld [vmem:[#allocation4 + $0x10] sm:$0xff]
    %v5908 = vld [vmem:[#allocation4 + $0x18] sm:$0xff]
    %v5909 = vld [vmem:[#allocation4 + $0x20] sm:$0xff]
    %v5910 = vld [vmem:[#allocation4 + $0x28] sm:$0xff]
    %v5911 = vld [vmem:[#allocation4 + $0x30] sm:$0xff]
    %v5912 = vld [vmem:[#allocation4 + $0x38] sm:$0xff]
    %v5913 = vld [vmem:[#allocation4 + $0x40] sm:$0xff]
    %v5914 = vld [vmem:[#allocation4 + $0x48] sm:$0xff]
    %v5915 = vld [vmem:[#allocation4 + $0x50] sm:$0xff]
    %v5916 = vld [vmem:[#allocation4 + $0x58] sm:$0xff]
    %v5917 = vld [vmem:[#allocation4 + $0x60] sm:$0xff]
    %v5918 = vld [vmem:[#allocation4 + $0x68] sm:$0xff]
    %v5919 = vld [vmem:[#allocation4 + $0x70] sm:$0xff]
    %v5920 = vld [vmem:[#allocation4 + $0x78] sm:$0xff]
    %v5921 = vld [vmem:[#allocation4 + $0x80] sm:$0xff]
    %v5922 = vld [vmem:[#allocation4 + $0x88] sm:$0xff]
    %v5923 = vld [vmem:[#allocation4 + $0x90] sm:$0xff]
    %v5924 = vld [vmem:[#allocation4 + $0x98] sm:$0xff]
    %v5925 = vld [vmem:[#allocation4 + $0xa0] sm:$0xff]
    %v5926 = vld [vmem:[#allocation4 + $0xa8] sm:$0xff]
    %v5927 = vld [vmem:[#allocation4 + $0xb0] sm:$0xff]
    %v5928 = vld [vmem:[#allocation4 + $0xb8] sm:$0xff]
    %v5929 = vld [vmem:[#allocation4 + $0xc0] sm:$0xff]
    %v5930 = vld [vmem:[#allocation4 + $0xc8] sm:$0xff]
    %v5931 = vld [vmem:[#allocation4 + $0xd0] sm:$0xff]
    %v5932 = vld [vmem:[#allocation4 + $0xd8] sm:$0xff]
    %v5933 = vld [vmem:[%s656] sm:$0xf]
    %v5935 = vsel %vm574, %v5933, 0
    %5937 = vmatprep.subr.bf16.mxu0 0
    %5938 = vmatpush1.bf16.msra.mxu0 0
    %5939 = vmatprep.subr.bf16.mxu0 0
    %5940 = vmatpush1.bf16.msra.mxu0 0
    %5941 = vmatprep.subr.bf16.mxu0 0
    %5942 = vmatpush1.bf16.msra.mxu0 0
    %5943 = vmatprep.subr.bf16.mxu0 0
    %5944 = vmatpush1.bf16.msra.mxu0 0
    %5945 = vmatprep.subr.bf16.mxu0 0
    %5946 = vmatpush1.bf16.msra.mxu0 0
    %5947 = vmatprep.subr.bf16.mxu0 0
    %5948 = vmatpush1.bf16.msra.mxu0 0
    %5949 = vmatprep.subr.bf16.mxu0 0
    %5950 = vmatpush1.bf16.msra.mxu0 0
    %5951 = vmatprep.subr.bf16.mxu0 %v5860
    %5952 = vmatpush1.bf16.msra.mxu0 %v5857
    %5953 = vmatprep.subr.bf16.mxu0 0
    %5954 = vmatpush2.bf16.msra.mxu0 0
    %5955 = vmatprep.subr.bf16.mxu0 0
    %5956 = vmatpush2.bf16.msra.mxu0 0
    %5957 = vmatprep.subr.bf16.mxu0 0
    %5958 = vmatpush2.bf16.msra.mxu0 0
    %5959 = vmatprep.subr.bf16.mxu0 0
    %5960 = vmatpush2.bf16.msra.mxu0 0
    %5961 = vmatprep.subr.bf16.mxu0 0
    %5962 = vmatpush2.bf16.msra.mxu0 0
    %5963 = vmatprep.subr.bf16.mxu0 0
    %5964 = vmatpush2.bf16.msra.mxu0 0
    %5965 = vmatprep.subr.bf16.mxu0 0
    %5966 = vmatpush2.bf16.msra.mxu0 0
    %5967 = vmatprep.subr.bf16.mxu0 0
    %5968 = vmatpush2.bf16.msra.mxu0 0
    %5969 = vmatprep.mubr.bf16.mxu0 0
    %5970 = vmatmul.mubr.bf16.gmra.mxu0 %v5935
    %v5971 = vpop.f32.mrf.mxu0
    %v5972 = vadd.f32 0.0, %v5971
    %v5973 = vpop.f32.mrf.mxu0
    %v5974 = vadd.f32 0.0, %v5973
    %v5975 = vpop.f32.mrf.mxu0
    %v5976 = vpop.f32.mrf.mxu0
    %5977 = vdwg.mxu0
    %v5978 = vpack.c.bf16 %v5972, %v5972
    %v5979 = vpack.c.bf16 %v5974, %v5974
    %v5980 = vld [vmem:[%s704] sm:$0xff]
    %v5981 = vld [vmem:[%s704 + $0x8] sm:$0xff]
    %v5982 = vld [vmem:[%s704 + $0x10] sm:$0xff]
    %v5983 = vld [vmem:[%s704 + $0x18] sm:$0xff]
    %v5984 = vld [vmem:[%s704 + $0x20] sm:$0xff]
    %v5985 = vld [vmem:[%s704 + $0x28] sm:$0xff]
    %v5986 = vld [vmem:[%s704 + $0x30] sm:$0xff]
    %v5987 = vld [vmem:[%s704 + $0x38] sm:$0xff]
    %v5988 = vld [vmem:[%s704 + $0x40] sm:$0xff]
    %v5989 = vld [vmem:[%s704 + $0x48] sm:$0xff]
    %v5990 = vld [vmem:[%s704 + $0x50] sm:$0xff]
    %v5991 = vld [vmem:[%s704 + $0x58] sm:$0xff]
    %v5992 = vld [vmem:[%s704 + $0x60] sm:$0xff]
    %v5993 = vld [vmem:[%s704 + $0x68] sm:$0xff]
    %v5994 = vld [vmem:[%s704 + $0x70] sm:$0xff]
    %v5995 = vld [vmem:[%s704 + $0x78] sm:$0xff]
    %v5996 = vld [vmem:[%s704 + $0x80] sm:$0xff]
    %v5997 = vld [vmem:[%s704 + $0x88] sm:$0xff]
    %v5998 = vld [vmem:[%s704 + $0x90] sm:$0xff]
    %v5999 = vld [vmem:[%s704 + $0x98] sm:$0xff]
    %v6000 = vld [vmem:[%s704 + $0xa0] sm:$0xff]
    %v6001 = vld [vmem:[%s704 + $0xa8] sm:$0xff]
    %v6002 = vld [vmem:[%s704 + $0xb0] sm:$0xff]
    %v6003 = vld [vmem:[%s704 + $0xb8] sm:$0xff]
    %v6004 = vld [vmem:[%s704 + $0xc0] sm:$0xff]
    %v6005 = vld [vmem:[%s704 + $0xc8] sm:$0xff]
    %v6006 = vld [vmem:[%s704 + $0xd0] sm:$0xff]
    %v6007 = vld [vmem:[%s704 + $0xd8] sm:$0xff]
    %v6036 = vunpack.c.l.b16 %v5980
    %v6037 = vunpack.c.h.b16 %v5980
    %v6038 = vunpack.c.l.b16 %v5981
    %v6039 = vunpack.c.h.b16 %v5981
    %v6040 = vunpack.c.l.b16 %v5982
    %v6041 = vunpack.c.h.b16 %v5982
    %v6042 = vunpack.c.l.b16 %v5983
    %v6043 = vunpack.c.h.b16 %v5983
    %v6044 = vunpack.c.l.b16 %v5984
    %v6045 = vunpack.c.h.b16 %v5984
    %v6046 = vunpack.c.l.b16 %v5985
    %v6047 = vunpack.c.h.b16 %v5985
    %v6048 = vunpack.c.l.b16 %v5986
    %v6049 = vunpack.c.h.b16 %v5986
    %v6050 = vunpack.c.l.b16 %v5987
    %v6051 = vunpack.c.h.b16 %v5987
    %v6052 = vunpack.c.l.b16 %v5988
    %v6053 = vunpack.c.h.b16 %v5988
    %v6054 = vunpack.c.l.b16 %v5989
    %v6055 = vunpack.c.h.b16 %v5989
    %v6056 = vunpack.c.l.b16 %v5990
    %v6057 = vunpack.c.h.b16 %v5990
    %v6058 = vunpack.c.l.b16 %v5991
    %v6059 = vunpack.c.h.b16 %v5991
    %v6060 = vunpack.c.l.b16 %v5992
    %v6061 = vunpack.c.h.b16 %v5992
    %v6062 = vunpack.c.l.b16 %v5993
    %v6063 = vunpack.c.h.b16 %v5993
    %v6064 = vunpack.c.l.b16 %v5994
    %v6065 = vunpack.c.h.b16 %v5994
    %v6066 = vunpack.c.l.b16 %v5995
    %v6067 = vunpack.c.h.b16 %v5995
    %v6068 = vunpack.c.l.b16 %v5996
    %v6069 = vunpack.c.h.b16 %v5996
    %v6070 = vunpack.c.l.b16 %v5997
    %v6071 = vunpack.c.h.b16 %v5997
    %v6072 = vunpack.c.l.b16 %v5998
    %v6073 = vunpack.c.h.b16 %v5998
    %v6074 = vunpack.c.l.b16 %v5999
    %v6075 = vunpack.c.h.b16 %v5999
    %v6076 = vunpack.c.l.b16 %v6000
    %v6077 = vunpack.c.h.b16 %v6000
    %v6078 = vunpack.c.l.b16 %v6001
    %v6079 = vunpack.c.h.b16 %v6001
    %v6080 = vunpack.c.l.b16 %v6002
    %v6081 = vunpack.c.h.b16 %v6002
    %v6082 = vunpack.c.l.b16 %v6003
    %v6083 = vunpack.c.h.b16 %v6003
    %v6084 = vunpack.c.l.b16 %v6004
    %v6085 = vunpack.c.h.b16 %v6004
    %v6086 = vunpack.c.l.b16 %v6005
    %v6087 = vunpack.c.h.b16 %v6005
    %v6088 = vunpack.c.l.b16 %v6006
    %v6089 = vunpack.c.h.b16 %v6006
    %v6090 = vunpack.c.l.b16 %v6007
    %v6091 = vunpack.c.h.b16 %v6007
    %v6092 = vpack.c.b16 %v6038, %v6036
    %v6093 = vpack.c.b16 %v6039, %v6037
    %v6094 = vpack.c.b16 %v6042, %v6040
    %v6095 = vpack.c.b16 %v6043, %v6041
    %v6096 = vpack.c.b16 %v6046, %v6044
    %v6097 = vpack.c.b16 %v6047, %v6045
    %v6098 = vpack.c.b16 %v6050, %v6048
    %v6099 = vpack.c.b16 %v6051, %v6049
    %v6100 = vpack.c.b16 %v6054, %v6052
    %v6101 = vpack.c.b16 %v6055, %v6053
    %v6102 = vpack.c.b16 %v6058, %v6056
    %v6103 = vpack.c.b16 %v6059, %v6057
    %v6104 = vpack.c.b16 %v6062, %v6060
    %v6105 = vpack.c.b16 %v6063, %v6061
    %v6106 = vpack.c.b16 %v6066, %v6064
    %v6107 = vpack.c.b16 %v6067, %v6065
    %v6108 = vpack.c.b16 %v6070, %v6068
    %v6109 = vpack.c.b16 %v6071, %v6069
    %v6110 = vpack.c.b16 %v6074, %v6072
    %v6111 = vpack.c.b16 %v6075, %v6073
    %v6112 = vpack.c.b16 %v6078, %v6076
    %v6113 = vpack.c.b16 %v6079, %v6077
    %v6114 = vpack.c.b16 %v6082, %v6080
    %v6115 = vpack.c.b16 %v6083, %v6081
    %v6116 = vpack.c.b16 %v6086, %v6084
    %v6117 = vpack.c.b16 %v6087, %v6085
    %v6118 = vpack.c.b16 %v6090, %v6088
    %v6119 = vpack.c.b16 %v6091, %v6089
    %v6149 = vsel %vm873, %v5979, 0
    %6151 = vmatprep.subr.bf16.mxu0 %v6107
    %6152 = vmatpush1.bf16.msra.mxu0 %v6106
    %6153 = vmatprep.subr.bf16.mxu0 %v6105
    %6154 = vmatpush1.bf16.msra.mxu0 %v6104
    %6155 = vmatprep.subr.bf16.mxu0 %v6103
    %6156 = vmatpush1.bf16.msra.mxu0 %v6102
    %6157 = vmatprep.subr.bf16.mxu0 %v6101
    %6158 = vmatpush1.bf16.msra.mxu0 %v6100
    %6159 = vmatprep.subr.bf16.mxu0 %v6099
    %6160 = vmatpush1.bf16.msra.mxu0 %v6098
    %6161 = vmatprep.subr.bf16.mxu0 %v6097
    %6162 = vmatpush1.bf16.msra.mxu0 %v6096
    %6163 = vmatprep.subr.bf16.mxu0 %v6095
    %6164 = vmatpush1.bf16.msra.mxu0 %v6094
    %6165 = vmatprep.subr.bf16.mxu0 %v6093
    %6166 = vmatpush1.bf16.msra.mxu0 %v6092
    %6167 = vmatprep.subr.bf16.mxu0 0
    %6168 = vmatpush2.bf16.msra.mxu0 0
    %6169 = vmatprep.subr.bf16.mxu0 0
    %6170 = vmatpush2.bf16.msra.mxu0 0
    %6171 = vmatprep.subr.bf16.mxu0 %v6119
    %6172 = vmatpush2.bf16.msra.mxu0 %v6118
    %6173 = vmatprep.subr.bf16.mxu0 %v6117
    %6174 = vmatpush2.bf16.msra.mxu0 %v6116
    %6175 = vmatprep.subr.bf16.mxu0 %v6115
    %6176 = vmatpush2.bf16.msra.mxu0 %v6114
    %6177 = vmatprep.subr.bf16.mxu0 %v6113
    %6178 = vmatpush2.bf16.msra.mxu0 %v6112
    %6179 = vmatprep.subr.bf16.mxu0 %v6111
    %6180 = vmatpush2.bf16.msra.mxu0 %v6110
    %6181 = vmatprep.subr.bf16.mxu0 %v6109
    %6182 = vmatpush2.bf16.msra.mxu0 %v6108
    %6183 = vmatprep.mubr.bf16.mxu0 %v6149
    %6184 = vmatmul.mubr.bf16.gmra.mxu0 %v5978
    %v6185 = vpop.f32.mrf.mxu0
    %v6186 = vadd.f32 0.0, %v6185
    %v6187 = vpop.f32.mrf.mxu0
    %v6188 = vadd.f32 0.0, %v6187
    %v6189 = vpop.f32.mrf.mxu0
    %v6190 = vpop.f32.mrf.mxu0
    %6191 = vdwg.mxu0
    %v6220 = vunpack.c.l.b16 %v5905
    %v6221 = vunpack.c.h.b16 %v5905
    %v6222 = vunpack.c.l.b16 %v5906
    %v6223 = vunpack.c.h.b16 %v5906
    %v6224 = vunpack.c.l.b16 %v5907
    %v6225 = vunpack.c.h.b16 %v5907
    %v6226 = vunpack.c.l.b16 %v5908
    %v6227 = vunpack.c.h.b16 %v5908
    %v6228 = vunpack.c.l.b16 %v5909
    %v6229 = vunpack.c.h.b16 %v5909
    %v6230 = vunpack.c.l.b16 %v5910
    %v6231 = vunpack.c.h.b16 %v5910
    %v6232 = vunpack.c.l.b16 %v5911
    %v6233 = vunpack.c.h.b16 %v5911
    %v6234 = vunpack.c.l.b16 %v5912
    %v6235 = vunpack.c.h.b16 %v5912
    %v6236 = vunpack.c.l.b16 %v5913
    %v6237 = vunpack.c.h.b16 %v5913
    %v6238 = vunpack.c.l.b16 %v5914
    %v6239 = vunpack.c.h.b16 %v5914
    %v6240 = vunpack.c.l.b16 %v5915
    %v6241 = vunpack.c.h.b16 %v5915
    %v6242 = vunpack.c.l.b16 %v5916
    %v6243 = vunpack.c.h.b16 %v5916
    %v6244 = vunpack.c.l.b16 %v5917
    %v6245 = vunpack.c.h.b16 %v5917
    %v6246 = vunpack.c.l.b16 %v5918
    %v6247 = vunpack.c.h.b16 %v5918
    %v6248 = vunpack.c.l.b16 %v5919
    %v6249 = vunpack.c.h.b16 %v5919
    %v6250 = vunpack.c.l.b16 %v5920
    %v6251 = vunpack.c.h.b16 %v5920
    %v6252 = vunpack.c.l.b16 %v5921
    %v6253 = vunpack.c.h.b16 %v5921
    %v6254 = vunpack.c.l.b16 %v5922
    %v6255 = vunpack.c.h.b16 %v5922
    %v6256 = vunpack.c.l.b16 %v5923
    %v6257 = vunpack.c.h.b16 %v5923
    %v6258 = vunpack.c.l.b16 %v5924
    %v6259 = vunpack.c.h.b16 %v5924
    %v6260 = vunpack.c.l.b16 %v5925
    %v6261 = vunpack.c.h.b16 %v5925
    %v6262 = vunpack.c.l.b16 %v5926
    %v6263 = vunpack.c.h.b16 %v5926
    %v6264 = vunpack.c.l.b16 %v5927
    %v6265 = vunpack.c.h.b16 %v5927
    %v6266 = vunpack.c.l.b16 %v5928
    %v6267 = vunpack.c.h.b16 %v5928
    %v6268 = vunpack.c.l.b16 %v5929
    %v6269 = vunpack.c.h.b16 %v5929
    %v6270 = vunpack.c.l.b16 %v5930
    %v6271 = vunpack.c.h.b16 %v5930
    %v6272 = vunpack.c.l.b16 %v5931
    %v6273 = vunpack.c.h.b16 %v5931
    %v6274 = vunpack.c.l.b16 %v5932
    %v6275 = vunpack.c.h.b16 %v5932
    %v6276 = vpack.c.b16 %v6222, %v6220
    %v6277 = vpack.c.b16 %v6223, %v6221
    %v6278 = vpack.c.b16 %v6226, %v6224
    %v6279 = vpack.c.b16 %v6227, %v6225
    %v6280 = vpack.c.b16 %v6230, %v6228
    %v6281 = vpack.c.b16 %v6231, %v6229
    %v6282 = vpack.c.b16 %v6234, %v6232
    %v6283 = vpack.c.b16 %v6235, %v6233
    %v6284 = vpack.c.b16 %v6238, %v6236
    %v6285 = vpack.c.b16 %v6239, %v6237
    %v6286 = vpack.c.b16 %v6242, %v6240
    %v6287 = vpack.c.b16 %v6243, %v6241
    %v6288 = vpack.c.b16 %v6246, %v6244
    %v6289 = vpack.c.b16 %v6247, %v6245
    %v6290 = vpack.c.b16 %v6250, %v6248
    %v6291 = vpack.c.b16 %v6251, %v6249
    %v6292 = vpack.c.b16 %v6254, %v6252
    %v6293 = vpack.c.b16 %v6255, %v6253
    %v6294 = vpack.c.b16 %v6258, %v6256
    %v6295 = vpack.c.b16 %v6259, %v6257
    %v6296 = vpack.c.b16 %v6262, %v6260
    %v6297 = vpack.c.b16 %v6263, %v6261
    %v6298 = vpack.c.b16 %v6266, %v6264
    %v6299 = vpack.c.b16 %v6267, %v6265
    %v6300 = vpack.c.b16 %v6270, %v6268
    %v6301 = vpack.c.b16 %v6271, %v6269
    %v6302 = vpack.c.b16 %v6274, %v6272
    %v6303 = vpack.c.b16 %v6275, %v6273
    %v6333 = vsel %vm873, %v5904, 0
    %6335 = vmatprep.subr.bf16.mxu0 %v6291
    %6336 = vmatpush1.bf16.msra.mxu0 %v6290
    %6337 = vmatprep.subr.bf16.mxu0 %v6289
    %6338 = vmatpush1.bf16.msra.mxu0 %v6288
    %6339 = vmatprep.subr.bf16.mxu0 %v6287
    %6340 = vmatpush1.bf16.msra.mxu0 %v6286
    %6341 = vmatprep.subr.bf16.mxu0 %v6285
    %6342 = vmatpush1.bf16.msra.mxu0 %v6284
    %6343 = vmatprep.subr.bf16.mxu0 %v6283
    %6344 = vmatpush1.bf16.msra.mxu0 %v6282
    %6345 = vmatprep.subr.bf16.mxu0 %v6281
    %6346 = vmatpush1.bf16.msra.mxu0 %v6280
    %6347 = vmatprep.subr.bf16.mxu0 %v6279
    %6348 = vmatpush1.bf16.msra.mxu0 %v6278
    %6349 = vmatprep.subr.bf16.mxu0 %v6277
    %6350 = vmatpush1.bf16.msra.mxu0 %v6276
    %6351 = vmatprep.subr.bf16.mxu0 0
    %6352 = vmatpush2.bf16.msra.mxu0 0
    %6353 = vmatprep.subr.bf16.mxu0 0
    %6354 = vmatpush2.bf16.msra.mxu0 0
    %6355 = vmatprep.subr.bf16.mxu0 %v6303
    %6356 = vmatpush2.bf16.msra.mxu0 %v6302
    %6357 = vmatprep.subr.bf16.mxu0 %v6301
    %6358 = vmatpush2.bf16.msra.mxu0 %v6300
    %6359 = vmatprep.subr.bf16.mxu0 %v6299
    %6360 = vmatpush2.bf16.msra.mxu0 %v6298
    %6361 = vmatprep.subr.bf16.mxu0 %v6297
    %6362 = vmatpush2.bf16.msra.mxu0 %v6296
    %6363 = vmatprep.subr.bf16.mxu0 %v6295
    %6364 = vmatpush2.bf16.msra.mxu0 %v6294
    %6365 = vmatprep.subr.bf16.mxu0 %v6293
    %6366 = vmatpush2.bf16.msra.mxu0 %v6292
    %6367 = vmatprep.mubr.bf16.mxu0 %v6333
    %6368 = vmatmul.mubr.bf16.gmra.mxu0 %v5903
    %v6369 = vpop.f32.mrf.mxu0
    %v6370 = vadd.f32 %v6186, %v6369
    %v6371 = vpop.f32.mrf.mxu0
    %v6372 = vadd.f32 %v6188, %v6371
    %v6373 = vpop.f32.mrf.mxu0
    %v6374 = vpop.f32.mrf.mxu0
    %6375 = vdwg.mxu0
    %v6376 = vld [vmem:[%s1102] sm:$0xf]
    %v6378 = vsel %vm574, %v6376, 0
    %6380 = vmatprep.subr.bf16.mxu0 0
    %6381 = vmatpush1.bf16.msra.mxu0 0
    %6382 = vmatprep.subr.bf16.mxu0 0
    %6383 = vmatpush1.bf16.msra.mxu0 0
    %6384 = vmatprep.subr.bf16.mxu0 0
    %6385 = vmatpush1.bf16.msra.mxu0 0
    %6386 = vmatprep.subr.bf16.mxu0 0
    %6387 = vmatpush1.bf16.msra.mxu0 0
    %6388 = vmatprep.subr.bf16.mxu0 0
    %6389 = vmatpush1.bf16.msra.mxu0 0
    %6390 = vmatprep.subr.bf16.mxu0 0
    %6391 = vmatpush1.bf16.msra.mxu0 0
    %6392 = vmatprep.subr.bf16.mxu0 0
    %6393 = vmatpush1.bf16.msra.mxu0 0
    %6394 = vmatprep.subr.bf16.mxu0 %v5860
    %6395 = vmatpush1.bf16.msra.mxu0 %v5857
    %6396 = vmatprep.subr.bf16.mxu0 0
    %6397 = vmatpush2.bf16.msra.mxu0 0
    %6398 = vmatprep.subr.bf16.mxu0 0
    %6399 = vmatpush2.bf16.msra.mxu0 0
    %6400 = vmatprep.subr.bf16.mxu0 0
    %6401 = vmatpush2.bf16.msra.mxu0 0
    %6402 = vmatprep.subr.bf16.mxu0 0
    %6403 = vmatpush2.bf16.msra.mxu0 0
    %6404 = vmatprep.subr.bf16.mxu0 0
    %6405 = vmatpush2.bf16.msra.mxu0 0
    %6406 = vmatprep.subr.bf16.mxu0 0
    %6407 = vmatpush2.bf16.msra.mxu0 0
    %6408 = vmatprep.subr.bf16.mxu0 0
    %6409 = vmatpush2.bf16.msra.mxu0 0
    %6410 = vmatprep.subr.bf16.mxu0 0
    %6411 = vmatpush2.bf16.msra.mxu0 0
    %6412 = vmatprep.mubr.bf16.mxu0 0
    %6413 = vmatmul.mubr.bf16.gmra.mxu0 %v6378
    %v6414 = vpop.f32.mrf.mxu0
    %v6415 = vadd.f32 0.0, %v6414
    %v6416 = vpop.f32.mrf.mxu0
    %v6417 = vadd.f32 0.0, %v6416
    %v6418 = vpop.f32.mrf.mxu0
    %v6419 = vpop.f32.mrf.mxu0
    %6420 = vdwg.mxu0
    %v6421 = vpack.c.bf16 %v6415, %v6415
    %v6422 = vpack.c.bf16 %v6417, %v6417
    %v6423 = vld [vmem:[%s1150] sm:$0xff]
    %v6424 = vld [vmem:[%s1150 + $0x8] sm:$0xff]
    %v6425 = vld [vmem:[%s1150 + $0x10] sm:$0xff]
    %v6426 = vld [vmem:[%s1150 + $0x18] sm:$0xff]
    %v6427 = vld [vmem:[%s1150 + $0x20] sm:$0xff]
    %v6428 = vld [vmem:[%s1150 + $0x28] sm:$0xff]
    %v6429 = vld [vmem:[%s1150 + $0x30] sm:$0xff]
    %v6430 = vld [vmem:[%s1150 + $0x38] sm:$0xff]
    %v6431 = vld [vmem:[%s1150 + $0x40] sm:$0xff]
    %v6432 = vld [vmem:[%s1150 + $0x48] sm:$0xff]
    %v6433 = vld [vmem:[%s1150 + $0x50] sm:$0xff]
    %v6434 = vld [vmem:[%s1150 + $0x58] sm:$0xff]
    %v6435 = vld [vmem:[%s1150 + $0x60] sm:$0xff]
    %v6436 = vld [vmem:[%s1150 + $0x68] sm:$0xff]
    %v6437 = vld [vmem:[%s1150 + $0x70] sm:$0xff]
    %v6438 = vld [vmem:[%s1150 + $0x78] sm:$0xff]
    %v6439 = vld [vmem:[%s1150 + $0x80] sm:$0xff]
    %v6440 = vld [vmem:[%s1150 + $0x88] sm:$0xff]
    %v6441 = vld [vmem:[%s1150 + $0x90] sm:$0xff]
    %v6442 = vld [vmem:[%s1150 + $0x98] sm:$0xff]
    %v6443 = vld [vmem:[%s1150 + $0xa0] sm:$0xff]
    %v6444 = vld [vmem:[%s1150 + $0xa8] sm:$0xff]
    %v6445 = vld [vmem:[%s1150 + $0xb0] sm:$0xff]
    %v6446 = vld [vmem:[%s1150 + $0xb8] sm:$0xff]
    %v6447 = vld [vmem:[%s1150 + $0xc0] sm:$0xff]
    %v6448 = vld [vmem:[%s1150 + $0xc8] sm:$0xff]
    %v6449 = vld [vmem:[%s1150 + $0xd0] sm:$0xff]
    %v6450 = vld [vmem:[%s1150 + $0xd8] sm:$0xff]
    %v6479 = vunpack.c.l.b16 %v6423
    %v6480 = vunpack.c.h.b16 %v6423
    %v6481 = vunpack.c.l.b16 %v6424
    %v6482 = vunpack.c.h.b16 %v6424
    %v6483 = vunpack.c.l.b16 %v6425
    %v6484 = vunpack.c.h.b16 %v6425
    %v6485 = vunpack.c.l.b16 %v6426
    %v6486 = vunpack.c.h.b16 %v6426
    %v6487 = vunpack.c.l.b16 %v6427
    %v6488 = vunpack.c.h.b16 %v6427
    %v6489 = vunpack.c.l.b16 %v6428
    %v6490 = vunpack.c.h.b16 %v6428
    %v6491 = vunpack.c.l.b16 %v6429
    %v6492 = vunpack.c.h.b16 %v6429
    %v6493 = vunpack.c.l.b16 %v6430
    %v6494 = vunpack.c.h.b16 %v6430
    %v6495 = vunpack.c.l.b16 %v6431
    %v6496 = vunpack.c.h.b16 %v6431
    %v6497 = vunpack.c.l.b16 %v6432
    %v6498 = vunpack.c.h.b16 %v6432
    %v6499 = vunpack.c.l.b16 %v6433
    %v6500 = vunpack.c.h.b16 %v6433
    %v6501 = vunpack.c.l.b16 %v6434
    %v6502 = vunpack.c.h.b16 %v6434
    %v6503 = vunpack.c.l.b16 %v6435
    %v6504 = vunpack.c.h.b16 %v6435
    %v6505 = vunpack.c.l.b16 %v6436
    %v6506 = vunpack.c.h.b16 %v6436
    %v6507 = vunpack.c.l.b16 %v6437
    %v6508 = vunpack.c.h.b16 %v6437
    %v6509 = vunpack.c.l.b16 %v6438
    %v6510 = vunpack.c.h.b16 %v6438
    %v6511 = vunpack.c.l.b16 %v6439
    %v6512 = vunpack.c.h.b16 %v6439
    %v6513 = vunpack.c.l.b16 %v6440
    %v6514 = vunpack.c.h.b16 %v6440
    %v6515 = vunpack.c.l.b16 %v6441
    %v6516 = vunpack.c.h.b16 %v6441
    %v6517 = vunpack.c.l.b16 %v6442
    %v6518 = vunpack.c.h.b16 %v6442
    %v6519 = vunpack.c.l.b16 %v6443
    %v6520 = vunpack.c.h.b16 %v6443
    %v6521 = vunpack.c.l.b16 %v6444
    %v6522 = vunpack.c.h.b16 %v6444
    %v6523 = vunpack.c.l.b16 %v6445
    %v6524 = vunpack.c.h.b16 %v6445
    %v6525 = vunpack.c.l.b16 %v6446
    %v6526 = vunpack.c.h.b16 %v6446
    %v6527 = vunpack.c.l.b16 %v6447
    %v6528 = vunpack.c.h.b16 %v6447
    %v6529 = vunpack.c.l.b16 %v6448
    %v6530 = vunpack.c.h.b16 %v6448
    %v6531 = vunpack.c.l.b16 %v6449
    %v6532 = vunpack.c.h.b16 %v6449
    %v6533 = vunpack.c.l.b16 %v6450
    %v6534 = vunpack.c.h.b16 %v6450
    %v6535 = vpack.c.b16 %v6481, %v6479
    %v6536 = vpack.c.b16 %v6482, %v6480
    %v6537 = vpack.c.b16 %v6485, %v6483
    %v6538 = vpack.c.b16 %v6486, %v6484
    %v6539 = vpack.c.b16 %v6489, %v6487
    %v6540 = vpack.c.b16 %v6490, %v6488
    %v6541 = vpack.c.b16 %v6493, %v6491
    %v6542 = vpack.c.b16 %v6494, %v6492
    %v6543 = vpack.c.b16 %v6497, %v6495
    %v6544 = vpack.c.b16 %v6498, %v6496
    %v6545 = vpack.c.b16 %v6501, %v6499
    %v6546 = vpack.c.b16 %v6502, %v6500
    %v6547 = vpack.c.b16 %v6505, %v6503
    %v6548 = vpack.c.b16 %v6506, %v6504
    %v6549 = vpack.c.b16 %v6509, %v6507
    %v6550 = vpack.c.b16 %v6510, %v6508
    %v6551 = vpack.c.b16 %v6513, %v6511
    %v6552 = vpack.c.b16 %v6514, %v6512
    %v6553 = vpack.c.b16 %v6517, %v6515
    %v6554 = vpack.c.b16 %v6518, %v6516
    %v6555 = vpack.c.b16 %v6521, %v6519
    %v6556 = vpack.c.b16 %v6522, %v6520
    %v6557 = vpack.c.b16 %v6525, %v6523
    %v6558 = vpack.c.b16 %v6526, %v6524
    %v6559 = vpack.c.b16 %v6529, %v6527
    %v6560 = vpack.c.b16 %v6530, %v6528
    %v6561 = vpack.c.b16 %v6533, %v6531
    %v6562 = vpack.c.b16 %v6534, %v6532
    %v6592 = vsel %vm873, %v6422, 0
    %6594 = vmatprep.subr.bf16.mxu0 %v6550
    %6595 = vmatpush1.bf16.msra.mxu0 %v6549
    %6596 = vmatprep.subr.bf16.mxu0 %v6548
    %6597 = vmatpush1.bf16.msra.mxu0 %v6547
    %6598 = vmatprep.subr.bf16.mxu0 %v6546
    %6599 = vmatpush1.bf16.msra.mxu0 %v6545
    %6600 = vmatprep.subr.bf16.mxu0 %v6544
    %6601 = vmatpush1.bf16.msra.mxu0 %v6543
    %6602 = vmatprep.subr.bf16.mxu0 %v6542
    %6603 = vmatpush1.bf16.msra.mxu0 %v6541
    %6604 = vmatprep.subr.bf16.mxu0 %v6540
    %6605 = vmatpush1.bf16.msra.mxu0 %v6539
    %6606 = vmatprep.subr.bf16.mxu0 %v6538
    %6607 = vmatpush1.bf16.msra.mxu0 %v6537
    %6608 = vmatprep.subr.bf16.mxu0 %v6536
    %6609 = vmatpush1.bf16.msra.mxu0 %v6535
    %6610 = vmatprep.subr.bf16.mxu0 0
    %6611 = vmatpush2.bf16.msra.mxu0 0
    %6612 = vmatprep.subr.bf16.mxu0 0
    %6613 = vmatpush2.bf16.msra.mxu0 0
    %6614 = vmatprep.subr.bf16.mxu0 %v6562
    %6615 = vmatpush2.bf16.msra.mxu0 %v6561
    %6616 = vmatprep.subr.bf16.mxu0 %v6560
    %6617 = vmatpush2.bf16.msra.mxu0 %v6559
    %6618 = vmatprep.subr.bf16.mxu0 %v6558
    %6619 = vmatpush2.bf16.msra.mxu0 %v6557
    %6620 = vmatprep.subr.bf16.mxu0 %v6556
    %6621 = vmatpush2.bf16.msra.mxu0 %v6555
    %6622 = vmatprep.subr.bf16.mxu0 %v6554
    %6623 = vmatpush2.bf16.msra.mxu0 %v6553
    %6624 = vmatprep.subr.bf16.mxu0 %v6552
    %6625 = vmatpush2.bf16.msra.mxu0 %v6551
    %6626 = vmatprep.mubr.bf16.mxu0 %v6592
    %6627 = vmatmul.mubr.bf16.gmra.mxu0 %v6421
    %v6628 = vpop.f32.mrf.mxu0
    %v6629 = vadd.f32 0.0, %v6628
    %v6630 = vpop.f32.mrf.mxu0
    %v6631 = vadd.f32 0.0, %v6630
    %v6632 = vpop.f32.mrf.mxu0
    %v6633 = vpop.f32.mrf.mxu0
    %6634 = vdwg.mxu0
    %v6635 = vadd.f32 %v6370, %v6629
    %v6636 = vadd.f32 %v6372, %v6631
    %v6637 = vld [vmem:[#allocation6] sm:$0x3]
    %v6639 = vlaneseq
    %v6640 = vshrl.u32 %v6639, 7
    %v6641 = vsub.s32 0, %v6640
    %v6642 = vrot.slane %v6637, %v6641
    %v6643 = vlaneseq
    %v6644 = vshrl.u32 %v6643, 7
    %v6645 = vsub.s32 1, %v6644
    %v6646 = vrot.slane %v6637, %v6645
    %v6649 = vadd.f32 %v6635, %v6642
    %v6650 = vadd.f32 %v6636, %v6646
    %v6651 = vmax.f32 %v6649, 0.0
    %v6652 = vmax.f32 %v6650, 0.0
    %v6653 = vpack.c.bf16 %v6651, %v6651
    %v6654 = vpack.c.bf16 %v6652, %v6652
    %v6655 = vld [vmem:[%s7] sm:$0x1]
    %v6657 = vsel %vm1384, %v6655, 0
    %v6660 = vand.u32 %v6653, %v1391
    %v6663 = vand.u32 %v6654, %v1391
    %6665 = vmatprep.subr.bf16.mxu0 0
    %6666 = vmatpush1.bf16.msra.mxu0 0
    %6667 = vmatprep.subr.bf16.mxu0 0
    %6668 = vmatpush1.bf16.msra.mxu0 0
    %6669 = vmatprep.subr.bf16.mxu0 0
    %6670 = vmatpush1.bf16.msra.mxu0 0
    %6671 = vmatprep.subr.bf16.mxu0 0
    %6672 = vmatpush1.bf16.msra.mxu0 0
    %6673 = vmatprep.subr.bf16.mxu0 0
    %6674 = vmatpush1.bf16.msra.mxu0 0
    %6675 = vmatprep.subr.bf16.mxu0 0
    %6676 = vmatpush1.bf16.msra.mxu0 0
    %6677 = vmatprep.subr.bf16.mxu0 0
    %6678 = vmatpush1.bf16.msra.mxu0 0
    %6679 = vmatprep.subr.bf16.mxu0 %v6663
    %6680 = vmatpush1.bf16.msra.mxu0 %v6660
    %6681 = vmatprep.subr.bf16.mxu0 0
    %6682 = vmatpush2.bf16.msra.mxu0 0
    %6683 = vmatprep.subr.bf16.mxu0 0
    %6684 = vmatpush2.bf16.msra.mxu0 0
    %6685 = vmatprep.subr.bf16.mxu0 0
    %6686 = vmatpush2.bf16.msra.mxu0 0
    %6687 = vmatprep.subr.bf16.mxu0 0
    %6688 = vmatpush2.bf16.msra.mxu0 0
    %6689 = vmatprep.subr.bf16.mxu0 0
    %6690 = vmatpush2.bf16.msra.mxu0 0
    %6691 = vmatprep.subr.bf16.mxu0 0
    %6692 = vmatpush2.bf16.msra.mxu0 0
    %6693 = vmatprep.subr.bf16.mxu0 0
    %6694 = vmatpush2.bf16.msra.mxu0 0
    %6695 = vmatprep.subr.bf16.mxu0 0
    %6696 = vmatpush2.bf16.msra.mxu0 0
    %6697 = vmatprep.mubr.bf16.mxu0 0
    %6698 = vmatmul.mubr.bf16.gmra.mxu0 %v6657
    %v6699 = vpop.f32.mrf.mxu0
    %v6700 = vadd.f32 0.0, %v6699
    %v6701 = vpop.f32.mrf.mxu0
    %v6702 = vadd.f32 0.0, %v6701
    %v6703 = vpop.f32.mrf.mxu0
    %v6704 = vpop.f32.mrf.mxu0
    %6705 = vdwg.mxu0
    %v6706 = vpack.c.bf16 %v6700, %v6700
    %v6707 = vpack.c.bf16 %v6702, %v6702
    %v6708 = vld [vmem:[#allocation7] sm:$0xf]
    %v6709 = vld [vmem:[#allocation7 + $0x4] sm:$0xf]
    %v6710 = vld [vmem:[#allocation7 + $0x8] sm:$0xf]
    %v6711 = vld [vmem:[#allocation7 + $0xc] sm:$0xf]
    %v6712 = vld [vmem:[#allocation7 + $0x10] sm:$0xf]
    %v6713 = vld [vmem:[#allocation7 + $0x14] sm:$0xf]
    %v6714 = vld [vmem:[#allocation7 + $0x18] sm:$0xf]
    %v6715 = vld [vmem:[#allocation7 + $0x1c] sm:$0xf]
    %v6716 = vld [vmem:[#allocation7 + $0x20] sm:$0xf]
    %v6717 = vld [vmem:[#allocation7 + $0x24] sm:$0xf]
    %v6718 = vld [vmem:[#allocation7 + $0x28] sm:$0xf]
    %v6719 = vld [vmem:[#allocation7 + $0x2c] sm:$0xf]
    %v6720 = vld [vmem:[#allocation7 + $0x30] sm:$0xf]
    %v6721 = vld [vmem:[#allocation7 + $0x34] sm:$0xf]
    %v6722 = vld [vmem:[#allocation7 + $0x38] sm:$0xf]
    %v6723 = vld [vmem:[#allocation7 + $0x3c] sm:$0xf]
    %v6724 = vld [vmem:[#allocation7 + $0x40] sm:$0xf]
    %v6725 = vld [vmem:[#allocation7 + $0x44] sm:$0xf]
    %v6726 = vld [vmem:[#allocation7 + $0x48] sm:$0xf]
    %v6727 = vld [vmem:[#allocation7 + $0x4c] sm:$0xf]
    %v6728 = vld [vmem:[#allocation7 + $0x50] sm:$0xf]
    %v6729 = vld [vmem:[#allocation7 + $0x54] sm:$0xf]
    %v6730 = vld [vmem:[#allocation7 + $0x58] sm:$0xf]
    %v6731 = vld [vmem:[#allocation7 + $0x5c] sm:$0xf]
    %v6732 = vld [vmem:[#allocation7 + $0x60] sm:$0xf]
    %v6733 = vld [vmem:[#allocation7 + $0x64] sm:$0xf]
    %v6734 = vld [vmem:[#allocation7 + $0x68] sm:$0xf]
    %v6735 = vld [vmem:[#allocation7 + $0x6c] sm:$0xf]
    %v6736 = vld [vmem:[%s1469] sm:$0x1]
    %v6738 = vsel %vm1384, %v6736, 0
    %6740 = vmatprep.subr.bf16.mxu0 0
    %6741 = vmatpush1.bf16.msra.mxu0 0
    %6742 = vmatprep.subr.bf16.mxu0 0
    %6743 = vmatpush1.bf16.msra.mxu0 0
    %6744 = vmatprep.subr.bf16.mxu0 0
    %6745 = vmatpush1.bf16.msra.mxu0 0
    %6746 = vmatprep.subr.bf16.mxu0 0
    %6747 = vmatpush1.bf16.msra.mxu0 0
    %6748 = vmatprep.subr.bf16.mxu0 0
    %6749 = vmatpush1.bf16.msra.mxu0 0
    %6750 = vmatprep.subr.bf16.mxu0 0
    %6751 = vmatpush1.bf16.msra.mxu0 0
    %6752 = vmatprep.subr.bf16.mxu0 0
    %6753 = vmatpush1.bf16.msra.mxu0 0
    %6754 = vmatprep.subr.bf16.mxu0 %v6663
    %6755 = vmatpush1.bf16.msra.mxu0 %v6660
    %6756 = vmatprep.subr.bf16.mxu0 0
    %6757 = vmatpush2.bf16.msra.mxu0 0
    %6758 = vmatprep.subr.bf16.mxu0 0
    %6759 = vmatpush2.bf16.msra.mxu0 0
    %6760 = vmatprep.subr.bf16.mxu0 0
    %6761 = vmatpush2.bf16.msra.mxu0 0
    %6762 = vmatprep.subr.bf16.mxu0 0
    %6763 = vmatpush2.bf16.msra.mxu0 0
    %6764 = vmatprep.subr.bf16.mxu0 0
    %6765 = vmatpush2.bf16.msra.mxu0 0
    %6766 = vmatprep.subr.bf16.mxu0 0
    %6767 = vmatpush2.bf16.msra.mxu0 0
    %6768 = vmatprep.subr.bf16.mxu0 0
    %6769 = vmatpush2.bf16.msra.mxu0 0
    %6770 = vmatprep.subr.bf16.mxu0 0
    %6771 = vmatpush2.bf16.msra.mxu0 0
    %6772 = vmatprep.mubr.bf16.mxu0 0
    %6773 = vmatmul.mubr.bf16.gmra.mxu0 %v6738
    %v6774 = vpop.f32.mrf.mxu0
    %v6775 = vadd.f32 0.0, %v6774
    %v6776 = vpop.f32.mrf.mxu0
    %v6777 = vadd.f32 0.0, %v6776
    %v6778 = vpop.f32.mrf.mxu0
    %v6779 = vpop.f32.mrf.mxu0
    %6780 = vdwg.mxu0
    %v6781 = vpack.c.bf16 %v6775, %v6775
    %v6782 = vpack.c.bf16 %v6777, %v6777
    %v6783 = vld [vmem:[%s1517] sm:$0xf]
    %v6784 = vld [vmem:[%s1517 + $0x4] sm:$0xf]
    %v6785 = vld [vmem:[%s1517 + $0x8] sm:$0xf]
    %v6786 = vld [vmem:[%s1517 + $0xc] sm:$0xf]
    %v6787 = vld [vmem:[%s1517 + $0x10] sm:$0xf]
    %v6788 = vld [vmem:[%s1517 + $0x14] sm:$0xf]
    %v6789 = vld [vmem:[%s1517 + $0x18] sm:$0xf]
    %v6790 = vld [vmem:[%s1517 + $0x1c] sm:$0xf]
    %v6791 = vld [vmem:[%s1517 + $0x20] sm:$0xf]
    %v6792 = vld [vmem:[%s1517 + $0x24] sm:$0xf]
    %v6793 = vld [vmem:[%s1517 + $0x28] sm:$0xf]
    %v6794 = vld [vmem:[%s1517 + $0x2c] sm:$0xf]
    %v6795 = vld [vmem:[%s1517 + $0x30] sm:$0xf]
    %v6796 = vld [vmem:[%s1517 + $0x34] sm:$0xf]
    %v6797 = vld [vmem:[%s1517 + $0x38] sm:$0xf]
    %v6798 = vld [vmem:[%s1517 + $0x3c] sm:$0xf]
    %v6799 = vld [vmem:[%s1517 + $0x40] sm:$0xf]
    %v6800 = vld [vmem:[%s1517 + $0x44] sm:$0xf]
    %v6801 = vld [vmem:[%s1517 + $0x48] sm:$0xf]
    %v6802 = vld [vmem:[%s1517 + $0x4c] sm:$0xf]
    %v6803 = vld [vmem:[%s1517 + $0x50] sm:$0xf]
    %v6804 = vld [vmem:[%s1517 + $0x54] sm:$0xf]
    %v6805 = vld [vmem:[%s1517 + $0x58] sm:$0xf]
    %v6806 = vld [vmem:[%s1517 + $0x5c] sm:$0xf]
    %v6807 = vld [vmem:[%s1517 + $0x60] sm:$0xf]
    %v6808 = vld [vmem:[%s1517 + $0x64] sm:$0xf]
    %v6809 = vld [vmem:[%s1517 + $0x68] sm:$0xf]
    %v6810 = vld [vmem:[%s1517 + $0x6c] sm:$0xf]
    %v6839 = vunpack.c.l.b16 %v6783
    %v6840 = vunpack.c.l.b16 %v6784
    %v6841 = vunpack.c.l.b16 %v6785
    %v6842 = vunpack.c.l.b16 %v6786
    %v6843 = vunpack.c.l.b16 %v6787
    %v6844 = vunpack.c.l.b16 %v6788
    %v6845 = vunpack.c.l.b16 %v6789
    %v6846 = vunpack.c.l.b16 %v6790
    %v6847 = vunpack.c.l.b16 %v6791
    %v6848 = vunpack.c.l.b16 %v6792
    %v6849 = vunpack.c.l.b16 %v6793
    %v6850 = vunpack.c.l.b16 %v6794
    %v6851 = vunpack.c.l.b16 %v6795
    %v6852 = vunpack.c.l.b16 %v6796
    %v6853 = vunpack.c.l.b16 %v6797
    %v6854 = vunpack.c.l.b16 %v6798
    %v6855 = vunpack.c.l.b16 %v6799
    %v6856 = vunpack.c.l.b16 %v6800
    %v6857 = vunpack.c.l.b16 %v6801
    %v6858 = vunpack.c.l.b16 %v6802
    %v6859 = vunpack.c.l.b16 %v6803
    %v6860 = vunpack.c.l.b16 %v6804
    %v6861 = vunpack.c.l.b16 %v6805
    %v6862 = vunpack.c.l.b16 %v6806
    %v6863 = vunpack.c.l.b16 %v6807
    %v6864 = vunpack.c.l.b16 %v6808
    %v6865 = vunpack.c.l.b16 %v6809
    %v6866 = vunpack.c.l.b16 %v6810
    %v6867 = vpack.c.b16 %v6840, %v6839
    %v6868 = vpack.c.b16 %v6842, %v6841
    %v6869 = vpack.c.b16 %v6844, %v6843
    %v6870 = vpack.c.b16 %v6846, %v6845
    %v6871 = vpack.c.b16 %v6848, %v6847
    %v6872 = vpack.c.b16 %v6850, %v6849
    %v6873 = vpack.c.b16 %v6852, %v6851
    %v6874 = vpack.c.b16 %v6854, %v6853
    %v6875 = vpack.c.b16 %v6856, %v6855
    %v6876 = vpack.c.b16 %v6858, %v6857
    %v6877 = vpack.c.b16 %v6860, %v6859
    %v6878 = vpack.c.b16 %v6862, %v6861
    %v6879 = vpack.c.b16 %v6864, %v6863
    %v6880 = vpack.c.b16 %v6866, %v6865
    %v6896 = vsel %vm873, %v6782, 0
    %6898 = vmatprep.subr.bf16.mxu0 0
    %6899 = vmatpush1.bf16.msra.mxu0 %v6874
    %6900 = vmatprep.subr.bf16.mxu0 0
    %6901 = vmatpush1.bf16.msra.mxu0 %v6873
    %6902 = vmatprep.subr.bf16.mxu0 0
    %6903 = vmatpush1.bf16.msra.mxu0 %v6872
    %6904 = vmatprep.subr.bf16.mxu0 0
    %6905 = vmatpush1.bf16.msra.mxu0 %v6871
    %6906 = vmatprep.subr.bf16.mxu0 0
    %6907 = vmatpush1.bf16.msra.mxu0 %v6870
    %6908 = vmatprep.subr.bf16.mxu0 0
    %6909 = vmatpush1.bf16.msra.mxu0 %v6869
    %6910 = vmatprep.subr.bf16.mxu0 0
    %6911 = vmatpush1.bf16.msra.mxu0 %v6868
    %6912 = vmatprep.subr.bf16.mxu0 0
    %6913 = vmatpush1.bf16.msra.mxu0 %v6867
    %6914 = vmatprep.subr.bf16.mxu0 0
    %6915 = vmatpush2.bf16.msra.mxu0 0
    %6916 = vmatprep.subr.bf16.mxu0 0
    %6917 = vmatpush2.bf16.msra.mxu0 0
    %6918 = vmatprep.subr.bf16.mxu0 0
    %6919 = vmatpush2.bf16.msra.mxu0 %v6880
    %6920 = vmatprep.subr.bf16.mxu0 0
    %6921 = vmatpush2.bf16.msra.mxu0 %v6879
    %6922 = vmatprep.subr.bf16.mxu0 0
    %6923 = vmatpush2.bf16.msra.mxu0 %v6878
    %6924 = vmatprep.subr.bf16.mxu0 0
    %6925 = vmatpush2.bf16.msra.mxu0 %v6877
    %6926 = vmatprep.subr.bf16.mxu0 0
    %6927 = vmatpush2.bf16.msra.mxu0 %v6876
    %6928 = vmatprep.subr.bf16.mxu0 0
    %6929 = vmatpush2.bf16.msra.mxu0 %v6875
    %6930 = vmatprep.mubr.bf16.mxu0 %v6896
    %6931 = vmatmul.mubr.bf16.gmra.mxu0 %v6781
    %v6932 = vpop.f32.mrf.mxu0
    %v6933 = vadd.f32 0.0, %v6932
    %v6934 = vpop.f32.mrf.mxu0
    %v6935 = vpop.f32.mrf.mxu0
    %v6936 = vpop.f32.mrf.mxu0
    %6937 = vdwg.mxu0
    %v6966 = vunpack.c.l.b16 %v6708
    %v6967 = vunpack.c.l.b16 %v6709
    %v6968 = vunpack.c.l.b16 %v6710
    %v6969 = vunpack.c.l.b16 %v6711
    %v6970 = vunpack.c.l.b16 %v6712
    %v6971 = vunpack.c.l.b16 %v6713
    %v6972 = vunpack.c.l.b16 %v6714
    %v6973 = vunpack.c.l.b16 %v6715
    %v6974 = vunpack.c.l.b16 %v6716
    %v6975 = vunpack.c.l.b16 %v6717
    %v6976 = vunpack.c.l.b16 %v6718
    %v6977 = vunpack.c.l.b16 %v6719
    %v6978 = vunpack.c.l.b16 %v6720
    %v6979 = vunpack.c.l.b16 %v6721
    %v6980 = vunpack.c.l.b16 %v6722
    %v6981 = vunpack.c.l.b16 %v6723
    %v6982 = vunpack.c.l.b16 %v6724
    %v6983 = vunpack.c.l.b16 %v6725
    %v6984 = vunpack.c.l.b16 %v6726
    %v6985 = vunpack.c.l.b16 %v6727
    %v6986 = vunpack.c.l.b16 %v6728
    %v6987 = vunpack.c.l.b16 %v6729
    %v6988 = vunpack.c.l.b16 %v6730
    %v6989 = vunpack.c.l.b16 %v6731
    %v6990 = vunpack.c.l.b16 %v6732
    %v6991 = vunpack.c.l.b16 %v6733
    %v6992 = vunpack.c.l.b16 %v6734
    %v6993 = vunpack.c.l.b16 %v6735
    %v6994 = vpack.c.b16 %v6967, %v6966
    %v6995 = vpack.c.b16 %v6969, %v6968
    %v6996 = vpack.c.b16 %v6971, %v6970
    %v6997 = vpack.c.b16 %v6973, %v6972
    %v6998 = vpack.c.b16 %v6975, %v6974
    %v6999 = vpack.c.b16 %v6977, %v6976
    %v7000 = vpack.c.b16 %v6979, %v6978
    %v7001 = vpack.c.b16 %v6981, %v6980
    %v7002 = vpack.c.b16 %v6983, %v6982
    %v7003 = vpack.c.b16 %v6985, %v6984
    %v7004 = vpack.c.b16 %v6987, %v6986
    %v7005 = vpack.c.b16 %v6989, %v6988
    %v7006 = vpack.c.b16 %v6991, %v6990
    %v7007 = vpack.c.b16 %v6993, %v6992
    %v7023 = vsel %vm873, %v6707, 0
    %7025 = vmatprep.subr.bf16.mxu0 0
    %7026 = vmatpush1.bf16.msra.mxu0 %v7001
    %7027 = vmatprep.subr.bf16.mxu0 0
    %7028 = vmatpush1.bf16.msra.mxu0 %v7000
    %7029 = vmatprep.subr.bf16.mxu0 0
    %7030 = vmatpush1.bf16.msra.mxu0 %v6999
    %7031 = vmatprep.subr.bf16.mxu0 0
    %7032 = vmatpush1.bf16.msra.mxu0 %v6998
    %7033 = vmatprep.subr.bf16.mxu0 0
    %7034 = vmatpush1.bf16.msra.mxu0 %v6997
    %7035 = vmatprep.subr.bf16.mxu0 0
    %7036 = vmatpush1.bf16.msra.mxu0 %v6996
    %7037 = vmatprep.subr.bf16.mxu0 0
    %7038 = vmatpush1.bf16.msra.mxu0 %v6995
    %7039 = vmatprep.subr.bf16.mxu0 0
    %7040 = vmatpush1.bf16.msra.mxu0 %v6994
    %7041 = vmatprep.subr.bf16.mxu0 0
    %7042 = vmatpush2.bf16.msra.mxu0 0
    %7043 = vmatprep.subr.bf16.mxu0 0
    %7044 = vmatpush2.bf16.msra.mxu0 0
    %7045 = vmatprep.subr.bf16.mxu0 0
    %7046 = vmatpush2.bf16.msra.mxu0 %v7007
    %7047 = vmatprep.subr.bf16.mxu0 0
    %7048 = vmatpush2.bf16.msra.mxu0 %v7006
    %7049 = vmatprep.subr.bf16.mxu0 0
    %7050 = vmatpush2.bf16.msra.mxu0 %v7005
    %7051 = vmatprep.subr.bf16.mxu0 0
    %7052 = vmatpush2.bf16.msra.mxu0 %v7004
    %7053 = vmatprep.subr.bf16.mxu0 0
    %7054 = vmatpush2.bf16.msra.mxu0 %v7003
    %7055 = vmatprep.subr.bf16.mxu0 0
    %7056 = vmatpush2.bf16.msra.mxu0 %v7002
    %7057 = vmatprep.mubr.bf16.mxu0 %v7023
    %7058 = vmatmul.mubr.bf16.gmra.mxu0 %v6706
    %v7059 = vpop.f32.mrf.mxu0
    %v7060 = vadd.f32 %v6933, %v7059
    %v7061 = vpop.f32.mrf.mxu0
    %v7062 = vpop.f32.mrf.mxu0
    %v7063 = vpop.f32.mrf.mxu0
    %7064 = vdwg.mxu0
    %v7065 = vld [vmem:[%s1800] sm:$0x1]
    %v7067 = vsel %vm1384, %v7065, 0
    %7069 = vmatprep.subr.bf16.mxu0 0
    %7070 = vmatpush1.bf16.msra.mxu0 0
    %7071 = vmatprep.subr.bf16.mxu0 0
    %7072 = vmatpush1.bf16.msra.mxu0 0
    %7073 = vmatprep.subr.bf16.mxu0 0
    %7074 = vmatpush1.bf16.msra.mxu0 0
    %7075 = vmatprep.subr.bf16.mxu0 0
    %7076 = vmatpush1.bf16.msra.mxu0 0
    %7077 = vmatprep.subr.bf16.mxu0 0
    %7078 = vmatpush1.bf16.msra.mxu0 0
    %7079 = vmatprep.subr.bf16.mxu0 0
    %7080 = vmatpush1.bf16.msra.mxu0 0
    %7081 = vmatprep.subr.bf16.mxu0 0
    %7082 = vmatpush1.bf16.msra.mxu0 0
    %7083 = vmatprep.subr.bf16.mxu0 %v6663
    %7084 = vmatpush1.bf16.msra.mxu0 %v6660
    %7085 = vmatprep.subr.bf16.mxu0 0
    %7086 = vmatpush2.bf16.msra.mxu0 0
    %7087 = vmatprep.subr.bf16.mxu0 0
    %7088 = vmatpush2.bf16.msra.mxu0 0
    %7089 = vmatprep.subr.bf16.mxu0 0
    %7090 = vmatpush2.bf16.msra.mxu0 0
    %7091 = vmatprep.subr.bf16.mxu0 0
    %7092 = vmatpush2.bf16.msra.mxu0 0
    %7093 = vmatprep.subr.bf16.mxu0 0
    %7094 = vmatpush2.bf16.msra.mxu0 0
    %7095 = vmatprep.subr.bf16.mxu0 0
    %7096 = vmatpush2.bf16.msra.mxu0 0
    %7097 = vmatprep.subr.bf16.mxu0 0
    %7098 = vmatpush2.bf16.msra.mxu0 0
    %7099 = vmatprep.subr.bf16.mxu0 0
    %7100 = vmatpush2.bf16.msra.mxu0 0
    %7101 = vmatprep.mubr.bf16.mxu0 0
    %7102 = vmatmul.mubr.bf16.gmra.mxu0 %v7067
    %v7103 = vpop.f32.mrf.mxu0
    %v7104 = vadd.f32 0.0, %v7103
    %v7105 = vpop.f32.mrf.mxu0
    %v7106 = vadd.f32 0.0, %v7105
    %v7107 = vpop.f32.mrf.mxu0
    %v7108 = vpop.f32.mrf.mxu0
    %7109 = vdwg.mxu0
    %v7110 = vpack.c.bf16 %v7104, %v7104
    %v7111 = vpack.c.bf16 %v7106, %v7106
    %v7112 = vld [vmem:[%s1848] sm:$0xf]
    %v7113 = vld [vmem:[%s1848 + $0x4] sm:$0xf]
    %v7114 = vld [vmem:[%s1848 + $0x8] sm:$0xf]
    %v7115 = vld [vmem:[%s1848 + $0xc] sm:$0xf]
    %v7116 = vld [vmem:[%s1848 + $0x10] sm:$0xf]
    %v7117 = vld [vmem:[%s1848 + $0x14] sm:$0xf]
    %v7118 = vld [vmem:[%s1848 + $0x18] sm:$0xf]
    %v7119 = vld [vmem:[%s1848 + $0x1c] sm:$0xf]
    %v7120 = vld [vmem:[%s1848 + $0x20] sm:$0xf]
    %v7121 = vld [vmem:[%s1848 + $0x24] sm:$0xf]
    %v7122 = vld [vmem:[%s1848 + $0x28] sm:$0xf]
    %v7123 = vld [vmem:[%s1848 + $0x2c] sm:$0xf]
    %v7124 = vld [vmem:[%s1848 + $0x30] sm:$0xf]
    %v7125 = vld [vmem:[%s1848 + $0x34] sm:$0xf]
    %v7126 = vld [vmem:[%s1848 + $0x38] sm:$0xf]
    %v7127 = vld [vmem:[%s1848 + $0x3c] sm:$0xf]
    %v7128 = vld [vmem:[%s1848 + $0x40] sm:$0xf]
    %v7129 = vld [vmem:[%s1848 + $0x44] sm:$0xf]
    %v7130 = vld [vmem:[%s1848 + $0x48] sm:$0xf]
    %v7131 = vld [vmem:[%s1848 + $0x4c] sm:$0xf]
    %v7132 = vld [vmem:[%s1848 + $0x50] sm:$0xf]
    %v7133 = vld [vmem:[%s1848 + $0x54] sm:$0xf]
    %v7134 = vld [vmem:[%s1848 + $0x58] sm:$0xf]
    %v7135 = vld [vmem:[%s1848 + $0x5c] sm:$0xf]
    %v7136 = vld [vmem:[%s1848 + $0x60] sm:$0xf]
    %v7137 = vld [vmem:[%s1848 + $0x64] sm:$0xf]
    %v7138 = vld [vmem:[%s1848 + $0x68] sm:$0xf]
    %v7139 = vld [vmem:[%s1848 + $0x6c] sm:$0xf]
    %v7168 = vunpack.c.l.b16 %v7112
    %v7169 = vunpack.c.l.b16 %v7113
    %v7170 = vunpack.c.l.b16 %v7114
    %v7171 = vunpack.c.l.b16 %v7115
    %v7172 = vunpack.c.l.b16 %v7116
    %v7173 = vunpack.c.l.b16 %v7117
    %v7174 = vunpack.c.l.b16 %v7118
    %v7175 = vunpack.c.l.b16 %v7119
    %v7176 = vunpack.c.l.b16 %v7120
    %v7177 = vunpack.c.l.b16 %v7121
    %v7178 = vunpack.c.l.b16 %v7122
    %v7179 = vunpack.c.l.b16 %v7123
    %v7180 = vunpack.c.l.b16 %v7124
    %v7181 = vunpack.c.l.b16 %v7125
    %v7182 = vunpack.c.l.b16 %v7126
    %v7183 = vunpack.c.l.b16 %v7127
    %v7184 = vunpack.c.l.b16 %v7128
    %v7185 = vunpack.c.l.b16 %v7129
    %v7186 = vunpack.c.l.b16 %v7130
    %v7187 = vunpack.c.l.b16 %v7131
    %v7188 = vunpack.c.l.b16 %v7132
    %v7189 = vunpack.c.l.b16 %v7133
    %v7190 = vunpack.c.l.b16 %v7134
    %v7191 = vunpack.c.l.b16 %v7135
    %v7192 = vunpack.c.l.b16 %v7136
    %v7193 = vunpack.c.l.b16 %v7137
    %v7194 = vunpack.c.l.b16 %v7138
    %v7195 = vunpack.c.l.b16 %v7139
    %v7196 = vpack.c.b16 %v7169, %v7168
    %v7197 = vpack.c.b16 %v7171, %v7170
    %v7198 = vpack.c.b16 %v7173, %v7172
    %v7199 = vpack.c.b16 %v7175, %v7174
    %v7200 = vpack.c.b16 %v7177, %v7176
    %v7201 = vpack.c.b16 %v7179, %v7178
    %v7202 = vpack.c.b16 %v7181, %v7180
    %v7203 = vpack.c.b16 %v7183, %v7182
    %v7204 = vpack.c.b16 %v7185, %v7184
    %v7205 = vpack.c.b16 %v7187, %v7186
    %v7206 = vpack.c.b16 %v7189, %v7188
    %v7207 = vpack.c.b16 %v7191, %v7190
    %v7208 = vpack.c.b16 %v7193, %v7192
    %v7209 = vpack.c.b16 %v7195, %v7194
    %v7225 = vsel %vm873, %v7111, 0
    %7227 = vmatprep.subr.bf16.mxu0 0
    %7228 = vmatpush1.bf16.msra.mxu0 %v7203
    %7229 = vmatprep.subr.bf16.mxu0 0
    %7230 = vmatpush1.bf16.msra.mxu0 %v7202
    %7231 = vmatprep.subr.bf16.mxu0 0
    %7232 = vmatpush1.bf16.msra.mxu0 %v7201
    %7233 = vmatprep.subr.bf16.mxu0 0
    %7234 = vmatpush1.bf16.msra.mxu0 %v7200
    %7235 = vmatprep.subr.bf16.mxu0 0
    %7236 = vmatpush1.bf16.msra.mxu0 %v7199
    %7237 = vmatprep.subr.bf16.mxu0 0
    %7238 = vmatpush1.bf16.msra.mxu0 %v7198
    %7239 = vmatprep.subr.bf16.mxu0 0
    %7240 = vmatpush1.bf16.msra.mxu0 %v7197
    %7241 = vmatprep.subr.bf16.mxu0 0
    %7242 = vmatpush1.bf16.msra.mxu0 %v7196
    %7243 = vmatprep.subr.bf16.mxu0 0
    %7244 = vmatpush2.bf16.msra.mxu0 0
    %7245 = vmatprep.subr.bf16.mxu0 0
    %7246 = vmatpush2.bf16.msra.mxu0 0
    %7247 = vmatprep.subr.bf16.mxu0 0
    %7248 = vmatpush2.bf16.msra.mxu0 %v7209
    %7249 = vmatprep.subr.bf16.mxu0 0
    %7250 = vmatpush2.bf16.msra.mxu0 %v7208
    %7251 = vmatprep.subr.bf16.mxu0 0
    %7252 = vmatpush2.bf16.msra.mxu0 %v7207
    %7253 = vmatprep.subr.bf16.mxu0 0
    %7254 = vmatpush2.bf16.msra.mxu0 %v7206
    %7255 = vmatprep.subr.bf16.mxu0 0
    %7256 = vmatpush2.bf16.msra.mxu0 %v7205
    %7257 = vmatprep.subr.bf16.mxu0 0
    %7258 = vmatpush2.bf16.msra.mxu0 %v7204
    %7259 = vmatprep.mubr.bf16.mxu0 %v7225
    %7260 = vmatmul.mubr.bf16.gmra.mxu0 %v7110
    %v7261 = vpop.f32.mrf.mxu0
    %v7262 = vadd.f32 0.0, %v7261
    %v7263 = vpop.f32.mrf.mxu0
    %v7264 = vpop.f32.mrf.mxu0
    %v7265 = vpop.f32.mrf.mxu0
    %7266 = vdwg.mxu0
    %v7267 = vadd.f32 %v7060, %v7262
    %v7268 = vld [vmem:[%s2005] sm:$0x1]
    %v7270 = vsel %vm1384, %v7268, 0
    %7272 = vmatprep.subr.bf16.mxu0 0
    %7273 = vmatpush1.bf16.msra.mxu0 0
    %7274 = vmatprep.subr.bf16.mxu0 0
    %7275 = vmatpush1.bf16.msra.mxu0 0
    %7276 = vmatprep.subr.bf16.mxu0 0
    %7277 = vmatpush1.bf16.msra.mxu0 0
    %7278 = vmatprep.subr.bf16.mxu0 0
    %7279 = vmatpush1.bf16.msra.mxu0 0
    %7280 = vmatprep.subr.bf16.mxu0 0
    %7281 = vmatpush1.bf16.msra.mxu0 0
    %7282 = vmatprep.subr.bf16.mxu0 0
    %7283 = vmatpush1.bf16.msra.mxu0 0
    %7284 = vmatprep.subr.bf16.mxu0 0
    %7285 = vmatpush1.bf16.msra.mxu0 0
    %7286 = vmatprep.subr.bf16.mxu0 %v6663
    %7287 = vmatpush1.bf16.msra.mxu0 %v6660
    %7288 = vmatprep.subr.bf16.mxu0 0
    %7289 = vmatpush2.bf16.msra.mxu0 0
    %7290 = vmatprep.subr.bf16.mxu0 0
    %7291 = vmatpush2.bf16.msra.mxu0 0
    %7292 = vmatprep.subr.bf16.mxu0 0
    %7293 = vmatpush2.bf16.msra.mxu0 0
    %7294 = vmatprep.subr.bf16.mxu0 0
    %7295 = vmatpush2.bf16.msra.mxu0 0
    %7296 = vmatprep.subr.bf16.mxu0 0
    %7297 = vmatpush2.bf16.msra.mxu0 0
    %7298 = vmatprep.subr.bf16.mxu0 0
    %7299 = vmatpush2.bf16.msra.mxu0 0
    %7300 = vmatprep.subr.bf16.mxu0 0
    %7301 = vmatpush2.bf16.msra.mxu0 0
    %7302 = vmatprep.subr.bf16.mxu0 0
    %7303 = vmatpush2.bf16.msra.mxu0 0
    %7304 = vmatprep.mubr.bf16.mxu0 0
    %7305 = vmatmul.mubr.bf16.gmra.mxu0 %v7270
    %v7306 = vpop.f32.mrf.mxu0
    %v7307 = vadd.f32 0.0, %v7306
    %v7308 = vpop.f32.mrf.mxu0
    %v7309 = vadd.f32 0.0, %v7308
    %v7310 = vpop.f32.mrf.mxu0
    %v7311 = vpop.f32.mrf.mxu0
    %7312 = vdwg.mxu0
    %v7313 = vpack.c.bf16 %v7307, %v7307
    %v7314 = vpack.c.bf16 %v7309, %v7309
    %v7315 = vld [vmem:[%s2053] sm:$0xf]
    %v7316 = vld [vmem:[%s2053 + $0x4] sm:$0xf]
    %v7317 = vld [vmem:[%s2053 + $0x8] sm:$0xf]
    %v7318 = vld [vmem:[%s2053 + $0xc] sm:$0xf]
    %v7319 = vld [vmem:[%s2053 + $0x10] sm:$0xf]
    %v7320 = vld [vmem:[%s2053 + $0x14] sm:$0xf]
    %v7321 = vld [vmem:[%s2053 + $0x18] sm:$0xf]
    %v7322 = vld [vmem:[%s2053 + $0x1c] sm:$0xf]
    %v7323 = vld [vmem:[%s2053 + $0x20] sm:$0xf]
    %v7324 = vld [vmem:[%s2053 + $0x24] sm:$0xf]
    %v7325 = vld [vmem:[%s2053 + $0x28] sm:$0xf]
    %v7326 = vld [vmem:[%s2053 + $0x2c] sm:$0xf]
    %v7327 = vld [vmem:[%s2053 + $0x30] sm:$0xf]
    %v7328 = vld [vmem:[%s2053 + $0x34] sm:$0xf]
    %v7329 = vld [vmem:[%s2053 + $0x38] sm:$0xf]
    %v7330 = vld [vmem:[%s2053 + $0x3c] sm:$0xf]
    %v7331 = vld [vmem:[%s2053 + $0x40] sm:$0xf]
    %v7332 = vld [vmem:[%s2053 + $0x44] sm:$0xf]
    %v7333 = vld [vmem:[%s2053 + $0x48] sm:$0xf]
    %v7334 = vld [vmem:[%s2053 + $0x4c] sm:$0xf]
    %v7335 = vld [vmem:[%s2053 + $0x50] sm:$0xf]
    %v7336 = vld [vmem:[%s2053 + $0x54] sm:$0xf]
    %v7337 = vld [vmem:[%s2053 + $0x58] sm:$0xf]
    %v7338 = vld [vmem:[%s2053 + $0x5c] sm:$0xf]
    %v7339 = vld [vmem:[%s2053 + $0x60] sm:$0xf]
    %v7340 = vld [vmem:[%s2053 + $0x64] sm:$0xf]
    %v7341 = vld [vmem:[%s2053 + $0x68] sm:$0xf]
    %v7342 = vld [vmem:[%s2053 + $0x6c] sm:$0xf]
    %v7371 = vunpack.c.l.b16 %v7315
    %v7372 = vunpack.c.l.b16 %v7316
    %v7373 = vunpack.c.l.b16 %v7317
    %v7374 = vunpack.c.l.b16 %v7318
    %v7375 = vunpack.c.l.b16 %v7319
    %v7376 = vunpack.c.l.b16 %v7320
    %v7377 = vunpack.c.l.b16 %v7321
    %v7378 = vunpack.c.l.b16 %v7322
    %v7379 = vunpack.c.l.b16 %v7323
    %v7380 = vunpack.c.l.b16 %v7324
    %v7381 = vunpack.c.l.b16 %v7325
    %v7382 = vunpack.c.l.b16 %v7326
    %v7383 = vunpack.c.l.b16 %v7327
    %v7384 = vunpack.c.l.b16 %v7328
    %v7385 = vunpack.c.l.b16 %v7329
    %v7386 = vunpack.c.l.b16 %v7330
    %v7387 = vunpack.c.l.b16 %v7331
    %v7388 = vunpack.c.l.b16 %v7332
    %v7389 = vunpack.c.l.b16 %v7333
    %v7390 = vunpack.c.l.b16 %v7334
    %v7391 = vunpack.c.l.b16 %v7335
    %v7392 = vunpack.c.l.b16 %v7336
    %v7393 = vunpack.c.l.b16 %v7337
    %v7394 = vunpack.c.l.b16 %v7338
    %v7395 = vunpack.c.l.b16 %v7339
    %v7396 = vunpack.c.l.b16 %v7340
    %v7397 = vunpack.c.l.b16 %v7341
    %v7398 = vunpack.c.l.b16 %v7342
    %v7399 = vpack.c.b16 %v7372, %v7371
    %v7400 = vpack.c.b16 %v7374, %v7373
    %v7401 = vpack.c.b16 %v7376, %v7375
    %v7402 = vpack.c.b16 %v7378, %v7377
    %v7403 = vpack.c.b16 %v7380, %v7379
    %v7404 = vpack.c.b16 %v7382, %v7381
    %v7405 = vpack.c.b16 %v7384, %v7383
    %v7406 = vpack.c.b16 %v7386, %v7385
    %v7407 = vpack.c.b16 %v7388, %v7387
    %v7408 = vpack.c.b16 %v7390, %v7389
    %v7409 = vpack.c.b16 %v7392, %v7391
    %v7410 = vpack.c.b16 %v7394, %v7393
    %v7411 = vpack.c.b16 %v7396, %v7395
    %v7412 = vpack.c.b16 %v7398, %v7397
    %v7428 = vsel %vm873, %v7314, 0
    %7430 = vmatprep.subr.bf16.mxu0 0
    %7431 = vmatpush1.bf16.msra.mxu0 %v7406
    %7432 = vmatprep.subr.bf16.mxu0 0
    %7433 = vmatpush1.bf16.msra.mxu0 %v7405
    %7434 = vmatprep.subr.bf16.mxu0 0
    %7435 = vmatpush1.bf16.msra.mxu0 %v7404
    %7436 = vmatprep.subr.bf16.mxu0 0
    %7437 = vmatpush1.bf16.msra.mxu0 %v7403
    %7438 = vmatprep.subr.bf16.mxu0 0
    %7439 = vmatpush1.bf16.msra.mxu0 %v7402
    %7440 = vmatprep.subr.bf16.mxu0 0
    %7441 = vmatpush1.bf16.msra.mxu0 %v7401
    %7442 = vmatprep.subr.bf16.mxu0 0
    %7443 = vmatpush1.bf16.msra.mxu0 %v7400
    %7444 = vmatprep.subr.bf16.mxu0 0
    %7445 = vmatpush1.bf16.msra.mxu0 %v7399
    %7446 = vmatprep.subr.bf16.mxu0 0
    %7447 = vmatpush2.bf16.msra.mxu0 0
    %7448 = vmatprep.subr.bf16.mxu0 0
    %7449 = vmatpush2.bf16.msra.mxu0 0
    %7450 = vmatprep.subr.bf16.mxu0 0
    %7451 = vmatpush2.bf16.msra.mxu0 %v7412
    %7452 = vmatprep.subr.bf16.mxu0 0
    %7453 = vmatpush2.bf16.msra.mxu0 %v7411
    %7454 = vmatprep.subr.bf16.mxu0 0
    %7455 = vmatpush2.bf16.msra.mxu0 %v7410
    %7456 = vmatprep.subr.bf16.mxu0 0
    %7457 = vmatpush2.bf16.msra.mxu0 %v7409
    %7458 = vmatprep.subr.bf16.mxu0 0
    %7459 = vmatpush2.bf16.msra.mxu0 %v7408
    %7460 = vmatprep.subr.bf16.mxu0 0
    %7461 = vmatpush2.bf16.msra.mxu0 %v7407
    %7462 = vmatprep.mubr.bf16.mxu0 %v7428
    %7463 = vmatmul.mubr.bf16.gmra.mxu0 %v7313
    %v7464 = vpop.f32.mrf.mxu0
    %v7465 = vadd.f32 0.0, %v7464
    %v7466 = vpop.f32.mrf.mxu0
    %v7467 = vpop.f32.mrf.mxu0
    %v7468 = vpop.f32.mrf.mxu0
    %7469 = vdwg.mxu0
    %v7470 = vadd.f32 %v7267, %v7465
    %v7471 = vld [vmem:[%s2210] sm:$0x1]
    %v7473 = vsel %vm1384, %v7471, 0
    %7475 = vmatprep.subr.bf16.mxu0 0
    %7476 = vmatpush1.bf16.msra.mxu0 0
    %7477 = vmatprep.subr.bf16.mxu0 0
    %7478 = vmatpush1.bf16.msra.mxu0 0
    %7479 = vmatprep.subr.bf16.mxu0 0
    %7480 = vmatpush1.bf16.msra.mxu0 0
    %7481 = vmatprep.subr.bf16.mxu0 0
    %7482 = vmatpush1.bf16.msra.mxu0 0
    %7483 = vmatprep.subr.bf16.mxu0 0
    %7484 = vmatpush1.bf16.msra.mxu0 0
    %7485 = vmatprep.subr.bf16.mxu0 0
    %7486 = vmatpush1.bf16.msra.mxu0 0
    %7487 = vmatprep.subr.bf16.mxu0 0
    %7488 = vmatpush1.bf16.msra.mxu0 0
    %7489 = vmatprep.subr.bf16.mxu0 %v6663
    %7490 = vmatpush1.bf16.msra.mxu0 %v6660
    %7491 = vmatprep.subr.bf16.mxu0 0
    %7492 = vmatpush2.bf16.msra.mxu0 0
    %7493 = vmatprep.subr.bf16.mxu0 0
    %7494 = vmatpush2.bf16.msra.mxu0 0
    %7495 = vmatprep.subr.bf16.mxu0 0
    %7496 = vmatpush2.bf16.msra.mxu0 0
    %7497 = vmatprep.subr.bf16.mxu0 0
    %7498 = vmatpush2.bf16.msra.mxu0 0
    %7499 = vmatprep.subr.bf16.mxu0 0
    %7500 = vmatpush2.bf16.msra.mxu0 0
    %7501 = vmatprep.subr.bf16.mxu0 0
    %7502 = vmatpush2.bf16.msra.mxu0 0
    %7503 = vmatprep.subr.bf16.mxu0 0
    %7504 = vmatpush2.bf16.msra.mxu0 0
    %7505 = vmatprep.subr.bf16.mxu0 0
    %7506 = vmatpush2.bf16.msra.mxu0 0
    %7507 = vmatprep.mubr.bf16.mxu0 0
    %7508 = vmatmul.mubr.bf16.gmra.mxu0 %v7473
    %v7509 = vpop.f32.mrf.mxu0
    %v7510 = vadd.f32 0.0, %v7509
    %v7511 = vpop.f32.mrf.mxu0
    %v7512 = vadd.f32 0.0, %v7511
    %v7513 = vpop.f32.mrf.mxu0
    %v7514 = vpop.f32.mrf.mxu0
    %7515 = vdwg.mxu0
    %v7516 = vpack.c.bf16 %v7510, %v7510
    %v7517 = vpack.c.bf16 %v7512, %v7512
    %v7518 = vld [vmem:[%s2258] sm:$0xf]
    %v7519 = vld [vmem:[%s2258 + $0x4] sm:$0xf]
    %v7520 = vld [vmem:[%s2258 + $0x8] sm:$0xf]
    %v7521 = vld [vmem:[%s2258 + $0xc] sm:$0xf]
    %v7522 = vld [vmem:[%s2258 + $0x10] sm:$0xf]
    %v7523 = vld [vmem:[%s2258 + $0x14] sm:$0xf]
    %v7524 = vld [vmem:[%s2258 + $0x18] sm:$0xf]
    %v7525 = vld [vmem:[%s2258 + $0x1c] sm:$0xf]
    %v7526 = vld [vmem:[%s2258 + $0x20] sm:$0xf]
    %v7527 = vld [vmem:[%s2258 + $0x24] sm:$0xf]
    %v7528 = vld [vmem:[%s2258 + $0x28] sm:$0xf]
    %v7529 = vld [vmem:[%s2258 + $0x2c] sm:$0xf]
    %v7530 = vld [vmem:[%s2258 + $0x30] sm:$0xf]
    %v7531 = vld [vmem:[%s2258 + $0x34] sm:$0xf]
    %v7532 = vld [vmem:[%s2258 + $0x38] sm:$0xf]
    %v7533 = vld [vmem:[%s2258 + $0x3c] sm:$0xf]
    %v7534 = vld [vmem:[%s2258 + $0x40] sm:$0xf]
    %v7535 = vld [vmem:[%s2258 + $0x44] sm:$0xf]
    %v7536 = vld [vmem:[%s2258 + $0x48] sm:$0xf]
    %v7537 = vld [vmem:[%s2258 + $0x4c] sm:$0xf]
    %v7538 = vld [vmem:[%s2258 + $0x50] sm:$0xf]
    %v7539 = vld [vmem:[%s2258 + $0x54] sm:$0xf]
    %v7540 = vld [vmem:[%s2258 + $0x58] sm:$0xf]
    %v7541 = vld [vmem:[%s2258 + $0x5c] sm:$0xf]
    %v7542 = vld [vmem:[%s2258 + $0x60] sm:$0xf]
    %v7543 = vld [vmem:[%s2258 + $0x64] sm:$0xf]
    %v7544 = vld [vmem:[%s2258 + $0x68] sm:$0xf]
    %v7545 = vld [vmem:[%s2258 + $0x6c] sm:$0xf]
    %v7574 = vunpack.c.l.b16 %v7518
    %v7575 = vunpack.c.l.b16 %v7519
    %v7576 = vunpack.c.l.b16 %v7520
    %v7577 = vunpack.c.l.b16 %v7521
    %v7578 = vunpack.c.l.b16 %v7522
    %v7579 = vunpack.c.l.b16 %v7523
    %v7580 = vunpack.c.l.b16 %v7524
    %v7581 = vunpack.c.l.b16 %v7525
    %v7582 = vunpack.c.l.b16 %v7526
    %v7583 = vunpack.c.l.b16 %v7527
    %v7584 = vunpack.c.l.b16 %v7528
    %v7585 = vunpack.c.l.b16 %v7529
    %v7586 = vunpack.c.l.b16 %v7530
    %v7587 = vunpack.c.l.b16 %v7531
    %v7588 = vunpack.c.l.b16 %v7532
    %v7589 = vunpack.c.l.b16 %v7533
    %v7590 = vunpack.c.l.b16 %v7534
    %v7591 = vunpack.c.l.b16 %v7535
    %v7592 = vunpack.c.l.b16 %v7536
    %v7593 = vunpack.c.l.b16 %v7537
    %v7594 = vunpack.c.l.b16 %v7538
    %v7595 = vunpack.c.l.b16 %v7539
    %v7596 = vunpack.c.l.b16 %v7540
    %v7597 = vunpack.c.l.b16 %v7541
    %v7598 = vunpack.c.l.b16 %v7542
    %v7599 = vunpack.c.l.b16 %v7543
    %v7600 = vunpack.c.l.b16 %v7544
    %v7601 = vunpack.c.l.b16 %v7545
    %v7602 = vpack.c.b16 %v7575, %v7574
    %v7603 = vpack.c.b16 %v7577, %v7576
    %v7604 = vpack.c.b16 %v7579, %v7578
    %v7605 = vpack.c.b16 %v7581, %v7580
    %v7606 = vpack.c.b16 %v7583, %v7582
    %v7607 = vpack.c.b16 %v7585, %v7584
    %v7608 = vpack.c.b16 %v7587, %v7586
    %v7609 = vpack.c.b16 %v7589, %v7588
    %v7610 = vpack.c.b16 %v7591, %v7590
    %v7611 = vpack.c.b16 %v7593, %v7592
    %v7612 = vpack.c.b16 %v7595, %v7594
    %v7613 = vpack.c.b16 %v7597, %v7596
    %v7614 = vpack.c.b16 %v7599, %v7598
    %v7615 = vpack.c.b16 %v7601, %v7600
    %v7631 = vsel %vm873, %v7517, 0
    %7633 = vmatprep.subr.bf16.mxu0 0
    %7634 = vmatpush1.bf16.msra.mxu0 %v7609
    %7635 = vmatprep.subr.bf16.mxu0 0
    %7636 = vmatpush1.bf16.msra.mxu0 %v7608
    %7637 = vmatprep.subr.bf16.mxu0 0
    %7638 = vmatpush1.bf16.msra.mxu0 %v7607
    %7639 = vmatprep.subr.bf16.mxu0 0
    %7640 = vmatpush1.bf16.msra.mxu0 %v7606
    %7641 = vmatprep.subr.bf16.mxu0 0
    %7642 = vmatpush1.bf16.msra.mxu0 %v7605
    %7643 = vmatprep.subr.bf16.mxu0 0
    %7644 = vmatpush1.bf16.msra.mxu0 %v7604
    %7645 = vmatprep.subr.bf16.mxu0 0
    %7646 = vmatpush1.bf16.msra.mxu0 %v7603
    %7647 = vmatprep.subr.bf16.mxu0 0
    %7648 = vmatpush1.bf16.msra.mxu0 %v7602
    %7649 = vmatprep.subr.bf16.mxu0 0
    %7650 = vmatpush2.bf16.msra.mxu0 0
    %7651 = vmatprep.subr.bf16.mxu0 0
    %7652 = vmatpush2.bf16.msra.mxu0 0
    %7653 = vmatprep.subr.bf16.mxu0 0
    %7654 = vmatpush2.bf16.msra.mxu0 %v7615
    %7655 = vmatprep.subr.bf16.mxu0 0
    %7656 = vmatpush2.bf16.msra.mxu0 %v7614
    %7657 = vmatprep.subr.bf16.mxu0 0
    %7658 = vmatpush2.bf16.msra.mxu0 %v7613
    %7659 = vmatprep.subr.bf16.mxu0 0
    %7660 = vmatpush2.bf16.msra.mxu0 %v7612
    %7661 = vmatprep.subr.bf16.mxu0 0
    %7662 = vmatpush2.bf16.msra.mxu0 %v7611
    %7663 = vmatprep.subr.bf16.mxu0 0
    %7664 = vmatpush2.bf16.msra.mxu0 %v7610
    %7665 = vmatprep.mubr.bf16.mxu0 %v7631
    %7666 = vmatmul.mubr.bf16.gmra.mxu0 %v7516
    %v7667 = vpop.f32.mrf.mxu0
    %v7668 = vadd.f32 0.0, %v7667
    %v7669 = vpop.f32.mrf.mxu0
    %v7670 = vpop.f32.mrf.mxu0
    %v7671 = vpop.f32.mrf.mxu0
    %7672 = vdwg.mxu0
    %v7673 = vadd.f32 %v7470, %v7668
    %v7674 = vld [vmem:[%s2415] sm:$0x1]
    %v7676 = vsel %vm1384, %v7674, 0
    %7678 = vmatprep.subr.bf16.mxu0 0
    %7679 = vmatpush1.bf16.msra.mxu0 0
    %7680 = vmatprep.subr.bf16.mxu0 0
    %7681 = vmatpush1.bf16.msra.mxu0 0
    %7682 = vmatprep.subr.bf16.mxu0 0
    %7683 = vmatpush1.bf16.msra.mxu0 0
    %7684 = vmatprep.subr.bf16.mxu0 0
    %7685 = vmatpush1.bf16.msra.mxu0 0
    %7686 = vmatprep.subr.bf16.mxu0 0
    %7687 = vmatpush1.bf16.msra.mxu0 0
    %7688 = vmatprep.subr.bf16.mxu0 0
    %7689 = vmatpush1.bf16.msra.mxu0 0
    %7690 = vmatprep.subr.bf16.mxu0 0
    %7691 = vmatpush1.bf16.msra.mxu0 0
    %7692 = vmatprep.subr.bf16.mxu0 %v6663
    %7693 = vmatpush1.bf16.msra.mxu0 %v6660
    %7694 = vmatprep.subr.bf16.mxu0 0
    %7695 = vmatpush2.bf16.msra.mxu0 0
    %7696 = vmatprep.subr.bf16.mxu0 0
    %7697 = vmatpush2.bf16.msra.mxu0 0
    %7698 = vmatprep.subr.bf16.mxu0 0
    %7699 = vmatpush2.bf16.msra.mxu0 0
    %7700 = vmatprep.subr.bf16.mxu0 0
    %7701 = vmatpush2.bf16.msra.mxu0 0
    %7702 = vmatprep.subr.bf16.mxu0 0
    %7703 = vmatpush2.bf16.msra.mxu0 0
    %7704 = vmatprep.subr.bf16.mxu0 0
    %7705 = vmatpush2.bf16.msra.mxu0 0
    %7706 = vmatprep.subr.bf16.mxu0 0
    %7707 = vmatpush2.bf16.msra.mxu0 0
    %7708 = vmatprep.subr.bf16.mxu0 0
    %7709 = vmatpush2.bf16.msra.mxu0 0
    %7710 = vmatprep.mubr.bf16.mxu0 0
    %7711 = vmatmul.mubr.bf16.gmra.mxu0 %v7676
    %v7712 = vpop.f32.mrf.mxu0
    %v7713 = vadd.f32 0.0, %v7712
    %v7714 = vpop.f32.mrf.mxu0
    %v7715 = vadd.f32 0.0, %v7714
    %v7716 = vpop.f32.mrf.mxu0
    %v7717 = vpop.f32.mrf.mxu0
    %7718 = vdwg.mxu0
    %v7719 = vpack.c.bf16 %v7713, %v7713
    %v7720 = vpack.c.bf16 %v7715, %v7715
    %v7721 = vld [vmem:[%s2463] sm:$0xf]
    %v7722 = vld [vmem:[%s2463 + $0x4] sm:$0xf]
    %v7723 = vld [vmem:[%s2463 + $0x8] sm:$0xf]
    %v7724 = vld [vmem:[%s2463 + $0xc] sm:$0xf]
    %v7725 = vld [vmem:[%s2463 + $0x10] sm:$0xf]
    %v7726 = vld [vmem:[%s2463 + $0x14] sm:$0xf]
    %v7727 = vld [vmem:[%s2463 + $0x18] sm:$0xf]
    %v7728 = vld [vmem:[%s2463 + $0x1c] sm:$0xf]
    %v7729 = vld [vmem:[%s2463 + $0x20] sm:$0xf]
    %v7730 = vld [vmem:[%s2463 + $0x24] sm:$0xf]
    %v7731 = vld [vmem:[%s2463 + $0x28] sm:$0xf]
    %v7732 = vld [vmem:[%s2463 + $0x2c] sm:$0xf]
    %v7733 = vld [vmem:[%s2463 + $0x30] sm:$0xf]
    %v7734 = vld [vmem:[%s2463 + $0x34] sm:$0xf]
    %v7735 = vld [vmem:[%s2463 + $0x38] sm:$0xf]
    %v7736 = vld [vmem:[%s2463 + $0x3c] sm:$0xf]
    %v7737 = vld [vmem:[%s2463 + $0x40] sm:$0xf]
    %v7738 = vld [vmem:[%s2463 + $0x44] sm:$0xf]
    %v7739 = vld [vmem:[%s2463 + $0x48] sm:$0xf]
    %v7740 = vld [vmem:[%s2463 + $0x4c] sm:$0xf]
    %v7741 = vld [vmem:[%s2463 + $0x50] sm:$0xf]
    %v7742 = vld [vmem:[%s2463 + $0x54] sm:$0xf]
    %v7743 = vld [vmem:[%s2463 + $0x58] sm:$0xf]
    %v7744 = vld [vmem:[%s2463 + $0x5c] sm:$0xf]
    %v7745 = vld [vmem:[%s2463 + $0x60] sm:$0xf]
    %v7746 = vld [vmem:[%s2463 + $0x64] sm:$0xf]
    %v7747 = vld [vmem:[%s2463 + $0x68] sm:$0xf]
    %v7748 = vld [vmem:[%s2463 + $0x6c] sm:$0xf]
    %v7777 = vunpack.c.l.b16 %v7721
    %v7778 = vunpack.c.l.b16 %v7722
    %v7779 = vunpack.c.l.b16 %v7723
    %v7780 = vunpack.c.l.b16 %v7724
    %v7781 = vunpack.c.l.b16 %v7725
    %v7782 = vunpack.c.l.b16 %v7726
    %v7783 = vunpack.c.l.b16 %v7727
    %v7784 = vunpack.c.l.b16 %v7728
    %v7785 = vunpack.c.l.b16 %v7729
    %v7786 = vunpack.c.l.b16 %v7730
    %v7787 = vunpack.c.l.b16 %v7731
    %v7788 = vunpack.c.l.b16 %v7732
    %v7789 = vunpack.c.l.b16 %v7733
    %v7790 = vunpack.c.l.b16 %v7734
    %v7791 = vunpack.c.l.b16 %v7735
    %v7792 = vunpack.c.l.b16 %v7736
    %v7793 = vunpack.c.l.b16 %v7737
    %v7794 = vunpack.c.l.b16 %v7738
    %v7795 = vunpack.c.l.b16 %v7739
    %v7796 = vunpack.c.l.b16 %v7740
    %v7797 = vunpack.c.l.b16 %v7741
    %v7798 = vunpack.c.l.b16 %v7742
    %v7799 = vunpack.c.l.b16 %v7743
    %v7800 = vunpack.c.l.b16 %v7744
    %v7801 = vunpack.c.l.b16 %v7745
    %v7802 = vunpack.c.l.b16 %v7746
    %v7803 = vunpack.c.l.b16 %v7747
    %v7804 = vunpack.c.l.b16 %v7748
    %v7805 = vpack.c.b16 %v7778, %v7777
    %v7806 = vpack.c.b16 %v7780, %v7779
    %v7807 = vpack.c.b16 %v7782, %v7781
    %v7808 = vpack.c.b16 %v7784, %v7783
    %v7809 = vpack.c.b16 %v7786, %v7785
    %v7810 = vpack.c.b16 %v7788, %v7787
    %v7811 = vpack.c.b16 %v7790, %v7789
    %v7812 = vpack.c.b16 %v7792, %v7791
    %v7813 = vpack.c.b16 %v7794, %v7793
    %v7814 = vpack.c.b16 %v7796, %v7795
    %v7815 = vpack.c.b16 %v7798, %v7797
    %v7816 = vpack.c.b16 %v7800, %v7799
    %v7817 = vpack.c.b16 %v7802, %v7801
    %v7818 = vpack.c.b16 %v7804, %v7803
    %v7834 = vsel %vm873, %v7720, 0
    %7836 = vmatprep.subr.bf16.mxu0 0
    %7837 = vmatpush1.bf16.msra.mxu0 %v7812
    %7838 = vmatprep.subr.bf16.mxu0 0
    %7839 = vmatpush1.bf16.msra.mxu0 %v7811
    %7840 = vmatprep.subr.bf16.mxu0 0
    %7841 = vmatpush1.bf16.msra.mxu0 %v7810
    %7842 = vmatprep.subr.bf16.mxu0 0
    %7843 = vmatpush1.bf16.msra.mxu0 %v7809
    %7844 = vmatprep.subr.bf16.mxu0 0
    %7845 = vmatpush1.bf16.msra.mxu0 %v7808
    %7846 = vmatprep.subr.bf16.mxu0 0
    %7847 = vmatpush1.bf16.msra.mxu0 %v7807
    %7848 = vmatprep.subr.bf16.mxu0 0
    %7849 = vmatpush1.bf16.msra.mxu0 %v7806
    %7850 = vmatprep.subr.bf16.mxu0 0
    %7851 = vmatpush1.bf16.msra.mxu0 %v7805
    %7852 = vmatprep.subr.bf16.mxu0 0
    %7853 = vmatpush2.bf16.msra.mxu0 0
    %7854 = vmatprep.subr.bf16.mxu0 0
    %7855 = vmatpush2.bf16.msra.mxu0 0
    %7856 = vmatprep.subr.bf16.mxu0 0
    %7857 = vmatpush2.bf16.msra.mxu0 %v7818
    %7858 = vmatprep.subr.bf16.mxu0 0
    %7859 = vmatpush2.bf16.msra.mxu0 %v7817
    %7860 = vmatprep.subr.bf16.mxu0 0
    %7861 = vmatpush2.bf16.msra.mxu0 %v7816
    %7862 = vmatprep.subr.bf16.mxu0 0
    %7863 = vmatpush2.bf16.msra.mxu0 %v7815
    %7864 = vmatprep.subr.bf16.mxu0 0
    %7865 = vmatpush2.bf16.msra.mxu0 %v7814
    %7866 = vmatprep.subr.bf16.mxu0 0
    %7867 = vmatpush2.bf16.msra.mxu0 %v7813
    %7868 = vmatprep.mubr.bf16.mxu0 %v7834
    %7869 = vmatmul.mubr.bf16.gmra.mxu0 %v7719
    %v7870 = vpop.f32.mrf.mxu0
    %v7871 = vadd.f32 0.0, %v7870
    %v7872 = vpop.f32.mrf.mxu0
    %v7873 = vpop.f32.mrf.mxu0
    %v7874 = vpop.f32.mrf.mxu0
    %7875 = vdwg.mxu0
    %v7876 = vadd.f32 %v7673, %v7871
    %v7877 = vld [vmem:[%s2620] sm:$0x1]
    %v7879 = vsel %vm1384, %v7877, 0
    %7881 = vmatprep.subr.bf16.mxu0 0
    %7882 = vmatpush1.bf16.msra.mxu0 0
    %7883 = vmatprep.subr.bf16.mxu0 0
    %7884 = vmatpush1.bf16.msra.mxu0 0
    %7885 = vmatprep.subr.bf16.mxu0 0
    %7886 = vmatpush1.bf16.msra.mxu0 0
    %7887 = vmatprep.subr.bf16.mxu0 0
    %7888 = vmatpush1.bf16.msra.mxu0 0
    %7889 = vmatprep.subr.bf16.mxu0 0
    %7890 = vmatpush1.bf16.msra.mxu0 0
    %7891 = vmatprep.subr.bf16.mxu0 0
    %7892 = vmatpush1.bf16.msra.mxu0 0
    %7893 = vmatprep.subr.bf16.mxu0 0
    %7894 = vmatpush1.bf16.msra.mxu0 0
    %7895 = vmatprep.subr.bf16.mxu0 %v6663
    %7896 = vmatpush1.bf16.msra.mxu0 %v6660
    %7897 = vmatprep.subr.bf16.mxu0 0
    %7898 = vmatpush2.bf16.msra.mxu0 0
    %7899 = vmatprep.subr.bf16.mxu0 0
    %7900 = vmatpush2.bf16.msra.mxu0 0
    %7901 = vmatprep.subr.bf16.mxu0 0
    %7902 = vmatpush2.bf16.msra.mxu0 0
    %7903 = vmatprep.subr.bf16.mxu0 0
    %7904 = vmatpush2.bf16.msra.mxu0 0
    %7905 = vmatprep.subr.bf16.mxu0 0
    %7906 = vmatpush2.bf16.msra.mxu0 0
    %7907 = vmatprep.subr.bf16.mxu0 0
    %7908 = vmatpush2.bf16.msra.mxu0 0
    %7909 = vmatprep.subr.bf16.mxu0 0
    %7910 = vmatpush2.bf16.msra.mxu0 0
    %7911 = vmatprep.subr.bf16.mxu0 0
    %7912 = vmatpush2.bf16.msra.mxu0 0
    %7913 = vmatprep.mubr.bf16.mxu0 0
    %7914 = vmatmul.mubr.bf16.gmra.mxu0 %v7879
    %v7915 = vpop.f32.mrf.mxu0
    %v7916 = vadd.f32 0.0, %v7915
    %v7917 = vpop.f32.mrf.mxu0
    %v7918 = vadd.f32 0.0, %v7917
    %v7919 = vpop.f32.mrf.mxu0
    %v7920 = vpop.f32.mrf.mxu0
    %7921 = vdwg.mxu0
    %v7922 = vpack.c.bf16 %v7916, %v7916
    %v7923 = vpack.c.bf16 %v7918, %v7918
    %v7924 = vld [vmem:[%s2668] sm:$0xf]
    %v7925 = vld [vmem:[%s2668 + $0x4] sm:$0xf]
    %v7926 = vld [vmem:[%s2668 + $0x8] sm:$0xf]
    %v7927 = vld [vmem:[%s2668 + $0xc] sm:$0xf]
    %v7928 = vld [vmem:[%s2668 + $0x10] sm:$0xf]
    %v7929 = vld [vmem:[%s2668 + $0x14] sm:$0xf]
    %v7930 = vld [vmem:[%s2668 + $0x18] sm:$0xf]
    %v7931 = vld [vmem:[%s2668 + $0x1c] sm:$0xf]
    %v7932 = vld [vmem:[%s2668 + $0x20] sm:$0xf]
    %v7933 = vld [vmem:[%s2668 + $0x24] sm:$0xf]
    %v7934 = vld [vmem:[%s2668 + $0x28] sm:$0xf]
    %v7935 = vld [vmem:[%s2668 + $0x2c] sm:$0xf]
    %v7936 = vld [vmem:[%s2668 + $0x30] sm:$0xf]
    %v7937 = vld [vmem:[%s2668 + $0x34] sm:$0xf]
    %v7938 = vld [vmem:[%s2668 + $0x38] sm:$0xf]
    %v7939 = vld [vmem:[%s2668 + $0x3c] sm:$0xf]
    %v7940 = vld [vmem:[%s2668 + $0x40] sm:$0xf]
    %v7941 = vld [vmem:[%s2668 + $0x44] sm:$0xf]
    %v7942 = vld [vmem:[%s2668 + $0x48] sm:$0xf]
    %v7943 = vld [vmem:[%s2668 + $0x4c] sm:$0xf]
    %v7944 = vld [vmem:[%s2668 + $0x50] sm:$0xf]
    %v7945 = vld [vmem:[%s2668 + $0x54] sm:$0xf]
    %v7946 = vld [vmem:[%s2668 + $0x58] sm:$0xf]
    %v7947 = vld [vmem:[%s2668 + $0x5c] sm:$0xf]
    %v7948 = vld [vmem:[%s2668 + $0x60] sm:$0xf]
    %v7949 = vld [vmem:[%s2668 + $0x64] sm:$0xf]
    %v7950 = vld [vmem:[%s2668 + $0x68] sm:$0xf]
    %v7951 = vld [vmem:[%s2668 + $0x6c] sm:$0xf]
    %v7980 = vunpack.c.l.b16 %v7924
    %v7981 = vunpack.c.l.b16 %v7925
    %v7982 = vunpack.c.l.b16 %v7926
    %v7983 = vunpack.c.l.b16 %v7927
    %v7984 = vunpack.c.l.b16 %v7928
    %v7985 = vunpack.c.l.b16 %v7929
    %v7986 = vunpack.c.l.b16 %v7930
    %v7987 = vunpack.c.l.b16 %v7931
    %v7988 = vunpack.c.l.b16 %v7932
    %v7989 = vunpack.c.l.b16 %v7933
    %v7990 = vunpack.c.l.b16 %v7934
    %v7991 = vunpack.c.l.b16 %v7935
    %v7992 = vunpack.c.l.b16 %v7936
    %v7993 = vunpack.c.l.b16 %v7937
    %v7994 = vunpack.c.l.b16 %v7938
    %v7995 = vunpack.c.l.b16 %v7939
    %v7996 = vunpack.c.l.b16 %v7940
    %v7997 = vunpack.c.l.b16 %v7941
    %v7998 = vunpack.c.l.b16 %v7942
    %v7999 = vunpack.c.l.b16 %v7943
    %v8000 = vunpack.c.l.b16 %v7944
    %v8001 = vunpack.c.l.b16 %v7945
    %v8002 = vunpack.c.l.b16 %v7946
    %v8003 = vunpack.c.l.b16 %v7947
    %v8004 = vunpack.c.l.b16 %v7948
    %v8005 = vunpack.c.l.b16 %v7949
    %v8006 = vunpack.c.l.b16 %v7950
    %v8007 = vunpack.c.l.b16 %v7951
    %v8008 = vpack.c.b16 %v7981, %v7980
    %v8009 = vpack.c.b16 %v7983, %v7982
    %v8010 = vpack.c.b16 %v7985, %v7984
    %v8011 = vpack.c.b16 %v7987, %v7986
    %v8012 = vpack.c.b16 %v7989, %v7988
    %v8013 = vpack.c.b16 %v7991, %v7990
    %v8014 = vpack.c.b16 %v7993, %v7992
    %v8015 = vpack.c.b16 %v7995, %v7994
    %v8016 = vpack.c.b16 %v7997, %v7996
    %v8017 = vpack.c.b16 %v7999, %v7998
    %v8018 = vpack.c.b16 %v8001, %v8000
    %v8019 = vpack.c.b16 %v8003, %v8002
    %v8020 = vpack.c.b16 %v8005, %v8004
    %v8021 = vpack.c.b16 %v8007, %v8006
    %v8037 = vsel %vm873, %v7923, 0
    %8039 = vmatprep.subr.bf16.mxu0 0
    %8040 = vmatpush1.bf16.msra.mxu0 %v8015
    %8041 = vmatprep.subr.bf16.mxu0 0
    %8042 = vmatpush1.bf16.msra.mxu0 %v8014
    %8043 = vmatprep.subr.bf16.mxu0 0
    %8044 = vmatpush1.bf16.msra.mxu0 %v8013
    %8045 = vmatprep.subr.bf16.mxu0 0
    %8046 = vmatpush1.bf16.msra.mxu0 %v8012
    %8047 = vmatprep.subr.bf16.mxu0 0
    %8048 = vmatpush1.bf16.msra.mxu0 %v8011
    %8049 = vmatprep.subr.bf16.mxu0 0
    %8050 = vmatpush1.bf16.msra.mxu0 %v8010
    %8051 = vmatprep.subr.bf16.mxu0 0
    %8052 = vmatpush1.bf16.msra.mxu0 %v8009
    %8053 = vmatprep.subr.bf16.mxu0 0
    %8054 = vmatpush1.bf16.msra.mxu0 %v8008
    %8055 = vmatprep.subr.bf16.mxu0 0
    %8056 = vmatpush2.bf16.msra.mxu0 0
    %8057 = vmatprep.subr.bf16.mxu0 0
    %8058 = vmatpush2.bf16.msra.mxu0 0
    %8059 = vmatprep.subr.bf16.mxu0 0
    %8060 = vmatpush2.bf16.msra.mxu0 %v8021
    %8061 = vmatprep.subr.bf16.mxu0 0
    %8062 = vmatpush2.bf16.msra.mxu0 %v8020
    %8063 = vmatprep.subr.bf16.mxu0 0
    %8064 = vmatpush2.bf16.msra.mxu0 %v8019
    %8065 = vmatprep.subr.bf16.mxu0 0
    %8066 = vmatpush2.bf16.msra.mxu0 %v8018
    %8067 = vmatprep.subr.bf16.mxu0 0
    %8068 = vmatpush2.bf16.msra.mxu0 %v8017
    %8069 = vmatprep.subr.bf16.mxu0 0
    %8070 = vmatpush2.bf16.msra.mxu0 %v8016
    %8071 = vmatprep.mubr.bf16.mxu0 %v8037
    %8072 = vmatmul.mubr.bf16.gmra.mxu0 %v7922
    %v8073 = vpop.f32.mrf.mxu0
    %v8074 = vadd.f32 0.0, %v8073
    %v8075 = vpop.f32.mrf.mxu0
    %v8076 = vpop.f32.mrf.mxu0
    %v8077 = vpop.f32.mrf.mxu0
    %8078 = vdwg.mxu0
    %v8079 = vadd.f32 %v7876, %v8074
    %v8080 = vld [vmem:[%s9] sm:$0x1]
    %v8081 = vadd.f32 %v8079, %v8080
    %v8082 = vpack.c.bf16 %v8081, %v8081
    %v8083 = vld [vmem:[#allocation9] sm:$0xff]
    %v8084 = vld [vmem:[#allocation9 + $0x8] sm:$0xff]
    %v8085 = vld [vmem:[#allocation9 + $0x10] sm:$0xff]
    %v8086 = vld [vmem:[#allocation9 + $0x18] sm:$0xff]
    %v8087 = vld [vmem:[#allocation9 + $0x20] sm:$0xff]
    %v8088 = vld [vmem:[#allocation9 + $0x28] sm:$0xff]
    %v8089 = vld [vmem:[#allocation9 + $0x30] sm:$0xff]
    %v8090 = vld [vmem:[#allocation9 + $0x38] sm:$0xff]
    %v8099 = vunpack.c.l.b16 %v8083
    %v8100 = vunpack.c.h.b16 %v8083
    %v8101 = vunpack.c.l.b16 %v8084
    %v8102 = vunpack.c.h.b16 %v8084
    %v8103 = vunpack.c.l.b16 %v8085
    %v8104 = vunpack.c.h.b16 %v8085
    %v8105 = vunpack.c.l.b16 %v8086
    %v8106 = vunpack.c.h.b16 %v8086
    %v8107 = vunpack.c.l.b16 %v8087
    %v8108 = vunpack.c.h.b16 %v8087
    %v8109 = vunpack.c.l.b16 %v8088
    %v8110 = vunpack.c.h.b16 %v8088
    %v8111 = vunpack.c.l.b16 %v8089
    %v8112 = vunpack.c.h.b16 %v8089
    %v8113 = vunpack.c.l.b16 %v8090
    %v8114 = vunpack.c.h.b16 %v8090
    %v8115 = vpack.c.b16 %v8101, %v8099
    %v8116 = vpack.c.b16 %v8102, %v8100
    %v8117 = vpack.c.b16 %v8105, %v8103
    %v8118 = vpack.c.b16 %v8106, %v8104
    %v8119 = vpack.c.b16 %v8109, %v8107
    %v8120 = vpack.c.b16 %v8110, %v8108
    %v8121 = vpack.c.b16 %v8113, %v8111
    %v8122 = vpack.c.b16 %v8114, %v8112
    %v8132 = vsel %vm2876, %v8082, 0
    %8134 = vmatprep.subr.bf16.mxu0 0
    %8135 = vmatpush1.bf16.msra.mxu0 0
    %8136 = vmatprep.subr.bf16.mxu0 0
    %8137 = vmatpush1.bf16.msra.mxu0 0
    %8138 = vmatprep.subr.bf16.mxu0 0
    %8139 = vmatpush1.bf16.msra.mxu0 0
    %8140 = vmatprep.subr.bf16.mxu0 0
    %8141 = vmatpush1.bf16.msra.mxu0 0
    %8142 = vmatprep.subr.bf16.mxu0 %v8122
    %8143 = vmatpush1.bf16.msra.mxu0 %v8121
    %8144 = vmatprep.subr.bf16.mxu0 %v8120
    %8145 = vmatpush1.bf16.msra.mxu0 %v8119
    %8146 = vmatprep.subr.bf16.mxu0 %v8118
    %8147 = vmatpush1.bf16.msra.mxu0 %v8117
    %8148 = vmatprep.subr.bf16.mxu0 %v8116
    %8149 = vmatpush1.bf16.msra.mxu0 %v8115
    %8150 = vmatprep.subr.bf16.mxu0 0
    %8151 = vmatpush2.bf16.msra.mxu0 0
    %8152 = vmatprep.subr.bf16.mxu0 0
    %8153 = vmatpush2.bf16.msra.mxu0 0
    %8154 = vmatprep.subr.bf16.mxu0 0
    %8155 = vmatpush2.bf16.msra.mxu0 0
    %8156 = vmatprep.subr.bf16.mxu0 0
    %8157 = vmatpush2.bf16.msra.mxu0 0
    %8158 = vmatprep.subr.bf16.mxu0 0
    %8159 = vmatpush2.bf16.msra.mxu0 0
    %8160 = vmatprep.subr.bf16.mxu0 0
    %8161 = vmatpush2.bf16.msra.mxu0 0
    %8162 = vmatprep.subr.bf16.mxu0 0
    %8163 = vmatpush2.bf16.msra.mxu0 0
    %8164 = vmatprep.subr.bf16.mxu0 0
    %8165 = vmatpush2.bf16.msra.mxu0 0
    %8166 = vmatprep.mubr.bf16.mxu0 0
    %8167 = vmatmul.mubr.bf16.gmra.mxu0 %v8132
    %v8168 = vpop.f32.mrf.mxu0
    %v8169 = vadd.f32 0.0, %v8168
    %v8170 = vpop.f32.mrf.mxu0
    %v8171 = vadd.f32 0.0, %v8170
    %v8172 = vpop.f32.mrf.mxu0
    %v8173 = vpop.f32.mrf.mxu0
    %8174 = vdwg.mxu0
    %v8175 = vld [vmem:[%s10] sm:$0xf]
    %v8176 = vpack.c.bf16 %v8169, %v8169
    %v8177 = vpack.c.bf16 %v8171, %v8171
    %v8178 = vld [vmem:[%s2924] sm:$0xff]
    %v8179 = vld [vmem:[%s2924 + $0x8] sm:$0xff]
    %v8180 = vld [vmem:[%s2924 + $0x10] sm:$0xff]
    %v8181 = vld [vmem:[%s2924 + $0x18] sm:$0xff]
    %v8182 = vld [vmem:[%s2924 + $0x20] sm:$0xff]
    %v8183 = vld [vmem:[%s2924 + $0x28] sm:$0xff]
    %v8184 = vld [vmem:[%s2924 + $0x30] sm:$0xff]
    %v8185 = vld [vmem:[%s2924 + $0x38] sm:$0xff]
    %v8194 = vunpack.c.l.b16 %v8178
    %v8195 = vunpack.c.h.b16 %v8178
    %v8196 = vunpack.c.l.b16 %v8179
    %v8197 = vunpack.c.h.b16 %v8179
    %v8198 = vunpack.c.l.b16 %v8180
    %v8199 = vunpack.c.h.b16 %v8180
    %v8200 = vunpack.c.l.b16 %v8181
    %v8201 = vunpack.c.h.b16 %v8181
    %v8202 = vunpack.c.l.b16 %v8182
    %v8203 = vunpack.c.h.b16 %v8182
    %v8204 = vunpack.c.l.b16 %v8183
    %v8205 = vunpack.c.h.b16 %v8183
    %v8206 = vunpack.c.l.b16 %v8184
    %v8207 = vunpack.c.h.b16 %v8184
    %v8208 = vunpack.c.l.b16 %v8185
    %v8209 = vunpack.c.h.b16 %v8185
    %v8210 = vpack.c.b16 %v8196, %v8194
    %v8211 = vpack.c.b16 %v8197, %v8195
    %v8212 = vpack.c.b16 %v8200, %v8198
    %v8213 = vpack.c.b16 %v8201, %v8199
    %v8214 = vpack.c.b16 %v8204, %v8202
    %v8215 = vpack.c.b16 %v8205, %v8203
    %v8216 = vpack.c.b16 %v8208, %v8206
    %v8217 = vpack.c.b16 %v8209, %v8207
    %8226 = vmatprep.subr.bf16.mxu0 0
    %8227 = vmatpush1.bf16.msra.mxu0 0
    %8228 = vmatprep.subr.bf16.mxu0 0
    %8229 = vmatpush1.bf16.msra.mxu0 0
    %8230 = vmatprep.subr.bf16.mxu0 0
    %8231 = vmatpush1.bf16.msra.mxu0 0
    %8232 = vmatprep.subr.bf16.mxu0 0
    %8233 = vmatpush1.bf16.msra.mxu0 0
    %8234 = vmatprep.subr.bf16.mxu0 %v8217
    %8235 = vmatpush1.bf16.msra.mxu0 %v8216
    %8236 = vmatprep.subr.bf16.mxu0 %v8215
    %8237 = vmatpush1.bf16.msra.mxu0 %v8214
    %8238 = vmatprep.subr.bf16.mxu0 %v8213
    %8239 = vmatpush1.bf16.msra.mxu0 %v8212
    %8240 = vmatprep.subr.bf16.mxu0 %v8211
    %8241 = vmatpush1.bf16.msra.mxu0 %v8210
    %8242 = vmatprep.subr.bf16.mxu0 0
    %8243 = vmatpush2.bf16.msra.mxu0 0
    %8244 = vmatprep.subr.bf16.mxu0 0
    %8245 = vmatpush2.bf16.msra.mxu0 0
    %8246 = vmatprep.subr.bf16.mxu0 0
    %8247 = vmatpush2.bf16.msra.mxu0 0
    %8248 = vmatprep.subr.bf16.mxu0 0
    %8249 = vmatpush2.bf16.msra.mxu0 0
    %8250 = vmatprep.subr.bf16.mxu0 0
    %8251 = vmatpush2.bf16.msra.mxu0 0
    %8252 = vmatprep.subr.bf16.mxu0 0
    %8253 = vmatpush2.bf16.msra.mxu0 0
    %8254 = vmatprep.subr.bf16.mxu0 0
    %8255 = vmatpush2.bf16.msra.mxu0 0
    %8256 = vmatprep.subr.bf16.mxu0 0
    %8257 = vmatpush2.bf16.msra.mxu0 0
    %8258 = vmatprep.mubr.bf16.mxu0 0
    %8259 = vmatmul.mubr.bf16.gmra.mxu0 %v8132
    %v8260 = vpop.f32.mrf.mxu0
    %v8261 = vadd.f32 0.0, %v8260
    %v8262 = vpop.f32.mrf.mxu0
    %v8263 = vadd.f32 0.0, %v8262
    %v8264 = vpop.f32.mrf.mxu0
    %v8265 = vpop.f32.mrf.mxu0
    %8266 = vdwg.mxu0
    %v8267 = vld [vmem:[%s3014] sm:$0xf]
    %v8268 = vpack.c.bf16 %v8261, %v8261
    %v8269 = vpack.c.bf16 %v8263, %v8263
    %v8271 = vsel %vm3018, %v8267, 0
    %v8274 = vand.u32 %v8268, %v3024
    %v8277 = vand.u32 %v8269, %v3024
    %8279 = vmatprep.subr.bf16.mxu0 0
    %8280 = vmatpush1.bf16.msra.mxu0 0
    %8281 = vmatprep.subr.bf16.mxu0 0
    %8282 = vmatpush1.bf16.msra.mxu0 0
    %8283 = vmatprep.subr.bf16.mxu0 0
    %8284 = vmatpush1.bf16.msra.mxu0 0
    %8285 = vmatprep.subr.bf16.mxu0 0
    %8286 = vmatpush1.bf16.msra.mxu0 0
    %8287 = vmatprep.subr.bf16.mxu0 0
    %8288 = vmatpush1.bf16.msra.mxu0 0
    %8289 = vmatprep.subr.bf16.mxu0 0
    %8290 = vmatpush1.bf16.msra.mxu0 0
    %8291 = vmatprep.subr.bf16.mxu0 0
    %8292 = vmatpush1.bf16.msra.mxu0 0
    %8293 = vmatprep.subr.bf16.mxu0 %v8277
    %8294 = vmatpush1.bf16.msra.mxu0 %v8274
    %8295 = vmatprep.subr.bf16.mxu0 0
    %8296 = vmatpush2.bf16.msra.mxu0 0
    %8297 = vmatprep.subr.bf16.mxu0 0
    %8298 = vmatpush2.bf16.msra.mxu0 0
    %8299 = vmatprep.subr.bf16.mxu0 0
    %8300 = vmatpush2.bf16.msra.mxu0 0
    %8301 = vmatprep.subr.bf16.mxu0 0
    %8302 = vmatpush2.bf16.msra.mxu0 0
    %8303 = vmatprep.subr.bf16.mxu0 0
    %8304 = vmatpush2.bf16.msra.mxu0 0
    %8305 = vmatprep.subr.bf16.mxu0 0
    %8306 = vmatpush2.bf16.msra.mxu0 0
    %8307 = vmatprep.subr.bf16.mxu0 0
    %8308 = vmatpush2.bf16.msra.mxu0 0
    %8309 = vmatprep.subr.bf16.mxu0 0
    %8310 = vmatpush2.bf16.msra.mxu0 0
    %8311 = vmatprep.mubr.bf16.mxu0 0
    %8312 = vmatmul.mubr.bf16.gmra.mxu0 %v8271
    %v8313 = vpop.f32.mrf.mxu0
    %v8314 = vadd.f32 0.0, %v8313
    %v8315 = vpop.f32.mrf.mxu0
    %v8316 = vadd.f32 0.0, %v8315
    %v8317 = vpop.f32.mrf.mxu0
    %v8318 = vpop.f32.mrf.mxu0
    %8319 = vdwg.mxu0
    %v8321 = vsel %vm3018, %v8175, 0
    %v8324 = vand.u32 %v8176, %v3024
    %v8327 = vand.u32 %v8177, %v3024
    %8329 = vmatprep.subr.bf16.mxu0 0
    %8330 = vmatpush1.bf16.msra.mxu0 0
    %8331 = vmatprep.subr.bf16.mxu0 0
    %8332 = vmatpush1.bf16.msra.mxu0 0
    %8333 = vmatprep.subr.bf16.mxu0 0
    %8334 = vmatpush1.bf16.msra.mxu0 0
    %8335 = vmatprep.subr.bf16.mxu0 0
    %8336 = vmatpush1.bf16.msra.mxu0 0
    %8337 = vmatprep.subr.bf16.mxu0 0
    %8338 = vmatpush1.bf16.msra.mxu0 0
    %8339 = vmatprep.subr.bf16.mxu0 0
    %8340 = vmatpush1.bf16.msra.mxu0 0
    %8341 = vmatprep.subr.bf16.mxu0 0
    %8342 = vmatpush1.bf16.msra.mxu0 0
    %8343 = vmatprep.subr.bf16.mxu0 %v8327
    %8344 = vmatpush1.bf16.msra.mxu0 %v8324
    %8345 = vmatprep.subr.bf16.mxu0 0
    %8346 = vmatpush2.bf16.msra.mxu0 0
    %8347 = vmatprep.subr.bf16.mxu0 0
    %8348 = vmatpush2.bf16.msra.mxu0 0
    %8349 = vmatprep.subr.bf16.mxu0 0
    %8350 = vmatpush2.bf16.msra.mxu0 0
    %8351 = vmatprep.subr.bf16.mxu0 0
    %8352 = vmatpush2.bf16.msra.mxu0 0
    %8353 = vmatprep.subr.bf16.mxu0 0
    %8354 = vmatpush2.bf16.msra.mxu0 0
    %8355 = vmatprep.subr.bf16.mxu0 0
    %8356 = vmatpush2.bf16.msra.mxu0 0
    %8357 = vmatprep.subr.bf16.mxu0 0
    %8358 = vmatpush2.bf16.msra.mxu0 0
    %8359 = vmatprep.subr.bf16.mxu0 0
    %8360 = vmatpush2.bf16.msra.mxu0 0
    %8361 = vmatprep.mubr.bf16.mxu0 0
    %8362 = vmatmul.mubr.bf16.gmra.mxu0 %v8321
    %v8363 = vpop.f32.mrf.mxu0
    %v8364 = vadd.f32 %v8314, %v8363
    %v8365 = vpop.f32.mrf.mxu0
    %v8366 = vadd.f32 %v8316, %v8365
    %v8367 = vpop.f32.mrf.mxu0
    %v8368 = vpop.f32.mrf.mxu0
    %8369 = vdwg.mxu0
    %v8370 = vld [vmem:[%s3122] sm:$0xff]
    %v8371 = vld [vmem:[%s3122 + $0x8] sm:$0xff]
    %v8372 = vld [vmem:[%s3122 + $0x10] sm:$0xff]
    %v8373 = vld [vmem:[%s3122 + $0x18] sm:$0xff]
    %v8374 = vld [vmem:[%s3122 + $0x20] sm:$0xff]
    %v8375 = vld [vmem:[%s3122 + $0x28] sm:$0xff]
    %v8376 = vld [vmem:[%s3122 + $0x30] sm:$0xff]
    %v8377 = vld [vmem:[%s3122 + $0x38] sm:$0xff]
    %v8386 = vunpack.c.l.b16 %v8370
    %v8387 = vunpack.c.h.b16 %v8370
    %v8388 = vunpack.c.l.b16 %v8371
    %v8389 = vunpack.c.h.b16 %v8371
    %v8390 = vunpack.c.l.b16 %v8372
    %v8391 = vunpack.c.h.b16 %v8372
    %v8392 = vunpack.c.l.b16 %v8373
    %v8393 = vunpack.c.h.b16 %v8373
    %v8394 = vunpack.c.l.b16 %v8374
    %v8395 = vunpack.c.h.b16 %v8374
    %v8396 = vunpack.c.l.b16 %v8375
    %v8397 = vunpack.c.h.b16 %v8375
    %v8398 = vunpack.c.l.b16 %v8376
    %v8399 = vunpack.c.h.b16 %v8376
    %v8400 = vunpack.c.l.b16 %v8377
    %v8401 = vunpack.c.h.b16 %v8377
    %v8402 = vpack.c.b16 %v8388, %v8386
    %v8403 = vpack.c.b16 %v8389, %v8387
    %v8404 = vpack.c.b16 %v8392, %v8390
    %v8405 = vpack.c.b16 %v8393, %v8391
    %v8406 = vpack.c.b16 %v8396, %v8394
    %v8407 = vpack.c.b16 %v8397, %v8395
    %v8408 = vpack.c.b16 %v8400, %v8398
    %v8409 = vpack.c.b16 %v8401, %v8399
    %8418 = vmatprep.subr.bf16.mxu0 0
    %8419 = vmatpush1.bf16.msra.mxu0 0
    %8420 = vmatprep.subr.bf16.mxu0 0
    %8421 = vmatpush1.bf16.msra.mxu0 0
    %8422 = vmatprep.subr.bf16.mxu0 0
    %8423 = vmatpush1.bf16.msra.mxu0 0
    %8424 = vmatprep.subr.bf16.mxu0 0
    %8425 = vmatpush1.bf16.msra.mxu0 0
    %8426 = vmatprep.subr.bf16.mxu0 %v8409
    %8427 = vmatpush1.bf16.msra.mxu0 %v8408
    %8428 = vmatprep.subr.bf16.mxu0 %v8407
    %8429 = vmatpush1.bf16.msra.mxu0 %v8406
    %8430 = vmatprep.subr.bf16.mxu0 %v8405
    %8431 = vmatpush1.bf16.msra.mxu0 %v8404
    %8432 = vmatprep.subr.bf16.mxu0 %v8403
    %8433 = vmatpush1.bf16.msra.mxu0 %v8402
    %8434 = vmatprep.subr.bf16.mxu0 0
    %8435 = vmatpush2.bf16.msra.mxu0 0
    %8436 = vmatprep.subr.bf16.mxu0 0
    %8437 = vmatpush2.bf16.msra.mxu0 0
    %8438 = vmatprep.subr.bf16.mxu0 0
    %8439 = vmatpush2.bf16.msra.mxu0 0
    %8440 = vmatprep.subr.bf16.mxu0 0
    %8441 = vmatpush2.bf16.msra.mxu0 0
    %8442 = vmatprep.subr.bf16.mxu0 0
    %8443 = vmatpush2.bf16.msra.mxu0 0
    %8444 = vmatprep.subr.bf16.mxu0 0
    %8445 = vmatpush2.bf16.msra.mxu0 0
    %8446 = vmatprep.subr.bf16.mxu0 0
    %8447 = vmatpush2.bf16.msra.mxu0 0
    %8448 = vmatprep.subr.bf16.mxu0 0
    %8449 = vmatpush2.bf16.msra.mxu0 0
    %8450 = vmatprep.mubr.bf16.mxu0 0
    %8451 = vmatmul.mubr.bf16.gmra.mxu0 %v8132
    %v8452 = vpop.f32.mrf.mxu0
    %v8453 = vadd.f32 0.0, %v8452
    %v8454 = vpop.f32.mrf.mxu0
    %v8455 = vadd.f32 0.0, %v8454
    %v8456 = vpop.f32.mrf.mxu0
    %v8457 = vpop.f32.mrf.mxu0
    %8458 = vdwg.mxu0
    %v8459 = vld [vmem:[%s3212] sm:$0xf]
    %v8460 = vpack.c.bf16 %v8453, %v8453
    %v8461 = vpack.c.bf16 %v8455, %v8455
    %v8463 = vsel %vm3018, %v8459, 0
    %v8466 = vand.u32 %v8460, %v3024
    %v8469 = vand.u32 %v8461, %v3024
    %8471 = vmatprep.subr.bf16.mxu0 0
    %8472 = vmatpush1.bf16.msra.mxu0 0
    %8473 = vmatprep.subr.bf16.mxu0 0
    %8474 = vmatpush1.bf16.msra.mxu0 0
    %8475 = vmatprep.subr.bf16.mxu0 0
    %8476 = vmatpush1.bf16.msra.mxu0 0
    %8477 = vmatprep.subr.bf16.mxu0 0
    %8478 = vmatpush1.bf16.msra.mxu0 0
    %8479 = vmatprep.subr.bf16.mxu0 0
    %8480 = vmatpush1.bf16.msra.mxu0 0
    %8481 = vmatprep.subr.bf16.mxu0 0
    %8482 = vmatpush1.bf16.msra.mxu0 0
    %8483 = vmatprep.subr.bf16.mxu0 0
    %8484 = vmatpush1.bf16.msra.mxu0 0
    %8485 = vmatprep.subr.bf16.mxu0 %v8469
    %8486 = vmatpush1.bf16.msra.mxu0 %v8466
    %8487 = vmatprep.subr.bf16.mxu0 0
    %8488 = vmatpush2.bf16.msra.mxu0 0
    %8489 = vmatprep.subr.bf16.mxu0 0
    %8490 = vmatpush2.bf16.msra.mxu0 0
    %8491 = vmatprep.subr.bf16.mxu0 0
    %8492 = vmatpush2.bf16.msra.mxu0 0
    %8493 = vmatprep.subr.bf16.mxu0 0
    %8494 = vmatpush2.bf16.msra.mxu0 0
    %8495 = vmatprep.subr.bf16.mxu0 0
    %8496 = vmatpush2.bf16.msra.mxu0 0
    %8497 = vmatprep.subr.bf16.mxu0 0
    %8498 = vmatpush2.bf16.msra.mxu0 0
    %8499 = vmatprep.subr.bf16.mxu0 0
    %8500 = vmatpush2.bf16.msra.mxu0 0
    %8501 = vmatprep.subr.bf16.mxu0 0
    %8502 = vmatpush2.bf16.msra.mxu0 0
    %8503 = vmatprep.mubr.bf16.mxu0 0
    %8504 = vmatmul.mubr.bf16.gmra.mxu0 %v8463
    %v8505 = vpop.f32.mrf.mxu0
    %v8506 = vadd.f32 0.0, %v8505
    %v8507 = vpop.f32.mrf.mxu0
    %v8508 = vadd.f32 0.0, %v8507
    %v8509 = vpop.f32.mrf.mxu0
    %v8510 = vpop.f32.mrf.mxu0
    %8511 = vdwg.mxu0
    %v8512 = vadd.f32 %v8364, %v8506
    %v8513 = vadd.f32 %v8366, %v8508
    %v8514 = vld [vmem:[%s3268] sm:$0xff]
    %v8515 = vld [vmem:[%s3268 + $0x8] sm:$0xff]
    %v8516 = vld [vmem:[%s3268 + $0x10] sm:$0xff]
    %v8517 = vld [vmem:[%s3268 + $0x18] sm:$0xff]
    %v8518 = vld [vmem:[%s3268 + $0x20] sm:$0xff]
    %v8519 = vld [vmem:[%s3268 + $0x28] sm:$0xff]
    %v8520 = vld [vmem:[%s3268 + $0x30] sm:$0xff]
    %v8521 = vld [vmem:[%s3268 + $0x38] sm:$0xff]
    %v8530 = vunpack.c.l.b16 %v8514
    %v8531 = vunpack.c.h.b16 %v8514
    %v8532 = vunpack.c.l.b16 %v8515
    %v8533 = vunpack.c.h.b16 %v8515
    %v8534 = vunpack.c.l.b16 %v8516
    %v8535 = vunpack.c.h.b16 %v8516
    %v8536 = vunpack.c.l.b16 %v8517
    %v8537 = vunpack.c.h.b16 %v8517
    %v8538 = vunpack.c.l.b16 %v8518
    %v8539 = vunpack.c.h.b16 %v8518
    %v8540 = vunpack.c.l.b16 %v8519
    %v8541 = vunpack.c.h.b16 %v8519
    %v8542 = vunpack.c.l.b16 %v8520
    %v8543 = vunpack.c.h.b16 %v8520
    %v8544 = vunpack.c.l.b16 %v8521
    %v8545 = vunpack.c.h.b16 %v8521
    %v8546 = vpack.c.b16 %v8532, %v8530
    %v8547 = vpack.c.b16 %v8533, %v8531
    %v8548 = vpack.c.b16 %v8536, %v8534
    %v8549 = vpack.c.b16 %v8537, %v8535
    %v8550 = vpack.c.b16 %v8540, %v8538
    %v8551 = vpack.c.b16 %v8541, %v8539
    %v8552 = vpack.c.b16 %v8544, %v8542
    %v8553 = vpack.c.b16 %v8545, %v8543
    %8562 = vmatprep.subr.bf16.mxu0 0
    %8563 = vmatpush1.bf16.msra.mxu0 0
    %8564 = vmatprep.subr.bf16.mxu0 0
    %8565 = vmatpush1.bf16.msra.mxu0 0
    %8566 = vmatprep.subr.bf16.mxu0 0
    %8567 = vmatpush1.bf16.msra.mxu0 0
    %8568 = vmatprep.subr.bf16.mxu0 0
    %8569 = vmatpush1.bf16.msra.mxu0 0
    %8570 = vmatprep.subr.bf16.mxu0 %v8553
    %8571 = vmatpush1.bf16.msra.mxu0 %v8552
    %8572 = vmatprep.subr.bf16.mxu0 %v8551
    %8573 = vmatpush1.bf16.msra.mxu0 %v8550
    %8574 = vmatprep.subr.bf16.mxu0 %v8549
    %8575 = vmatpush1.bf16.msra.mxu0 %v8548
    %8576 = vmatprep.subr.bf16.mxu0 %v8547
    %8577 = vmatpush1.bf16.msra.mxu0 %v8546
    %8578 = vmatprep.subr.bf16.mxu0 0
    %8579 = vmatpush2.bf16.msra.mxu0 0
    %8580 = vmatprep.subr.bf16.mxu0 0
    %8581 = vmatpush2.bf16.msra.mxu0 0
    %8582 = vmatprep.subr.bf16.mxu0 0
    %8583 = vmatpush2.bf16.msra.mxu0 0
    %8584 = vmatprep.subr.bf16.mxu0 0
    %8585 = vmatpush2.bf16.msra.mxu0 0
    %8586 = vmatprep.subr.bf16.mxu0 0
    %8587 = vmatpush2.bf16.msra.mxu0 0
    %8588 = vmatprep.subr.bf16.mxu0 0
    %8589 = vmatpush2.bf16.msra.mxu0 0
    %8590 = vmatprep.subr.bf16.mxu0 0
    %8591 = vmatpush2.bf16.msra.mxu0 0
    %8592 = vmatprep.subr.bf16.mxu0 0
    %8593 = vmatpush2.bf16.msra.mxu0 0
    %8594 = vmatprep.mubr.bf16.mxu0 0
    %8595 = vmatmul.mubr.bf16.gmra.mxu0 %v8132
    %v8596 = vpop.f32.mrf.mxu0
    %v8597 = vadd.f32 0.0, %v8596
    %v8598 = vpop.f32.mrf.mxu0
    %v8599 = vadd.f32 0.0, %v8598
    %v8600 = vpop.f32.mrf.mxu0
    %v8601 = vpop.f32.mrf.mxu0
    %8602 = vdwg.mxu0
    %v8603 = vld [vmem:[%s3358] sm:$0xf]
    %v8604 = vpack.c.bf16 %v8597, %v8597
    %v8605 = vpack.c.bf16 %v8599, %v8599
    %v8607 = vsel %vm3018, %v8603, 0
    %v8610 = vand.u32 %v8604, %v3024
    %v8613 = vand.u32 %v8605, %v3024
    %8615 = vmatprep.subr.bf16.mxu0 0
    %8616 = vmatpush1.bf16.msra.mxu0 0
    %8617 = vmatprep.subr.bf16.mxu0 0
    %8618 = vmatpush1.bf16.msra.mxu0 0
    %8619 = vmatprep.subr.bf16.mxu0 0
    %8620 = vmatpush1.bf16.msra.mxu0 0
    %8621 = vmatprep.subr.bf16.mxu0 0
    %8622 = vmatpush1.bf16.msra.mxu0 0
    %8623 = vmatprep.subr.bf16.mxu0 0
    %8624 = vmatpush1.bf16.msra.mxu0 0
    %8625 = vmatprep.subr.bf16.mxu0 0
    %8626 = vmatpush1.bf16.msra.mxu0 0
    %8627 = vmatprep.subr.bf16.mxu0 0
    %8628 = vmatpush1.bf16.msra.mxu0 0
    %8629 = vmatprep.subr.bf16.mxu0 %v8613
    %8630 = vmatpush1.bf16.msra.mxu0 %v8610
    %8631 = vmatprep.subr.bf16.mxu0 0
    %8632 = vmatpush2.bf16.msra.mxu0 0
    %8633 = vmatprep.subr.bf16.mxu0 0
    %8634 = vmatpush2.bf16.msra.mxu0 0
    %8635 = vmatprep.subr.bf16.mxu0 0
    %8636 = vmatpush2.bf16.msra.mxu0 0
    %8637 = vmatprep.subr.bf16.mxu0 0
    %8638 = vmatpush2.bf16.msra.mxu0 0
    %8639 = vmatprep.subr.bf16.mxu0 0
    %8640 = vmatpush2.bf16.msra.mxu0 0
    %8641 = vmatprep.subr.bf16.mxu0 0
    %8642 = vmatpush2.bf16.msra.mxu0 0
    %8643 = vmatprep.subr.bf16.mxu0 0
    %8644 = vmatpush2.bf16.msra.mxu0 0
    %8645 = vmatprep.subr.bf16.mxu0 0
    %8646 = vmatpush2.bf16.msra.mxu0 0
    %8647 = vmatprep.mubr.bf16.mxu0 0
    %8648 = vmatmul.mubr.bf16.gmra.mxu0 %v8607
    %v8649 = vpop.f32.mrf.mxu0
    %v8650 = vadd.f32 0.0, %v8649
    %v8651 = vpop.f32.mrf.mxu0
    %v8652 = vadd.f32 0.0, %v8651
    %v8653 = vpop.f32.mrf.mxu0
    %v8654 = vpop.f32.mrf.mxu0
    %8655 = vdwg.mxu0
    %v8656 = vadd.f32 %v8512, %v8650
    %v8657 = vadd.f32 %v8513, %v8652
    %v8658 = vld [vmem:[%s3414] sm:$0xff]
    %v8659 = vld [vmem:[%s3414 + $0x8] sm:$0xff]
    %v8660 = vld [vmem:[%s3414 + $0x10] sm:$0xff]
    %v8661 = vld [vmem:[%s3414 + $0x18] sm:$0xff]
    %v8662 = vld [vmem:[%s3414 + $0x20] sm:$0xff]
    %v8663 = vld [vmem:[%s3414 + $0x28] sm:$0xff]
    %v8664 = vld [vmem:[%s3414 + $0x30] sm:$0xff]
    %v8665 = vld [vmem:[%s3414 + $0x38] sm:$0xff]
    %v8674 = vunpack.c.l.b16 %v8658
    %v8675 = vunpack.c.h.b16 %v8658
    %v8676 = vunpack.c.l.b16 %v8659
    %v8677 = vunpack.c.h.b16 %v8659
    %v8678 = vunpack.c.l.b16 %v8660
    %v8679 = vunpack.c.h.b16 %v8660
    %v8680 = vunpack.c.l.b16 %v8661
    %v8681 = vunpack.c.h.b16 %v8661
    %v8682 = vunpack.c.l.b16 %v8662
    %v8683 = vunpack.c.h.b16 %v8662
    %v8684 = vunpack.c.l.b16 %v8663
    %v8685 = vunpack.c.h.b16 %v8663
    %v8686 = vunpack.c.l.b16 %v8664
    %v8687 = vunpack.c.h.b16 %v8664
    %v8688 = vunpack.c.l.b16 %v8665
    %v8689 = vunpack.c.h.b16 %v8665
    %v8690 = vpack.c.b16 %v8676, %v8674
    %v8691 = vpack.c.b16 %v8677, %v8675
    %v8692 = vpack.c.b16 %v8680, %v8678
    %v8693 = vpack.c.b16 %v8681, %v8679
    %v8694 = vpack.c.b16 %v8684, %v8682
    %v8695 = vpack.c.b16 %v8685, %v8683
    %v8696 = vpack.c.b16 %v8688, %v8686
    %v8697 = vpack.c.b16 %v8689, %v8687
    %8706 = vmatprep.subr.bf16.mxu0 0
    %8707 = vmatpush1.bf16.msra.mxu0 0
    %8708 = vmatprep.subr.bf16.mxu0 0
    %8709 = vmatpush1.bf16.msra.mxu0 0
    %8710 = vmatprep.subr.bf16.mxu0 0
    %8711 = vmatpush1.bf16.msra.mxu0 0
    %8712 = vmatprep.subr.bf16.mxu0 0
    %8713 = vmatpush1.bf16.msra.mxu0 0
    %8714 = vmatprep.subr.bf16.mxu0 %v8697
    %8715 = vmatpush1.bf16.msra.mxu0 %v8696
    %8716 = vmatprep.subr.bf16.mxu0 %v8695
    %8717 = vmatpush1.bf16.msra.mxu0 %v8694
    %8718 = vmatprep.subr.bf16.mxu0 %v8693
    %8719 = vmatpush1.bf16.msra.mxu0 %v8692
    %8720 = vmatprep.subr.bf16.mxu0 %v8691
    %8721 = vmatpush1.bf16.msra.mxu0 %v8690
    %8722 = vmatprep.subr.bf16.mxu0 0
    %8723 = vmatpush2.bf16.msra.mxu0 0
    %8724 = vmatprep.subr.bf16.mxu0 0
    %8725 = vmatpush2.bf16.msra.mxu0 0
    %8726 = vmatprep.subr.bf16.mxu0 0
    %8727 = vmatpush2.bf16.msra.mxu0 0
    %8728 = vmatprep.subr.bf16.mxu0 0
    %8729 = vmatpush2.bf16.msra.mxu0 0
    %8730 = vmatprep.subr.bf16.mxu0 0
    %8731 = vmatpush2.bf16.msra.mxu0 0
    %8732 = vmatprep.subr.bf16.mxu0 0
    %8733 = vmatpush2.bf16.msra.mxu0 0
    %8734 = vmatprep.subr.bf16.mxu0 0
    %8735 = vmatpush2.bf16.msra.mxu0 0
    %8736 = vmatprep.subr.bf16.mxu0 0
    %8737 = vmatpush2.bf16.msra.mxu0 0
    %8738 = vmatprep.mubr.bf16.mxu0 0
    %8739 = vmatmul.mubr.bf16.gmra.mxu0 %v8132
    %v8740 = vpop.f32.mrf.mxu0
    %v8741 = vadd.f32 0.0, %v8740
    %v8742 = vpop.f32.mrf.mxu0
    %v8743 = vadd.f32 0.0, %v8742
    %v8744 = vpop.f32.mrf.mxu0
    %v8745 = vpop.f32.mrf.mxu0
    %8746 = vdwg.mxu0
    %v8747 = vld [vmem:[%s3504] sm:$0xf]
    %v8748 = vpack.c.bf16 %v8741, %v8741
    %v8749 = vpack.c.bf16 %v8743, %v8743
    %v8751 = vsel %vm3018, %v8747, 0
    %v8754 = vand.u32 %v8748, %v3024
    %v8757 = vand.u32 %v8749, %v3024
    %8759 = vmatprep.subr.bf16.mxu0 0
    %8760 = vmatpush1.bf16.msra.mxu0 0
    %8761 = vmatprep.subr.bf16.mxu0 0
    %8762 = vmatpush1.bf16.msra.mxu0 0
    %8763 = vmatprep.subr.bf16.mxu0 0
    %8764 = vmatpush1.bf16.msra.mxu0 0
    %8765 = vmatprep.subr.bf16.mxu0 0
    %8766 = vmatpush1.bf16.msra.mxu0 0
    %8767 = vmatprep.subr.bf16.mxu0 0
    %8768 = vmatpush1.bf16.msra.mxu0 0
    %8769 = vmatprep.subr.bf16.mxu0 0
    %8770 = vmatpush1.bf16.msra.mxu0 0
    %8771 = vmatprep.subr.bf16.mxu0 0
    %8772 = vmatpush1.bf16.msra.mxu0 0
    %8773 = vmatprep.subr.bf16.mxu0 %v8757
    %8774 = vmatpush1.bf16.msra.mxu0 %v8754
    %8775 = vmatprep.subr.bf16.mxu0 0
    %8776 = vmatpush2.bf16.msra.mxu0 0
    %8777 = vmatprep.subr.bf16.mxu0 0
    %8778 = vmatpush2.bf16.msra.mxu0 0
    %8779 = vmatprep.subr.bf16.mxu0 0
    %8780 = vmatpush2.bf16.msra.mxu0 0
    %8781 = vmatprep.subr.bf16.mxu0 0
    %8782 = vmatpush2.bf16.msra.mxu0 0
    %8783 = vmatprep.subr.bf16.mxu0 0
    %8784 = vmatpush2.bf16.msra.mxu0 0
    %8785 = vmatprep.subr.bf16.mxu0 0
    %8786 = vmatpush2.bf16.msra.mxu0 0
    %8787 = vmatprep.subr.bf16.mxu0 0
    %8788 = vmatpush2.bf16.msra.mxu0 0
    %8789 = vmatprep.subr.bf16.mxu0 0
    %8790 = vmatpush2.bf16.msra.mxu0 0
    %8791 = vmatprep.mubr.bf16.mxu0 0
    %8792 = vmatmul.mubr.bf16.gmra.mxu0 %v8751
    %v8793 = vpop.f32.mrf.mxu0
    %v8794 = vadd.f32 0.0, %v8793
    %v8795 = vpop.f32.mrf.mxu0
    %v8796 = vadd.f32 0.0, %v8795
    %v8797 = vpop.f32.mrf.mxu0
    %v8798 = vpop.f32.mrf.mxu0
    %8799 = vdwg.mxu0
    %v8800 = vadd.f32 %v8656, %v8794
    %v8801 = vadd.f32 %v8657, %v8796
    %v8802 = vld [vmem:[%s3560] sm:$0xff]
    %v8803 = vld [vmem:[%s3560 + $0x8] sm:$0xff]
    %v8804 = vld [vmem:[%s3560 + $0x10] sm:$0xff]
    %v8805 = vld [vmem:[%s3560 + $0x18] sm:$0xff]
    %v8806 = vld [vmem:[%s3560 + $0x20] sm:$0xff]
    %v8807 = vld [vmem:[%s3560 + $0x28] sm:$0xff]
    %v8808 = vld [vmem:[%s3560 + $0x30] sm:$0xff]
    %v8809 = vld [vmem:[%s3560 + $0x38] sm:$0xff]
    %v8818 = vunpack.c.l.b16 %v8802
    %v8819 = vunpack.c.h.b16 %v8802
    %v8820 = vunpack.c.l.b16 %v8803
    %v8821 = vunpack.c.h.b16 %v8803
    %v8822 = vunpack.c.l.b16 %v8804
    %v8823 = vunpack.c.h.b16 %v8804
    %v8824 = vunpack.c.l.b16 %v8805
    %v8825 = vunpack.c.h.b16 %v8805
    %v8826 = vunpack.c.l.b16 %v8806
    %v8827 = vunpack.c.h.b16 %v8806
    %v8828 = vunpack.c.l.b16 %v8807
    %v8829 = vunpack.c.h.b16 %v8807
    %v8830 = vunpack.c.l.b16 %v8808
    %v8831 = vunpack.c.h.b16 %v8808
    %v8832 = vunpack.c.l.b16 %v8809
    %v8833 = vunpack.c.h.b16 %v8809
    %v8834 = vpack.c.b16 %v8820, %v8818
    %v8835 = vpack.c.b16 %v8821, %v8819
    %v8836 = vpack.c.b16 %v8824, %v8822
    %v8837 = vpack.c.b16 %v8825, %v8823
    %v8838 = vpack.c.b16 %v8828, %v8826
    %v8839 = vpack.c.b16 %v8829, %v8827
    %v8840 = vpack.c.b16 %v8832, %v8830
    %v8841 = vpack.c.b16 %v8833, %v8831
    %8850 = vmatprep.subr.bf16.mxu0 0
    %8851 = vmatpush1.bf16.msra.mxu0 0
    %8852 = vmatprep.subr.bf16.mxu0 0
    %8853 = vmatpush1.bf16.msra.mxu0 0
    %8854 = vmatprep.subr.bf16.mxu0 0
    %8855 = vmatpush1.bf16.msra.mxu0 0
    %8856 = vmatprep.subr.bf16.mxu0 0
    %8857 = vmatpush1.bf16.msra.mxu0 0
    %8858 = vmatprep.subr.bf16.mxu0 %v8841
    %8859 = vmatpush1.bf16.msra.mxu0 %v8840
    %8860 = vmatprep.subr.bf16.mxu0 %v8839
    %8861 = vmatpush1.bf16.msra.mxu0 %v8838
    %8862 = vmatprep.subr.bf16.mxu0 %v8837
    %8863 = vmatpush1.bf16.msra.mxu0 %v8836
    %8864 = vmatprep.subr.bf16.mxu0 %v8835
    %8865 = vmatpush1.bf16.msra.mxu0 %v8834
    %8866 = vmatprep.subr.bf16.mxu0 0
    %8867 = vmatpush2.bf16.msra.mxu0 0
    %8868 = vmatprep.subr.bf16.mxu0 0
    %8869 = vmatpush2.bf16.msra.mxu0 0
    %8870 = vmatprep.subr.bf16.mxu0 0
    %8871 = vmatpush2.bf16.msra.mxu0 0
    %8872 = vmatprep.subr.bf16.mxu0 0
    %8873 = vmatpush2.bf16.msra.mxu0 0
    %8874 = vmatprep.subr.bf16.mxu0 0
    %8875 = vmatpush2.bf16.msra.mxu0 0
    %8876 = vmatprep.subr.bf16.mxu0 0
    %8877 = vmatpush2.bf16.msra.mxu0 0
    %8878 = vmatprep.subr.bf16.mxu0 0
    %8879 = vmatpush2.bf16.msra.mxu0 0
    %8880 = vmatprep.subr.bf16.mxu0 0
    %8881 = vmatpush2.bf16.msra.mxu0 0
    %8882 = vmatprep.mubr.bf16.mxu0 0
    %8883 = vmatmul.mubr.bf16.gmra.mxu0 %v8132
    %v8884 = vpop.f32.mrf.mxu0
    %v8885 = vadd.f32 0.0, %v8884
    %v8886 = vpop.f32.mrf.mxu0
    %v8887 = vadd.f32 0.0, %v8886
    %v8888 = vpop.f32.mrf.mxu0
    %v8889 = vpop.f32.mrf.mxu0
    %8890 = vdwg.mxu0
    %v8891 = vld [vmem:[%s3650] sm:$0xf]
    %v8892 = vpack.c.bf16 %v8885, %v8885
    %v8893 = vpack.c.bf16 %v8887, %v8887
    %v8895 = vsel %vm3018, %v8891, 0
    %v8898 = vand.u32 %v8892, %v3024
    %v8901 = vand.u32 %v8893, %v3024
    %8903 = vmatprep.subr.bf16.mxu0 0
    %8904 = vmatpush1.bf16.msra.mxu0 0
    %8905 = vmatprep.subr.bf16.mxu0 0
    %8906 = vmatpush1.bf16.msra.mxu0 0
    %8907 = vmatprep.subr.bf16.mxu0 0
    %8908 = vmatpush1.bf16.msra.mxu0 0
    %8909 = vmatprep.subr.bf16.mxu0 0
    %8910 = vmatpush1.bf16.msra.mxu0 0
    %8911 = vmatprep.subr.bf16.mxu0 0
    %8912 = vmatpush1.bf16.msra.mxu0 0
    %8913 = vmatprep.subr.bf16.mxu0 0
    %8914 = vmatpush1.bf16.msra.mxu0 0
    %8915 = vmatprep.subr.bf16.mxu0 0
    %8916 = vmatpush1.bf16.msra.mxu0 0
    %8917 = vmatprep.subr.bf16.mxu0 %v8901
    %8918 = vmatpush1.bf16.msra.mxu0 %v8898
    %8919 = vmatprep.subr.bf16.mxu0 0
    %8920 = vmatpush2.bf16.msra.mxu0 0
    %8921 = vmatprep.subr.bf16.mxu0 0
    %8922 = vmatpush2.bf16.msra.mxu0 0
    %8923 = vmatprep.subr.bf16.mxu0 0
    %8924 = vmatpush2.bf16.msra.mxu0 0
    %8925 = vmatprep.subr.bf16.mxu0 0
    %8926 = vmatpush2.bf16.msra.mxu0 0
    %8927 = vmatprep.subr.bf16.mxu0 0
    %8928 = vmatpush2.bf16.msra.mxu0 0
    %8929 = vmatprep.subr.bf16.mxu0 0
    %8930 = vmatpush2.bf16.msra.mxu0 0
    %8931 = vmatprep.subr.bf16.mxu0 0
    %8932 = vmatpush2.bf16.msra.mxu0 0
    %8933 = vmatprep.subr.bf16.mxu0 0
    %8934 = vmatpush2.bf16.msra.mxu0 0
    %8935 = vmatprep.mubr.bf16.mxu0 0
    %8936 = vmatmul.mubr.bf16.gmra.mxu0 %v8895
    %v8937 = vpop.f32.mrf.mxu0
    %v8938 = vadd.f32 0.0, %v8937
    %v8939 = vpop.f32.mrf.mxu0
    %v8940 = vadd.f32 0.0, %v8939
    %v8941 = vpop.f32.mrf.mxu0
    %v8942 = vpop.f32.mrf.mxu0
    %8943 = vdwg.mxu0
    %v8944 = vadd.f32 %v8800, %v8938
    %v8945 = vadd.f32 %v8801, %v8940
    %v8946 = vld [vmem:[%s3706] sm:$0xff]
    %v8947 = vld [vmem:[%s3706 + $0x8] sm:$0xff]
    %v8948 = vld [vmem:[%s3706 + $0x10] sm:$0xff]
    %v8949 = vld [vmem:[%s3706 + $0x18] sm:$0xff]
    %v8950 = vld [vmem:[%s3706 + $0x20] sm:$0xff]
    %v8951 = vld [vmem:[%s3706 + $0x28] sm:$0xff]
    %v8952 = vld [vmem:[%s3706 + $0x30] sm:$0xff]
    %v8953 = vld [vmem:[%s3706 + $0x38] sm:$0xff]
    %v8962 = vunpack.c.l.b16 %v8946
    %v8963 = vunpack.c.h.b16 %v8946
    %v8964 = vunpack.c.l.b16 %v8947
    %v8965 = vunpack.c.h.b16 %v8947
    %v8966 = vunpack.c.l.b16 %v8948
    %v8967 = vunpack.c.h.b16 %v8948
    %v8968 = vunpack.c.l.b16 %v8949
    %v8969 = vunpack.c.h.b16 %v8949
    %v8970 = vunpack.c.l.b16 %v8950
    %v8971 = vunpack.c.h.b16 %v8950
    %v8972 = vunpack.c.l.b16 %v8951
    %v8973 = vunpack.c.h.b16 %v8951
    %v8974 = vunpack.c.l.b16 %v8952
    %v8975 = vunpack.c.h.b16 %v8952
    %v8976 = vunpack.c.l.b16 %v8953
    %v8977 = vunpack.c.h.b16 %v8953
    %v8978 = vpack.c.b16 %v8964, %v8962
    %v8979 = vpack.c.b16 %v8965, %v8963
    %v8980 = vpack.c.b16 %v8968, %v8966
    %v8981 = vpack.c.b16 %v8969, %v8967
    %v8982 = vpack.c.b16 %v8972, %v8970
    %v8983 = vpack.c.b16 %v8973, %v8971
    %v8984 = vpack.c.b16 %v8976, %v8974
    %v8985 = vpack.c.b16 %v8977, %v8975
    %8994 = vmatprep.subr.bf16.mxu0 0
    %8995 = vmatpush1.bf16.msra.mxu0 0
    %8996 = vmatprep.subr.bf16.mxu0 0
    %8997 = vmatpush1.bf16.msra.mxu0 0
    %8998 = vmatprep.subr.bf16.mxu0 0
    %8999 = vmatpush1.bf16.msra.mxu0 0
    %9000 = vmatprep.subr.bf16.mxu0 0
    %9001 = vmatpush1.bf16.msra.mxu0 0
    %9002 = vmatprep.subr.bf16.mxu0 %v8985
    %9003 = vmatpush1.bf16.msra.mxu0 %v8984
    %9004 = vmatprep.subr.bf16.mxu0 %v8983
    %9005 = vmatpush1.bf16.msra.mxu0 %v8982
    %9006 = vmatprep.subr.bf16.mxu0 %v8981
    %9007 = vmatpush1.bf16.msra.mxu0 %v8980
    %9008 = vmatprep.subr.bf16.mxu0 %v8979
    %9009 = vmatpush1.bf16.msra.mxu0 %v8978
    %9010 = vmatprep.subr.bf16.mxu0 0
    %9011 = vmatpush2.bf16.msra.mxu0 0
    %9012 = vmatprep.subr.bf16.mxu0 0
    %9013 = vmatpush2.bf16.msra.mxu0 0
    %9014 = vmatprep.subr.bf16.mxu0 0
    %9015 = vmatpush2.bf16.msra.mxu0 0
    %9016 = vmatprep.subr.bf16.mxu0 0
    %9017 = vmatpush2.bf16.msra.mxu0 0
    %9018 = vmatprep.subr.bf16.mxu0 0
    %9019 = vmatpush2.bf16.msra.mxu0 0
    %9020 = vmatprep.subr.bf16.mxu0 0
    %9021 = vmatpush2.bf16.msra.mxu0 0
    %9022 = vmatprep.subr.bf16.mxu0 0
    %9023 = vmatpush2.bf16.msra.mxu0 0
    %9024 = vmatprep.subr.bf16.mxu0 0
    %9025 = vmatpush2.bf16.msra.mxu0 0
    %9026 = vmatprep.mubr.bf16.mxu0 0
    %9027 = vmatmul.mubr.bf16.gmra.mxu0 %v8132
    %v9028 = vpop.f32.mrf.mxu0
    %v9029 = vadd.f32 0.0, %v9028
    %v9030 = vpop.f32.mrf.mxu0
    %v9031 = vadd.f32 0.0, %v9030
    %v9032 = vpop.f32.mrf.mxu0
    %v9033 = vpop.f32.mrf.mxu0
    %9034 = vdwg.mxu0
    %v9035 = vld [vmem:[%s3796] sm:$0xf]
    %v9036 = vpack.c.bf16 %v9029, %v9029
    %v9037 = vpack.c.bf16 %v9031, %v9031
    %v9039 = vsel %vm3018, %v9035, 0
    %v9042 = vand.u32 %v9036, %v3024
    %v9045 = vand.u32 %v9037, %v3024
    %9047 = vmatprep.subr.bf16.mxu0 0
    %9048 = vmatpush1.bf16.msra.mxu0 0
    %9049 = vmatprep.subr.bf16.mxu0 0
    %9050 = vmatpush1.bf16.msra.mxu0 0
    %9051 = vmatprep.subr.bf16.mxu0 0
    %9052 = vmatpush1.bf16.msra.mxu0 0
    %9053 = vmatprep.subr.bf16.mxu0 0
    %9054 = vmatpush1.bf16.msra.mxu0 0
    %9055 = vmatprep.subr.bf16.mxu0 0
    %9056 = vmatpush1.bf16.msra.mxu0 0
    %9057 = vmatprep.subr.bf16.mxu0 0
    %9058 = vmatpush1.bf16.msra.mxu0 0
    %9059 = vmatprep.subr.bf16.mxu0 0
    %9060 = vmatpush1.bf16.msra.mxu0 0
    %9061 = vmatprep.subr.bf16.mxu0 %v9045
    %9062 = vmatpush1.bf16.msra.mxu0 %v9042
    %9063 = vmatprep.subr.bf16.mxu0 0
    %9064 = vmatpush2.bf16.msra.mxu0 0
    %9065 = vmatprep.subr.bf16.mxu0 0
    %9066 = vmatpush2.bf16.msra.mxu0 0
    %9067 = vmatprep.subr.bf16.mxu0 0
    %9068 = vmatpush2.bf16.msra.mxu0 0
    %9069 = vmatprep.subr.bf16.mxu0 0
    %9070 = vmatpush2.bf16.msra.mxu0 0
    %9071 = vmatprep.subr.bf16.mxu0 0
    %9072 = vmatpush2.bf16.msra.mxu0 0
    %9073 = vmatprep.subr.bf16.mxu0 0
    %9074 = vmatpush2.bf16.msra.mxu0 0
    %9075 = vmatprep.subr.bf16.mxu0 0
    %9076 = vmatpush2.bf16.msra.mxu0 0
    %9077 = vmatprep.subr.bf16.mxu0 0
    %9078 = vmatpush2.bf16.msra.mxu0 0
    %9079 = vmatprep.mubr.bf16.mxu0 0
    %9080 = vmatmul.mubr.bf16.gmra.mxu0 %v9039
    %v9081 = vpop.f32.mrf.mxu0
    %v9082 = vadd.f32 0.0, %v9081
    %v9083 = vpop.f32.mrf.mxu0
    %v9084 = vadd.f32 0.0, %v9083
    %v9085 = vpop.f32.mrf.mxu0
    %v9086 = vpop.f32.mrf.mxu0
    %9087 = vdwg.mxu0
    %v9088 = vadd.f32 %v8944, %v9082
    %v9089 = vadd.f32 %v8945, %v9084
    %v9090 = vld [vmem:[%s12] sm:$0x3]
    %v9092 = vlaneseq
    %v9093 = vshrl.u32 %v9092, 7
    %v9094 = vsub.s32 0, %v9093
    %v9095 = vrot.slane %v9090, %v9094
    %v9096 = vlaneseq
    %v9097 = vshrl.u32 %v9096, 7
    %v9098 = vsub.s32 1, %v9097
    %v9099 = vrot.slane %v9090, %v9098
    %v9102 = vadd.f32 %v9088, %v9095
    %v9103 = vadd.f32 %v9089, %v9099
    %v9104 = vmax.f32 %v9102, 0.0
    %v9105 = vmax.f32 %v9103, 0.0
    %v9106 = vpack.c.bf16 %v9104, %v9104
    %v9107 = vpack.c.bf16 %v9105, %v9105
    %v9108 = vld [vmem:[#allocation10] sm:$0xff]
    %v9109 = vld [vmem:[#allocation10 + $0x8] sm:$0xff]
    %v9110 = vld [vmem:[#allocation10 + $0x10] sm:$0xff]
    %v9111 = vld [vmem:[#allocation10 + $0x18] sm:$0xff]
    %v9112 = vld [vmem:[#allocation10 + $0x20] sm:$0xff]
    %v9113 = vld [vmem:[#allocation10 + $0x28] sm:$0xff]
    %v9114 = vld [vmem:[#allocation10 + $0x30] sm:$0xff]
    %v9115 = vld [vmem:[#allocation10 + $0x38] sm:$0xff]
    %v9116 = vld [vmem:[#allocation10 + $0x40] sm:$0xff]
    %v9117 = vld [vmem:[#allocation10 + $0x48] sm:$0xff]
    %v9118 = vld [vmem:[#allocation10 + $0x50] sm:$0xff]
    %v9119 = vld [vmem:[#allocation10 + $0x58] sm:$0xff]
    %v9120 = vld [vmem:[#allocation10 + $0x60] sm:$0xff]
    %v9121 = vld [vmem:[#allocation10 + $0x68] sm:$0xff]
    %v9122 = vld [vmem:[#allocation10 + $0x70] sm:$0xff]
    %v9123 = vld [vmem:[#allocation10 + $0x78] sm:$0xff]
    %v9124 = vld [vmem:[#allocation10 + $0x80] sm:$0xff]
    %v9125 = vld [vmem:[#allocation10 + $0x88] sm:$0xff]
    %v9126 = vld [vmem:[#allocation10 + $0x90] sm:$0xff]
    %v9127 = vld [vmem:[#allocation10 + $0x98] sm:$0xff]
    %v9128 = vld [vmem:[#allocation10 + $0xa0] sm:$0xff]
    %v9129 = vld [vmem:[#allocation10 + $0xa8] sm:$0xff]
    %v9130 = vld [vmem:[#allocation10 + $0xb0] sm:$0xff]
    %v9131 = vld [vmem:[#allocation10 + $0xb8] sm:$0xff]
    %v9132 = vld [vmem:[#allocation10 + $0xc0] sm:$0xff]
    %v9133 = vld [vmem:[#allocation10 + $0xc8] sm:$0xff]
    %v9134 = vld [vmem:[#allocation10 + $0xd0] sm:$0xff]
    %v9135 = vld [vmem:[#allocation10 + $0xd8] sm:$0xff]
    %v9164 = vunpack.c.l.b16 %v9108
    %v9165 = vunpack.c.h.b16 %v9108
    %v9166 = vunpack.c.l.b16 %v9109
    %v9167 = vunpack.c.h.b16 %v9109
    %v9168 = vunpack.c.l.b16 %v9110
    %v9169 = vunpack.c.h.b16 %v9110
    %v9170 = vunpack.c.l.b16 %v9111
    %v9171 = vunpack.c.h.b16 %v9111
    %v9172 = vunpack.c.l.b16 %v9112
    %v9173 = vunpack.c.h.b16 %v9112
    %v9174 = vunpack.c.l.b16 %v9113
    %v9175 = vunpack.c.h.b16 %v9113
    %v9176 = vunpack.c.l.b16 %v9114
    %v9177 = vunpack.c.h.b16 %v9114
    %v9178 = vunpack.c.l.b16 %v9115
    %v9179 = vunpack.c.h.b16 %v9115
    %v9180 = vunpack.c.l.b16 %v9116
    %v9181 = vunpack.c.h.b16 %v9116
    %v9182 = vunpack.c.l.b16 %v9117
    %v9183 = vunpack.c.h.b16 %v9117
    %v9184 = vunpack.c.l.b16 %v9118
    %v9185 = vunpack.c.h.b16 %v9118
    %v9186 = vunpack.c.l.b16 %v9119
    %v9187 = vunpack.c.h.b16 %v9119
    %v9188 = vunpack.c.l.b16 %v9120
    %v9189 = vunpack.c.h.b16 %v9120
    %v9190 = vunpack.c.l.b16 %v9121
    %v9191 = vunpack.c.h.b16 %v9121
    %v9192 = vunpack.c.l.b16 %v9122
    %v9193 = vunpack.c.h.b16 %v9122
    %v9194 = vunpack.c.l.b16 %v9123
    %v9195 = vunpack.c.h.b16 %v9123
    %v9196 = vunpack.c.l.b16 %v9124
    %v9197 = vunpack.c.h.b16 %v9124
    %v9198 = vunpack.c.l.b16 %v9125
    %v9199 = vunpack.c.h.b16 %v9125
    %v9200 = vunpack.c.l.b16 %v9126
    %v9201 = vunpack.c.h.b16 %v9126
    %v9202 = vunpack.c.l.b16 %v9127
    %v9203 = vunpack.c.h.b16 %v9127
    %v9204 = vunpack.c.l.b16 %v9128
    %v9205 = vunpack.c.h.b16 %v9128
    %v9206 = vunpack.c.l.b16 %v9129
    %v9207 = vunpack.c.h.b16 %v9129
    %v9208 = vunpack.c.l.b16 %v9130
    %v9209 = vunpack.c.h.b16 %v9130
    %v9210 = vunpack.c.l.b16 %v9131
    %v9211 = vunpack.c.h.b16 %v9131
    %v9212 = vunpack.c.l.b16 %v9132
    %v9213 = vunpack.c.h.b16 %v9132
    %v9214 = vunpack.c.l.b16 %v9133
    %v9215 = vunpack.c.h.b16 %v9133
    %v9216 = vunpack.c.l.b16 %v9134
    %v9217 = vunpack.c.h.b16 %v9134
    %v9218 = vunpack.c.l.b16 %v9135
    %v9219 = vunpack.c.h.b16 %v9135
    %v9220 = vpack.c.b16 %v9166, %v9164
    %v9221 = vpack.c.b16 %v9167, %v9165
    %v9222 = vpack.c.b16 %v9170, %v9168
    %v9223 = vpack.c.b16 %v9171, %v9169
    %v9224 = vpack.c.b16 %v9174, %v9172
    %v9225 = vpack.c.b16 %v9175, %v9173
    %v9226 = vpack.c.b16 %v9178, %v9176
    %v9227 = vpack.c.b16 %v9179, %v9177
    %v9228 = vpack.c.b16 %v9182, %v9180
    %v9229 = vpack.c.b16 %v9183, %v9181
    %v9230 = vpack.c.b16 %v9186, %v9184
    %v9231 = vpack.c.b16 %v9187, %v9185
    %v9232 = vpack.c.b16 %v9190, %v9188
    %v9233 = vpack.c.b16 %v9191, %v9189
    %v9234 = vpack.c.b16 %v9194, %v9192
    %v9235 = vpack.c.b16 %v9195, %v9193
    %v9236 = vpack.c.b16 %v9198, %v9196
    %v9237 = vpack.c.b16 %v9199, %v9197
    %v9238 = vpack.c.b16 %v9202, %v9200
    %v9239 = vpack.c.b16 %v9203, %v9201
    %v9240 = vpack.c.b16 %v9206, %v9204
    %v9241 = vpack.c.b16 %v9207, %v9205
    %v9242 = vpack.c.b16 %v9210, %v9208
    %v9243 = vpack.c.b16 %v9211, %v9209
    %v9244 = vpack.c.b16 %v9214, %v9212
    %v9245 = vpack.c.b16 %v9215, %v9213
    %v9246 = vpack.c.b16 %v9218, %v9216
    %v9247 = vpack.c.b16 %v9219, %v9217
    %v9277 = vsel %vm873, %v9107, 0
    %9279 = vmatprep.subr.bf16.mxu0 %v9235
    %9280 = vmatpush1.bf16.msra.mxu0 %v9234
    %9281 = vmatprep.subr.bf16.mxu0 %v9233
    %9282 = vmatpush1.bf16.msra.mxu0 %v9232
    %9283 = vmatprep.subr.bf16.mxu0 %v9231
    %9284 = vmatpush1.bf16.msra.mxu0 %v9230
    %9285 = vmatprep.subr.bf16.mxu0 %v9229
    %9286 = vmatpush1.bf16.msra.mxu0 %v9228
    %9287 = vmatprep.subr.bf16.mxu0 %v9227
    %9288 = vmatpush1.bf16.msra.mxu0 %v9226
    %9289 = vmatprep.subr.bf16.mxu0 %v9225
    %9290 = vmatpush1.bf16.msra.mxu0 %v9224
    %9291 = vmatprep.subr.bf16.mxu0 %v9223
    %9292 = vmatpush1.bf16.msra.mxu0 %v9222
    %9293 = vmatprep.subr.bf16.mxu0 %v9221
    %9294 = vmatpush1.bf16.msra.mxu0 %v9220
    %9295 = vmatprep.subr.bf16.mxu0 0
    %9296 = vmatpush2.bf16.msra.mxu0 0
    %9297 = vmatprep.subr.bf16.mxu0 0
    %9298 = vmatpush2.bf16.msra.mxu0 0
    %9299 = vmatprep.subr.bf16.mxu0 %v9247
    %9300 = vmatpush2.bf16.msra.mxu0 %v9246
    %9301 = vmatprep.subr.bf16.mxu0 %v9245
    %9302 = vmatpush2.bf16.msra.mxu0 %v9244
    %9303 = vmatprep.subr.bf16.mxu0 %v9243
    %9304 = vmatpush2.bf16.msra.mxu0 %v9242
    %9305 = vmatprep.subr.bf16.mxu0 %v9241
    %9306 = vmatpush2.bf16.msra.mxu0 %v9240
    %9307 = vmatprep.subr.bf16.mxu0 %v9239
    %9308 = vmatpush2.bf16.msra.mxu0 %v9238
    %9309 = vmatprep.subr.bf16.mxu0 %v9237
    %9310 = vmatpush2.bf16.msra.mxu0 %v9236
    %9311 = vmatprep.mubr.bf16.mxu0 %v9277
    %9312 = vmatmul.mubr.bf16.gmra.mxu0 %v9106
    %v9313 = vpop.f32.mrf.mxu0
    %v9314 = vadd.f32 0.0, %v9313
    %v9315 = vpop.f32.mrf.mxu0
    %v9316 = vadd.f32 0.0, %v9315
    %v9317 = vpop.f32.mrf.mxu0
    %v9318 = vpop.f32.mrf.mxu0
    %9319 = vdwg.mxu0
    %v9320 = vld [vmem:[%s13] sm:$0xf]
    %v9321 = vld [vmem:[%s13 + $0x4] sm:$0x7]
    %v9322 = vpack.c.bf16 %v9314, %v9314
    %v9323 = vpack.c.bf16 %v9316, %v9316
    %v9324 = vld [vmem:[%s4086] sm:$0xff]
    %v9325 = vld [vmem:[%s4086 + $0x8] sm:$0xff]
    %v9326 = vld [vmem:[%s4086 + $0x10] sm:$0xff]
    %v9327 = vld [vmem:[%s4086 + $0x18] sm:$0xff]
    %v9328 = vld [vmem:[%s4086 + $0x20] sm:$0xff]
    %v9329 = vld [vmem:[%s4086 + $0x28] sm:$0xff]
    %v9330 = vld [vmem:[%s4086 + $0x30] sm:$0xff]
    %v9331 = vld [vmem:[%s4086 + $0x38] sm:$0xff]
    %v9332 = vld [vmem:[%s4086 + $0x40] sm:$0xff]
    %v9333 = vld [vmem:[%s4086 + $0x48] sm:$0xff]
    %v9334 = vld [vmem:[%s4086 + $0x50] sm:$0xff]
    %v9335 = vld [vmem:[%s4086 + $0x58] sm:$0xff]
    %v9336 = vld [vmem:[%s4086 + $0x60] sm:$0xff]
    %v9337 = vld [vmem:[%s4086 + $0x68] sm:$0xff]
    %v9338 = vld [vmem:[%s4086 + $0x70] sm:$0xff]
    %v9339 = vld [vmem:[%s4086 + $0x78] sm:$0xff]
    %v9340 = vld [vmem:[%s4086 + $0x80] sm:$0xff]
    %v9341 = vld [vmem:[%s4086 + $0x88] sm:$0xff]
    %v9342 = vld [vmem:[%s4086 + $0x90] sm:$0xff]
    %v9343 = vld [vmem:[%s4086 + $0x98] sm:$0xff]
    %v9344 = vld [vmem:[%s4086 + $0xa0] sm:$0xff]
    %v9345 = vld [vmem:[%s4086 + $0xa8] sm:$0xff]
    %v9346 = vld [vmem:[%s4086 + $0xb0] sm:$0xff]
    %v9347 = vld [vmem:[%s4086 + $0xb8] sm:$0xff]
    %v9348 = vld [vmem:[%s4086 + $0xc0] sm:$0xff]
    %v9349 = vld [vmem:[%s4086 + $0xc8] sm:$0xff]
    %v9350 = vld [vmem:[%s4086 + $0xd0] sm:$0xff]
    %v9351 = vld [vmem:[%s4086 + $0xd8] sm:$0xff]
    %v9380 = vunpack.c.l.b16 %v9324
    %v9381 = vunpack.c.h.b16 %v9324
    %v9382 = vunpack.c.l.b16 %v9325
    %v9383 = vunpack.c.h.b16 %v9325
    %v9384 = vunpack.c.l.b16 %v9326
    %v9385 = vunpack.c.h.b16 %v9326
    %v9386 = vunpack.c.l.b16 %v9327
    %v9387 = vunpack.c.h.b16 %v9327
    %v9388 = vunpack.c.l.b16 %v9328
    %v9389 = vunpack.c.h.b16 %v9328
    %v9390 = vunpack.c.l.b16 %v9329
    %v9391 = vunpack.c.h.b16 %v9329
    %v9392 = vunpack.c.l.b16 %v9330
    %v9393 = vunpack.c.h.b16 %v9330
    %v9394 = vunpack.c.l.b16 %v9331
    %v9395 = vunpack.c.h.b16 %v9331
    %v9396 = vunpack.c.l.b16 %v9332
    %v9397 = vunpack.c.h.b16 %v9332
    %v9398 = vunpack.c.l.b16 %v9333
    %v9399 = vunpack.c.h.b16 %v9333
    %v9400 = vunpack.c.l.b16 %v9334
    %v9401 = vunpack.c.h.b16 %v9334
    %v9402 = vunpack.c.l.b16 %v9335
    %v9403 = vunpack.c.h.b16 %v9335
    %v9404 = vunpack.c.l.b16 %v9336
    %v9405 = vunpack.c.h.b16 %v9336
    %v9406 = vunpack.c.l.b16 %v9337
    %v9407 = vunpack.c.h.b16 %v9337
    %v9408 = vunpack.c.l.b16 %v9338
    %v9409 = vunpack.c.h.b16 %v9338
    %v9410 = vunpack.c.l.b16 %v9339
    %v9411 = vunpack.c.h.b16 %v9339
    %v9412 = vunpack.c.l.b16 %v9340
    %v9413 = vunpack.c.h.b16 %v9340
    %v9414 = vunpack.c.l.b16 %v9341
    %v9415 = vunpack.c.h.b16 %v9341
    %v9416 = vunpack.c.l.b16 %v9342
    %v9417 = vunpack.c.h.b16 %v9342
    %v9418 = vunpack.c.l.b16 %v9343
    %v9419 = vunpack.c.h.b16 %v9343
    %v9420 = vunpack.c.l.b16 %v9344
    %v9421 = vunpack.c.h.b16 %v9344
    %v9422 = vunpack.c.l.b16 %v9345
    %v9423 = vunpack.c.h.b16 %v9345
    %v9424 = vunpack.c.l.b16 %v9346
    %v9425 = vunpack.c.h.b16 %v9346
    %v9426 = vunpack.c.l.b16 %v9347
    %v9427 = vunpack.c.h.b16 %v9347
    %v9428 = vunpack.c.l.b16 %v9348
    %v9429 = vunpack.c.h.b16 %v9348
    %v9430 = vunpack.c.l.b16 %v9349
    %v9431 = vunpack.c.h.b16 %v9349
    %v9432 = vunpack.c.l.b16 %v9350
    %v9433 = vunpack.c.h.b16 %v9350
    %v9434 = vunpack.c.l.b16 %v9351
    %v9435 = vunpack.c.h.b16 %v9351
    %v9436 = vpack.c.b16 %v9382, %v9380
    %v9437 = vpack.c.b16 %v9383, %v9381
    %v9438 = vpack.c.b16 %v9386, %v9384
    %v9439 = vpack.c.b16 %v9387, %v9385
    %v9440 = vpack.c.b16 %v9390, %v9388
    %v9441 = vpack.c.b16 %v9391, %v9389
    %v9442 = vpack.c.b16 %v9394, %v9392
    %v9443 = vpack.c.b16 %v9395, %v9393
    %v9444 = vpack.c.b16 %v9398, %v9396
    %v9445 = vpack.c.b16 %v9399, %v9397
    %v9446 = vpack.c.b16 %v9402, %v9400
    %v9447 = vpack.c.b16 %v9403, %v9401
    %v9448 = vpack.c.b16 %v9406, %v9404
    %v9449 = vpack.c.b16 %v9407, %v9405
    %v9450 = vpack.c.b16 %v9410, %v9408
    %v9451 = vpack.c.b16 %v9411, %v9409
    %v9452 = vpack.c.b16 %v9414, %v9412
    %v9453 = vpack.c.b16 %v9415, %v9413
    %v9454 = vpack.c.b16 %v9418, %v9416
    %v9455 = vpack.c.b16 %v9419, %v9417
    %v9456 = vpack.c.b16 %v9422, %v9420
    %v9457 = vpack.c.b16 %v9423, %v9421
    %v9458 = vpack.c.b16 %v9426, %v9424
    %v9459 = vpack.c.b16 %v9427, %v9425
    %v9460 = vpack.c.b16 %v9430, %v9428
    %v9461 = vpack.c.b16 %v9431, %v9429
    %v9462 = vpack.c.b16 %v9434, %v9432
    %v9463 = vpack.c.b16 %v9435, %v9433
    %9492 = vmatprep.subr.bf16.mxu0 %v9451
    %9493 = vmatpush1.bf16.msra.mxu0 %v9450
    %9494 = vmatprep.subr.bf16.mxu0 %v9449
    %9495 = vmatpush1.bf16.msra.mxu0 %v9448
    %9496 = vmatprep.subr.bf16.mxu0 %v9447
    %9497 = vmatpush1.bf16.msra.mxu0 %v9446
    %9498 = vmatprep.subr.bf16.mxu0 %v9445
    %9499 = vmatpush1.bf16.msra.mxu0 %v9444
    %9500 = vmatprep.subr.bf16.mxu0 %v9443
    %9501 = vmatpush1.bf16.msra.mxu0 %v9442
    %9502 = vmatprep.subr.bf16.mxu0 %v9441
    %9503 = vmatpush1.bf16.msra.mxu0 %v9440
    %9504 = vmatprep.subr.bf16.mxu0 %v9439
    %9505 = vmatpush1.bf16.msra.mxu0 %v9438
    %9506 = vmatprep.subr.bf16.mxu0 %v9437
    %9507 = vmatpush1.bf16.msra.mxu0 %v9436
    %9508 = vmatprep.subr.bf16.mxu0 0
    %9509 = vmatpush2.bf16.msra.mxu0 0
    %9510 = vmatprep.subr.bf16.mxu0 0
    %9511 = vmatpush2.bf16.msra.mxu0 0
    %9512 = vmatprep.subr.bf16.mxu0 %v9463
    %9513 = vmatpush2.bf16.msra.mxu0 %v9462
    %9514 = vmatprep.subr.bf16.mxu0 %v9461
    %9515 = vmatpush2.bf16.msra.mxu0 %v9460
    %9516 = vmatprep.subr.bf16.mxu0 %v9459
    %9517 = vmatpush2.bf16.msra.mxu0 %v9458
    %9518 = vmatprep.subr.bf16.mxu0 %v9457
    %9519 = vmatpush2.bf16.msra.mxu0 %v9456
    %9520 = vmatprep.subr.bf16.mxu0 %v9455
    %9521 = vmatpush2.bf16.msra.mxu0 %v9454
    %9522 = vmatprep.subr.bf16.mxu0 %v9453
    %9523 = vmatpush2.bf16.msra.mxu0 %v9452
    %9524 = vmatprep.mubr.bf16.mxu0 %v9277
    %9525 = vmatmul.mubr.bf16.gmra.mxu0 %v9106
    %v9526 = vpop.f32.mrf.mxu0
    %v9527 = vadd.f32 0.0, %v9526
    %v9528 = vpop.f32.mrf.mxu0
    %v9529 = vadd.f32 0.0, %v9528
    %v9530 = vpop.f32.mrf.mxu0
    %v9531 = vpop.f32.mrf.mxu0
    %9532 = vdwg.mxu0
    %v9533 = vld [vmem:[%s4296] sm:$0xf]
    %v9534 = vld [vmem:[%s4296 + $0x4] sm:$0x7]
    %v9535 = vpack.c.bf16 %v9527, %v9527
    %v9536 = vpack.c.bf16 %v9529, %v9529
    %v9539 = vunpack.c.l.b16 %v9533
    %v9540 = vunpack.c.l.b16 %v9534
    %v9541 = vpack.c.b16 %v9540, %v9539
    %v9543 = vsel %vm1384, %v9541, 0
    %v9546 = vand.u32 %v9535, %v1391
    %v9549 = vand.u32 %v9536, %v1391
    %9551 = vmatprep.subr.bf16.mxu0 0
    %9552 = vmatpush1.bf16.msra.mxu0 0
    %9553 = vmatprep.subr.bf16.mxu0 0
    %9554 = vmatpush1.bf16.msra.mxu0 0
    %9555 = vmatprep.subr.bf16.mxu0 0
    %9556 = vmatpush1.bf16.msra.mxu0 0
    %9557 = vmatprep.subr.bf16.mxu0 0
    %9558 = vmatpush1.bf16.msra.mxu0 0
    %9559 = vmatprep.subr.bf16.mxu0 0
    %9560 = vmatpush1.bf16.msra.mxu0 0
    %9561 = vmatprep.subr.bf16.mxu0 0
    %9562 = vmatpush1.bf16.msra.mxu0 0
    %9563 = vmatprep.subr.bf16.mxu0 0
    %9564 = vmatpush1.bf16.msra.mxu0 0
    %9565 = vmatprep.subr.bf16.mxu0 %v9549
    %9566 = vmatpush1.bf16.msra.mxu0 %v9546
    %9567 = vmatprep.subr.bf16.mxu0 0
    %9568 = vmatpush2.bf16.msra.mxu0 0
    %9569 = vmatprep.subr.bf16.mxu0 0
    %9570 = vmatpush2.bf16.msra.mxu0 0
    %9571 = vmatprep.subr.bf16.mxu0 0
    %9572 = vmatpush2.bf16.msra.mxu0 0
    %9573 = vmatprep.subr.bf16.mxu0 0
    %9574 = vmatpush2.bf16.msra.mxu0 0
    %9575 = vmatprep.subr.bf16.mxu0 0
    %9576 = vmatpush2.bf16.msra.mxu0 0
    %9577 = vmatprep.subr.bf16.mxu0 0
    %9578 = vmatpush2.bf16.msra.mxu0 0
    %9579 = vmatprep.subr.bf16.mxu0 0
    %9580 = vmatpush2.bf16.msra.mxu0 0
    %9581 = vmatprep.subr.bf16.mxu0 0
    %9582 = vmatpush2.bf16.msra.mxu0 0
    %9583 = vmatprep.mubr.bf16.mxu0 0
    %9584 = vmatmul.mubr.bf16.gmra.mxu0 %v9543
    %v9585 = vpop.f32.mrf.mxu0
    %v9586 = vadd.f32 0.0, %v9585
    %v9587 = vpop.f32.mrf.mxu0
    %v9588 = vadd.f32 0.0, %v9587
    %v9589 = vpop.f32.mrf.mxu0
    %v9590 = vadd.f32 0.0, %v9589
    %v9591 = vpop.f32.mrf.mxu0
    %v9592 = vadd.f32 0.0, %v9591
    %9593 = vdwg.mxu0
    %v9596 = vunpack.c.l.b16 %v9320
    %v9597 = vunpack.c.l.b16 %v9321
    %v9598 = vpack.c.b16 %v9597, %v9596
    %v9600 = vsel %vm1384, %v9598, 0
    %v9603 = vand.u32 %v9322, %v1391
    %v9606 = vand.u32 %v9323, %v1391
    %9608 = vmatprep.subr.bf16.mxu0 0
    %9609 = vmatpush1.bf16.msra.mxu0 0
    %9610 = vmatprep.subr.bf16.mxu0 0
    %9611 = vmatpush1.bf16.msra.mxu0 0
    %9612 = vmatprep.subr.bf16.mxu0 0
    %9613 = vmatpush1.bf16.msra.mxu0 0
    %9614 = vmatprep.subr.bf16.mxu0 0
    %9615 = vmatpush1.bf16.msra.mxu0 0
    %9616 = vmatprep.subr.bf16.mxu0 0
    %9617 = vmatpush1.bf16.msra.mxu0 0
    %9618 = vmatprep.subr.bf16.mxu0 0
    %9619 = vmatpush1.bf16.msra.mxu0 0
    %9620 = vmatprep.subr.bf16.mxu0 0
    %9621 = vmatpush1.bf16.msra.mxu0 0
    %9622 = vmatprep.subr.bf16.mxu0 %v9606
    %9623 = vmatpush1.bf16.msra.mxu0 %v9603
    %9624 = vmatprep.subr.bf16.mxu0 0
    %9625 = vmatpush2.bf16.msra.mxu0 0
    %9626 = vmatprep.subr.bf16.mxu0 0
    %9627 = vmatpush2.bf16.msra.mxu0 0
    %9628 = vmatprep.subr.bf16.mxu0 0
    %9629 = vmatpush2.bf16.msra.mxu0 0
    %9630 = vmatprep.subr.bf16.mxu0 0
    %9631 = vmatpush2.bf16.msra.mxu0 0
    %9632 = vmatprep.subr.bf16.mxu0 0
    %9633 = vmatpush2.bf16.msra.mxu0 0
    %9634 = vmatprep.subr.bf16.mxu0 0
    %9635 = vmatpush2.bf16.msra.mxu0 0
    %9636 = vmatprep.subr.bf16.mxu0 0
    %9637 = vmatpush2.bf16.msra.mxu0 0
    %9638 = vmatprep.subr.bf16.mxu0 0
    %9639 = vmatpush2.bf16.msra.mxu0 0
    %9640 = vmatprep.mubr.bf16.mxu0 0
    %9641 = vmatmul.mubr.bf16.gmra.mxu0 %v9600
    %v9642 = vpop.f32.mrf.mxu0
    %v9643 = vadd.f32 %v9586, %v9642
    %v9644 = vpop.f32.mrf.mxu0
    %v9645 = vadd.f32 %v9588, %v9644
    %v9646 = vpop.f32.mrf.mxu0
    %v9647 = vadd.f32 %v9590, %v9646
    %v9648 = vpop.f32.mrf.mxu0
    %v9649 = vadd.f32 %v9592, %v9648
    %9650 = vdwg.mxu0
    %v9651 = vld [vmem:[%s4415] sm:$0xff]
    %v9652 = vld [vmem:[%s4415 + $0x8] sm:$0xff]
    %v9653 = vld [vmem:[%s4415 + $0x10] sm:$0xff]
    %v9654 = vld [vmem:[%s4415 + $0x18] sm:$0xff]
    %v9655 = vld [vmem:[%s4415 + $0x20] sm:$0xff]
    %v9656 = vld [vmem:[%s4415 + $0x28] sm:$0xff]
    %v9657 = vld [vmem:[%s4415 + $0x30] sm:$0xff]
    %v9658 = vld [vmem:[%s4415 + $0x38] sm:$0xff]
    %v9659 = vld [vmem:[%s4415 + $0x40] sm:$0xff]
    %v9660 = vld [vmem:[%s4415 + $0x48] sm:$0xff]
    %v9661 = vld [vmem:[%s4415 + $0x50] sm:$0xff]
    %v9662 = vld [vmem:[%s4415 + $0x58] sm:$0xff]
    %v9663 = vld [vmem:[%s4415 + $0x60] sm:$0xff]
    %v9664 = vld [vmem:[%s4415 + $0x68] sm:$0xff]
    %v9665 = vld [vmem:[%s4415 + $0x70] sm:$0xff]
    %v9666 = vld [vmem:[%s4415 + $0x78] sm:$0xff]
    %v9667 = vld [vmem:[%s4415 + $0x80] sm:$0xff]
    %v9668 = vld [vmem:[%s4415 + $0x88] sm:$0xff]
    %v9669 = vld [vmem:[%s4415 + $0x90] sm:$0xff]
    %v9670 = vld [vmem:[%s4415 + $0x98] sm:$0xff]
    %v9671 = vld [vmem:[%s4415 + $0xa0] sm:$0xff]
    %v9672 = vld [vmem:[%s4415 + $0xa8] sm:$0xff]
    %v9673 = vld [vmem:[%s4415 + $0xb0] sm:$0xff]
    %v9674 = vld [vmem:[%s4415 + $0xb8] sm:$0xff]
    %v9675 = vld [vmem:[%s4415 + $0xc0] sm:$0xff]
    %v9676 = vld [vmem:[%s4415 + $0xc8] sm:$0xff]
    %v9677 = vld [vmem:[%s4415 + $0xd0] sm:$0xff]
    %v9678 = vld [vmem:[%s4415 + $0xd8] sm:$0xff]
    %v9707 = vunpack.c.l.b16 %v9651
    %v9708 = vunpack.c.h.b16 %v9651
    %v9709 = vunpack.c.l.b16 %v9652
    %v9710 = vunpack.c.h.b16 %v9652
    %v9711 = vunpack.c.l.b16 %v9653
    %v9712 = vunpack.c.h.b16 %v9653
    %v9713 = vunpack.c.l.b16 %v9654
    %v9714 = vunpack.c.h.b16 %v9654
    %v9715 = vunpack.c.l.b16 %v9655
    %v9716 = vunpack.c.h.b16 %v9655
    %v9717 = vunpack.c.l.b16 %v9656
    %v9718 = vunpack.c.h.b16 %v9656
    %v9719 = vunpack.c.l.b16 %v9657
    %v9720 = vunpack.c.h.b16 %v9657
    %v9721 = vunpack.c.l.b16 %v9658
    %v9722 = vunpack.c.h.b16 %v9658
    %v9723 = vunpack.c.l.b16 %v9659
    %v9724 = vunpack.c.h.b16 %v9659
    %v9725 = vunpack.c.l.b16 %v9660
    %v9726 = vunpack.c.h.b16 %v9660
    %v9727 = vunpack.c.l.b16 %v9661
    %v9728 = vunpack.c.h.b16 %v9661
    %v9729 = vunpack.c.l.b16 %v9662
    %v9730 = vunpack.c.h.b16 %v9662
    %v9731 = vunpack.c.l.b16 %v9663
    %v9732 = vunpack.c.h.b16 %v9663
    %v9733 = vunpack.c.l.b16 %v9664
    %v9734 = vunpack.c.h.b16 %v9664
    %v9735 = vunpack.c.l.b16 %v9665
    %v9736 = vunpack.c.h.b16 %v9665
    %v9737 = vunpack.c.l.b16 %v9666
    %v9738 = vunpack.c.h.b16 %v9666
    %v9739 = vunpack.c.l.b16 %v9667
    %v9740 = vunpack.c.h.b16 %v9667
    %v9741 = vunpack.c.l.b16 %v9668
    %v9742 = vunpack.c.h.b16 %v9668
    %v9743 = vunpack.c.l.b16 %v9669
    %v9744 = vunpack.c.h.b16 %v9669
    %v9745 = vunpack.c.l.b16 %v9670
    %v9746 = vunpack.c.h.b16 %v9670
    %v9747 = vunpack.c.l.b16 %v9671
    %v9748 = vunpack.c.h.b16 %v9671
    %v9749 = vunpack.c.l.b16 %v9672
    %v9750 = vunpack.c.h.b16 %v9672
    %v9751 = vunpack.c.l.b16 %v9673
    %v9752 = vunpack.c.h.b16 %v9673
    %v9753 = vunpack.c.l.b16 %v9674
    %v9754 = vunpack.c.h.b16 %v9674
    %v9755 = vunpack.c.l.b16 %v9675
    %v9756 = vunpack.c.h.b16 %v9675
    %v9757 = vunpack.c.l.b16 %v9676
    %v9758 = vunpack.c.h.b16 %v9676
    %v9759 = vunpack.c.l.b16 %v9677
    %v9760 = vunpack.c.h.b16 %v9677
    %v9761 = vunpack.c.l.b16 %v9678
    %v9762 = vunpack.c.h.b16 %v9678
    %v9763 = vpack.c.b16 %v9709, %v9707
    %v9764 = vpack.c.b16 %v9710, %v9708
    %v9765 = vpack.c.b16 %v9713, %v9711
    %v9766 = vpack.c.b16 %v9714, %v9712
    %v9767 = vpack.c.b16 %v9717, %v9715
    %v9768 = vpack.c.b16 %v9718, %v9716
    %v9769 = vpack.c.b16 %v9721, %v9719
    %v9770 = vpack.c.b16 %v9722, %v9720
    %v9771 = vpack.c.b16 %v9725, %v9723
    %v9772 = vpack.c.b16 %v9726, %v9724
    %v9773 = vpack.c.b16 %v9729, %v9727
    %v9774 = vpack.c.b16 %v9730, %v9728
    %v9775 = vpack.c.b16 %v9733, %v9731
    %v9776 = vpack.c.b16 %v9734, %v9732
    %v9777 = vpack.c.b16 %v9737, %v9735
    %v9778 = vpack.c.b16 %v9738, %v9736
    %v9779 = vpack.c.b16 %v9741, %v9739
    %v9780 = vpack.c.b16 %v9742, %v9740
    %v9781 = vpack.c.b16 %v9745, %v9743
    %v9782 = vpack.c.b16 %v9746, %v9744
    %v9783 = vpack.c.b16 %v9749, %v9747
    %v9784 = vpack.c.b16 %v9750, %v9748
    %v9785 = vpack.c.b16 %v9753, %v9751
    %v9786 = vpack.c.b16 %v9754, %v9752
    %v9787 = vpack.c.b16 %v9757, %v9755
    %v9788 = vpack.c.b16 %v9758, %v9756
    %v9789 = vpack.c.b16 %v9761, %v9759
    %v9790 = vpack.c.b16 %v9762, %v9760
    %9819 = vmatprep.subr.bf16.mxu0 %v9778
    %9820 = vmatpush1.bf16.msra.mxu0 %v9777
    %9821 = vmatprep.subr.bf16.mxu0 %v9776
    %9822 = vmatpush1.bf16.msra.mxu0 %v9775
    %9823 = vmatprep.subr.bf16.mxu0 %v9774
    %9824 = vmatpush1.bf16.msra.mxu0 %v9773
    %9825 = vmatprep.subr.bf16.mxu0 %v9772
    %9826 = vmatpush1.bf16.msra.mxu0 %v9771
    %9827 = vmatprep.subr.bf16.mxu0 %v9770
    %9828 = vmatpush1.bf16.msra.mxu0 %v9769
    %9829 = vmatprep.subr.bf16.mxu0 %v9768
    %9830 = vmatpush1.bf16.msra.mxu0 %v9767
    %9831 = vmatprep.subr.bf16.mxu0 %v9766
    %9832 = vmatpush1.bf16.msra.mxu0 %v9765
    %9833 = vmatprep.subr.bf16.mxu0 %v9764
    %9834 = vmatpush1.bf16.msra.mxu0 %v9763
    %9835 = vmatprep.subr.bf16.mxu0 0
    %9836 = vmatpush2.bf16.msra.mxu0 0
    %9837 = vmatprep.subr.bf16.mxu0 0
    %9838 = vmatpush2.bf16.msra.mxu0 0
    %9839 = vmatprep.subr.bf16.mxu0 %v9790
    %9840 = vmatpush2.bf16.msra.mxu0 %v9789
    %9841 = vmatprep.subr.bf16.mxu0 %v9788
    %9842 = vmatpush2.bf16.msra.mxu0 %v9787
    %9843 = vmatprep.subr.bf16.mxu0 %v9786
    %9844 = vmatpush2.bf16.msra.mxu0 %v9785
    %9845 = vmatprep.subr.bf16.mxu0 %v9784
    %9846 = vmatpush2.bf16.msra.mxu0 %v9783
    %9847 = vmatprep.subr.bf16.mxu0 %v9782
    %9848 = vmatpush2.bf16.msra.mxu0 %v9781
    %9849 = vmatprep.subr.bf16.mxu0 %v9780
    %9850 = vmatpush2.bf16.msra.mxu0 %v9779
    %9851 = vmatprep.mubr.bf16.mxu0 %v9277
    %9852 = vmatmul.mubr.bf16.gmra.mxu0 %v9106
    %v9853 = vpop.f32.mrf.mxu0
    %v9854 = vadd.f32 0.0, %v9853
    %v9855 = vpop.f32.mrf.mxu0
    %v9856 = vadd.f32 0.0, %v9855
    %v9857 = vpop.f32.mrf.mxu0
    %v9858 = vpop.f32.mrf.mxu0
    %9859 = vdwg.mxu0
    %v9860 = vld [vmem:[%s4625] sm:$0xf]
    %v9861 = vld [vmem:[%s4625 + $0x4] sm:$0x7]
    %v9862 = vpack.c.bf16 %v9854, %v9854
    %v9863 = vpack.c.bf16 %v9856, %v9856
    %v9866 = vunpack.c.l.b16 %v9860
    %v9867 = vunpack.c.l.b16 %v9861
    %v9868 = vpack.c.b16 %v9867, %v9866
    %v9870 = vsel %vm1384, %v9868, 0
    %v9873 = vand.u32 %v9862, %v1391
    %v9876 = vand.u32 %v9863, %v1391
    %9878 = vmatprep.subr.bf16.mxu0 0
    %9879 = vmatpush1.bf16.msra.mxu0 0
    %9880 = vmatprep.subr.bf16.mxu0 0
    %9881 = vmatpush1.bf16.msra.mxu0 0
    %9882 = vmatprep.subr.bf16.mxu0 0
    %9883 = vmatpush1.bf16.msra.mxu0 0
    %9884 = vmatprep.subr.bf16.mxu0 0
    %9885 = vmatpush1.bf16.msra.mxu0 0
    %9886 = vmatprep.subr.bf16.mxu0 0
    %9887 = vmatpush1.bf16.msra.mxu0 0
    %9888 = vmatprep.subr.bf16.mxu0 0
    %9889 = vmatpush1.bf16.msra.mxu0 0
    %9890 = vmatprep.subr.bf16.mxu0 0
    %9891 = vmatpush1.bf16.msra.mxu0 0
    %9892 = vmatprep.subr.bf16.mxu0 %v9876
    %9893 = vmatpush1.bf16.msra.mxu0 %v9873
    %9894 = vmatprep.subr.bf16.mxu0 0
    %9895 = vmatpush2.bf16.msra.mxu0 0
    %9896 = vmatprep.subr.bf16.mxu0 0
    %9897 = vmatpush2.bf16.msra.mxu0 0
    %9898 = vmatprep.subr.bf16.mxu0 0
    %9899 = vmatpush2.bf16.msra.mxu0 0
    %9900 = vmatprep.subr.bf16.mxu0 0
    %9901 = vmatpush2.bf16.msra.mxu0 0
    %9902 = vmatprep.subr.bf16.mxu0 0
    %9903 = vmatpush2.bf16.msra.mxu0 0
    %9904 = vmatprep.subr.bf16.mxu0 0
    %9905 = vmatpush2.bf16.msra.mxu0 0
    %9906 = vmatprep.subr.bf16.mxu0 0
    %9907 = vmatpush2.bf16.msra.mxu0 0
    %9908 = vmatprep.subr.bf16.mxu0 0
    %9909 = vmatpush2.bf16.msra.mxu0 0
    %9910 = vmatprep.mubr.bf16.mxu0 0
    %9911 = vmatmul.mubr.bf16.gmra.mxu0 %v9870
    %v9912 = vpop.f32.mrf.mxu0
    %v9913 = vadd.f32 0.0, %v9912
    %v9914 = vpop.f32.mrf.mxu0
    %v9915 = vadd.f32 0.0, %v9914
    %v9916 = vpop.f32.mrf.mxu0
    %v9917 = vadd.f32 0.0, %v9916
    %v9918 = vpop.f32.mrf.mxu0
    %v9919 = vadd.f32 0.0, %v9918
    %9920 = vdwg.mxu0
    %v9921 = vadd.f32 %v9643, %v9913
    %v9922 = vadd.f32 %v9645, %v9915
    %v9923 = vadd.f32 %v9647, %v9917
    %v9924 = vadd.f32 %v9649, %v9919
    %v9925 = vld [vmem:[%s15] sm:$0x3]
    %v9927 = vlaneseq
    %v9928 = vshrl.u32 %v9927, 7
    %v9929 = vsub.s32 0, %v9928
    %v9930 = vrot.slane %v9925, %v9929
    %v9931 = vlaneseq
    %v9932 = vshrl.u32 %v9931, 7
    %v9933 = vsub.s32 1, %v9932
    %v9934 = vrot.slane %v9925, %v9933
    %v9937 = vadd.f32 %v9921, %v9930
    %v9938 = vadd.f32 %v9922, %v9934
    %v9939 = vadd.f32 %v9923, %v9930
    %v9940 = vadd.f32 %v9924, %v9934
    %v9941 = vmax.f32 %v9937, 0.0
    %v9942 = vmax.f32 %v9938, 0.0
    %v9943 = vmax.f32 %v9939, 0.0
    %v9944 = vmax.f32 %v9940, 0.0
    %v9945 = vpack.c.bf16 %v9943, %v9941
    %v9946 = vpack.c.bf16 %v9944, %v9942
    %v9947 = vld [vmem:[#allocation12] sm:$0xf]
    %v9948 = vld [vmem:[#allocation12 + $0x4] sm:$0xf]
    %v9949 = vld [vmem:[#allocation12 + $0x8] sm:$0xf]
    %v9950 = vld [vmem:[#allocation12 + $0xc] sm:$0xf]
    %v9951 = vld [vmem:[#allocation12 + $0x10] sm:$0xf]
    %v9952 = vld [vmem:[#allocation12 + $0x14] sm:$0xf]
    %v9953 = vld [vmem:[#allocation12 + $0x18] sm:$0xf]
    %v9954 = vld [vmem:[#allocation12 + $0x1c] sm:$0xf]
    %v9955 = vld [vmem:[#allocation12 + $0x20] sm:$0xf]
    %v9956 = vld [vmem:[#allocation12 + $0x24] sm:$0xf]
    %v9957 = vld [vmem:[#allocation12 + $0x28] sm:$0xf]
    %v9958 = vld [vmem:[#allocation12 + $0x2c] sm:$0xf]
    %v9959 = vld [vmem:[#allocation12 + $0x30] sm:$0xf]
    %v9960 = vld [vmem:[#allocation12 + $0x34] sm:$0xf]
    %v9961 = vld [vmem:[#allocation12 + $0x38] sm:$0xf]
    %v9962 = vld [vmem:[#allocation12 + $0x3c] sm:$0xf]
    %v9963 = vld [vmem:[#allocation12 + $0x40] sm:$0xf]
    %v9964 = vld [vmem:[#allocation12 + $0x44] sm:$0xf]
    %v9965 = vld [vmem:[#allocation12 + $0x48] sm:$0xf]
    %v9966 = vld [vmem:[#allocation12 + $0x4c] sm:$0xf]
    %v9967 = vld [vmem:[#allocation12 + $0x50] sm:$0xf]
    %v9968 = vld [vmem:[#allocation12 + $0x54] sm:$0xf]
    %v9969 = vld [vmem:[#allocation12 + $0x58] sm:$0xf]
    %v9970 = vld [vmem:[#allocation12 + $0x5c] sm:$0xf]
    %v9971 = vld [vmem:[#allocation12 + $0x60] sm:$0xf]
    %v9972 = vld [vmem:[#allocation12 + $0x64] sm:$0xf]
    %v9973 = vld [vmem:[#allocation12 + $0x68] sm:$0xf]
    %v9974 = vld [vmem:[#allocation12 + $0x6c] sm:$0xf]
    %v10003 = vunpack.c.l.b16 %v9947
    %v10004 = vunpack.c.l.b16 %v9948
    %v10005 = vunpack.c.l.b16 %v9949
    %v10006 = vunpack.c.l.b16 %v9950
    %v10007 = vunpack.c.l.b16 %v9951
    %v10008 = vunpack.c.l.b16 %v9952
    %v10009 = vunpack.c.l.b16 %v9953
    %v10010 = vunpack.c.l.b16 %v9954
    %v10011 = vunpack.c.l.b16 %v9955
    %v10012 = vunpack.c.l.b16 %v9956
    %v10013 = vunpack.c.l.b16 %v9957
    %v10014 = vunpack.c.l.b16 %v9958
    %v10015 = vunpack.c.l.b16 %v9959
    %v10016 = vunpack.c.l.b16 %v9960
    %v10017 = vunpack.c.l.b16 %v9961
    %v10018 = vunpack.c.l.b16 %v9962
    %v10019 = vunpack.c.l.b16 %v9963
    %v10020 = vunpack.c.l.b16 %v9964
    %v10021 = vunpack.c.l.b16 %v9965
    %v10022 = vunpack.c.l.b16 %v9966
    %v10023 = vunpack.c.l.b16 %v9967
    %v10024 = vunpack.c.l.b16 %v9968
    %v10025 = vunpack.c.l.b16 %v9969
    %v10026 = vunpack.c.l.b16 %v9970
    %v10027 = vunpack.c.l.b16 %v9971
    %v10028 = vunpack.c.l.b16 %v9972
    %v10029 = vunpack.c.l.b16 %v9973
    %v10030 = vunpack.c.l.b16 %v9974
    %v10031 = vpack.c.b16 %v10004, %v10003
    %v10032 = vpack.c.b16 %v10006, %v10005
    %v10033 = vpack.c.b16 %v10008, %v10007
    %v10034 = vpack.c.b16 %v10010, %v10009
    %v10035 = vpack.c.b16 %v10012, %v10011
    %v10036 = vpack.c.b16 %v10014, %v10013
    %v10037 = vpack.c.b16 %v10016, %v10015
    %v10038 = vpack.c.b16 %v10018, %v10017
    %v10039 = vpack.c.b16 %v10020, %v10019
    %v10040 = vpack.c.b16 %v10022, %v10021
    %v10041 = vpack.c.b16 %v10024, %v10023
    %v10042 = vpack.c.b16 %v10026, %v10025
    %v10043 = vpack.c.b16 %v10028, %v10027
    %v10044 = vpack.c.b16 %v10030, %v10029
    %v10060 = vsel %vm873, %v9946, 0
    %10062 = vmatprep.subr.bf16.mxu0 0
    %10063 = vmatpush1.bf16.msra.mxu0 %v10038
    %10064 = vmatprep.subr.bf16.mxu0 0
    %10065 = vmatpush1.bf16.msra.mxu0 %v10037
    %10066 = vmatprep.subr.bf16.mxu0 0
    %10067 = vmatpush1.bf16.msra.mxu0 %v10036
    %10068 = vmatprep.subr.bf16.mxu0 0
    %10069 = vmatpush1.bf16.msra.mxu0 %v10035
    %10070 = vmatprep.subr.bf16.mxu0 0
    %10071 = vmatpush1.bf16.msra.mxu0 %v10034
    %10072 = vmatprep.subr.bf16.mxu0 0
    %10073 = vmatpush1.bf16.msra.mxu0 %v10033
    %10074 = vmatprep.subr.bf16.mxu0 0
    %10075 = vmatpush1.bf16.msra.mxu0 %v10032
    %10076 = vmatprep.subr.bf16.mxu0 0
    %10077 = vmatpush1.bf16.msra.mxu0 %v10031
    %10078 = vmatprep.subr.bf16.mxu0 0
    %10079 = vmatpush2.bf16.msra.mxu0 0
    %10080 = vmatprep.subr.bf16.mxu0 0
    %10081 = vmatpush2.bf16.msra.mxu0 0
    %10082 = vmatprep.subr.bf16.mxu0 0
    %10083 = vmatpush2.bf16.msra.mxu0 %v10044
    %10084 = vmatprep.subr.bf16.mxu0 0
    %10085 = vmatpush2.bf16.msra.mxu0 %v10043
    %10086 = vmatprep.subr.bf16.mxu0 0
    %10087 = vmatpush2.bf16.msra.mxu0 %v10042
    %10088 = vmatprep.subr.bf16.mxu0 0
    %10089 = vmatpush2.bf16.msra.mxu0 %v10041
    %10090 = vmatprep.subr.bf16.mxu0 0
    %10091 = vmatpush2.bf16.msra.mxu0 %v10040
    %10092 = vmatprep.subr.bf16.mxu0 0
    %10093 = vmatpush2.bf16.msra.mxu0 %v10039
    %10094 = vmatprep.mubr.bf16.mxu0 %v10060
    %10095 = vmatmul.mubr.bf16.gmra.mxu0 %v9945
    %v10096 = vpop.f32.mrf.mxu0
    %v10097 = vadd.f32 0.0, %v10096
    %v10098 = vpop.f32.mrf.mxu0
    %v10099 = vpop.f32.mrf.mxu0
    %v10100 = vadd.f32 0.0, %v10099
    %v10101 = vpop.f32.mrf.mxu0
    %10102 = vdwg.mxu0
    %v10103 = vld [vmem:[%s16] sm:$0xf]
    %v10104 = vld [vmem:[%s16 + $0x4] sm:$0xf]
    %v10105 = vld [vmem:[%s16 + $0x8] sm:$0xf]
    %v10106 = vld [vmem:[%s16 + $0xc] sm:$0x3]
    %v10107 = vpack.c.bf16 %v10100, %v10097
    %v10108 = vld [vmem:[%s4874] sm:$0xf]
    %v10109 = vld [vmem:[%s4874 + $0x4] sm:$0xf]
    %v10110 = vld [vmem:[%s4874 + $0x8] sm:$0xf]
    %v10111 = vld [vmem:[%s4874 + $0xc] sm:$0xf]
    %v10112 = vld [vmem:[%s4874 + $0x10] sm:$0xf]
    %v10113 = vld [vmem:[%s4874 + $0x14] sm:$0xf]
    %v10114 = vld [vmem:[%s4874 + $0x18] sm:$0xf]
    %v10115 = vld [vmem:[%s4874 + $0x1c] sm:$0xf]
    %v10116 = vld [vmem:[%s4874 + $0x20] sm:$0xf]
    %v10117 = vld [vmem:[%s4874 + $0x24] sm:$0xf]
    %v10118 = vld [vmem:[%s4874 + $0x28] sm:$0xf]
    %v10119 = vld [vmem:[%s4874 + $0x2c] sm:$0xf]
    %v10120 = vld [vmem:[%s4874 + $0x30] sm:$0xf]
    %v10121 = vld [vmem:[%s4874 + $0x34] sm:$0xf]
    %v10122 = vld [vmem:[%s4874 + $0x38] sm:$0xf]
    %v10123 = vld [vmem:[%s4874 + $0x3c] sm:$0xf]
    %v10124 = vld [vmem:[%s4874 + $0x40] sm:$0xf]
    %v10125 = vld [vmem:[%s4874 + $0x44] sm:$0xf]
    %v10126 = vld [vmem:[%s4874 + $0x48] sm:$0xf]
    %v10127 = vld [vmem:[%s4874 + $0x4c] sm:$0xf]
    %v10128 = vld [vmem:[%s4874 + $0x50] sm:$0xf]
    %v10129 = vld [vmem:[%s4874 + $0x54] sm:$0xf]
    %v10130 = vld [vmem:[%s4874 + $0x58] sm:$0xf]
    %v10131 = vld [vmem:[%s4874 + $0x5c] sm:$0xf]
    %v10132 = vld [vmem:[%s4874 + $0x60] sm:$0xf]
    %v10133 = vld [vmem:[%s4874 + $0x64] sm:$0xf]
    %v10134 = vld [vmem:[%s4874 + $0x68] sm:$0xf]
    %v10135 = vld [vmem:[%s4874 + $0x6c] sm:$0xf]
    %v10164 = vunpack.c.l.b16 %v10108
    %v10165 = vunpack.c.l.b16 %v10109
    %v10166 = vunpack.c.l.b16 %v10110
    %v10167 = vunpack.c.l.b16 %v10111
    %v10168 = vunpack.c.l.b16 %v10112
    %v10169 = vunpack.c.l.b16 %v10113
    %v10170 = vunpack.c.l.b16 %v10114
    %v10171 = vunpack.c.l.b16 %v10115
    %v10172 = vunpack.c.l.b16 %v10116
    %v10173 = vunpack.c.l.b16 %v10117
    %v10174 = vunpack.c.l.b16 %v10118
    %v10175 = vunpack.c.l.b16 %v10119
    %v10176 = vunpack.c.l.b16 %v10120
    %v10177 = vunpack.c.l.b16 %v10121
    %v10178 = vunpack.c.l.b16 %v10122
    %v10179 = vunpack.c.l.b16 %v10123
    %v10180 = vunpack.c.l.b16 %v10124
    %v10181 = vunpack.c.l.b16 %v10125
    %v10182 = vunpack.c.l.b16 %v10126
    %v10183 = vunpack.c.l.b16 %v10127
    %v10184 = vunpack.c.l.b16 %v10128
    %v10185 = vunpack.c.l.b16 %v10129
    %v10186 = vunpack.c.l.b16 %v10130
    %v10187 = vunpack.c.l.b16 %v10131
    %v10188 = vunpack.c.l.b16 %v10132
    %v10189 = vunpack.c.l.b16 %v10133
    %v10190 = vunpack.c.l.b16 %v10134
    %v10191 = vunpack.c.l.b16 %v10135
    %v10192 = vpack.c.b16 %v10165, %v10164
    %v10193 = vpack.c.b16 %v10167, %v10166
    %v10194 = vpack.c.b16 %v10169, %v10168
    %v10195 = vpack.c.b16 %v10171, %v10170
    %v10196 = vpack.c.b16 %v10173, %v10172
    %v10197 = vpack.c.b16 %v10175, %v10174
    %v10198 = vpack.c.b16 %v10177, %v10176
    %v10199 = vpack.c.b16 %v10179, %v10178
    %v10200 = vpack.c.b16 %v10181, %v10180
    %v10201 = vpack.c.b16 %v10183, %v10182
    %v10202 = vpack.c.b16 %v10185, %v10184
    %v10203 = vpack.c.b16 %v10187, %v10186
    %v10204 = vpack.c.b16 %v10189, %v10188
    %v10205 = vpack.c.b16 %v10191, %v10190
    %10220 = vmatprep.subr.bf16.mxu0 0
    %10221 = vmatpush1.bf16.msra.mxu0 %v10199
    %10222 = vmatprep.subr.bf16.mxu0 0
    %10223 = vmatpush1.bf16.msra.mxu0 %v10198
    %10224 = vmatprep.subr.bf16.mxu0 0
    %10225 = vmatpush1.bf16.msra.mxu0 %v10197
    %10226 = vmatprep.subr.bf16.mxu0 0
    %10227 = vmatpush1.bf16.msra.mxu0 %v10196
    %10228 = vmatprep.subr.bf16.mxu0 0
    %10229 = vmatpush1.bf16.msra.mxu0 %v10195
    %10230 = vmatprep.subr.bf16.mxu0 0
    %10231 = vmatpush1.bf16.msra.mxu0 %v10194
    %10232 = vmatprep.subr.bf16.mxu0 0
    %10233 = vmatpush1.bf16.msra.mxu0 %v10193
    %10234 = vmatprep.subr.bf16.mxu0 0
    %10235 = vmatpush1.bf16.msra.mxu0 %v10192
    %10236 = vmatprep.subr.bf16.mxu0 0
    %10237 = vmatpush2.bf16.msra.mxu0 0
    %10238 = vmatprep.subr.bf16.mxu0 0
    %10239 = vmatpush2.bf16.msra.mxu0 0
    %10240 = vmatprep.subr.bf16.mxu0 0
    %10241 = vmatpush2.bf16.msra.mxu0 %v10205
    %10242 = vmatprep.subr.bf16.mxu0 0
    %10243 = vmatpush2.bf16.msra.mxu0 %v10204
    %10244 = vmatprep.subr.bf16.mxu0 0
    %10245 = vmatpush2.bf16.msra.mxu0 %v10203
    %10246 = vmatprep.subr.bf16.mxu0 0
    %10247 = vmatpush2.bf16.msra.mxu0 %v10202
    %10248 = vmatprep.subr.bf16.mxu0 0
    %10249 = vmatpush2.bf16.msra.mxu0 %v10201
    %10250 = vmatprep.subr.bf16.mxu0 0
    %10251 = vmatpush2.bf16.msra.mxu0 %v10200
    %10252 = vmatprep.mubr.bf16.mxu0 %v10060
    %10253 = vmatmul.mubr.bf16.gmra.mxu0 %v9945
    %v10254 = vpop.f32.mrf.mxu0
    %v10255 = vadd.f32 0.0, %v10254
    %v10256 = vpop.f32.mrf.mxu0
    %v10257 = vpop.f32.mrf.mxu0
    %v10258 = vadd.f32 0.0, %v10257
    %v10259 = vpop.f32.mrf.mxu0
    %10260 = vdwg.mxu0
    %v10261 = vld [vmem:[%s5028] sm:$0xf]
    %v10262 = vld [vmem:[%s5028 + $0x4] sm:$0xf]
    %v10263 = vld [vmem:[%s5028 + $0x8] sm:$0xf]
    %v10264 = vld [vmem:[%s5028 + $0xc] sm:$0x3]
    %v10265 = vpack.c.bf16 %v10258, %v10255
    %v10270 = vunpack.c.l.b16 %v10261
    %v10271 = vunpack.c.l.b16 %v10262
    %v10272 = vunpack.c.l.b16 %v10263
    %v10273 = vunpack.c.l.b16 %v10264
    %v10274 = vpack.c.b16 %v10271, %v10270
    %v10275 = vpack.c.b16 %v10273, %v10272
    %v10277 = vsel %vm574, %v10274, 0
    %v10280 = vsel %vm574, %v10275, 0
    %v10283 = vsel %vm578, %v10265, 0
    %10285 = vmatprep.subr.bf16.mxu0 0
    %10286 = vmatpush1.bf16.msra.mxu0 0
    %10287 = vmatprep.subr.bf16.mxu0 0
    %10288 = vmatpush1.bf16.msra.mxu0 0
    %10289 = vmatprep.subr.bf16.mxu0 0
    %10290 = vmatpush1.bf16.msra.mxu0 0
    %10291 = vmatprep.subr.bf16.mxu0 0
    %10292 = vmatpush1.bf16.msra.mxu0 0
    %10293 = vmatprep.subr.bf16.mxu0 0
    %10294 = vmatpush1.bf16.msra.mxu0 0
    %10295 = vmatprep.subr.bf16.mxu0 0
    %10296 = vmatpush1.bf16.msra.mxu0 0
    %10297 = vmatprep.subr.bf16.mxu0 0
    %10298 = vmatpush1.bf16.msra.mxu0 0
    %10299 = vmatprep.subr.bf16.mxu0 0
    %10300 = vmatpush1.bf16.msra.mxu0 %v10283
    %10301 = vmatprep.subr.bf16.mxu0 0
    %10302 = vmatpush2.bf16.msra.mxu0 0
    %10303 = vmatprep.subr.bf16.mxu0 0
    %10304 = vmatpush2.bf16.msra.mxu0 0
    %10305 = vmatprep.subr.bf16.mxu0 0
    %10306 = vmatpush2.bf16.msra.mxu0 0
    %10307 = vmatprep.subr.bf16.mxu0 0
    %10308 = vmatpush2.bf16.msra.mxu0 0
    %10309 = vmatprep.subr.bf16.mxu0 0
    %10310 = vmatpush2.bf16.msra.mxu0 0
    %10311 = vmatprep.subr.bf16.mxu0 0
    %10312 = vmatpush2.bf16.msra.mxu0 0
    %10313 = vmatprep.subr.bf16.mxu0 0
    %10314 = vmatpush2.bf16.msra.mxu0 0
    %10315 = vmatprep.subr.bf16.mxu0 0
    %10316 = vmatpush2.bf16.msra.mxu0 0
    %10317 = vmatprep.mubr.bf16.mxu0 0
    %10318 = vmatmul.mubr.bf16.gmra.mxu0 %v10277
    %v10319 = vpop.f32.mrf.mxu0
    %v10320 = vadd.f32 0.0, %v10319
    %v10321 = vpop.f32.mrf.mxu0
    %v10322 = vpop.f32.mrf.mxu0
    %v10323 = vadd.f32 0.0, %v10322
    %v10324 = vpop.f32.mrf.mxu0
    %10325 = vmatprep.mubr.bf16.mxu0 0
    %10326 = vmatmul.mubr.bf16.gmra.mxu0 %v10280
    %v10327 = vpop.f32.mrf.mxu0
    %v10328 = vadd.f32 0.0, %v10327
    %v10329 = vpop.f32.mrf.mxu0
    %v10330 = vpop.f32.mrf.mxu0
    %v10331 = vadd.f32 0.0, %v10330
    %v10332 = vpop.f32.mrf.mxu0
    %10333 = vdwg.mxu0
    %v10338 = vunpack.c.l.b16 %v10103
    %v10339 = vunpack.c.l.b16 %v10104
    %v10340 = vunpack.c.l.b16 %v10105
    %v10341 = vunpack.c.l.b16 %v10106
    %v10342 = vpack.c.b16 %v10339, %v10338
    %v10343 = vpack.c.b16 %v10341, %v10340
    %v10345 = vsel %vm574, %v10342, 0
    %v10348 = vsel %vm574, %v10343, 0
    %v10351 = vsel %vm578, %v10107, 0
    %10353 = vmatprep.subr.bf16.mxu0 0
    %10354 = vmatpush1.bf16.msra.mxu0 0
    %10355 = vmatprep.subr.bf16.mxu0 0
    %10356 = vmatpush1.bf16.msra.mxu0 0
    %10357 = vmatprep.subr.bf16.mxu0 0
    %10358 = vmatpush1.bf16.msra.mxu0 0
    %10359 = vmatprep.subr.bf16.mxu0 0
    %10360 = vmatpush1.bf16.msra.mxu0 0
    %10361 = vmatprep.subr.bf16.mxu0 0
    %10362 = vmatpush1.bf16.msra.mxu0 0
    %10363 = vmatprep.subr.bf16.mxu0 0
    %10364 = vmatpush1.bf16.msra.mxu0 0
    %10365 = vmatprep.subr.bf16.mxu0 0
    %10366 = vmatpush1.bf16.msra.mxu0 0
    %10367 = vmatprep.subr.bf16.mxu0 0
    %10368 = vmatpush1.bf16.msra.mxu0 %v10351
    %10369 = vmatprep.subr.bf16.mxu0 0
    %10370 = vmatpush2.bf16.msra.mxu0 0
    %10371 = vmatprep.subr.bf16.mxu0 0
    %10372 = vmatpush2.bf16.msra.mxu0 0
    %10373 = vmatprep.subr.bf16.mxu0 0
    %10374 = vmatpush2.bf16.msra.mxu0 0
    %10375 = vmatprep.subr.bf16.mxu0 0
    %10376 = vmatpush2.bf16.msra.mxu0 0
    %10377 = vmatprep.subr.bf16.mxu0 0
    %10378 = vmatpush2.bf16.msra.mxu0 0
    %10379 = vmatprep.subr.bf16.mxu0 0
    %10380 = vmatpush2.bf16.msra.mxu0 0
    %10381 = vmatprep.subr.bf16.mxu0 0
    %10382 = vmatpush2.bf16.msra.mxu0 0
    %10383 = vmatprep.subr.bf16.mxu0 0
    %10384 = vmatpush2.bf16.msra.mxu0 0
    %10385 = vmatprep.mubr.bf16.mxu0 0
    %10386 = vmatmul.mubr.bf16.gmra.mxu0 %v10345
    %v10387 = vpop.f32.mrf.mxu0
    %v10388 = vadd.f32 %v10320, %v10387
    %v10389 = vpop.f32.mrf.mxu0
    %v10390 = vpop.f32.mrf.mxu0
    %v10391 = vadd.f32 %v10323, %v10390
    %v10392 = vpop.f32.mrf.mxu0
    %10393 = vmatprep.mubr.bf16.mxu0 0
    %10394 = vmatmul.mubr.bf16.gmra.mxu0 %v10348
    %v10395 = vpop.f32.mrf.mxu0
    %v10396 = vadd.f32 %v10328, %v10395
    %v10397 = vpop.f32.mrf.mxu0
    %v10398 = vpop.f32.mrf.mxu0
    %v10399 = vadd.f32 %v10331, %v10398
    %v10400 = vpop.f32.mrf.mxu0
    %10401 = vdwg.mxu0
    %v10402 = vld [vmem:[%s5170] sm:$0xf]
    %v10403 = vld [vmem:[%s5170 + $0x4] sm:$0xf]
    %v10404 = vld [vmem:[%s5170 + $0x8] sm:$0xf]
    %v10405 = vld [vmem:[%s5170 + $0xc] sm:$0xf]
    %v10406 = vld [vmem:[%s5170 + $0x10] sm:$0xf]
    %v10407 = vld [vmem:[%s5170 + $0x14] sm:$0xf]
    %v10408 = vld [vmem:[%s5170 + $0x18] sm:$0xf]
    %v10409 = vld [vmem:[%s5170 + $0x1c] sm:$0xf]
    %v10410 = vld [vmem:[%s5170 + $0x20] sm:$0xf]
    %v10411 = vld [vmem:[%s5170 + $0x24] sm:$0xf]
    %v10412 = vld [vmem:[%s5170 + $0x28] sm:$0xf]
    %v10413 = vld [vmem:[%s5170 + $0x2c] sm:$0xf]
    %v10414 = vld [vmem:[%s5170 + $0x30] sm:$0xf]
    %v10415 = vld [vmem:[%s5170 + $0x34] sm:$0xf]
    %v10416 = vld [vmem:[%s5170 + $0x38] sm:$0xf]
    %v10417 = vld [vmem:[%s5170 + $0x3c] sm:$0xf]
    %v10418 = vld [vmem:[%s5170 + $0x40] sm:$0xf]
    %v10419 = vld [vmem:[%s5170 + $0x44] sm:$0xf]
    %v10420 = vld [vmem:[%s5170 + $0x48] sm:$0xf]
    %v10421 = vld [vmem:[%s5170 + $0x4c] sm:$0xf]
    %v10422 = vld [vmem:[%s5170 + $0x50] sm:$0xf]
    %v10423 = vld [vmem:[%s5170 + $0x54] sm:$0xf]
    %v10424 = vld [vmem:[%s5170 + $0x58] sm:$0xf]
    %v10425 = vld [vmem:[%s5170 + $0x5c] sm:$0xf]
    %v10426 = vld [vmem:[%s5170 + $0x60] sm:$0xf]
    %v10427 = vld [vmem:[%s5170 + $0x64] sm:$0xf]
    %v10428 = vld [vmem:[%s5170 + $0x68] sm:$0xf]
    %v10429 = vld [vmem:[%s5170 + $0x6c] sm:$0xf]
    %v10458 = vunpack.c.l.b16 %v10402
    %v10459 = vunpack.c.l.b16 %v10403
    %v10460 = vunpack.c.l.b16 %v10404
    %v10461 = vunpack.c.l.b16 %v10405
    %v10462 = vunpack.c.l.b16 %v10406
    %v10463 = vunpack.c.l.b16 %v10407
    %v10464 = vunpack.c.l.b16 %v10408
    %v10465 = vunpack.c.l.b16 %v10409
    %v10466 = vunpack.c.l.b16 %v10410
    %v10467 = vunpack.c.l.b16 %v10411
    %v10468 = vunpack.c.l.b16 %v10412
    %v10469 = vunpack.c.l.b16 %v10413
    %v10470 = vunpack.c.l.b16 %v10414
    %v10471 = vunpack.c.l.b16 %v10415
    %v10472 = vunpack.c.l.b16 %v10416
    %v10473 = vunpack.c.l.b16 %v10417
    %v10474 = vunpack.c.l.b16 %v10418
    %v10475 = vunpack.c.l.b16 %v10419
    %v10476 = vunpack.c.l.b16 %v10420
    %v10477 = vunpack.c.l.b16 %v10421
    %v10478 = vunpack.c.l.b16 %v10422
    %v10479 = vunpack.c.l.b16 %v10423
    %v10480 = vunpack.c.l.b16 %v10424
    %v10481 = vunpack.c.l.b16 %v10425
    %v10482 = vunpack.c.l.b16 %v10426
    %v10483 = vunpack.c.l.b16 %v10427
    %v10484 = vunpack.c.l.b16 %v10428
    %v10485 = vunpack.c.l.b16 %v10429
    %v10486 = vpack.c.b16 %v10459, %v10458
    %v10487 = vpack.c.b16 %v10461, %v10460
    %v10488 = vpack.c.b16 %v10463, %v10462
    %v10489 = vpack.c.b16 %v10465, %v10464
    %v10490 = vpack.c.b16 %v10467, %v10466
    %v10491 = vpack.c.b16 %v10469, %v10468
    %v10492 = vpack.c.b16 %v10471, %v10470
    %v10493 = vpack.c.b16 %v10473, %v10472
    %v10494 = vpack.c.b16 %v10475, %v10474
    %v10495 = vpack.c.b16 %v10477, %v10476
    %v10496 = vpack.c.b16 %v10479, %v10478
    %v10497 = vpack.c.b16 %v10481, %v10480
    %v10498 = vpack.c.b16 %v10483, %v10482
    %v10499 = vpack.c.b16 %v10485, %v10484
    %10514 = vmatprep.subr.bf16.mxu0 0
    %10515 = vmatpush1.bf16.msra.mxu0 %v10493
    %10516 = vmatprep.subr.bf16.mxu0 0
    %10517 = vmatpush1.bf16.msra.mxu0 %v10492
    %10518 = vmatprep.subr.bf16.mxu0 0
    %10519 = vmatpush1.bf16.msra.mxu0 %v10491
    %10520 = vmatprep.subr.bf16.mxu0 0
    %10521 = vmatpush1.bf16.msra.mxu0 %v10490
    %10522 = vmatprep.subr.bf16.mxu0 0
    %10523 = vmatpush1.bf16.msra.mxu0 %v10489
    %10524 = vmatprep.subr.bf16.mxu0 0
    %10525 = vmatpush1.bf16.msra.mxu0 %v10488
    %10526 = vmatprep.subr.bf16.mxu0 0
    %10527 = vmatpush1.bf16.msra.mxu0 %v10487
    %10528 = vmatprep.subr.bf16.mxu0 0
    %10529 = vmatpush1.bf16.msra.mxu0 %v10486
    %10530 = vmatprep.subr.bf16.mxu0 0
    %10531 = vmatpush2.bf16.msra.mxu0 0
    %10532 = vmatprep.subr.bf16.mxu0 0
    %10533 = vmatpush2.bf16.msra.mxu0 0
    %10534 = vmatprep.subr.bf16.mxu0 0
    %10535 = vmatpush2.bf16.msra.mxu0 %v10499
    %10536 = vmatprep.subr.bf16.mxu0 0
    %10537 = vmatpush2.bf16.msra.mxu0 %v10498
    %10538 = vmatprep.subr.bf16.mxu0 0
    %10539 = vmatpush2.bf16.msra.mxu0 %v10497
    %10540 = vmatprep.subr.bf16.mxu0 0
    %10541 = vmatpush2.bf16.msra.mxu0 %v10496
    %10542 = vmatprep.subr.bf16.mxu0 0
    %10543 = vmatpush2.bf16.msra.mxu0 %v10495
    %10544 = vmatprep.subr.bf16.mxu0 0
    %10545 = vmatpush2.bf16.msra.mxu0 %v10494
    %10546 = vmatprep.mubr.bf16.mxu0 %v10060
    %10547 = vmatmul.mubr.bf16.gmra.mxu0 %v9945
    %v10548 = vpop.f32.mrf.mxu0
    %v10549 = vadd.f32 0.0, %v10548
    %v10550 = vpop.f32.mrf.mxu0
    %v10551 = vpop.f32.mrf.mxu0
    %v10552 = vadd.f32 0.0, %v10551
    %v10553 = vpop.f32.mrf.mxu0
    %10554 = vdwg.mxu0
    %v10555 = vld [vmem:[%s5324] sm:$0xf]
    %v10556 = vld [vmem:[%s5324 + $0x4] sm:$0xf]
    %v10557 = vld [vmem:[%s5324 + $0x8] sm:$0xf]
    %v10558 = vld [vmem:[%s5324 + $0xc] sm:$0x3]
    %v10559 = vpack.c.bf16 %v10552, %v10549
    %v10564 = vunpack.c.l.b16 %v10555
    %v10565 = vunpack.c.l.b16 %v10556
    %v10566 = vunpack.c.l.b16 %v10557
    %v10567 = vunpack.c.l.b16 %v10558
    %v10568 = vpack.c.b16 %v10565, %v10564
    %v10569 = vpack.c.b16 %v10567, %v10566
    %v10571 = vsel %vm574, %v10568, 0
    %v10574 = vsel %vm574, %v10569, 0
    %v10577 = vsel %vm578, %v10559, 0
    %10579 = vmatprep.subr.bf16.mxu0 0
    %10580 = vmatpush1.bf16.msra.mxu0 0
    %10581 = vmatprep.subr.bf16.mxu0 0
    %10582 = vmatpush1.bf16.msra.mxu0 0
    %10583 = vmatprep.subr.bf16.mxu0 0
    %10584 = vmatpush1.bf16.msra.mxu0 0
    %10585 = vmatprep.subr.bf16.mxu0 0
    %10586 = vmatpush1.bf16.msra.mxu0 0
    %10587 = vmatprep.subr.bf16.mxu0 0
    %10588 = vmatpush1.bf16.msra.mxu0 0
    %10589 = vmatprep.subr.bf16.mxu0 0
    %10590 = vmatpush1.bf16.msra.mxu0 0
    %10591 = vmatprep.subr.bf16.mxu0 0
    %10592 = vmatpush1.bf16.msra.mxu0 0
    %10593 = vmatprep.subr.bf16.mxu0 0
    %10594 = vmatpush1.bf16.msra.mxu0 %v10577
    %10595 = vmatprep.subr.bf16.mxu0 0
    %10596 = vmatpush2.bf16.msra.mxu0 0
    %10597 = vmatprep.subr.bf16.mxu0 0
    %10598 = vmatpush2.bf16.msra.mxu0 0
    %10599 = vmatprep.subr.bf16.mxu0 0
    %10600 = vmatpush2.bf16.msra.mxu0 0
    %10601 = vmatprep.subr.bf16.mxu0 0
    %10602 = vmatpush2.bf16.msra.mxu0 0
    %10603 = vmatprep.subr.bf16.mxu0 0
    %10604 = vmatpush2.bf16.msra.mxu0 0
    %10605 = vmatprep.subr.bf16.mxu0 0
    %10606 = vmatpush2.bf16.msra.mxu0 0
    %10607 = vmatprep.subr.bf16.mxu0 0
    %10608 = vmatpush2.bf16.msra.mxu0 0
    %10609 = vmatprep.subr.bf16.mxu0 0
    %10610 = vmatpush2.bf16.msra.mxu0 0
    %10611 = vmatprep.mubr.bf16.mxu0 0
    %10612 = vmatmul.mubr.bf16.gmra.mxu0 %v10571
    %v10613 = vpop.f32.mrf.mxu0
    %v10614 = vadd.f32 0.0, %v10613
    %v10615 = vpop.f32.mrf.mxu0
    %v10616 = vpop.f32.mrf.mxu0
    %v10617 = vadd.f32 0.0, %v10616
    %v10618 = vpop.f32.mrf.mxu0
    %10619 = vmatprep.mubr.bf16.mxu0 0
    %10620 = vmatmul.mubr.bf16.gmra.mxu0 %v10574
    %v10621 = vpop.f32.mrf.mxu0
    %v10622 = vadd.f32 0.0, %v10621
    %v10623 = vpop.f32.mrf.mxu0
    %v10624 = vpop.f32.mrf.mxu0
    %v10625 = vadd.f32 0.0, %v10624
    %v10626 = vpop.f32.mrf.mxu0
    %10627 = vdwg.mxu0
    %v10628 = vadd.f32 %v10388, %v10614
    %v10629 = vadd.f32 %v10391, %v10617
    %v10630 = vadd.f32 %v10396, %v10622
    %v10631 = vadd.f32 %v10399, %v10625
    %v10632 = vld [vmem:[%s18] sm:$0x1]
    %v10634 = vlaneseq
    %v10635 = vshrl.u32 %v10634, 7
    %v10636 = vsub.s32 0, %v10635
    %v10637 = vrot.slane %v10632, %v10636
    %v10639 = vadd.f32 %v10628, %v10637
    %v10640 = vadd.f32 %v10629, %v10637
    %v10641 = vadd.f32 %v10630, %v10637
    %v10642 = vadd.f32 %v10631, %v10637
    %v10643 = vsub.f32 0.0, %v10639
    %v10644 = vsub.f32 0.0, %v10640
    %v10645 = vsub.f32 0.0, %v10641
    %v10646 = vsub.f32 0.0, %v10642
    %v10647 = vmul.f32 %v10643, 1.442695
    %v10648 = vpow.pop %v10647
    %v10649 = vmul.f32 %v10644, 1.442695
    %v10650 = vpow.pop %v10649
    %v10651 = vmul.f32 %v10645, 1.442695
    %v10652 = vpow.pop %v10651
    %v10653 = vmul.f32 %v10646, 1.442695
    %v10654 = vpow.pop %v10653
    %v10655 = vadd.f32 %v10648, 1.0
    %v10656 = vadd.f32 %v10650, 1.0
    %v10657 = vadd.f32 %v10652, 1.0
    %v10658 = vadd.f32 %v10654, 1.0
    %v10659 = vrcp.pop %v10655
    %v10660 = vrcp.pop %v10656
    %v10661 = vrcp.pop %v10657
    %v10662 = vrcp.pop %v10658
    %s10663 = scalar_lea.vmem %s19, 32
    %10664 = vst.msk [vmem:[%s10663] sm:$0xff] %vm167, %v10659
    %10665 = vst.msk [vmem:[%s10663 + $0x8] sm:$0xff] %vm167, %v10660
    %10666 = vst.msk [vmem:[%s10663 + $0x10] sm:$0xff] %vm167, %v10661
    %10667 = vst.msk [vmem:[%s10663 + $0x18] sm:$0xf] %vm5436, %v10662
    // Predicated region
    $region106: #{forward.1} parent=1 // pred_check
      _
    $region107: #{forward.1} parent=1 // pred_check_branch
      %10669 = sbr.rel (0) target = $region109
    $region108: #{forward.1} parent=1 // pred_region
      _
    $region109: #{forward.1} parent=1 // pred_fallthru
      _
    // Predicated region
    $region110: #{forward.1} parent=1 // pred_check
      _
    $region111: #{forward.1} parent=1 // pred_check_branch
      %10671 = sbr.rel (0) target = $region113
    $region112: #{forward.1} parent=1 // pred_region
      _
    $region113: #{forward.1} parent=1 // pred_fallthru
      _
    %10672 = vsyncpa [#allocation3], 1
    %10673 = vsyncpa [#allocation5], 1
    %10674 = vsyncpa [#allocation8], 1
    %10675 = vsyncpa [#allocation11], 1

</llo_original>
